<compile_context>
chip_gen: v7x
topology: tpu7x:2x2x1
jax: 0.10.0
libtpu: 0.0.40
codegen_flags: <defaults>
</compile_context>

<pallas_src>
import functools

import numpy as np

import jax
import jax.numpy as jnp
from jax import lax
from jax.experimental import pallas as pl
from jax.experimental.pallas import tpu as pltpu


# ------------------------------ Pallas kernel --------------------------------


def _make_kernel(num_blocks):
    """Builds the single fused whole-network kernel (one batch element/step)."""

    def kernel(*refs):
        x_ref, stem_w_ref, stem_b_ref, mp_ref = refs[:4]
        blk_refs = refs[4:4 + 7 * num_blocks]
        w5_ref, b5_ref, wf_ref, fcb_ref, o_ref = refs[4 + 7 * num_blocks:]
        f32 = jnp.float32

        # --- stem: bn0 + conv1(3x3, s2, pad 1) + BN + ReLU as ONE K=9*Cin
        # matmul; the bn0/zero-padding interaction lives in the host-computed
        # per-output-position bias map.
        y = jnp.maximum(
            jnp.dot(x_ref[...], stem_w_ref[...], preferred_element_type=f32)
            + stem_b_ref[...], 0.0)

        # --- maxpool 3x3 / s2 / pad 1: 9 spatial gather matmuls + elementwise
        # max.  Zero rows (padding taps) are exact because y is post-ReLU.
        m = None
        for k in range(9):
            t = jnp.dot(mp_ref[k], y, preferred_element_type=f32)
            m = t if m is None else jnp.maximum(m, t)
        y = m

        # --- InvertedResidual blocks (stride-1 and stride-2 share this path;
        # shuffle/chunk/concat live in W1/W2, spatial structure in S).
        for i in range(num_blocks):
            (s_ref, w1_ref, b1_ref, dw_ref, db_ref,
             w2_ref, b2_ref) = blk_refs[7 * i:7 * i + 7]
            z = jnp.maximum(
                jnp.dot(y, w1_ref[...], preferred_element_type=f32)
                + b1_ref[...], 0.0)
            # 3x3 depthwise for both branches at once: one matmul of the
            # combined gather matrix S (P_out, 9*P_in) against the nine
            # per-tap-weighted copies of z stacked along rows.
            zw = jnp.concatenate([z * dw_ref[k] for k in range(9)], axis=0)
            acc = jnp.dot(s_ref[...], zw, preferred_element_type=f32)
            y = jnp.maximum(
                jnp.dot(acc + db_ref[...], w2_ref[...],
                        preferred_element_type=f32) + b2_ref[...], 0.0)

        # --- head: conv5(1x1) + BN + ReLU, global spatial mean, fc.
        y5 = jnp.maximum(
            jnp.dot(y, w5_ref[...], preferred_element_type=f32)
            + b5_ref[...], 0.0)
        feat = jnp.sum(y5, axis=0, keepdims=True) * (1.0 / y5.shape[0])
        o_ref[...] = (jnp.dot(feat, wf_ref[...], preferred_element_type=f32)
                      + fcb_ref[...])

    return kernel


# ------------------------------ Pallas wrapper --------------------------------


def _full_spec(shape):
    nd = len(shape)
    return pl.BlockSpec(shape, lambda b, _nd=nd: (0,) * _nd)


def _im2col_stem(x_nhwc):
    """One-time im2col of the raw input for the stride-2 stem conv (XLA glue)."""
    n, h, w, c = x_nhwc.shape
    ho = (h - 1) // 2 + 1
    wo = (w - 1) // 2 + 1
    xp = jnp.pad(x_nhwc, ((0, 0), (1, 1), (1, 1), (0, 0)))
    taps = []
    for di in range(3):
        for dj in range(3):
            t = lax.slice(xp, (0, di, dj, 0),
                          (n, di + (ho - 1) * 2 + 1, dj + (wo - 1) * 2 + 1, c),
                          (1, 2, 2, 1))
            taps.append(t.reshape(n, ho * wo, c))
    return jnp.concatenate(taps, axis=-1)          # (N, Ho*Wo, 9*Cin)


def shufflenet_v2_bn_forward(weights, num_blocks, num_classes, x_nchw):
    x = jnp.transpose(x_nchw, (0, 2, 3, 1)).astype(jnp.float32)   # NCHW->NHWC
    cols = _im2col_stem(x)
    n, p0, kdim = cols.shape
    in_specs = [pl.BlockSpec((None, p0, kdim), lambda b: (b, 0, 0))]
    in_specs += [_full_spec(wgt.shape) for wgt in weights]
    out = pl.pallas_call(
        _make_kernel(num_blocks),
        out_shape=jax.ShapeDtypeStruct((n, 1, num_classes), jnp.float32),
        grid=(n,),
        in_specs=in_specs,
        out_specs=pl.BlockSpec((None, 1, num_classes), lambda b: (b, 0, 0)),
        compiler_params=pltpu.CompilerParams(
            dimension_semantics=("parallel",)),
    )(cols, *weights)
    return out[:, 0, :]


# --------------------- deterministic parameter generation --------------------


class ParamGen:
    def __init__(self, seed=0):
        self._key = jax.random.PRNGKey(seed)

    def _next(self):
        self._key, sub = jax.random.split(self._key)
        return sub

    def normal(self, shape, scale=0.1):
        return scale * jax.random.normal(self._next(), shape, jnp.float32)

    def bn(self, c, eps=1e-5):
        gamma = 1.0 + self.normal((c,))
        beta = self.normal((c,))
        mean = self.normal((c,))
        var = 1.0 + jnp.abs(self.normal((c,)))
        scale = gamma / jnp.sqrt(var + eps)
        bias = beta - mean * scale
        return scale, bias


def make_block_params(pg, inp, oup, stride):
    bf = oup // 2
    assert stride != 1 or inp == bf << 1
    p = {}
    if stride > 1:
        s1, b1 = pg.bn(inp)
        s2, b2 = pg.bn(bf)
        p['branch1'] = dict(
            dw_w=pg.normal((3, 3, inp)), dw_scale=s1, dw_bias=b1,
            pw_w=pg.normal((inp, bf)), pw_scale=s2, pw_bias=b2)
    in2 = inp if stride > 1 else bf
    s1, b1 = pg.bn(bf)
    s2, b2 = pg.bn(bf)
    s3, b3 = pg.bn(bf)
    p['branch2'] = dict(
        pw1_w=pg.normal((in2, bf)), pw1_scale=s1, pw1_bias=b1,
        dw_w=pg.normal((3, 3, bf)), dw_scale=s2, dw_bias=b2,
        pw2_w=pg.normal((bf, bf)), pw2_scale=s3, pw2_bias=b3)
    return p


def make_params(pg, stages_repeats, stages_out_channels, n_in, num_classes):
    assert len(stages_repeats) == 3 and len(stages_out_channels) == 5
    params = {}
    params['bn0_scale'], params['bn0_bias'] = pg.bn(n_in)
    c0 = stages_out_channels[0]
    params['conv1_w'] = pg.normal((3, 3, n_in, c0))
    params['conv1_scale'], params['conv1_bias'] = pg.bn(c0)
    in_c = c0
    stages = []
    for reps, out_c in zip(stages_repeats, stages_out_channels[1:4]):
        blocks = [make_block_params(pg, in_c, out_c, 2)]
        for _ in range(reps - 1):
            blocks.append(make_block_params(pg, out_c, out_c, 1))
        stages.append(blocks)
        in_c = out_c
    params['stages'] = stages
    c_last = stages_out_channels[-1]
    params['conv5_w'] = pg.normal((in_c, c_last))
    params['conv5_scale'], params['conv5_bias'] = pg.bn(c_last)
    params['fc_w'] = pg.normal((c_last, num_classes))
    params['fc_b'] = pg.normal((num_classes,))
    return params


# ---- fold BN / shuffle / chunk / concat / 3x3 structure into kernel weights --


def _shuffle_perm(c):
    """perm[p] = logical (post channel_shuffle, groups=2) channel held at
    physical position p of the pre-shuffle concat([branchA, branchB])."""
    cpg = c // 2
    p = np.arange(c)
    return 2 * (p % cpg) + (p // cpg)


def _select_mats(h_in, w_in, stride):
    """0/1 gather matrices for a 3x3 / pad-1 window: S[k, p_out, p_in]."""
    h_out = (h_in - 1) // stride + 1
    w_out = (w_in - 1) // stride + 1
    s = np.zeros((9, h_out * w_out, h_in * w_in), np.float32)
    for k in range(9):
        di, dj = k // 3, k % 3
        for oy in range(h_out):
            for ox in range(w_out):
                iy = stride * oy + di - 1
                ix = stride * ox + dj - 1
                if 0 <= iy < h_in and 0 <= ix < w_in:
                    s[k, oy * w_out + ox, iy * w_in + ix] = 1.0
    return s, h_out, w_out


def _combine_select(s):
    """(9, P_out, P_in) -> (P_out, 9*P_in), matching vstack_k(z * dw_k)."""
    nine, p_out, p_in = s.shape
    return np.transpose(s, (1, 0, 2)).reshape(p_out, nine * p_in)


def _prep_stem(params, h, w):
    s0 = np.asarray(params['bn0_scale'])
    b0 = np.asarray(params['bn0_bias'])
    w1 = np.asarray(params['conv1_w'])            # (3, 3, Cin, C0)
    s1 = np.asarray(params['conv1_scale'])
    b1 = np.asarray(params['conv1_bias'])
    cin, c0 = w1.shape[2], w1.shape[3]
    ho = (h - 1) // 2 + 1
    wo = (w - 1) // 2 + 1
    # fold bn0 scale + conv1 BN scale into the (9*Cin, C0) weight
    wf = (w1 * s0[None, None, :, None]).reshape(9 * cin, c0) * s1[None, :]
    # per-tap contribution of the bn0 bias (only where the tap is not padding)
    wb0 = np.einsum('ijcf,c->ijf', w1, b0).reshape(9, c0)
    valid = np.zeros((ho * wo, 9), np.float32)
    for k in range(9):
        di, dj = k // 3, k % 3
        for oy in range(ho):
            for ox in range(wo):
                iy, ix = 2 * oy + di - 1, 2 * ox + dj - 1
                if 0 <= iy < h and 0 <= ix < w:
                    valid[oy * wo + ox, k] = 1.0
    bias_map = valid @ wb0 * s1[None, :] + b1[None, :]
    return [wf.astype(np.float32), bias_map.astype(np.float32)], ho, wo


def _prep_block_s2(blk, perm, h_in, w_in):
    b1p, b2p = blk['branch1'], blk['branch2']
    inp, bf = b1p['pw_w'].shape
    d1w = np.asarray(b1p['dw_w']).reshape(9, inp) * np.asarray(b1p['dw_scale'])[None, :]
    d1b = np.asarray(b1p['dw_bias'])
    p1w = np.asarray(b1p['pw_w']) * np.asarray(b1p['pw_scale'])[None, :]
    p1b = np.asarray(b1p['pw_bias'])
    q1w = np.asarray(b2p['pw1_w']) * np.asarray(b2p['pw1_scale'])[None, :]
    q1b = np.asarray(b2p['pw1_bias'])
    d2w = np.asarray(b2p['dw_w']).reshape(9, bf) * np.asarray(b2p['dw_scale'])[None, :]
    d2b = np.asarray(b2p['dw_bias'])
    q2w = np.asarray(b2p['pw2_w']) * np.asarray(b2p['pw2_scale'])[None, :]
    q2b = np.asarray(b2p['pw2_bias'])
    # W1 = [undo-shuffle identity | branch2 leading 1x1]; producer shuffle is
    # folded into the rows.  (The ReLU on the identity half is exact because
    # the block input is post-ReLU / post-maxpool, i.e. >= 0.)
    w1 = np.concatenate([np.eye(inp, dtype=np.float32), q1w], axis=1)[perm, :]
    b1v = np.concatenate([np.zeros(inp, np.float32), q1b])[None, :]
    s, h_out, w_out = _select_mats(h_in, w_in, 2)
    dw = np.concatenate([d1w, d2w], axis=1)[:, None, :]       # (9, 1, inp+bf)
    db = np.concatenate([d1b, d2b])[None, :]
    w2 = np.zeros((inp + bf, 2 * bf), np.float32)             # block-diagonal
    w2[:inp, :bf] = p1w
    w2[inp:, bf:] = q2w
    b2v = np.concatenate([p1b, q2b])[None, :]
    return [_combine_select(s), w1, b1v, dw, db, w2, b2v], h_out, w_out, 2 * bf


def _prep_block_s1(blk, perm, h, w):
    b2p = blk['branch2']
    bf = b2p['pw2_w'].shape[0]
    q1w = np.asarray(b2p['pw1_w']) * np.asarray(b2p['pw1_scale'])[None, :]
    q1b = np.asarray(b2p['pw1_bias'])
    d2w = np.asarray(b2p['dw_w']).reshape(9, bf) * np.asarray(b2p['dw_scale'])[None, :]
    d2b = np.asarray(b2p['dw_bias'])
    q2w = np.asarray(b2p['pw2_w']) * np.asarray(b2p['pw2_scale'])[None, :]
    q2b = np.asarray(b2p['pw2_bias'])
    eye = np.eye(bf, dtype=np.float32)
    zer = np.zeros((bf, bf), np.float32)
    # W1 = [chunk(2) passthrough select | branch2 leading 1x1], shuffle folded
    # into the rows.  Passthrough channels ride through the depthwise stage on
    # the (always valid) center tap with weight 1 and through W2 on an
    # identity block; the surrounding ReLUs are exact (input >= 0).
    w1 = np.block([[eye, zer], [zer, q1w]])[perm, :]
    b1v = np.concatenate([np.zeros(bf, np.float32), q1b])[None, :]
    s, _, _ = _select_mats(h, w, 1)
    dpass = np.zeros((9, bf), np.float32)
    dpass[4, :] = 1.0
    dw = np.concatenate([dpass, d2w], axis=1)[:, None, :]
    db = np.concatenate([np.zeros(bf, np.float32), d2b])[None, :]
    w2 = np.block([[eye, zer], [zer, q2w]])
    b2v = np.concatenate([np.zeros(bf, np.float32), q2b])[None, :]
    return [_combine_select(s), w1, b1v, dw, db, w2, b2v], h, w, 2 * bf


def _prep_head(params, perm):
    w5 = (np.asarray(params['conv5_w'])
          * np.asarray(params['conv5_scale'])[None, :])[perm, :]
    b5 = np.asarray(params['conv5_bias'])[None, :]
    wf = np.asarray(params['fc_w'])
    fcb = np.asarray(params['fc_b'])[None, :]
    return [w5, b5, wf, fcb]


def prepare_inputs(params, h, w):
    """Fold BN / channel_shuffle / chunk / concat / spatial 3x3 structure into
    the flat list of constant arrays consumed by the fused kernel."""
    weights, h, w = _prep_stem(params, h, w)
    mp_s, h, w = _select_mats(h, w, 2)             # maxpool gather matrices
    weights.append(mp_s)
    perm = np.arange(params['conv1_scale'].shape[0])
    num_blocks = 0
    for stage in params['stages']:
        for i, blk in enumerate(stage):
            if i == 0:
                arrs, h, w, cout = _prep_block_s2(blk, perm, h, w)
            else:
                arrs, h, w, cout = _prep_block_s1(blk, perm, h, w)
            weights += arrs
            perm = _shuffle_perm(cout)
            num_blocks += 1
    weights += _prep_head(params, perm)
    return [jnp.asarray(a, jnp.float32) for a in weights], num_blocks


# ------------------------------------ main -----------------------------------


if __name__ == "__main__":
    stages_repeats = [2, 2, 2]
    stages_out_channels = [8, 16, 32, 64, 128]
    n_in, num_classes = 8, 10

    pg = ParamGen(seed=0)
    raw_params = make_params(pg, stages_repeats, stages_out_channels,
                             n_in, num_classes)
    weights, num_blocks = prepare_inputs(raw_params, h=32, w=32)

    # NCHW input, like the PyTorch module: (batch=2, C=N=8, 32, 32).
    x = jax.random.normal(jax.random.PRNGKey(0), (2, n_in, 32, 32), jnp.float32)

    fwd = jax.jit(lambda ws, inp: shufflenet_v2_bn_forward(
        ws, num_blocks, num_classes, inp))
    out = fwd(weights, x)
    jax.block_until_ready(out)
    assert out.shape == (2, num_classes), out.shape
    assert bool(jnp.all(jnp.isfinite(out)))
    print("KERNEL_OK")
</pallas_src>

<mosaic_0001>
module attributes {stable_mosaic.version = 11 : i64} {
  func.func @kernel(%arg0: i32, %arg1: memref<1x256x72xf32, #tpu.memory_space<vmem>>, %arg2: memref<72x8xf32, #tpu.memory_space<vmem>>, %arg3: memref<256x8xf32, #tpu.memory_space<vmem>>, %arg4: memref<9x64x256xf32, #tpu.memory_space<vmem>>, %arg5: memref<16x576xf32, #tpu.memory_space<vmem>>, %arg6: memref<8x16xf32, #tpu.memory_space<vmem>>, %arg7: memref<1x16xf32, #tpu.memory_space<vmem>>, %arg8: memref<9x1x16xf32, #tpu.memory_space<vmem>>, %arg9: memref<1x16xf32, #tpu.memory_space<vmem>>, %arg10: memref<16x16xf32, #tpu.memory_space<vmem>>, %arg11: memref<1x16xf32, #tpu.memory_space<vmem>>, %arg12: memref<16x144xf32, #tpu.memory_space<vmem>>, %arg13: memref<16x16xf32, #tpu.memory_space<vmem>>, %arg14: memref<1x16xf32, #tpu.memory_space<vmem>>, %arg15: memref<9x1x16xf32, #tpu.memory_space<vmem>>, %arg16: memref<1x16xf32, #tpu.memory_space<vmem>>, %arg17: memref<16x16xf32, #tpu.memory_space<vmem>>, %arg18: memref<1x16xf32, #tpu.memory_space<vmem>>, %arg19: memref<4x144xf32, #tpu.memory_space<vmem>>, %arg20: memref<16x32xf32, #tpu.memory_space<vmem>>, %arg21: memref<1x32xf32, #tpu.memory_space<vmem>>, %arg22: memref<9x1x32xf32, #tpu.memory_space<vmem>>, %arg23: memref<1x32xf32, #tpu.memory_space<vmem>>, %arg24: memref<32x32xf32, #tpu.memory_space<vmem>>, %arg25: memref<1x32xf32, #tpu.memory_space<vmem>>, %arg26: memref<4x36xf32, #tpu.memory_space<vmem>>, %arg27: memref<32x32xf32, #tpu.memory_space<vmem>>, %arg28: memref<1x32xf32, #tpu.memory_space<vmem>>, %arg29: memref<9x1x32xf32, #tpu.memory_space<vmem>>, %arg30: memref<1x32xf32, #tpu.memory_space<vmem>>, %arg31: memref<32x32xf32, #tpu.memory_space<vmem>>, %arg32: memref<1x32xf32, #tpu.memory_space<vmem>>, %arg33: memref<1x36xf32, #tpu.memory_space<vmem>>, %arg34: memref<32x64xf32, #tpu.memory_space<vmem>>, %arg35: memref<1x64xf32, #tpu.memory_space<vmem>>, %arg36: memref<9x1x64xf32, #tpu.memory_space<vmem>>, %arg37: memref<1x64xf32, #tpu.memory_space<vmem>>, %arg38: memref<64x64xf32, #tpu.memory_space<vmem>>, %arg39: memref<1x64xf32, #tpu.memory_space<vmem>>, %arg40: memref<1x9xf32, #tpu.memory_space<vmem>>, %arg41: memref<64x64xf32, #tpu.memory_space<vmem>>, %arg42: memref<1x64xf32, #tpu.memory_space<vmem>>, %arg43: memref<9x1x64xf32, #tpu.memory_space<vmem>>, %arg44: memref<1x64xf32, #tpu.memory_space<vmem>>, %arg45: memref<64x64xf32, #tpu.memory_space<vmem>>, %arg46: memref<1x64xf32, #tpu.memory_space<vmem>>, %arg47: memref<64x128xf32, #tpu.memory_space<vmem>>, %arg48: memref<1x128xf32, #tpu.memory_space<vmem>>, %arg49: memref<128x10xf32, #tpu.memory_space<vmem>>, %arg50: memref<1x10xf32, #tpu.memory_space<vmem>>, %arg51: memref<1x1x10xf32, #tpu.memory_space<vmem>>) attributes {dimension_semantics = [#tpu.dimension_semantics<parallel>], iteration_bounds = array<i64: 2>, scalar_prefetch = 0 : i64, scratch_operands = 0 : i64, tpu.core_type = #tpu.core_type<tc>, window_params = [{transform_indices = @transform_0, window_bounds = array<i64: 1, 256, 72>}, {pipeline_mode = #tpu.pipeline_mode<synchronous>, transform_indices = @transform_1, window_bounds = array<i64: 72, 8>}, {pipeline_mode = #tpu.pipeline_mode<synchronous>, transform_indices = @transform_2, window_bounds = array<i64: 256, 8>}, {pipeline_mode = #tpu.pipeline_mode<synchronous>, transform_indices = @transform_3, window_bounds = array<i64: 9, 64, 256>}, {pipeline_mode = #tpu.pipeline_mode<synchronous>, transform_indices = @transform_4, window_bounds = array<i64: 16, 576>}, {pipeline_mode = #tpu.pipeline_mode<synchronous>, transform_indices = @transform_5, window_bounds = array<i64: 8, 16>}, {pipeline_mode = #tpu.pipeline_mode<synchronous>, transform_indices = @transform_6, window_bounds = array<i64: 1, 16>}, {pipeline_mode = #tpu.pipeline_mode<synchronous>, transform_indices = @transform_7, window_bounds = array<i64: 9, 1, 16>}, {pipeline_mode = #tpu.pipeline_mode<synchronous>, transform_indices = @transform_8, window_bounds = array<i64: 1, 16>}, {pipeline_mode = #tpu.pipeline_mode<synchronous>, transform_indices = @transform_9, window_bounds = array<i64: 16, 16>}, {pipeline_mode = #tpu.pipeline_mode<synchronous>, transform_indices = @transform_10, window_bounds = array<i64: 1, 16>}, {pipeline_mode = #tpu.pipeline_mode<synchronous>, transform_indices = @transform_11, window_bounds = array<i64: 16, 144>}, {pipeline_mode = #tpu.pipeline_mode<synchronous>, transform_indices = @transform_12, window_bounds = array<i64: 16, 16>}, {pipeline_mode = #tpu.pipeline_mode<synchronous>, transform_indices = @transform_13, window_bounds = array<i64: 1, 16>}, {pipeline_mode = #tpu.pipeline_mode<synchronous>, transform_indices = @transform_14, window_bounds = array<i64: 9, 1, 16>}, {pipeline_mode = #tpu.pipeline_mode<synchronous>, transform_indices = @transform_15, window_bounds = array<i64: 1, 16>}, {pipeline_mode = #tpu.pipeline_mode<synchronous>, transform_indices = @transform_16, window_bounds = array<i64: 16, 16>}, {pipeline_mode = #tpu.pipeline_mode<synchronous>, transform_indices = @transform_17, window_bounds = array<i64: 1, 16>}, {pipeline_mode = #tpu.pipeline_mode<synchronous>, transform_indices = @transform_18, window_bounds = array<i64: 4, 144>}, {pipeline_mode = #tpu.pipeline_mode<synchronous>, transform_indices = @transform_19, window_bounds = array<i64: 16, 32>}, {pipeline_mode = #tpu.pipeline_mode<synchronous>, transform_indices = @transform_20, window_bounds = array<i64: 1, 32>}, {pipeline_mode = #tpu.pipeline_mode<synchronous>, transform_indices = @transform_21, window_bounds = array<i64: 9, 1, 32>}, {pipeline_mode = #tpu.pipeline_mode<synchronous>, transform_indices = @transform_22, window_bounds = array<i64: 1, 32>}, {pipeline_mode = #tpu.pipeline_mode<synchronous>, transform_indices = @transform_23, window_bounds = array<i64: 32, 32>}, {pipeline_mode = #tpu.pipeline_mode<synchronous>, transform_indices = @transform_24, window_bounds = array<i64: 1, 32>}, {pipeline_mode = #tpu.pipeline_mode<synchronous>, transform_indices = @transform_25, window_bounds = array<i64: 4, 36>}, {pipeline_mode = #tpu.pipeline_mode<synchronous>, transform_indices = @transform_26, window_bounds = array<i64: 32, 32>}, {pipeline_mode = #tpu.pipeline_mode<synchronous>, transform_indices = @transform_27, window_bounds = array<i64: 1, 32>}, {pipeline_mode = #tpu.pipeline_mode<synchronous>, transform_indices = @transform_28, window_bounds = array<i64: 9, 1, 32>}, {pipeline_mode = #tpu.pipeline_mode<synchronous>, transform_indices = @transform_29, window_bounds = array<i64: 1, 32>}, {pipeline_mode = #tpu.pipeline_mode<synchronous>, transform_indices = @transform_30, window_bounds = array<i64: 32, 32>}, {pipeline_mode = #tpu.pipeline_mode<synchronous>, transform_indices = @transform_31, window_bounds = array<i64: 1, 32>}, {pipeline_mode = #tpu.pipeline_mode<synchronous>, transform_indices = @transform_32, window_bounds = array<i64: 1, 36>}, {pipeline_mode = #tpu.pipeline_mode<synchronous>, transform_indices = @transform_33, window_bounds = array<i64: 32, 64>}, {pipeline_mode = #tpu.pipeline_mode<synchronous>, transform_indices = @transform_34, window_bounds = array<i64: 1, 64>}, {pipeline_mode = #tpu.pipeline_mode<synchronous>, transform_indices = @transform_35, window_bounds = array<i64: 9, 1, 64>}, {pipeline_mode = #tpu.pipeline_mode<synchronous>, transform_indices = @transform_36, window_bounds = array<i64: 1, 64>}, {pipeline_mode = #tpu.pipeline_mode<synchronous>, transform_indices = @transform_37, window_bounds = array<i64: 64, 64>}, {pipeline_mode = #tpu.pipeline_mode<synchronous>, transform_indices = @transform_38, window_bounds = array<i64: 1, 64>}, {pipeline_mode = #tpu.pipeline_mode<synchronous>, transform_indices = @transform_39, window_bounds = array<i64: 1, 9>}, {pipeline_mode = #tpu.pipeline_mode<synchronous>, transform_indices = @transform_40, window_bounds = array<i64: 64, 64>}, {pipeline_mode = #tpu.pipeline_mode<synchronous>, transform_indices = @transform_41, window_bounds = array<i64: 1, 64>}, {pipeline_mode = #tpu.pipeline_mode<synchronous>, transform_indices = @transform_42, window_bounds = array<i64: 9, 1, 64>}, {pipeline_mode = #tpu.pipeline_mode<synchronous>, transform_indices = @transform_43, window_bounds = array<i64: 1, 64>}, {pipeline_mode = #tpu.pipeline_mode<synchronous>, transform_indices = @transform_44, window_bounds = array<i64: 64, 64>}, {pipeline_mode = #tpu.pipeline_mode<synchronous>, transform_indices = @transform_45, window_bounds = array<i64: 1, 64>}, {pipeline_mode = #tpu.pipeline_mode<synchronous>, transform_indices = @transform_46, window_bounds = array<i64: 64, 128>}, {pipeline_mode = #tpu.pipeline_mode<synchronous>, transform_indices = @transform_47, window_bounds = array<i64: 1, 128>}, {pipeline_mode = #tpu.pipeline_mode<synchronous>, transform_indices = @transform_48, window_bounds = array<i64: 128, 10>}, {pipeline_mode = #tpu.pipeline_mode<synchronous>, transform_indices = @transform_49, window_bounds = array<i64: 1, 10>}, {transform_indices = @transform_50, window_bounds = array<i64: 1, 1, 10>}]} {
    %c0 = arith.constant 0 : index
    %c0_0 = arith.constant 0 : index
    %c0_1 = arith.constant 0 : index
    %0 = vector.load %arg1[%c0, %c0_0, %c0_1] : memref<1x256x72xf32, #tpu.memory_space<vmem>>, vector<1x256x72xf32>
    %1 = vector.shape_cast %0 : vector<1x256x72xf32> to vector<256x72xf32>
    %c0_2 = arith.constant 0 : index
    %c0_3 = arith.constant 0 : index
    %2 = vector.load %arg2[%c0_2, %c0_3] : memref<72x8xf32, #tpu.memory_space<vmem>>, vector<72x8xf32>
    %cst = arith.constant dense<0.000000e+00> : vector<256x8xf32>
    %3 = tpu.matmul %1, %2, %cst {dimension_numbers = #tpu.dot_dimension_numbers<[1], [0], [0], [1], [0, 0, 1, 1], [], []>} : vector<256x72xf32>, vector<72x8xf32>, vector<256x8xf32> -> vector<256x8xf32>
    %c0_4 = arith.constant 0 : index
    %c0_5 = arith.constant 0 : index
    %4 = vector.load %arg3[%c0_4, %c0_5] : memref<256x8xf32, #tpu.memory_space<vmem>>, vector<256x8xf32>
    %5 = arith.addf %3, %4 : vector<256x8xf32>
    %cst_6 = arith.constant 0.000000e+00 : f32
    %6 = vector.broadcast %cst_6 : f32 to vector<256x8xf32>
    %7 = arith.maximumf %5, %6 : vector<256x8xf32>
    %c0_7 = arith.constant 0 : index
    %c0_8 = arith.constant 0 : index
    %c0_9 = arith.constant 0 : index
    %8 = vector.load %arg4[%c0_7, %c0_8, %c0_9] : memref<9x64x256xf32, #tpu.memory_space<vmem>>, vector<1x64x256xf32>
    %9 = vector.shape_cast %8 : vector<1x64x256xf32> to vector<64x256xf32>
    %cst_10 = arith.constant dense<0.000000e+00> : vector<64x8xf32>
    %10 = tpu.matmul %9, %7, %cst_10 {dimension_numbers = #tpu.dot_dimension_numbers<[1], [0], [0], [1], [0, 0, 1, 1], [], []>} : vector<64x256xf32>, vector<256x8xf32>, vector<64x8xf32> -> vector<64x8xf32>
    %c1 = arith.constant 1 : index
    %c0_11 = arith.constant 0 : index
    %c0_12 = arith.constant 0 : index
    %11 = vector.load %arg4[%c1, %c0_11, %c0_12] : memref<9x64x256xf32, #tpu.memory_space<vmem>>, vector<1x64x256xf32>
    %12 = vector.shape_cast %11 : vector<1x64x256xf32> to vector<64x256xf32>
    %cst_13 = arith.constant dense<0.000000e+00> : vector<64x8xf32>
    %13 = tpu.matmul %12, %7, %cst_13 {dimension_numbers = #tpu.dot_dimension_numbers<[1], [0], [0], [1], [0, 0, 1, 1], [], []>} : vector<64x256xf32>, vector<256x8xf32>, vector<64x8xf32> -> vector<64x8xf32>
    %14 = arith.maximumf %10, %13 : vector<64x8xf32>
    %c2 = arith.constant 2 : index
    %c0_14 = arith.constant 0 : index
    %c0_15 = arith.constant 0 : index
    %15 = vector.load %arg4[%c2, %c0_14, %c0_15] : memref<9x64x256xf32, #tpu.memory_space<vmem>>, vector<1x64x256xf32>
    %16 = vector.shape_cast %15 : vector<1x64x256xf32> to vector<64x256xf32>
    %cst_16 = arith.constant dense<0.000000e+00> : vector<64x8xf32>
    %17 = tpu.matmul %16, %7, %cst_16 {dimension_numbers = #tpu.dot_dimension_numbers<[1], [0], [0], [1], [0, 0, 1, 1], [], []>} : vector<64x256xf32>, vector<256x8xf32>, vector<64x8xf32> -> vector<64x8xf32>
    %18 = arith.maximumf %14, %17 : vector<64x8xf32>
    %c3 = arith.constant 3 : index
    %c0_17 = arith.constant 0 : index
    %c0_18 = arith.constant 0 : index
    %19 = vector.load %arg4[%c3, %c0_17, %c0_18] : memref<9x64x256xf32, #tpu.memory_space<vmem>>, vector<1x64x256xf32>
    %20 = vector.shape_cast %19 : vector<1x64x256xf32> to vector<64x256xf32>
    %cst_19 = arith.constant dense<0.000000e+00> : vector<64x8xf32>
    %21 = tpu.matmul %20, %7, %cst_19 {dimension_numbers = #tpu.dot_dimension_numbers<[1], [0], [0], [1], [0, 0, 1, 1], [], []>} : vector<64x256xf32>, vector<256x8xf32>, vector<64x8xf32> -> vector<64x8xf32>
    %22 = arith.maximumf %18, %21 : vector<64x8xf32>
    %c4 = arith.constant 4 : index
    %c0_20 = arith.constant 0 : index
    %c0_21 = arith.constant 0 : index
    %23 = vector.load %arg4[%c4, %c0_20, %c0_21] : memref<9x64x256xf32, #tpu.memory_space<vmem>>, vector<1x64x256xf32>
    %24 = vector.shape_cast %23 : vector<1x64x256xf32> to vector<64x256xf32>
    %cst_22 = arith.constant dense<0.000000e+00> : vector<64x8xf32>
    %25 = tpu.matmul %24, %7, %cst_22 {dimension_numbers = #tpu.dot_dimension_numbers<[1], [0], [0], [1], [0, 0, 1, 1], [], []>} : vector<64x256xf32>, vector<256x8xf32>, vector<64x8xf32> -> vector<64x8xf32>
    %26 = arith.maximumf %22, %25 : vector<64x8xf32>
    %c5 = arith.constant 5 : index
    %c0_23 = arith.constant 0 : index
    %c0_24 = arith.constant 0 : index
    %27 = vector.load %arg4[%c5, %c0_23, %c0_24] : memref<9x64x256xf32, #tpu.memory_space<vmem>>, vector<1x64x256xf32>
    %28 = vector.shape_cast %27 : vector<1x64x256xf32> to vector<64x256xf32>
    %cst_25 = arith.constant dense<0.000000e+00> : vector<64x8xf32>
    %29 = tpu.matmul %28, %7, %cst_25 {dimension_numbers = #tpu.dot_dimension_numbers<[1], [0], [0], [1], [0, 0, 1, 1], [], []>} : vector<64x256xf32>, vector<256x8xf32>, vector<64x8xf32> -> vector<64x8xf32>
    %30 = arith.maximumf %26, %29 : vector<64x8xf32>
    %c6 = arith.constant 6 : index
    %c0_26 = arith.constant 0 : index
    %c0_27 = arith.constant 0 : index
    %31 = vector.load %arg4[%c6, %c0_26, %c0_27] : memref<9x64x256xf32, #tpu.memory_space<vmem>>, vector<1x64x256xf32>
    %32 = vector.shape_cast %31 : vector<1x64x256xf32> to vector<64x256xf32>
    %cst_28 = arith.constant dense<0.000000e+00> : vector<64x8xf32>
    %33 = tpu.matmul %32, %7, %cst_28 {dimension_numbers = #tpu.dot_dimension_numbers<[1], [0], [0], [1], [0, 0, 1, 1], [], []>} : vector<64x256xf32>, vector<256x8xf32>, vector<64x8xf32> -> vector<64x8xf32>
    %34 = arith.maximumf %30, %33 : vector<64x8xf32>
    %c7 = arith.constant 7 : index
    %c0_29 = arith.constant 0 : index
    %c0_30 = arith.constant 0 : index
    %35 = vector.load %arg4[%c7, %c0_29, %c0_30] : memref<9x64x256xf32, #tpu.memory_space<vmem>>, vector<1x64x256xf32>
    %36 = vector.shape_cast %35 : vector<1x64x256xf32> to vector<64x256xf32>
    %cst_31 = arith.constant dense<0.000000e+00> : vector<64x8xf32>
    %37 = tpu.matmul %36, %7, %cst_31 {dimension_numbers = #tpu.dot_dimension_numbers<[1], [0], [0], [1], [0, 0, 1, 1], [], []>} : vector<64x256xf32>, vector<256x8xf32>, vector<64x8xf32> -> vector<64x8xf32>
    %38 = arith.maximumf %34, %37 : vector<64x8xf32>
    %c8 = arith.constant 8 : index
    %c0_32 = arith.constant 0 : index
    %c0_33 = arith.constant 0 : index
    %39 = vector.load %arg4[%c8, %c0_32, %c0_33] : memref<9x64x256xf32, #tpu.memory_space<vmem>>, vector<1x64x256xf32>
    %40 = vector.shape_cast %39 : vector<1x64x256xf32> to vector<64x256xf32>
    %cst_34 = arith.constant dense<0.000000e+00> : vector<64x8xf32>
    %41 = tpu.matmul %40, %7, %cst_34 {dimension_numbers = #tpu.dot_dimension_numbers<[1], [0], [0], [1], [0, 0, 1, 1], [], []>} : vector<64x256xf32>, vector<256x8xf32>, vector<64x8xf32> -> vector<64x8xf32>
    %42 = arith.maximumf %38, %41 : vector<64x8xf32>
    %c0_35 = arith.constant 0 : index
    %c0_36 = arith.constant 0 : index
    %43 = vector.load %arg6[%c0_35, %c0_36] : memref<8x16xf32, #tpu.memory_space<vmem>>, vector<8x16xf32>
    %cst_37 = arith.constant dense<0.000000e+00> : vector<64x16xf32>
    %44 = tpu.matmul %42, %43, %cst_37 {dimension_numbers = #tpu.dot_dimension_numbers<[1], [0], [0], [1], [0, 0, 1, 1], [], []>} : vector<64x8xf32>, vector<8x16xf32>, vector<64x16xf32> -> vector<64x16xf32>
    %c0_38 = arith.constant 0 : index
    %c0_39 = arith.constant 0 : index
    %45 = vector.load %arg7[%c0_38, %c0_39] : memref<1x16xf32, #tpu.memory_space<vmem>>, vector<1x16xf32>
    %46 = vector.broadcast %45 : vector<1x16xf32> to vector<64x16xf32>
    %47 = arith.addf %44, %46 : vector<64x16xf32>
    %cst_40 = arith.constant 0.000000e+00 : f32
    %48 = vector.broadcast %cst_40 : f32 to vector<64x16xf32>
    %49 = arith.maximumf %47, %48 : vector<64x16xf32>
    %c0_41 = arith.constant 0 : index
    %c0_42 = arith.constant 0 : index
    %c0_43 = arith.constant 0 : index
    %50 = vector.load %arg8[%c0_41, %c0_42, %c0_43] : memref<9x1x16xf32, #tpu.memory_space<vmem>>, vector<1x1x16xf32>
    %51 = vector.shape_cast %50 : vector<1x1x16xf32> to vector<1x16xf32>
    %52 = vector.broadcast %51 : vector<1x16xf32> to vector<64x16xf32>
    %53 = arith.mulf %49, %52 : vector<64x16xf32>
    %c1_44 = arith.constant 1 : index
    %c0_45 = arith.constant 0 : index
    %c0_46 = arith.constant 0 : index
    %54 = vector.load %arg8[%c1_44, %c0_45, %c0_46] : memref<9x1x16xf32, #tpu.memory_space<vmem>>, vector<1x1x16xf32>
    %55 = vector.shape_cast %54 : vector<1x1x16xf32> to vector<1x16xf32>
    %56 = vector.broadcast %55 : vector<1x16xf32> to vector<64x16xf32>
    %57 = arith.mulf %49, %56 : vector<64x16xf32>
    %c2_47 = arith.constant 2 : index
    %c0_48 = arith.constant 0 : index
    %c0_49 = arith.constant 0 : index
    %58 = vector.load %arg8[%c2_47, %c0_48, %c0_49] : memref<9x1x16xf32, #tpu.memory_space<vmem>>, vector<1x1x16xf32>
    %59 = vector.shape_cast %58 : vector<1x1x16xf32> to vector<1x16xf32>
    %60 = vector.broadcast %59 : vector<1x16xf32> to vector<64x16xf32>
    %61 = arith.mulf %49, %60 : vector<64x16xf32>
    %c3_50 = arith.constant 3 : index
    %c0_51 = arith.constant 0 : index
    %c0_52 = arith.constant 0 : index
    %62 = vector.load %arg8[%c3_50, %c0_51, %c0_52] : memref<9x1x16xf32, #tpu.memory_space<vmem>>, vector<1x1x16xf32>
    %63 = vector.shape_cast %62 : vector<1x1x16xf32> to vector<1x16xf32>
    %64 = vector.broadcast %63 : vector<1x16xf32> to vector<64x16xf32>
    %65 = arith.mulf %49, %64 : vector<64x16xf32>
    %c4_53 = arith.constant 4 : index
    %c0_54 = arith.constant 0 : index
    %c0_55 = arith.constant 0 : index
    %66 = vector.load %arg8[%c4_53, %c0_54, %c0_55] : memref<9x1x16xf32, #tpu.memory_space<vmem>>, vector<1x1x16xf32>
    %67 = vector.shape_cast %66 : vector<1x1x16xf32> to vector<1x16xf32>
    %68 = vector.broadcast %67 : vector<1x16xf32> to vector<64x16xf32>
    %69 = arith.mulf %49, %68 : vector<64x16xf32>
    %c5_56 = arith.constant 5 : index
    %c0_57 = arith.constant 0 : index
    %c0_58 = arith.constant 0 : index
    %70 = vector.load %arg8[%c5_56, %c0_57, %c0_58] : memref<9x1x16xf32, #tpu.memory_space<vmem>>, vector<1x1x16xf32>
    %71 = vector.shape_cast %70 : vector<1x1x16xf32> to vector<1x16xf32>
    %72 = vector.broadcast %71 : vector<1x16xf32> to vector<64x16xf32>
    %73 = arith.mulf %49, %72 : vector<64x16xf32>
    %c6_59 = arith.constant 6 : index
    %c0_60 = arith.constant 0 : index
    %c0_61 = arith.constant 0 : index
    %74 = vector.load %arg8[%c6_59, %c0_60, %c0_61] : memref<9x1x16xf32, #tpu.memory_space<vmem>>, vector<1x1x16xf32>
    %75 = vector.shape_cast %74 : vector<1x1x16xf32> to vector<1x16xf32>
    %76 = vector.broadcast %75 : vector<1x16xf32> to vector<64x16xf32>
    %77 = arith.mulf %49, %76 : vector<64x16xf32>
    %c7_62 = arith.constant 7 : index
    %c0_63 = arith.constant 0 : index
    %c0_64 = arith.constant 0 : index
    %78 = vector.load %arg8[%c7_62, %c0_63, %c0_64] : memref<9x1x16xf32, #tpu.memory_space<vmem>>, vector<1x1x16xf32>
    %79 = vector.shape_cast %78 : vector<1x1x16xf32> to vector<1x16xf32>
    %80 = vector.broadcast %79 : vector<1x16xf32> to vector<64x16xf32>
    %81 = arith.mulf %49, %80 : vector<64x16xf32>
    %c8_65 = arith.constant 8 : index
    %c0_66 = arith.constant 0 : index
    %c0_67 = arith.constant 0 : index
    %82 = vector.load %arg8[%c8_65, %c0_66, %c0_67] : memref<9x1x16xf32, #tpu.memory_space<vmem>>, vector<1x1x16xf32>
    %83 = vector.shape_cast %82 : vector<1x1x16xf32> to vector<1x16xf32>
    %84 = vector.broadcast %83 : vector<1x16xf32> to vector<64x16xf32>
    %85 = arith.mulf %49, %84 : vector<64x16xf32>
    %86 = tpu.concatenate %53, %57, %61, %65, %69, %73, %77, %81, %85 in 0 : vector<64x16xf32>, vector<64x16xf32>, vector<64x16xf32>, vector<64x16xf32>, vector<64x16xf32>, vector<64x16xf32>, vector<64x16xf32>, vector<64x16xf32>, vector<64x16xf32> -> vector<576x16xf32>
    %c0_68 = arith.constant 0 : index
    %c0_69 = arith.constant 0 : index
    %87 = vector.load %arg5[%c0_68, %c0_69] : memref<16x576xf32, #tpu.memory_space<vmem>>, vector<16x576xf32>
    %cst_70 = arith.constant dense<0.000000e+00> : vector<16x16xf32>
    %88 = tpu.matmul %87, %86, %cst_70 {dimension_numbers = #tpu.dot_dimension_numbers<[1], [0], [0], [1], [0, 0, 1, 1], [], []>} : vector<16x576xf32>, vector<576x16xf32>, vector<16x16xf32> -> vector<16x16xf32>
    %c0_71 = arith.constant 0 : index
    %c0_72 = arith.constant 0 : index
    %89 = vector.load %arg9[%c0_71, %c0_72] : memref<1x16xf32, #tpu.memory_space<vmem>>, vector<1x16xf32>
    %90 = vector.broadcast %89 : vector<1x16xf32> to vector<16x16xf32>
    %91 = arith.addf %88, %90 : vector<16x16xf32>
    %c0_73 = arith.constant 0 : index
    %c0_74 = arith.constant 0 : index
    %92 = vector.load %arg10[%c0_73, %c0_74] : memref<16x16xf32, #tpu.memory_space<vmem>>, vector<16x16xf32>
    %cst_75 = arith.constant dense<0.000000e+00> : vector<16x16xf32>
    %93 = tpu.matmul %91, %92, %cst_75 {dimension_numbers = #tpu.dot_dimension_numbers<[1], [0], [0], [1], [0, 0, 1, 1], [], []>} : vector<16x16xf32>, vector<16x16xf32>, vector<16x16xf32> -> vector<16x16xf32>
    %c0_76 = arith.constant 0 : index
    %c0_77 = arith.constant 0 : index
    %94 = vector.load %arg11[%c0_76, %c0_77] : memref<1x16xf32, #tpu.memory_space<vmem>>, vector<1x16xf32>
    %95 = vector.broadcast %94 : vector<1x16xf32> to vector<16x16xf32>
    %96 = arith.addf %93, %95 : vector<16x16xf32>
    %cst_78 = arith.constant 0.000000e+00 : f32
    %97 = vector.broadcast %cst_78 : f32 to vector<16x16xf32>
    %98 = arith.maximumf %96, %97 : vector<16x16xf32>
    %c0_79 = arith.constant 0 : index
    %c0_80 = arith.constant 0 : index
    %99 = vector.load %arg13[%c0_79, %c0_80] : memref<16x16xf32, #tpu.memory_space<vmem>>, vector<16x16xf32>
    %cst_81 = arith.constant dense<0.000000e+00> : vector<16x16xf32>
    %100 = tpu.matmul %98, %99, %cst_81 {dimension_numbers = #tpu.dot_dimension_numbers<[1], [0], [0], [1], [0, 0, 1, 1], [], []>} : vector<16x16xf32>, vector<16x16xf32>, vector<16x16xf32> -> vector<16x16xf32>
    %c0_82 = arith.constant 0 : index
    %c0_83 = arith.constant 0 : index
    %101 = vector.load %arg14[%c0_82, %c0_83] : memref<1x16xf32, #tpu.memory_space<vmem>>, vector<1x16xf32>
    %102 = vector.broadcast %101 : vector<1x16xf32> to vector<16x16xf32>
    %103 = arith.addf %100, %102 : vector<16x16xf32>
    %cst_84 = arith.constant 0.000000e+00 : f32
    %104 = vector.broadcast %cst_84 : f32 to vector<16x16xf32>
    %105 = arith.maximumf %103, %104 : vector<16x16xf32>
    %c0_85 = arith.constant 0 : index
    %c0_86 = arith.constant 0 : index
    %c0_87 = arith.constant 0 : index
    %106 = vector.load %arg15[%c0_85, %c0_86, %c0_87] : memref<9x1x16xf32, #tpu.memory_space<vmem>>, vector<1x1x16xf32>
    %107 = vector.shape_cast %106 : vector<1x1x16xf32> to vector<1x16xf32>
    %108 = vector.broadcast %107 : vector<1x16xf32> to vector<16x16xf32>
    %109 = arith.mulf %105, %108 : vector<16x16xf32>
    %c1_88 = arith.constant 1 : index
    %c0_89 = arith.constant 0 : index
    %c0_90 = arith.constant 0 : index
    %110 = vector.load %arg15[%c1_88, %c0_89, %c0_90] : memref<9x1x16xf32, #tpu.memory_space<vmem>>, vector<1x1x16xf32>
    %111 = vector.shape_cast %110 : vector<1x1x16xf32> to vector<1x16xf32>
    %112 = vector.broadcast %111 : vector<1x16xf32> to vector<16x16xf32>
    %113 = arith.mulf %105, %112 : vector<16x16xf32>
    %c2_91 = arith.constant 2 : index
    %c0_92 = arith.constant 0 : index
    %c0_93 = arith.constant 0 : index
    %114 = vector.load %arg15[%c2_91, %c0_92, %c0_93] : memref<9x1x16xf32, #tpu.memory_space<vmem>>, vector<1x1x16xf32>
    %115 = vector.shape_cast %114 : vector<1x1x16xf32> to vector<1x16xf32>
    %116 = vector.broadcast %115 : vector<1x16xf32> to vector<16x16xf32>
    %117 = arith.mulf %105, %116 : vector<16x16xf32>
    %c3_94 = arith.constant 3 : index
    %c0_95 = arith.constant 0 : index
    %c0_96 = arith.constant 0 : index
    %118 = vector.load %arg15[%c3_94, %c0_95, %c0_96] : memref<9x1x16xf32, #tpu.memory_space<vmem>>, vector<1x1x16xf32>
    %119 = vector.shape_cast %118 : vector<1x1x16xf32> to vector<1x16xf32>
    %120 = vector.broadcast %119 : vector<1x16xf32> to vector<16x16xf32>
    %121 = arith.mulf %105, %120 : vector<16x16xf32>
    %c4_97 = arith.constant 4 : index
    %c0_98 = arith.constant 0 : index
    %c0_99 = arith.constant 0 : index
    %122 = vector.load %arg15[%c4_97, %c0_98, %c0_99] : memref<9x1x16xf32, #tpu.memory_space<vmem>>, vector<1x1x16xf32>
    %123 = vector.shape_cast %122 : vector<1x1x16xf32> to vector<1x16xf32>
    %124 = vector.broadcast %123 : vector<1x16xf32> to vector<16x16xf32>
    %125 = arith.mulf %105, %124 : vector<16x16xf32>
    %c5_100 = arith.constant 5 : index
    %c0_101 = arith.constant 0 : index
    %c0_102 = arith.constant 0 : index
    %126 = vector.load %arg15[%c5_100, %c0_101, %c0_102] : memref<9x1x16xf32, #tpu.memory_space<vmem>>, vector<1x1x16xf32>
    %127 = vector.shape_cast %126 : vector<1x1x16xf32> to vector<1x16xf32>
    %128 = vector.broadcast %127 : vector<1x16xf32> to vector<16x16xf32>
    %129 = arith.mulf %105, %128 : vector<16x16xf32>
    %c6_103 = arith.constant 6 : index
    %c0_104 = arith.constant 0 : index
    %c0_105 = arith.constant 0 : index
    %130 = vector.load %arg15[%c6_103, %c0_104, %c0_105] : memref<9x1x16xf32, #tpu.memory_space<vmem>>, vector<1x1x16xf32>
    %131 = vector.shape_cast %130 : vector<1x1x16xf32> to vector<1x16xf32>
    %132 = vector.broadcast %131 : vector<1x16xf32> to vector<16x16xf32>
    %133 = arith.mulf %105, %132 : vector<16x16xf32>
    %c7_106 = arith.constant 7 : index
    %c0_107 = arith.constant 0 : index
    %c0_108 = arith.constant 0 : index
    %134 = vector.load %arg15[%c7_106, %c0_107, %c0_108] : memref<9x1x16xf32, #tpu.memory_space<vmem>>, vector<1x1x16xf32>
    %135 = vector.shape_cast %134 : vector<1x1x16xf32> to vector<1x16xf32>
    %136 = vector.broadcast %135 : vector<1x16xf32> to vector<16x16xf32>
    %137 = arith.mulf %105, %136 : vector<16x16xf32>
    %c8_109 = arith.constant 8 : index
    %c0_110 = arith.constant 0 : index
    %c0_111 = arith.constant 0 : index
    %138 = vector.load %arg15[%c8_109, %c0_110, %c0_111] : memref<9x1x16xf32, #tpu.memory_space<vmem>>, vector<1x1x16xf32>
    %139 = vector.shape_cast %138 : vector<1x1x16xf32> to vector<1x16xf32>
    %140 = vector.broadcast %139 : vector<1x16xf32> to vector<16x16xf32>
    %141 = arith.mulf %105, %140 : vector<16x16xf32>
    %142 = tpu.concatenate %109, %113, %117, %121, %125, %129, %133, %137, %141 in 0 : vector<16x16xf32>, vector<16x16xf32>, vector<16x16xf32>, vector<16x16xf32>, vector<16x16xf32>, vector<16x16xf32>, vector<16x16xf32>, vector<16x16xf32>, vector<16x16xf32> -> vector<144x16xf32>
    %c0_112 = arith.constant 0 : index
    %c0_113 = arith.constant 0 : index
    %143 = vector.load %arg12[%c0_112, %c0_113] : memref<16x144xf32, #tpu.memory_space<vmem>>, vector<16x144xf32>
    %cst_114 = arith.constant dense<0.000000e+00> : vector<16x16xf32>
    %144 = tpu.matmul %143, %142, %cst_114 {dimension_numbers = #tpu.dot_dimension_numbers<[1], [0], [0], [1], [0, 0, 1, 1], [], []>} : vector<16x144xf32>, vector<144x16xf32>, vector<16x16xf32> -> vector<16x16xf32>
    %c0_115 = arith.constant 0 : index
    %c0_116 = arith.constant 0 : index
    %145 = vector.load %arg16[%c0_115, %c0_116] : memref<1x16xf32, #tpu.memory_space<vmem>>, vector<1x16xf32>
    %146 = vector.broadcast %145 : vector<1x16xf32> to vector<16x16xf32>
    %147 = arith.addf %144, %146 : vector<16x16xf32>
    %c0_117 = arith.constant 0 : index
    %c0_118 = arith.constant 0 : index
    %148 = vector.load %arg17[%c0_117, %c0_118] : memref<16x16xf32, #tpu.memory_space<vmem>>, vector<16x16xf32>
    %cst_119 = arith.constant dense<0.000000e+00> : vector<16x16xf32>
    %149 = tpu.matmul %147, %148, %cst_119 {dimension_numbers = #tpu.dot_dimension_numbers<[1], [0], [0], [1], [0, 0, 1, 1], [], []>} : vector<16x16xf32>, vector<16x16xf32>, vector<16x16xf32> -> vector<16x16xf32>
    %c0_120 = arith.constant 0 : index
    %c0_121 = arith.constant 0 : index
    %150 = vector.load %arg18[%c0_120, %c0_121] : memref<1x16xf32, #tpu.memory_space<vmem>>, vector<1x16xf32>
    %151 = vector.broadcast %150 : vector<1x16xf32> to vector<16x16xf32>
    %152 = arith.addf %149, %151 : vector<16x16xf32>
    %cst_122 = arith.constant 0.000000e+00 : f32
    %153 = vector.broadcast %cst_122 : f32 to vector<16x16xf32>
    %154 = arith.maximumf %152, %153 : vector<16x16xf32>
    %c0_123 = arith.constant 0 : index
    %c0_124 = arith.constant 0 : index
    %155 = vector.load %arg20[%c0_123, %c0_124] : memref<16x32xf32, #tpu.memory_space<vmem>>, vector<16x32xf32>
    %cst_125 = arith.constant dense<0.000000e+00> : vector<16x32xf32>
    %156 = tpu.matmul %154, %155, %cst_125 {dimension_numbers = #tpu.dot_dimension_numbers<[1], [0], [0], [1], [0, 0, 1, 1], [], []>} : vector<16x16xf32>, vector<16x32xf32>, vector<16x32xf32> -> vector<16x32xf32>
    %c0_126 = arith.constant 0 : index
    %c0_127 = arith.constant 0 : index
    %157 = vector.load %arg21[%c0_126, %c0_127] : memref<1x32xf32, #tpu.memory_space<vmem>>, vector<1x32xf32>
    %158 = vector.broadcast %157 : vector<1x32xf32> to vector<16x32xf32>
    %159 = arith.addf %156, %158 : vector<16x32xf32>
    %cst_128 = arith.constant 0.000000e+00 : f32
    %160 = vector.broadcast %cst_128 : f32 to vector<16x32xf32>
    %161 = arith.maximumf %159, %160 : vector<16x32xf32>
    %c0_129 = arith.constant 0 : index
    %c0_130 = arith.constant 0 : index
    %c0_131 = arith.constant 0 : index
    %162 = vector.load %arg22[%c0_129, %c0_130, %c0_131] : memref<9x1x32xf32, #tpu.memory_space<vmem>>, vector<1x1x32xf32>
    %163 = vector.shape_cast %162 : vector<1x1x32xf32> to vector<1x32xf32>
    %164 = vector.broadcast %163 : vector<1x32xf32> to vector<16x32xf32>
    %165 = arith.mulf %161, %164 : vector<16x32xf32>
    %c1_132 = arith.constant 1 : index
    %c0_133 = arith.constant 0 : index
    %c0_134 = arith.constant 0 : index
    %166 = vector.load %arg22[%c1_132, %c0_133, %c0_134] : memref<9x1x32xf32, #tpu.memory_space<vmem>>, vector<1x1x32xf32>
    %167 = vector.shape_cast %166 : vector<1x1x32xf32> to vector<1x32xf32>
    %168 = vector.broadcast %167 : vector<1x32xf32> to vector<16x32xf32>
    %169 = arith.mulf %161, %168 : vector<16x32xf32>
    %c2_135 = arith.constant 2 : index
    %c0_136 = arith.constant 0 : index
    %c0_137 = arith.constant 0 : index
    %170 = vector.load %arg22[%c2_135, %c0_136, %c0_137] : memref<9x1x32xf32, #tpu.memory_space<vmem>>, vector<1x1x32xf32>
    %171 = vector.shape_cast %170 : vector<1x1x32xf32> to vector<1x32xf32>
    %172 = vector.broadcast %171 : vector<1x32xf32> to vector<16x32xf32>
    %173 = arith.mulf %161, %172 : vector<16x32xf32>
    %c3_138 = arith.constant 3 : index
    %c0_139 = arith.constant 0 : index
    %c0_140 = arith.constant 0 : index
    %174 = vector.load %arg22[%c3_138, %c0_139, %c0_140] : memref<9x1x32xf32, #tpu.memory_space<vmem>>, vector<1x1x32xf32>
    %175 = vector.shape_cast %174 : vector<1x1x32xf32> to vector<1x32xf32>
    %176 = vector.broadcast %175 : vector<1x32xf32> to vector<16x32xf32>
    %177 = arith.mulf %161, %176 : vector<16x32xf32>
    %c4_141 = arith.constant 4 : index
    %c0_142 = arith.constant 0 : index
    %c0_143 = arith.constant 0 : index
    %178 = vector.load %arg22[%c4_141, %c0_142, %c0_143] : memref<9x1x32xf32, #tpu.memory_space<vmem>>, vector<1x1x32xf32>
    %179 = vector.shape_cast %178 : vector<1x1x32xf32> to vector<1x32xf32>
    %180 = vector.broadcast %179 : vector<1x32xf32> to vector<16x32xf32>
    %181 = arith.mulf %161, %180 : vector<16x32xf32>
    %c5_144 = arith.constant 5 : index
    %c0_145 = arith.constant 0 : index
    %c0_146 = arith.constant 0 : index
    %182 = vector.load %arg22[%c5_144, %c0_145, %c0_146] : memref<9x1x32xf32, #tpu.memory_space<vmem>>, vector<1x1x32xf32>
    %183 = vector.shape_cast %182 : vector<1x1x32xf32> to vector<1x32xf32>
    %184 = vector.broadcast %183 : vector<1x32xf32> to vector<16x32xf32>
    %185 = arith.mulf %161, %184 : vector<16x32xf32>
    %c6_147 = arith.constant 6 : index
    %c0_148 = arith.constant 0 : index
    %c0_149 = arith.constant 0 : index
    %186 = vector.load %arg22[%c6_147, %c0_148, %c0_149] : memref<9x1x32xf32, #tpu.memory_space<vmem>>, vector<1x1x32xf32>
    %187 = vector.shape_cast %186 : vector<1x1x32xf32> to vector<1x32xf32>
    %188 = vector.broadcast %187 : vector<1x32xf32> to vector<16x32xf32>
    %189 = arith.mulf %161, %188 : vector<16x32xf32>
    %c7_150 = arith.constant 7 : index
    %c0_151 = arith.constant 0 : index
    %c0_152 = arith.constant 0 : index
    %190 = vector.load %arg22[%c7_150, %c0_151, %c0_152] : memref<9x1x32xf32, #tpu.memory_space<vmem>>, vector<1x1x32xf32>
    %191 = vector.shape_cast %190 : vector<1x1x32xf32> to vector<1x32xf32>
    %192 = vector.broadcast %191 : vector<1x32xf32> to vector<16x32xf32>
    %193 = arith.mulf %161, %192 : vector<16x32xf32>
    %c8_153 = arith.constant 8 : index
    %c0_154 = arith.constant 0 : index
    %c0_155 = arith.constant 0 : index
    %194 = vector.load %arg22[%c8_153, %c0_154, %c0_155] : memref<9x1x32xf32, #tpu.memory_space<vmem>>, vector<1x1x32xf32>
    %195 = vector.shape_cast %194 : vector<1x1x32xf32> to vector<1x32xf32>
    %196 = vector.broadcast %195 : vector<1x32xf32> to vector<16x32xf32>
    %197 = arith.mulf %161, %196 : vector<16x32xf32>
    %198 = tpu.concatenate %165, %169, %173, %177, %181, %185, %189, %193, %197 in 0 : vector<16x32xf32>, vector<16x32xf32>, vector<16x32xf32>, vector<16x32xf32>, vector<16x32xf32>, vector<16x32xf32>, vector<16x32xf32>, vector<16x32xf32>, vector<16x32xf32> -> vector<144x32xf32>
    %c0_156 = arith.constant 0 : index
    %c0_157 = arith.constant 0 : index
    %199 = vector.load %arg19[%c0_156, %c0_157] : memref<4x144xf32, #tpu.memory_space<vmem>>, vector<4x144xf32>
    %cst_158 = arith.constant dense<0.000000e+00> : vector<4x32xf32>
    %200 = tpu.matmul %199, %198, %cst_158 {dimension_numbers = #tpu.dot_dimension_numbers<[1], [0], [0], [1], [0, 0, 1, 1], [], []>} : vector<4x144xf32>, vector<144x32xf32>, vector<4x32xf32> -> vector<4x32xf32>
    %c0_159 = arith.constant 0 : index
    %c0_160 = arith.constant 0 : index
    %201 = vector.load %arg23[%c0_159, %c0_160] : memref<1x32xf32, #tpu.memory_space<vmem>>, vector<1x32xf32>
    %202 = vector.broadcast %201 : vector<1x32xf32> to vector<4x32xf32>
    %203 = arith.addf %200, %202 : vector<4x32xf32>
    %c0_161 = arith.constant 0 : index
    %c0_162 = arith.constant 0 : index
    %204 = vector.load %arg24[%c0_161, %c0_162] : memref<32x32xf32, #tpu.memory_space<vmem>>, vector<32x32xf32>
    %cst_163 = arith.constant dense<0.000000e+00> : vector<4x32xf32>
    %205 = tpu.matmul %203, %204, %cst_163 {dimension_numbers = #tpu.dot_dimension_numbers<[1], [0], [0], [1], [0, 0, 1, 1], [], []>} : vector<4x32xf32>, vector<32x32xf32>, vector<4x32xf32> -> vector<4x32xf32>
    %c0_164 = arith.constant 0 : index
    %c0_165 = arith.constant 0 : index
    %206 = vector.load %arg25[%c0_164, %c0_165] : memref<1x32xf32, #tpu.memory_space<vmem>>, vector<1x32xf32>
    %207 = vector.broadcast %206 : vector<1x32xf32> to vector<4x32xf32>
    %208 = arith.addf %205, %207 : vector<4x32xf32>
    %cst_166 = arith.constant 0.000000e+00 : f32
    %209 = vector.broadcast %cst_166 : f32 to vector<4x32xf32>
    %210 = arith.maximumf %208, %209 : vector<4x32xf32>
    %c0_167 = arith.constant 0 : index
    %c0_168 = arith.constant 0 : index
    %211 = vector.load %arg27[%c0_167, %c0_168] : memref<32x32xf32, #tpu.memory_space<vmem>>, vector<32x32xf32>
    %cst_169 = arith.constant dense<0.000000e+00> : vector<4x32xf32>
    %212 = tpu.matmul %210, %211, %cst_169 {dimension_numbers = #tpu.dot_dimension_numbers<[1], [0], [0], [1], [0, 0, 1, 1], [], []>} : vector<4x32xf32>, vector<32x32xf32>, vector<4x32xf32> -> vector<4x32xf32>
    %c0_170 = arith.constant 0 : index
    %c0_171 = arith.constant 0 : index
    %213 = vector.load %arg28[%c0_170, %c0_171] : memref<1x32xf32, #tpu.memory_space<vmem>>, vector<1x32xf32>
    %214 = vector.broadcast %213 : vector<1x32xf32> to vector<4x32xf32>
    %215 = arith.addf %212, %214 : vector<4x32xf32>
    %cst_172 = arith.constant 0.000000e+00 : f32
    %216 = vector.broadcast %cst_172 : f32 to vector<4x32xf32>
    %217 = arith.maximumf %215, %216 : vector<4x32xf32>
    %c0_173 = arith.constant 0 : index
    %c0_174 = arith.constant 0 : index
    %c0_175 = arith.constant 0 : index
    %218 = vector.load %arg29[%c0_173, %c0_174, %c0_175] : memref<9x1x32xf32, #tpu.memory_space<vmem>>, vector<1x1x32xf32>
    %219 = vector.shape_cast %218 : vector<1x1x32xf32> to vector<1x32xf32>
    %220 = vector.broadcast %219 : vector<1x32xf32> to vector<4x32xf32>
    %221 = arith.mulf %217, %220 : vector<4x32xf32>
    %c1_176 = arith.constant 1 : index
    %c0_177 = arith.constant 0 : index
    %c0_178 = arith.constant 0 : index
    %222 = vector.load %arg29[%c1_176, %c0_177, %c0_178] : memref<9x1x32xf32, #tpu.memory_space<vmem>>, vector<1x1x32xf32>
    %223 = vector.shape_cast %222 : vector<1x1x32xf32> to vector<1x32xf32>
    %224 = vector.broadcast %223 : vector<1x32xf32> to vector<4x32xf32>
    %225 = arith.mulf %217, %224 : vector<4x32xf32>
    %c2_179 = arith.constant 2 : index
    %c0_180 = arith.constant 0 : index
    %c0_181 = arith.constant 0 : index
    %226 = vector.load %arg29[%c2_179, %c0_180, %c0_181] : memref<9x1x32xf32, #tpu.memory_space<vmem>>, vector<1x1x32xf32>
    %227 = vector.shape_cast %226 : vector<1x1x32xf32> to vector<1x32xf32>
    %228 = vector.broadcast %227 : vector<1x32xf32> to vector<4x32xf32>
    %229 = arith.mulf %217, %228 : vector<4x32xf32>
    %c3_182 = arith.constant 3 : index
    %c0_183 = arith.constant 0 : index
    %c0_184 = arith.constant 0 : index
    %230 = vector.load %arg29[%c3_182, %c0_183, %c0_184] : memref<9x1x32xf32, #tpu.memory_space<vmem>>, vector<1x1x32xf32>
    %231 = vector.shape_cast %230 : vector<1x1x32xf32> to vector<1x32xf32>
    %232 = vector.broadcast %231 : vector<1x32xf32> to vector<4x32xf32>
    %233 = arith.mulf %217, %232 : vector<4x32xf32>
    %c4_185 = arith.constant 4 : index
    %c0_186 = arith.constant 0 : index
    %c0_187 = arith.constant 0 : index
    %234 = vector.load %arg29[%c4_185, %c0_186, %c0_187] : memref<9x1x32xf32, #tpu.memory_space<vmem>>, vector<1x1x32xf32>
    %235 = vector.shape_cast %234 : vector<1x1x32xf32> to vector<1x32xf32>
    %236 = vector.broadcast %235 : vector<1x32xf32> to vector<4x32xf32>
    %237 = arith.mulf %217, %236 : vector<4x32xf32>
    %c5_188 = arith.constant 5 : index
    %c0_189 = arith.constant 0 : index
    %c0_190 = arith.constant 0 : index
    %238 = vector.load %arg29[%c5_188, %c0_189, %c0_190] : memref<9x1x32xf32, #tpu.memory_space<vmem>>, vector<1x1x32xf32>
    %239 = vector.shape_cast %238 : vector<1x1x32xf32> to vector<1x32xf32>
    %240 = vector.broadcast %239 : vector<1x32xf32> to vector<4x32xf32>
    %241 = arith.mulf %217, %240 : vector<4x32xf32>
    %c6_191 = arith.constant 6 : index
    %c0_192 = arith.constant 0 : index
    %c0_193 = arith.constant 0 : index
    %242 = vector.load %arg29[%c6_191, %c0_192, %c0_193] : memref<9x1x32xf32, #tpu.memory_space<vmem>>, vector<1x1x32xf32>
    %243 = vector.shape_cast %242 : vector<1x1x32xf32> to vector<1x32xf32>
    %244 = vector.broadcast %243 : vector<1x32xf32> to vector<4x32xf32>
    %245 = arith.mulf %217, %244 : vector<4x32xf32>
    %c7_194 = arith.constant 7 : index
    %c0_195 = arith.constant 0 : index
    %c0_196 = arith.constant 0 : index
    %246 = vector.load %arg29[%c7_194, %c0_195, %c0_196] : memref<9x1x32xf32, #tpu.memory_space<vmem>>, vector<1x1x32xf32>
    %247 = vector.shape_cast %246 : vector<1x1x32xf32> to vector<1x32xf32>
    %248 = vector.broadcast %247 : vector<1x32xf32> to vector<4x32xf32>
    %249 = arith.mulf %217, %248 : vector<4x32xf32>
    %c8_197 = arith.constant 8 : index
    %c0_198 = arith.constant 0 : index
    %c0_199 = arith.constant 0 : index
    %250 = vector.load %arg29[%c8_197, %c0_198, %c0_199] : memref<9x1x32xf32, #tpu.memory_space<vmem>>, vector<1x1x32xf32>
    %251 = vector.shape_cast %250 : vector<1x1x32xf32> to vector<1x32xf32>
    %252 = vector.broadcast %251 : vector<1x32xf32> to vector<4x32xf32>
    %253 = arith.mulf %217, %252 : vector<4x32xf32>
    %254 = tpu.concatenate %221, %225, %229, %233, %237, %241, %245, %249, %253 in 0 : vector<4x32xf32>, vector<4x32xf32>, vector<4x32xf32>, vector<4x32xf32>, vector<4x32xf32>, vector<4x32xf32>, vector<4x32xf32>, vector<4x32xf32>, vector<4x32xf32> -> vector<36x32xf32>
    %c0_200 = arith.constant 0 : index
    %c0_201 = arith.constant 0 : index
    %255 = vector.load %arg26[%c0_200, %c0_201] : memref<4x36xf32, #tpu.memory_space<vmem>>, vector<4x36xf32>
    %cst_202 = arith.constant dense<0.000000e+00> : vector<4x32xf32>
    %256 = tpu.matmul %255, %254, %cst_202 {dimension_numbers = #tpu.dot_dimension_numbers<[1], [0], [0], [1], [0, 0, 1, 1], [], []>} : vector<4x36xf32>, vector<36x32xf32>, vector<4x32xf32> -> vector<4x32xf32>
    %c0_203 = arith.constant 0 : index
    %c0_204 = arith.constant 0 : index
    %257 = vector.load %arg30[%c0_203, %c0_204] : memref<1x32xf32, #tpu.memory_space<vmem>>, vector<1x32xf32>
    %258 = vector.broadcast %257 : vector<1x32xf32> to vector<4x32xf32>
    %259 = arith.addf %256, %258 : vector<4x32xf32>
    %c0_205 = arith.constant 0 : index
    %c0_206 = arith.constant 0 : index
    %260 = vector.load %arg31[%c0_205, %c0_206] : memref<32x32xf32, #tpu.memory_space<vmem>>, vector<32x32xf32>
    %cst_207 = arith.constant dense<0.000000e+00> : vector<4x32xf32>
    %261 = tpu.matmul %259, %260, %cst_207 {dimension_numbers = #tpu.dot_dimension_numbers<[1], [0], [0], [1], [0, 0, 1, 1], [], []>} : vector<4x32xf32>, vector<32x32xf32>, vector<4x32xf32> -> vector<4x32xf32>
    %c0_208 = arith.constant 0 : index
    %c0_209 = arith.constant 0 : index
    %262 = vector.load %arg32[%c0_208, %c0_209] : memref<1x32xf32, #tpu.memory_space<vmem>>, vector<1x32xf32>
    %263 = vector.broadcast %262 : vector<1x32xf32> to vector<4x32xf32>
    %264 = arith.addf %261, %263 : vector<4x32xf32>
    %cst_210 = arith.constant 0.000000e+00 : f32
    %265 = vector.broadcast %cst_210 : f32 to vector<4x32xf32>
    %266 = arith.maximumf %264, %265 : vector<4x32xf32>
    %c0_211 = arith.constant 0 : index
    %c0_212 = arith.constant 0 : index
    %267 = vector.load %arg34[%c0_211, %c0_212] : memref<32x64xf32, #tpu.memory_space<vmem>>, vector<32x64xf32>
    %cst_213 = arith.constant dense<0.000000e+00> : vector<4x64xf32>
    %268 = tpu.matmul %266, %267, %cst_213 {dimension_numbers = #tpu.dot_dimension_numbers<[1], [0], [0], [1], [0, 0, 1, 1], [], []>} : vector<4x32xf32>, vector<32x64xf32>, vector<4x64xf32> -> vector<4x64xf32>
    %c0_214 = arith.constant 0 : index
    %c0_215 = arith.constant 0 : index
    %269 = vector.load %arg35[%c0_214, %c0_215] : memref<1x64xf32, #tpu.memory_space<vmem>>, vector<1x64xf32>
    %270 = vector.broadcast %269 : vector<1x64xf32> to vector<4x64xf32>
    %271 = arith.addf %268, %270 : vector<4x64xf32>
    %cst_216 = arith.constant 0.000000e+00 : f32
    %272 = vector.broadcast %cst_216 : f32 to vector<4x64xf32>
    %273 = arith.maximumf %271, %272 : vector<4x64xf32>
    %c0_217 = arith.constant 0 : index
    %c0_218 = arith.constant 0 : index
    %c0_219 = arith.constant 0 : index
    %274 = vector.load %arg36[%c0_217, %c0_218, %c0_219] : memref<9x1x64xf32, #tpu.memory_space<vmem>>, vector<1x1x64xf32>
    %275 = vector.shape_cast %274 : vector<1x1x64xf32> to vector<1x64xf32>
    %276 = vector.broadcast %275 : vector<1x64xf32> to vector<4x64xf32>
    %277 = arith.mulf %273, %276 : vector<4x64xf32>
    %c1_220 = arith.constant 1 : index
    %c0_221 = arith.constant 0 : index
    %c0_222 = arith.constant 0 : index
    %278 = vector.load %arg36[%c1_220, %c0_221, %c0_222] : memref<9x1x64xf32, #tpu.memory_space<vmem>>, vector<1x1x64xf32>
    %279 = vector.shape_cast %278 : vector<1x1x64xf32> to vector<1x64xf32>
    %280 = vector.broadcast %279 : vector<1x64xf32> to vector<4x64xf32>
    %281 = arith.mulf %273, %280 : vector<4x64xf32>
    %c2_223 = arith.constant 2 : index
    %c0_224 = arith.constant 0 : index
    %c0_225 = arith.constant 0 : index
    %282 = vector.load %arg36[%c2_223, %c0_224, %c0_225] : memref<9x1x64xf32, #tpu.memory_space<vmem>>, vector<1x1x64xf32>
    %283 = vector.shape_cast %282 : vector<1x1x64xf32> to vector<1x64xf32>
    %284 = vector.broadcast %283 : vector<1x64xf32> to vector<4x64xf32>
    %285 = arith.mulf %273, %284 : vector<4x64xf32>
    %c3_226 = arith.constant 3 : index
    %c0_227 = arith.constant 0 : index
    %c0_228 = arith.constant 0 : index
    %286 = vector.load %arg36[%c3_226, %c0_227, %c0_228] : memref<9x1x64xf32, #tpu.memory_space<vmem>>, vector<1x1x64xf32>
    %287 = vector.shape_cast %286 : vector<1x1x64xf32> to vector<1x64xf32>
    %288 = vector.broadcast %287 : vector<1x64xf32> to vector<4x64xf32>
    %289 = arith.mulf %273, %288 : vector<4x64xf32>
    %c4_229 = arith.constant 4 : index
    %c0_230 = arith.constant 0 : index
    %c0_231 = arith.constant 0 : index
    %290 = vector.load %arg36[%c4_229, %c0_230, %c0_231] : memref<9x1x64xf32, #tpu.memory_space<vmem>>, vector<1x1x64xf32>
    %291 = vector.shape_cast %290 : vector<1x1x64xf32> to vector<1x64xf32>
    %292 = vector.broadcast %291 : vector<1x64xf32> to vector<4x64xf32>
    %293 = arith.mulf %273, %292 : vector<4x64xf32>
    %c5_232 = arith.constant 5 : index
    %c0_233 = arith.constant 0 : index
    %c0_234 = arith.constant 0 : index
    %294 = vector.load %arg36[%c5_232, %c0_233, %c0_234] : memref<9x1x64xf32, #tpu.memory_space<vmem>>, vector<1x1x64xf32>
    %295 = vector.shape_cast %294 : vector<1x1x64xf32> to vector<1x64xf32>
    %296 = vector.broadcast %295 : vector<1x64xf32> to vector<4x64xf32>
    %297 = arith.mulf %273, %296 : vector<4x64xf32>
    %c6_235 = arith.constant 6 : index
    %c0_236 = arith.constant 0 : index
    %c0_237 = arith.constant 0 : index
    %298 = vector.load %arg36[%c6_235, %c0_236, %c0_237] : memref<9x1x64xf32, #tpu.memory_space<vmem>>, vector<1x1x64xf32>
    %299 = vector.shape_cast %298 : vector<1x1x64xf32> to vector<1x64xf32>
    %300 = vector.broadcast %299 : vector<1x64xf32> to vector<4x64xf32>
    %301 = arith.mulf %273, %300 : vector<4x64xf32>
    %c7_238 = arith.constant 7 : index
    %c0_239 = arith.constant 0 : index
    %c0_240 = arith.constant 0 : index
    %302 = vector.load %arg36[%c7_238, %c0_239, %c0_240] : memref<9x1x64xf32, #tpu.memory_space<vmem>>, vector<1x1x64xf32>
    %303 = vector.shape_cast %302 : vector<1x1x64xf32> to vector<1x64xf32>
    %304 = vector.broadcast %303 : vector<1x64xf32> to vector<4x64xf32>
    %305 = arith.mulf %273, %304 : vector<4x64xf32>
    %c8_241 = arith.constant 8 : index
    %c0_242 = arith.constant 0 : index
    %c0_243 = arith.constant 0 : index
    %306 = vector.load %arg36[%c8_241, %c0_242, %c0_243] : memref<9x1x64xf32, #tpu.memory_space<vmem>>, vector<1x1x64xf32>
    %307 = vector.shape_cast %306 : vector<1x1x64xf32> to vector<1x64xf32>
    %308 = vector.broadcast %307 : vector<1x64xf32> to vector<4x64xf32>
    %309 = arith.mulf %273, %308 : vector<4x64xf32>
    %310 = tpu.concatenate %277, %281, %285, %289, %293, %297, %301, %305, %309 in 0 : vector<4x64xf32>, vector<4x64xf32>, vector<4x64xf32>, vector<4x64xf32>, vector<4x64xf32>, vector<4x64xf32>, vector<4x64xf32>, vector<4x64xf32>, vector<4x64xf32> -> vector<36x64xf32>
    %c0_244 = arith.constant 0 : index
    %c0_245 = arith.constant 0 : index
    %311 = vector.load %arg33[%c0_244, %c0_245] : memref<1x36xf32, #tpu.memory_space<vmem>>, vector<1x36xf32>
    %cst_246 = arith.constant dense<0.000000e+00> : vector<1x64xf32>
    %312 = tpu.matmul %311, %310, %cst_246 {dimension_numbers = #tpu.dot_dimension_numbers<[1], [0], [0], [1], [0, 0, 1, 1], [], []>} : vector<1x36xf32>, vector<36x64xf32>, vector<1x64xf32> -> vector<1x64xf32>
    %c0_247 = arith.constant 0 : index
    %c0_248 = arith.constant 0 : index
    %313 = vector.load %arg37[%c0_247, %c0_248] : memref<1x64xf32, #tpu.memory_space<vmem>>, vector<1x64xf32>
    %314 = arith.addf %312, %313 : vector<1x64xf32>
    %c0_249 = arith.constant 0 : index
    %c0_250 = arith.constant 0 : index
    %315 = vector.load %arg38[%c0_249, %c0_250] : memref<64x64xf32, #tpu.memory_space<vmem>>, vector<64x64xf32>
    %cst_251 = arith.constant dense<0.000000e+00> : vector<1x64xf32>
    %316 = tpu.matmul %314, %315, %cst_251 {dimension_numbers = #tpu.dot_dimension_numbers<[1], [0], [0], [1], [0, 0, 1, 1], [], []>} : vector<1x64xf32>, vector<64x64xf32>, vector<1x64xf32> -> vector<1x64xf32>
    %c0_252 = arith.constant 0 : index
    %c0_253 = arith.constant 0 : index
    %317 = vector.load %arg39[%c0_252, %c0_253] : memref<1x64xf32, #tpu.memory_space<vmem>>, vector<1x64xf32>
    %318 = arith.addf %316, %317 : vector<1x64xf32>
    %cst_254 = arith.constant 0.000000e+00 : f32
    %319 = vector.broadcast %cst_254 : f32 to vector<1x64xf32>
    %320 = arith.maximumf %318, %319 : vector<1x64xf32>
    %c0_255 = arith.constant 0 : index
    %c0_256 = arith.constant 0 : index
    %321 = vector.load %arg41[%c0_255, %c0_256] : memref<64x64xf32, #tpu.memory_space<vmem>>, vector<64x64xf32>
    %cst_257 = arith.constant dense<0.000000e+00> : vector<1x64xf32>
    %322 = tpu.matmul %320, %321, %cst_257 {dimension_numbers = #tpu.dot_dimension_numbers<[1], [0], [0], [1], [0, 0, 1, 1], [], []>} : vector<1x64xf32>, vector<64x64xf32>, vector<1x64xf32> -> vector<1x64xf32>
    %c0_258 = arith.constant 0 : index
    %c0_259 = arith.constant 0 : index
    %323 = vector.load %arg42[%c0_258, %c0_259] : memref<1x64xf32, #tpu.memory_space<vmem>>, vector<1x64xf32>
    %324 = arith.addf %322, %323 : vector<1x64xf32>
    %cst_260 = arith.constant 0.000000e+00 : f32
    %325 = vector.broadcast %cst_260 : f32 to vector<1x64xf32>
    %326 = arith.maximumf %324, %325 : vector<1x64xf32>
    %c0_261 = arith.constant 0 : index
    %c0_262 = arith.constant 0 : index
    %c0_263 = arith.constant 0 : index
    %327 = vector.load %arg43[%c0_261, %c0_262, %c0_263] : memref<9x1x64xf32, #tpu.memory_space<vmem>>, vector<1x1x64xf32>
    %328 = vector.shape_cast %327 : vector<1x1x64xf32> to vector<1x64xf32>
    %329 = arith.mulf %326, %328 : vector<1x64xf32>
    %c1_264 = arith.constant 1 : index
    %c0_265 = arith.constant 0 : index
    %c0_266 = arith.constant 0 : index
    %330 = vector.load %arg43[%c1_264, %c0_265, %c0_266] : memref<9x1x64xf32, #tpu.memory_space<vmem>>, vector<1x1x64xf32>
    %331 = vector.shape_cast %330 : vector<1x1x64xf32> to vector<1x64xf32>
    %332 = arith.mulf %326, %331 : vector<1x64xf32>
    %c2_267 = arith.constant 2 : index
    %c0_268 = arith.constant 0 : index
    %c0_269 = arith.constant 0 : index
    %333 = vector.load %arg43[%c2_267, %c0_268, %c0_269] : memref<9x1x64xf32, #tpu.memory_space<vmem>>, vector<1x1x64xf32>
    %334 = vector.shape_cast %333 : vector<1x1x64xf32> to vector<1x64xf32>
    %335 = arith.mulf %326, %334 : vector<1x64xf32>
    %c3_270 = arith.constant 3 : index
    %c0_271 = arith.constant 0 : index
    %c0_272 = arith.constant 0 : index
    %336 = vector.load %arg43[%c3_270, %c0_271, %c0_272] : memref<9x1x64xf32, #tpu.memory_space<vmem>>, vector<1x1x64xf32>
    %337 = vector.shape_cast %336 : vector<1x1x64xf32> to vector<1x64xf32>
    %338 = arith.mulf %326, %337 : vector<1x64xf32>
    %c4_273 = arith.constant 4 : index
    %c0_274 = arith.constant 0 : index
    %c0_275 = arith.constant 0 : index
    %339 = vector.load %arg43[%c4_273, %c0_274, %c0_275] : memref<9x1x64xf32, #tpu.memory_space<vmem>>, vector<1x1x64xf32>
    %340 = vector.shape_cast %339 : vector<1x1x64xf32> to vector<1x64xf32>
    %341 = arith.mulf %326, %340 : vector<1x64xf32>
    %c5_276 = arith.constant 5 : index
    %c0_277 = arith.constant 0 : index
    %c0_278 = arith.constant 0 : index
    %342 = vector.load %arg43[%c5_276, %c0_277, %c0_278] : memref<9x1x64xf32, #tpu.memory_space<vmem>>, vector<1x1x64xf32>
    %343 = vector.shape_cast %342 : vector<1x1x64xf32> to vector<1x64xf32>
    %344 = arith.mulf %326, %343 : vector<1x64xf32>
    %c6_279 = arith.constant 6 : index
    %c0_280 = arith.constant 0 : index
    %c0_281 = arith.constant 0 : index
    %345 = vector.load %arg43[%c6_279, %c0_280, %c0_281] : memref<9x1x64xf32, #tpu.memory_space<vmem>>, vector<1x1x64xf32>
    %346 = vector.shape_cast %345 : vector<1x1x64xf32> to vector<1x64xf32>
    %347 = arith.mulf %326, %346 : vector<1x64xf32>
    %c7_282 = arith.constant 7 : index
    %c0_283 = arith.constant 0 : index
    %c0_284 = arith.constant 0 : index
    %348 = vector.load %arg43[%c7_282, %c0_283, %c0_284] : memref<9x1x64xf32, #tpu.memory_space<vmem>>, vector<1x1x64xf32>
    %349 = vector.shape_cast %348 : vector<1x1x64xf32> to vector<1x64xf32>
    %350 = arith.mulf %326, %349 : vector<1x64xf32>
    %c8_285 = arith.constant 8 : index
    %c0_286 = arith.constant 0 : index
    %c0_287 = arith.constant 0 : index
    %351 = vector.load %arg43[%c8_285, %c0_286, %c0_287] : memref<9x1x64xf32, #tpu.memory_space<vmem>>, vector<1x1x64xf32>
    %352 = vector.shape_cast %351 : vector<1x1x64xf32> to vector<1x64xf32>
    %353 = arith.mulf %326, %352 : vector<1x64xf32>
    %354 = tpu.concatenate %329, %332, %335, %338, %341, %344, %347, %350, %353 in 0 : vector<1x64xf32>, vector<1x64xf32>, vector<1x64xf32>, vector<1x64xf32>, vector<1x64xf32>, vector<1x64xf32>, vector<1x64xf32>, vector<1x64xf32>, vector<1x64xf32> -> vector<9x64xf32>
    %c0_288 = arith.constant 0 : index
    %c0_289 = arith.constant 0 : index
    %355 = vector.load %arg40[%c0_288, %c0_289] : memref<1x9xf32, #tpu.memory_space<vmem>>, vector<1x9xf32>
    %cst_290 = arith.constant dense<0.000000e+00> : vector<1x64xf32>
    %356 = tpu.matmul %355, %354, %cst_290 {dimension_numbers = #tpu.dot_dimension_numbers<[1], [0], [0], [1], [0, 0, 1, 1], [], []>} : vector<1x9xf32>, vector<9x64xf32>, vector<1x64xf32> -> vector<1x64xf32>
    %c0_291 = arith.constant 0 : index
    %c0_292 = arith.constant 0 : index
    %357 = vector.load %arg44[%c0_291, %c0_292] : memref<1x64xf32, #tpu.memory_space<vmem>>, vector<1x64xf32>
    %358 = arith.addf %356, %357 : vector<1x64xf32>
    %c0_293 = arith.constant 0 : index
    %c0_294 = arith.constant 0 : index
    %359 = vector.load %arg45[%c0_293, %c0_294] : memref<64x64xf32, #tpu.memory_space<vmem>>, vector<64x64xf32>
    %cst_295 = arith.constant dense<0.000000e+00> : vector<1x64xf32>
    %360 = tpu.matmul %358, %359, %cst_295 {dimension_numbers = #tpu.dot_dimension_numbers<[1], [0], [0], [1], [0, 0, 1, 1], [], []>} : vector<1x64xf32>, vector<64x64xf32>, vector<1x64xf32> -> vector<1x64xf32>
    %c0_296 = arith.constant 0 : index
    %c0_297 = arith.constant 0 : index
    %361 = vector.load %arg46[%c0_296, %c0_297] : memref<1x64xf32, #tpu.memory_space<vmem>>, vector<1x64xf32>
    %362 = arith.addf %360, %361 : vector<1x64xf32>
    %cst_298 = arith.constant 0.000000e+00 : f32
    %363 = vector.broadcast %cst_298 : f32 to vector<1x64xf32>
    %364 = arith.maximumf %362, %363 : vector<1x64xf32>
    %c0_299 = arith.constant 0 : index
    %c0_300 = arith.constant 0 : index
    %365 = vector.load %arg47[%c0_299, %c0_300] : memref<64x128xf32, #tpu.memory_space<vmem>>, vector<64x128xf32>
    %cst_301 = arith.constant dense<0.000000e+00> : vector<1x128xf32>
    %366 = tpu.matmul %364, %365, %cst_301 {dimension_numbers = #tpu.dot_dimension_numbers<[1], [0], [0], [1], [0, 0, 1, 1], [], []>} : vector<1x64xf32>, vector<64x128xf32>, vector<1x128xf32> -> vector<1x128xf32>
    %c0_302 = arith.constant 0 : index
    %c0_303 = arith.constant 0 : index
    %367 = vector.load %arg48[%c0_302, %c0_303] : memref<1x128xf32, #tpu.memory_space<vmem>>, vector<1x128xf32>
    %368 = arith.addf %366, %367 : vector<1x128xf32>
    %cst_304 = arith.constant 0.000000e+00 : f32
    %369 = vector.broadcast %cst_304 : f32 to vector<1x128xf32>
    %370 = arith.maximumf %368, %369 : vector<1x128xf32>
    %cst_305 = arith.constant dense<0.000000e+00> : vector<128xf32>
    %371 = vector.multi_reduction <add>, %370, %cst_305 [0] : vector<1x128xf32> to vector<128xf32>
    %372 = vector.shape_cast %371 : vector<128xf32> to vector<1x128xf32>
    %cst_306 = arith.constant 1.000000e+00 : f32
    %373 = vector.broadcast %cst_306 : f32 to vector<1x128xf32>
    %374 = arith.mulf %372, %373 : vector<1x128xf32>
    %c0_307 = arith.constant 0 : index
    %c0_308 = arith.constant 0 : index
    %375 = vector.load %arg49[%c0_307, %c0_308] : memref<128x10xf32, #tpu.memory_space<vmem>>, vector<128x10xf32>
    %cst_309 = arith.constant dense<0.000000e+00> : vector<1x10xf32>
    %376 = tpu.matmul %374, %375, %cst_309 {dimension_numbers = #tpu.dot_dimension_numbers<[1], [0], [0], [1], [0, 0, 1, 1], [], []>} : vector<1x128xf32>, vector<128x10xf32>, vector<1x10xf32> -> vector<1x10xf32>
    %c0_310 = arith.constant 0 : index
    %c0_311 = arith.constant 0 : index
    %377 = vector.load %arg50[%c0_310, %c0_311] : memref<1x10xf32, #tpu.memory_space<vmem>>, vector<1x10xf32>
    %378 = arith.addf %376, %377 : vector<1x10xf32>
    %c0_312 = arith.constant 0 : index
    %c0_313 = arith.constant 0 : index
    %c0_314 = arith.constant 0 : index
    %379 = vector.load %arg51[%c0_312, %c0_313, %c0_314] : memref<1x1x10xf32, #tpu.memory_space<vmem>>, vector<1x1x10xf32>
    %380 = vector.shape_cast %379 : vector<1x1x10xf32> to vector<1x10xf32>
    %381 = vector.shape_cast %378 : vector<1x10xf32> to vector<1x1x10xf32>
    tpu.vector_store %arg51[%c0_312, %c0_313, %c0_314], %381 {strides = array<i32>} : memref<1x1x10xf32, #tpu.memory_space<vmem>>, vector<1x1x10xf32>,
    return
  }
  func.func @transform_0(%arg0: i32) -> (i32, i32, i32) {
    %c0_i32 = arith.constant 0 : i32
    %c0_i32_0 = arith.constant 0 : i32
    %c0_i32_1 = arith.constant 0 : i32
    return %arg0, %c0_i32, %c0_i32_0 : i32, i32, i32
  }
  func.func @transform_1(%arg0: i32) -> (i32, i32) {
    %c0_i32 = arith.constant 0 : i32
    %c0_i32_0 = arith.constant 0 : i32
    %c0_i32_1 = arith.constant 0 : i32
    return %c0_i32, %c0_i32_0 : i32, i32
  }
  func.func @transform_2(%arg0: i32) -> (i32, i32) {
    %c0_i32 = arith.constant 0 : i32
    %c0_i32_0 = arith.constant 0 : i32
    %c0_i32_1 = arith.constant 0 : i32
    return %c0_i32, %c0_i32_0 : i32, i32
  }
  func.func @transform_3(%arg0: i32) -> (i32, i32, i32) {
    %c0_i32 = arith.constant 0 : i32
    %c0_i32_0 = arith.constant 0 : i32
    %c0_i32_1 = arith.constant 0 : i32
    %c0_i32_2 = arith.constant 0 : i32
    return %c0_i32, %c0_i32_0, %c0_i32_1 : i32, i32, i32
  }
  func.func @transform_4(%arg0: i32) -> (i32, i32) {
    %c0_i32 = arith.constant 0 : i32
    %c0_i32_0 = arith.constant 0 : i32
    %c0_i32_1 = arith.constant 0 : i32
    return %c0_i32, %c0_i32_0 : i32, i32
  }
  func.func @transform_5(%arg0: i32) -> (i32, i32) {
    %c0_i32 = arith.constant 0 : i32
    %c0_i32_0 = arith.constant 0 : i32
    %c0_i32_1 = arith.constant 0 : i32
    return %c0_i32, %c0_i32_0 : i32, i32
  }
  func.func @transform_6(%arg0: i32) -> (i32, i32) {
    %c0_i32 = arith.constant 0 : i32
    %c0_i32_0 = arith.constant 0 : i32
    %c0_i32_1 = arith.constant 0 : i32
    return %c0_i32, %c0_i32_0 : i32, i32
  }
  func.func @transform_7(%arg0: i32) -> (i32, i32, i32) {
    %c0_i32 = arith.constant 0 : i32
    %c0_i32_0 = arith.constant 0 : i32
    %c0_i32_1 = arith.constant 0 : i32
    %c0_i32_2 = arith.constant 0 : i32
    return %c0_i32, %c0_i32_0, %c0_i32_1 : i32, i32, i32
  }
  func.func @transform_8(%arg0: i32) -> (i32, i32) {
    %c0_i32 = arith.constant 0 : i32
    %c0_i32_0 = arith.constant 0 : i32
    %c0_i32_1 = arith.constant 0 : i32
    return %c0_i32, %c0_i32_0 : i32, i32
  }
  func.func @transform_9(%arg0: i32) -> (i32, i32) {
    %c0_i32 = arith.constant 0 : i32
    %c0_i32_0 = arith.constant 0 : i32
    %c0_i32_1 = arith.constant 0 : i32
    return %c0_i32, %c0_i32_0 : i32, i32
  }
  func.func @transform_10(%arg0: i32) -> (i32, i32) {
    %c0_i32 = arith.constant 0 : i32
    %c0_i32_0 = arith.constant 0 : i32
    %c0_i32_1 = arith.constant 0 : i32
    return %c0_i32, %c0_i32_0 : i32, i32
  }
  func.func @transform_11(%arg0: i32) -> (i32, i32) {
    %c0_i32 = arith.constant 0 : i32
    %c0_i32_0 = arith.constant 0 : i32
    %c0_i32_1 = arith.constant 0 : i32
    return %c0_i32, %c0_i32_0 : i32, i32
  }
  func.func @transform_12(%arg0: i32) -> (i32, i32) {
    %c0_i32 = arith.constant 0 : i32
    %c0_i32_0 = arith.constant 0 : i32
    %c0_i32_1 = arith.constant 0 : i32
    return %c0_i32, %c0_i32_0 : i32, i32
  }
  func.func @transform_13(%arg0: i32) -> (i32, i32) {
    %c0_i32 = arith.constant 0 : i32
    %c0_i32_0 = arith.constant 0 : i32
    %c0_i32_1 = arith.constant 0 : i32
    return %c0_i32, %c0_i32_0 : i32, i32
  }
  func.func @transform_14(%arg0: i32) -> (i32, i32, i32) {
    %c0_i32 = arith.constant 0 : i32
    %c0_i32_0 = arith.constant 0 : i32
    %c0_i32_1 = arith.constant 0 : i32
    %c0_i32_2 = arith.constant 0 : i32
    return %c0_i32, %c0_i32_0, %c0_i32_1 : i32, i32, i32
  }
  func.func @transform_15(%arg0: i32) -> (i32, i32) {
    %c0_i32 = arith.constant 0 : i32
    %c0_i32_0 = arith.constant 0 : i32
    %c0_i32_1 = arith.constant 0 : i32
    return %c0_i32, %c0_i32_0 : i32, i32
  }
  func.func @transform_16(%arg0: i32) -> (i32, i32) {
    %c0_i32 = arith.constant 0 : i32
    %c0_i32_0 = arith.constant 0 : i32
    %c0_i32_1 = arith.constant 0 : i32
    return %c0_i32, %c0_i32_0 : i32, i32
  }
  func.func @transform_17(%arg0: i32) -> (i32, i32) {
    %c0_i32 = arith.constant 0 : i32
    %c0_i32_0 = arith.constant 0 : i32
    %c0_i32_1 = arith.constant 0 : i32
    return %c0_i32, %c0_i32_0 : i32, i32
  }
  func.func @transform_18(%arg0: i32) -> (i32, i32) {
    %c0_i32 = arith.constant 0 : i32
    %c0_i32_0 = arith.constant 0 : i32
    %c0_i32_1 = arith.constant 0 : i32
    return %c0_i32, %c0_i32_0 : i32, i32
  }
  func.func @transform_19(%arg0: i32) -> (i32, i32) {
    %c0_i32 = arith.constant 0 : i32
    %c0_i32_0 = arith.constant 0 : i32
    %c0_i32_1 = arith.constant 0 : i32
    return %c0_i32, %c0_i32_0 : i32, i32
  }
  func.func @transform_20(%arg0: i32) -> (i32, i32) {
    %c0_i32 = arith.constant 0 : i32
    %c0_i32_0 = arith.constant 0 : i32
    %c0_i32_1 = arith.constant 0 : i32
    return %c0_i32, %c0_i32_0 : i32, i32
  }
  func.func @transform_21(%arg0: i32) -> (i32, i32, i32) {
    %c0_i32 = arith.constant 0 : i32
    %c0_i32_0 = arith.constant 0 : i32
    %c0_i32_1 = arith.constant 0 : i32
    %c0_i32_2 = arith.constant 0 : i32
    return %c0_i32, %c0_i32_0, %c0_i32_1 : i32, i32, i32
  }
  func.func @transform_22(%arg0: i32) -> (i32, i32) {
    %c0_i32 = arith.constant 0 : i32
    %c0_i32_0 = arith.constant 0 : i32
    %c0_i32_1 = arith.constant 0 : i32
    return %c0_i32, %c0_i32_0 : i32, i32
  }
  func.func @transform_23(%arg0: i32) -> (i32, i32) {
    %c0_i32 = arith.constant 0 : i32
    %c0_i32_0 = arith.constant 0 : i32
    %c0_i32_1 = arith.constant 0 : i32
    return %c0_i32, %c0_i32_0 : i32, i32
  }
  func.func @transform_24(%arg0: i32) -> (i32, i32) {
    %c0_i32 = arith.constant 0 : i32
    %c0_i32_0 = arith.constant 0 : i32
    %c0_i32_1 = arith.constant 0 : i32
    return %c0_i32, %c0_i32_0 : i32, i32
  }
  func.func @transform_25(%arg0: i32) -> (i32, i32) {
    %c0_i32 = arith.constant 0 : i32
    %c0_i32_0 = arith.constant 0 : i32
    %c0_i32_1 = arith.constant 0 : i32
    return %c0_i32, %c0_i32_0 : i32, i32
  }
  func.func @transform_26(%arg0: i32) -> (i32, i32) {
    %c0_i32 = arith.constant 0 : i32
    %c0_i32_0 = arith.constant 0 : i32
    %c0_i32_1 = arith.constant 0 : i32
    return %c0_i32, %c0_i32_0 : i32, i32
  }
  func.func @transform_27(%arg0: i32) -> (i32, i32) {
    %c0_i32 = arith.constant 0 : i32
    %c0_i32_0 = arith.constant 0 : i32
    %c0_i32_1 = arith.constant 0 : i32
    return %c0_i32, %c0_i32_0 : i32, i32
  }
  func.func @transform_28(%arg0: i32) -> (i32, i32, i32) {
    %c0_i32 = arith.constant 0 : i32
    %c0_i32_0 = arith.constant 0 : i32
    %c0_i32_1 = arith.constant 0 : i32
    %c0_i32_2 = arith.constant 0 : i32
    return %c0_i32, %c0_i32_0, %c0_i32_1 : i32, i32, i32
  }
  func.func @transform_29(%arg0: i32) -> (i32, i32) {
    %c0_i32 = arith.constant 0 : i32
    %c0_i32_0 = arith.constant 0 : i32
    %c0_i32_1 = arith.constant 0 : i32
    return %c0_i32, %c0_i32_0 : i32, i32
  }
  func.func @transform_30(%arg0: i32) -> (i32, i32) {
    %c0_i32 = arith.constant 0 : i32
    %c0_i32_0 = arith.constant 0 : i32
    %c0_i32_1 = arith.constant 0 : i32
    return %c0_i32, %c0_i32_0 : i32, i32
  }
  func.func @transform_31(%arg0: i32) -> (i32, i32) {
    %c0_i32 = arith.constant 0 : i32
    %c0_i32_0 = arith.constant 0 : i32
    %c0_i32_1 = arith.constant 0 : i32
    return %c0_i32, %c0_i32_0 : i32, i32
  }
  func.func @transform_32(%arg0: i32) -> (i32, i32) {
    %c0_i32 = arith.constant 0 : i32
    %c0_i32_0 = arith.constant 0 : i32
    %c0_i32_1 = arith.constant 0 : i32
    return %c0_i32, %c0_i32_0 : i32, i32
  }
  func.func @transform_33(%arg0: i32) -> (i32, i32) {
    %c0_i32 = arith.constant 0 : i32
    %c0_i32_0 = arith.constant 0 : i32
    %c0_i32_1 = arith.constant 0 : i32
    return %c0_i32, %c0_i32_0 : i32, i32
  }
  func.func @transform_34(%arg0: i32) -> (i32, i32) {
    %c0_i32 = arith.constant 0 : i32
    %c0_i32_0 = arith.constant 0 : i32
    %c0_i32_1 = arith.constant 0 : i32
    return %c0_i32, %c0_i32_0 : i32, i32
  }
  func.func @transform_35(%arg0: i32) -> (i32, i32, i32) {
    %c0_i32 = arith.constant 0 : i32
    %c0_i32_0 = arith.constant 0 : i32
    %c0_i32_1 = arith.constant 0 : i32
    %c0_i32_2 = arith.constant 0 : i32
    return %c0_i32, %c0_i32_0, %c0_i32_1 : i32, i32, i32
  }
  func.func @transform_36(%arg0: i32) -> (i32, i32) {
    %c0_i32 = arith.constant 0 : i32
    %c0_i32_0 = arith.constant 0 : i32
    %c0_i32_1 = arith.constant 0 : i32
    return %c0_i32, %c0_i32_0 : i32, i32
  }
  func.func @transform_37(%arg0: i32) -> (i32, i32) {
    %c0_i32 = arith.constant 0 : i32
    %c0_i32_0 = arith.constant 0 : i32
    %c0_i32_1 = arith.constant 0 : i32
    return %c0_i32, %c0_i32_0 : i32, i32
  }
  func.func @transform_38(%arg0: i32) -> (i32, i32) {
    %c0_i32 = arith.constant 0 : i32
    %c0_i32_0 = arith.constant 0 : i32
    %c0_i32_1 = arith.constant 0 : i32
    return %c0_i32, %c0_i32_0 : i32, i32
  }
  func.func @transform_39(%arg0: i32) -> (i32, i32) {
    %c0_i32 = arith.constant 0 : i32
    %c0_i32_0 = arith.constant 0 : i32
    %c0_i32_1 = arith.constant 0 : i32
    return %c0_i32, %c0_i32_0 : i32, i32
  }
  func.func @transform_40(%arg0: i32) -> (i32, i32) {
    %c0_i32 = arith.constant 0 : i32
    %c0_i32_0 = arith.constant 0 : i32
    %c0_i32_1 = arith.constant 0 : i32
    return %c0_i32, %c0_i32_0 : i32, i32
  }
  func.func @transform_41(%arg0: i32) -> (i32, i32) {
    %c0_i32 = arith.constant 0 : i32
    %c0_i32_0 = arith.constant 0 : i32
    %c0_i32_1 = arith.constant 0 : i32
    return %c0_i32, %c0_i32_0 : i32, i32
  }
  func.func @transform_42(%arg0: i32) -> (i32, i32, i32) {
    %c0_i32 = arith.constant 0 : i32
    %c0_i32_0 = arith.constant 0 : i32
    %c0_i32_1 = arith.constant 0 : i32
    %c0_i32_2 = arith.constant 0 : i32
    return %c0_i32, %c0_i32_0, %c0_i32_1 : i32, i32, i32
  }
  func.func @transform_43(%arg0: i32) -> (i32, i32) {
    %c0_i32 = arith.constant 0 : i32
    %c0_i32_0 = arith.constant 0 : i32
    %c0_i32_1 = arith.constant 0 : i32
    return %c0_i32, %c0_i32_0 : i32, i32
  }
  func.func @transform_44(%arg0: i32) -> (i32, i32) {
    %c0_i32 = arith.constant 0 : i32
    %c0_i32_0 = arith.constant 0 : i32
    %c0_i32_1 = arith.constant 0 : i32
    return %c0_i32, %c0_i32_0 : i32, i32
  }
  func.func @transform_45(%arg0: i32) -> (i32, i32) {
    %c0_i32 = arith.constant 0 : i32
    %c0_i32_0 = arith.constant 0 : i32
    %c0_i32_1 = arith.constant 0 : i32
    return %c0_i32, %c0_i32_0 : i32, i32
  }
  func.func @transform_46(%arg0: i32) -> (i32, i32) {
    %c0_i32 = arith.constant 0 : i32
    %c0_i32_0 = arith.constant 0 : i32
    %c0_i32_1 = arith.constant 0 : i32
    return %c0_i32, %c0_i32_0 : i32, i32
  }
  func.func @transform_47(%arg0: i32) -> (i32, i32) {
    %c0_i32 = arith.constant 0 : i32
    %c0_i32_0 = arith.constant 0 : i32
    %c0_i32_1 = arith.constant 0 : i32
    return %c0_i32, %c0_i32_0 : i32, i32
  }
  func.func @transform_48(%arg0: i32) -> (i32, i32) {
    %c0_i32 = arith.constant 0 : i32
    %c0_i32_0 = arith.constant 0 : i32
    %c0_i32_1 = arith.constant 0 : i32
    return %c0_i32, %c0_i32_0 : i32, i32
  }
  func.func @transform_49(%arg0: i32) -> (i32, i32) {
    %c0_i32 = arith.constant 0 : i32
    %c0_i32_0 = arith.constant 0 : i32
    %c0_i32_1 = arith.constant 0 : i32
    return %c0_i32, %c0_i32_0 : i32, i32
  }
  func.func @transform_50(%arg0: i32) -> (i32, i32, i32) {
    %c0_i32 = arith.constant 0 : i32
    %c0_i32_0 = arith.constant 0 : i32
    %c0_i32_1 = arith.constant 0 : i32
    return %arg0, %c0_i32, %c0_i32_0 : i32, i32, i32
  }
}

</mosaic_0001>

<llo_original>
// kernel: _lambda_.1
$region0: #{_lambda_.1}
  #allocation0 [shape = 'u32[]', space=smem, size = 0x4, offset = 0x4, fixed_abs, tag = 'smem constant byte address 0x4 - core index']
  #allocation1 [shape = 'u32[144,128]{1,0:T(1,128)}', space=vmem, size = 0x12000, scoped, tag = 'internal scratch']
  %s0 = inlined_call_operand.smem [shape: u32[51], index: -1, kind: input, shape index: {}]
  %s1 = sld [smem:[%s0]]
  %s2 = scalar_lea.smem %s0, 1
  %s3 = sld [smem:[%s2]]
  %s4 = scalar_lea.smem %s0, 2
  %s5 = sld [smem:[%s4]]
  %s6 = scalar_lea.smem %s0, 3
  %s7 = sld [smem:[%s6]]
  %s8 = scalar_lea.smem %s0, 4
  %s9 = sld [smem:[%s8]]
  %s10 = scalar_lea.smem %s0, 5
  %s11 = sld [smem:[%s10]]
  %s12 = scalar_lea.smem %s0, 6
  %s13 = sld [smem:[%s12]]
  %s14 = scalar_lea.smem %s0, 7
  %s15 = sld [smem:[%s14]]
  %s16 = scalar_lea.smem %s0, 8
  %s17 = sld [smem:[%s16]]
  %s18 = scalar_lea.smem %s0, 9
  %s19 = sld [smem:[%s18]]
  %s20 = scalar_lea.smem %s0, 10
  %s21 = sld [smem:[%s20]]
  %s22 = scalar_lea.smem %s0, 11
  %s23 = sld [smem:[%s22]]
  %s24 = scalar_lea.smem %s0, 12
  %s25 = sld [smem:[%s24]]
  %s26 = scalar_lea.smem %s0, 13
  %s27 = sld [smem:[%s26]]
  %s28 = scalar_lea.smem %s0, 14
  %s29 = sld [smem:[%s28]]
  %s30 = scalar_lea.smem %s0, 15
  %s31 = sld [smem:[%s30]]
  %s32 = scalar_lea.smem %s0, 16
  %s33 = sld [smem:[%s32]]
  %s34 = scalar_lea.smem %s0, 17
  %s35 = sld [smem:[%s34]]
  %s36 = scalar_lea.smem %s0, 18
  %s37 = sld [smem:[%s36]]
  %s38 = scalar_lea.smem %s0, 19
  %s39 = sld [smem:[%s38]]
  %s40 = scalar_lea.smem %s0, 20
  %s41 = sld [smem:[%s40]]
  %s42 = scalar_lea.smem %s0, 21
  %s43 = sld [smem:[%s42]]
  %s44 = scalar_lea.smem %s0, 22
  %s45 = sld [smem:[%s44]]
  %s46 = scalar_lea.smem %s0, 23
  %s47 = sld [smem:[%s46]]
  %s48 = scalar_lea.smem %s0, 24
  %s49 = sld [smem:[%s48]]
  %s50 = scalar_lea.smem %s0, 25
  %s51 = sld [smem:[%s50]]
  %s52 = scalar_lea.smem %s0, 26
  %s53 = sld [smem:[%s52]]
  %s54 = scalar_lea.smem %s0, 27
  %s55 = sld [smem:[%s54]]
  %s56 = scalar_lea.smem %s0, 28
  %s57 = sld [smem:[%s56]]
  %s58 = scalar_lea.smem %s0, 29
  %s59 = sld [smem:[%s58]]
  %s60 = scalar_lea.smem %s0, 30
  %s61 = sld [smem:[%s60]]
  %s62 = scalar_lea.smem %s0, 31
  %s63 = sld [smem:[%s62]]
  %s64 = scalar_lea.smem %s0, 32
  %s65 = sld [smem:[%s64]]
  %s66 = scalar_lea.smem %s0, 33
  %s67 = sld [smem:[%s66]]
  %s68 = scalar_lea.smem %s0, 34
  %s69 = sld [smem:[%s68]]
  %s70 = scalar_lea.smem %s0, 35
  %s71 = sld [smem:[%s70]]
  %s72 = scalar_lea.smem %s0, 36
  %s73 = sld [smem:[%s72]]
  %s74 = scalar_lea.smem %s0, 37
  %s75 = sld [smem:[%s74]]
  %s76 = scalar_lea.smem %s0, 38
  %s77 = sld [smem:[%s76]]
  %s78 = scalar_lea.smem %s0, 39
  %s79 = sld [smem:[%s78]]
  %s80 = scalar_lea.smem %s0, 40
  %s81 = sld [smem:[%s80]]
  %s82 = scalar_lea.smem %s0, 41
  %s83 = sld [smem:[%s82]]
  %s84 = scalar_lea.smem %s0, 42
  %s85 = sld [smem:[%s84]]
  %s86 = scalar_lea.smem %s0, 43
  %s87 = sld [smem:[%s86]]
  %s88 = scalar_lea.smem %s0, 44
  %s89 = sld [smem:[%s88]]
  %s90 = scalar_lea.smem %s0, 45
  %s91 = sld [smem:[%s90]]
  %s92 = scalar_lea.smem %s0, 46
  %s93 = sld [smem:[%s92]]
  %s94 = scalar_lea.smem %s0, 47
  %s95 = sld [smem:[%s94]]
  %s96 = scalar_lea.smem %s0, 48
  %s97 = sld [smem:[%s96]]
  %s98 = scalar_lea.smem %s0, 49
  %s99 = sld [smem:[%s98]]
  %s100 = scalar_lea.smem %s0, 50
  %s101 = sld [smem:[%s100]]
  %s102 = sld [smem:[#allocation0]]
  $region269: #{_lambda_.1} parent=0
    _
  %s104 = ssub.s32 1, %s102
  %s105 = scalar_select 0, %s104, %s102
  $region1: #{_lambda_.1} parent=0
    #allocation2 [shape = 'u8[512]{0}', space=vmem, size = 0x400, scoped, tag = 'input window, operand 34, single buffered']
    #allocation3 [shape = 's32[2]{0}', space=sflag, size = 0x8, scoped, tag = 'scoped memory for _lambda_.1']
    #allocation4 [shape = 's32[2]{0}', space=sflag, size = 0x8, scoped, tag = 'scoped memory for _lambda_.1']
    #allocation5 [shape = 'u8[512]{0}', space=vmem, size = 0x400, scoped, tag = 'input window, operand 36, single buffered']
    #allocation6 [shape = 's32[1]{0}', space=sflag, size = 0x4, scoped, tag = 'scoped memory for _lambda_.1']
    #allocation7 [shape = 'u8[512]{0}', space=vmem, size = 0x400, scoped, tag = 'input window, operand 38, single buffered']
    #allocation8 [shape = 'u8[512]{0}', space=vmem, size = 0x400, scoped, tag = 'input window, operand 39, single buffered']
    #allocation9 [shape = 's32[1]{0}', space=sflag, size = 0x4, scoped, tag = 'scoped memory for _lambda_.1']
    #allocation10 [shape = 'u8[512]{0}', space=vmem, size = 0x400, scoped, tag = 'input window, operand 41, single buffered']
    #allocation11 [shape = 'u8[512]{0}', space=vmem, size = 0x400, scoped, tag = 'input window, operand 43, single buffered']
    #allocation12 [shape = 's32[1]{0}', space=sflag, size = 0x4, scoped, tag = 'scoped memory for _lambda_.1']
    #allocation13 [shape = 'u8[512]{0}', space=vmem, size = 0x400, scoped, tag = 'input window, operand 45, single buffered']
    #allocation14 [shape = 'u8[512]{0}', space=vmem, size = 0x400, scoped, tag = 'input window, operand 47, single buffered']
    #allocation15 [shape = 's32[1]{0}', space=sflag, size = 0x4, scoped, tag = 'scoped memory for _lambda_.1']
    #allocation16 [shape = 'u8[512]{0}', space=vmem, size = 0x400, scoped, tag = 'input window, operand 49, single buffered']
    #allocation17 [shape = 'u8[1024]{0}', space=vmem, size = 0x400, scoped, tag = 'output window, operand 0']
    %106 = vsyncpa [#allocation3], 0
    %107 = vsyncpa [#allocation6], 0
    %108 = vsyncpa [#allocation9], 0
    %109 = vsyncpa [#allocation12], 0
    %110 = vsyncpa [#allocation15], 0
    %111 = vsyncpa [#allocation4], 0
    %s112 = scalar_lea.sflag [#allocation4], 1
    %113 = vsyncpa %s112, 0
    loop: start=0, step=1, limit=4
    $region2: #{_lambda_.1} parent=1 // loop_pre_header
      _
    $region3: #{_lambda_.1} parent=1 // loop_header
      %s115 = sphi 0, %s119
      %p116 = scmp.ge.s32.totalorder %s115, 4
      %s125 = sphi 0, %s127
      %s128 = sphi 0, %s125
      %s129 = sphi 0, %s128
      %s145 = sphi 0, %s129
      %s149 = sphi 0, %s149
      %s151 = sphi 0, %s149
      %s152 = sphi 0, %s151
      %s166 = sphi 0, %s152
      %s170 = sphi 0, %s170
      %s172 = sphi 0, %s170
      %s173 = sphi 0, %s172
      %s187 = sphi 0, %s173
      %s191 = sphi 0, %s191
      %s193 = sphi 0, %s191
      %s194 = sphi 0, %s193
      %s208 = sphi 0, %s194
      %s212 = sphi 0, %s212
      %s214 = sphi 0, %s212
      %s215 = sphi 0, %s214
      %s229 = sphi 0, %s215
      %s233 = sphi 0, %s233
      %s235 = sphi 0, %s233
      %s236 = sphi 0, %s235
      %s250 = sphi 0, %s236
      %s254 = sphi 0, %s254
      %s256 = sphi 0, %s254
      %s257 = sphi 0, %s256
      %s271 = sphi 0, %s257
      %s275 = sphi 0, %s275
      %s277 = sphi 0, %s275
      %s278 = sphi 0, %s277
      %s292 = sphi 0, %s278
      %s296 = sphi 0, %s296
      %s298 = sphi 0, %s296
      %s299 = sphi 0, %s298
      %s313 = sphi 0, %s299
      %s317 = sphi 0, %s317
      %s319 = sphi 0, %s317
      %s320 = sphi 0, %s319
      %s334 = sphi 0, %s320
      %s338 = sphi 0, %s338
      %s340 = sphi 0, %s338
      %s341 = sphi 0, %s340
      %s355 = sphi 0, %s341
      %s359 = sphi 0, %s359
      %s361 = sphi 0, %s359
      %s362 = sphi 0, %s361
      %s376 = sphi 0, %s362
      %s380 = sphi 0, %s380
      %s382 = sphi 0, %s380
      %s383 = sphi 0, %s382
      %s397 = sphi 0, %s383
      %s401 = sphi 0, %s401
      %s403 = sphi 0, %s401
      %s404 = sphi 0, %s403
      %s418 = sphi 0, %s404
      %s422 = sphi 0, %s422
      %s424 = sphi 0, %s422
      %s425 = sphi 0, %s424
      %s439 = sphi 0, %s425
      %s443 = sphi 0, %s443
      %s445 = sphi 0, %s443
      %s446 = sphi 0, %s445
      %s460 = sphi 0, %s446
      %s464 = sphi 0, %s464
      %s466 = sphi 0, %s464
      %s467 = sphi 0, %s466
      %s481 = sphi 0, %s467
      %s485 = sphi 0, %s485
      %s487 = sphi 0, %s485
      %s488 = sphi 0, %s487
      %s502 = sphi 0, %s488
      %s506 = sphi 0, %s506
      %s508 = sphi 0, %s506
      %s509 = sphi 0, %s508
      %s523 = sphi 0, %s509
      %s527 = sphi 0, %s527
      %s529 = sphi 0, %s527
      %s530 = sphi 0, %s529
      %s544 = sphi 0, %s530
      %s548 = sphi 0, %s548
      %s550 = sphi 0, %s548
      %s551 = sphi 0, %s550
      %s565 = sphi 0, %s551
      %s569 = sphi 0, %s569
      %s571 = sphi 0, %s569
      %s572 = sphi 0, %s571
      %s586 = sphi 0, %s572
      %s590 = sphi 0, %s590
      %s592 = sphi 0, %s590
      %s593 = sphi 0, %s592
      %s607 = sphi 0, %s593
      %s611 = sphi 0, %s611
      %s613 = sphi 0, %s611
      %s614 = sphi 0, %s613
      %s628 = sphi 0, %s614
      %s632 = sphi 0, %s632
      %s634 = sphi 0, %s632
      %s635 = sphi 0, %s634
      %s649 = sphi 0, %s635
      %s653 = sphi 0, %s653
      %s655 = sphi 0, %s653
      %s656 = sphi 0, %s655
      %s670 = sphi 0, %s656
      %s674 = sphi 0, %s674
      %s676 = sphi 0, %s674
      %s677 = sphi 0, %s676
      %s691 = sphi 0, %s677
      %s695 = sphi 0, %s695
      %s697 = sphi 0, %s695
      %s698 = sphi 0, %s697
      %s712 = sphi 0, %s698
      %s716 = sphi 0, %s716
      %s718 = sphi 0, %s716
      %s719 = sphi 0, %s718
      %s733 = sphi 0, %s719
      %s737 = sphi 0, %s737
      %s739 = sphi 0, %s737
      %s740 = sphi 0, %s739
      %s754 = sphi 0, %s740
      %s758 = sphi 0, %s758
      %s760 = sphi 0, %s758
      %s761 = sphi 0, %s760
      %s775 = sphi 0, %s761
      %s779 = sphi 0, %s779
      %s781 = sphi 0, %s779
      %s782 = sphi 0, %s781
      %s796 = sphi 0, %s782
      %s800 = sphi 0, %s800
      %s802 = sphi 0, %s800
      %s803 = sphi 0, %s802
      %s817 = sphi 0, %s803
      %s821 = sphi 0, %s821
      %s823 = sphi 0, %s821
      %s824 = sphi 0, %s823
      %s838 = sphi 0, %s824
      %s842 = sphi 0, %s842
      %s844 = sphi 0, %s842
      %s845 = sphi 0, %s844
      %s859 = sphi 0, %s845
      %s863 = sphi 0, %s863
      %s865 = sphi 0, %s863
      %s866 = sphi 0, %s865
      %s880 = sphi 0, %s866
      %s884 = sphi 0, %s884
      %s886 = sphi 0, %s884
      %s887 = sphi 0, %s886
      %s901 = sphi 0, %s887
      %s905 = sphi 0, %s905
      %s907 = sphi 0, %s905
      %s908 = sphi 0, %s907
      %s922 = sphi 0, %s908
      %s926 = sphi 0, %s926
      %s928 = sphi 0, %s926
      %s929 = sphi 0, %s928
      %s943 = sphi 0, %s929
      %s947 = sphi 0, %s947
      %s949 = sphi 0, %s947
      %s950 = sphi 0, %s949
      %s964 = sphi 0, %s950
      %s968 = sphi 0, %s968
      %s970 = sphi 0, %s968
      %s971 = sphi 0, %s970
      %s985 = sphi 0, %s971
      %s989 = sphi 0, %s989
      %s991 = sphi 0, %s989
      %s992 = sphi 0, %s991
      %s1006 = sphi 0, %s992
      %s1010 = sphi 0, %s1010
      %s1012 = sphi 0, %s1010
      %s1013 = sphi 0, %s1012
      %s1027 = sphi 0, %s1013
      %s1031 = sphi 0, %s1031
      %s1033 = sphi 0, %s1031
      %s1034 = sphi 0, %s1033
      %s1048 = sphi 0, %s1034
      %s1052 = sphi 0, %s1052
      %s1054 = sphi 0, %s1052
      %s1055 = sphi 0, %s1054
      %s1069 = sphi 0, %s1055
      %s1073 = sphi 0, %s1073
      %s1075 = sphi 0, %s1073
      %s1076 = sphi 0, %s1075
      %s1090 = sphi 0, %s1076
      %s1094 = sphi 0, %s1094
      %s1096 = sphi 0, %s1094
      %s1097 = sphi 0, %s1096
      %s1111 = sphi 0, %s1097
      %s1115 = sphi 0, %s1115
      %s1117 = sphi 0, %s1115
      %s1118 = sphi 0, %s1117
      %s1132 = sphi 0, %s1118
      %s1136 = sphi 0, %s1136
      %s1138 = sphi 0, %s1136
      %s1139 = sphi 0, %s1138
      %s1153 = sphi 0, %s1139
      %s1157 = sphi 0, %s1157
      %s1159 = sphi 0, %s1157
      %s1160 = sphi 0, %s1159
      %s1174 = sphi 0, %s1160
      %s1180 = sphi 0, %s1182
      %s1183 = sphi 0, %s1180
      %s1184 = sphi 0, %s1183
      %s1200 = sphi 0, %s1184
    $region4: #{_lambda_.1} parent=1 // loop_header_branch
      %118 = sbr.rel (%p116) target = $region8
    $region5: #{_lambda_.1} parent=1 // loop_body
      %s120 = ssub.s32 %s115, 1
      %s121 = ssub.s32 %s115, 2
      %s122 = sadd.s32 %s115, 1
      %s123 = ssub.s32 %s115, %s122
      %p124 = scmp.eq.s32.totalorder %s123, 0
      %s126 = sadd.s32 %s125, 1
      %s127 = scalar_select %p124, %s125, %s126
      %p130 = pneg %p124
      %p131 = scmp.eq.s32.totalorder %s115, 1
      %p132 = por %p130, %p131
      %p133 = scmp.ne.s32.totalorder %s125, %s128
      %p134 = scmp.eq.s32.totalorder %s115, 0
      %p135 = por %p133, %p134
      %p136 = scmp.ne.s32.totalorder %s125, %s128
      %p137 = scmp.eq.s32.totalorder %s120, 1
      %p138 = por %p136, %p137
      %p139 = scmp.ne.s32.totalorder %s128, %s129
      %p140 = scmp.eq.s32.totalorder %s120, 0
      %p141 = por %p139, %p140
      %p142 = scmp.ne.s32.totalorder %s128, %s129
      %p143 = scmp.eq.s32.totalorder %s121, 1
      %p144 = por %p142, %p143
      %p146 = scmp.ne.s32.totalorder %s129, %s145
      %p147 = scmp.eq.s32.totalorder %s121, 0
      %p148 = por %p146, %p147
      %s150 = sadd.s32 %s149, 1
      %p153 = scmp.eq.s32.totalorder %s115, 1
      %p154 = scmp.ne.s32.totalorder %s149, %s151
      %p155 = scmp.eq.s32.totalorder %s115, 0
      %p156 = por %p154, %p155
      %p157 = scmp.ne.s32.totalorder %s149, %s151
      %p158 = scmp.eq.s32.totalorder %s120, 1
      %p159 = por %p157, %p158
      %p160 = scmp.ne.s32.totalorder %s151, %s152
      %p161 = scmp.eq.s32.totalorder %s120, 0
      %p162 = por %p160, %p161
      %p163 = scmp.ne.s32.totalorder %s151, %s152
      %p164 = scmp.eq.s32.totalorder %s121, 1
      %p165 = por %p163, %p164
      %p167 = scmp.ne.s32.totalorder %s152, %s166
      %p168 = scmp.eq.s32.totalorder %s121, 0
      %p169 = por %p167, %p168
      %s171 = sadd.s32 %s170, 1
      %p174 = scmp.eq.s32.totalorder %s115, 1
      %p175 = scmp.ne.s32.totalorder %s170, %s172
      %p176 = scmp.eq.s32.totalorder %s115, 0
      %p177 = por %p175, %p176
      %p178 = scmp.ne.s32.totalorder %s170, %s172
      %p179 = scmp.eq.s32.totalorder %s120, 1
      %p180 = por %p178, %p179
      %p181 = scmp.ne.s32.totalorder %s172, %s173
      %p182 = scmp.eq.s32.totalorder %s120, 0
      %p183 = por %p181, %p182
      %p184 = scmp.ne.s32.totalorder %s172, %s173
      %p185 = scmp.eq.s32.totalorder %s121, 1
      %p186 = por %p184, %p185
      %p188 = scmp.ne.s32.totalorder %s173, %s187
      %p189 = scmp.eq.s32.totalorder %s121, 0
      %p190 = por %p188, %p189
      %s192 = sadd.s32 %s191, 1
      %p195 = scmp.eq.s32.totalorder %s115, 1
      %p196 = scmp.ne.s32.totalorder %s191, %s193
      %p197 = scmp.eq.s32.totalorder %s115, 0
      %p198 = por %p196, %p197
      %p199 = scmp.ne.s32.totalorder %s191, %s193
      %p200 = scmp.eq.s32.totalorder %s120, 1
      %p201 = por %p199, %p200
      %p202 = scmp.ne.s32.totalorder %s193, %s194
      %p203 = scmp.eq.s32.totalorder %s120, 0
      %p204 = por %p202, %p203
      %p205 = scmp.ne.s32.totalorder %s193, %s194
      %p206 = scmp.eq.s32.totalorder %s121, 1
      %p207 = por %p205, %p206
      %p209 = scmp.ne.s32.totalorder %s194, %s208
      %p210 = scmp.eq.s32.totalorder %s121, 0
      %p211 = por %p209, %p210
      %s213 = sadd.s32 %s212, 1
      %p216 = scmp.eq.s32.totalorder %s115, 1
      %p217 = scmp.ne.s32.totalorder %s212, %s214
      %p218 = scmp.eq.s32.totalorder %s115, 0
      %p219 = por %p217, %p218
      %p220 = scmp.ne.s32.totalorder %s212, %s214
      %p221 = scmp.eq.s32.totalorder %s120, 1
      %p222 = por %p220, %p221
      %p223 = scmp.ne.s32.totalorder %s214, %s215
      %p224 = scmp.eq.s32.totalorder %s120, 0
      %p225 = por %p223, %p224
      %p226 = scmp.ne.s32.totalorder %s214, %s215
      %p227 = scmp.eq.s32.totalorder %s121, 1
      %p228 = por %p226, %p227
      %p230 = scmp.ne.s32.totalorder %s215, %s229
      %p231 = scmp.eq.s32.totalorder %s121, 0
      %p232 = por %p230, %p231
      %s234 = sadd.s32 %s233, 1
      %p237 = scmp.eq.s32.totalorder %s115, 1
      %p238 = scmp.ne.s32.totalorder %s233, %s235
      %p239 = scmp.eq.s32.totalorder %s115, 0
      %p240 = por %p238, %p239
      %p241 = scmp.ne.s32.totalorder %s233, %s235
      %p242 = scmp.eq.s32.totalorder %s120, 1
      %p243 = por %p241, %p242
      %p244 = scmp.ne.s32.totalorder %s235, %s236
      %p245 = scmp.eq.s32.totalorder %s120, 0
      %p246 = por %p244, %p245
      %p247 = scmp.ne.s32.totalorder %s235, %s236
      %p248 = scmp.eq.s32.totalorder %s121, 1
      %p249 = por %p247, %p248
      %p251 = scmp.ne.s32.totalorder %s236, %s250
      %p252 = scmp.eq.s32.totalorder %s121, 0
      %p253 = por %p251, %p252
      %s255 = sadd.s32 %s254, 1
      %p258 = scmp.eq.s32.totalorder %s115, 1
      %p259 = scmp.ne.s32.totalorder %s254, %s256
      %p260 = scmp.eq.s32.totalorder %s115, 0
      %p261 = por %p259, %p260
      %p262 = scmp.ne.s32.totalorder %s254, %s256
      %p263 = scmp.eq.s32.totalorder %s120, 1
      %p264 = por %p262, %p263
      %p265 = scmp.ne.s32.totalorder %s256, %s257
      %p266 = scmp.eq.s32.totalorder %s120, 0
      %p267 = por %p265, %p266
      %p268 = scmp.ne.s32.totalorder %s256, %s257
      %p269 = scmp.eq.s32.totalorder %s121, 1
      %p270 = por %p268, %p269
      %p272 = scmp.ne.s32.totalorder %s257, %s271
      %p273 = scmp.eq.s32.totalorder %s121, 0
      %p274 = por %p272, %p273
      %s276 = sadd.s32 %s275, 1
      %p279 = scmp.eq.s32.totalorder %s115, 1
      %p280 = scmp.ne.s32.totalorder %s275, %s277
      %p281 = scmp.eq.s32.totalorder %s115, 0
      %p282 = por %p280, %p281
      %p283 = scmp.ne.s32.totalorder %s275, %s277
      %p284 = scmp.eq.s32.totalorder %s120, 1
      %p285 = por %p283, %p284
      %p286 = scmp.ne.s32.totalorder %s277, %s278
      %p287 = scmp.eq.s32.totalorder %s120, 0
      %p288 = por %p286, %p287
      %p289 = scmp.ne.s32.totalorder %s277, %s278
      %p290 = scmp.eq.s32.totalorder %s121, 1
      %p291 = por %p289, %p290
      %p293 = scmp.ne.s32.totalorder %s278, %s292
      %p294 = scmp.eq.s32.totalorder %s121, 0
      %p295 = por %p293, %p294
      %s297 = sadd.s32 %s296, 1
      %p300 = scmp.eq.s32.totalorder %s115, 1
      %p301 = scmp.ne.s32.totalorder %s296, %s298
      %p302 = scmp.eq.s32.totalorder %s115, 0
      %p303 = por %p301, %p302
      %p304 = scmp.ne.s32.totalorder %s296, %s298
      %p305 = scmp.eq.s32.totalorder %s120, 1
      %p306 = por %p304, %p305
      %p307 = scmp.ne.s32.totalorder %s298, %s299
      %p308 = scmp.eq.s32.totalorder %s120, 0
      %p309 = por %p307, %p308
      %p310 = scmp.ne.s32.totalorder %s298, %s299
      %p311 = scmp.eq.s32.totalorder %s121, 1
      %p312 = por %p310, %p311
      %p314 = scmp.ne.s32.totalorder %s299, %s313
      %p315 = scmp.eq.s32.totalorder %s121, 0
      %p316 = por %p314, %p315
      %s318 = sadd.s32 %s317, 1
      %p321 = scmp.eq.s32.totalorder %s115, 1
      %p322 = scmp.ne.s32.totalorder %s317, %s319
      %p323 = scmp.eq.s32.totalorder %s115, 0
      %p324 = por %p322, %p323
      %p325 = scmp.ne.s32.totalorder %s317, %s319
      %p326 = scmp.eq.s32.totalorder %s120, 1
      %p327 = por %p325, %p326
      %p328 = scmp.ne.s32.totalorder %s319, %s320
      %p329 = scmp.eq.s32.totalorder %s120, 0
      %p330 = por %p328, %p329
      %p331 = scmp.ne.s32.totalorder %s319, %s320
      %p332 = scmp.eq.s32.totalorder %s121, 1
      %p333 = por %p331, %p332
      %p335 = scmp.ne.s32.totalorder %s320, %s334
      %p336 = scmp.eq.s32.totalorder %s121, 0
      %p337 = por %p335, %p336
      %s339 = sadd.s32 %s338, 1
      %p342 = scmp.eq.s32.totalorder %s115, 1
      %p343 = scmp.ne.s32.totalorder %s338, %s340
      %p344 = scmp.eq.s32.totalorder %s115, 0
      %p345 = por %p343, %p344
      %p346 = scmp.ne.s32.totalorder %s338, %s340
      %p347 = scmp.eq.s32.totalorder %s120, 1
      %p348 = por %p346, %p347
      %p349 = scmp.ne.s32.totalorder %s340, %s341
      %p350 = scmp.eq.s32.totalorder %s120, 0
      %p351 = por %p349, %p350
      %p352 = scmp.ne.s32.totalorder %s340, %s341
      %p353 = scmp.eq.s32.totalorder %s121, 1
      %p354 = por %p352, %p353
      %p356 = scmp.ne.s32.totalorder %s341, %s355
      %p357 = scmp.eq.s32.totalorder %s121, 0
      %p358 = por %p356, %p357
      %s360 = sadd.s32 %s359, 1
      %p363 = scmp.eq.s32.totalorder %s115, 1
      %p364 = scmp.ne.s32.totalorder %s359, %s361
      %p365 = scmp.eq.s32.totalorder %s115, 0
      %p366 = por %p364, %p365
      %p367 = scmp.ne.s32.totalorder %s359, %s361
      %p368 = scmp.eq.s32.totalorder %s120, 1
      %p369 = por %p367, %p368
      %p370 = scmp.ne.s32.totalorder %s361, %s362
      %p371 = scmp.eq.s32.totalorder %s120, 0
      %p372 = por %p370, %p371
      %p373 = scmp.ne.s32.totalorder %s361, %s362
      %p374 = scmp.eq.s32.totalorder %s121, 1
      %p375 = por %p373, %p374
      %p377 = scmp.ne.s32.totalorder %s362, %s376
      %p378 = scmp.eq.s32.totalorder %s121, 0
      %p379 = por %p377, %p378
      %s381 = sadd.s32 %s380, 1
      %p384 = scmp.eq.s32.totalorder %s115, 1
      %p385 = scmp.ne.s32.totalorder %s380, %s382
      %p386 = scmp.eq.s32.totalorder %s115, 0
      %p387 = por %p385, %p386
      %p388 = scmp.ne.s32.totalorder %s380, %s382
      %p389 = scmp.eq.s32.totalorder %s120, 1
      %p390 = por %p388, %p389
      %p391 = scmp.ne.s32.totalorder %s382, %s383
      %p392 = scmp.eq.s32.totalorder %s120, 0
      %p393 = por %p391, %p392
      %p394 = scmp.ne.s32.totalorder %s382, %s383
      %p395 = scmp.eq.s32.totalorder %s121, 1
      %p396 = por %p394, %p395
      %p398 = scmp.ne.s32.totalorder %s383, %s397
      %p399 = scmp.eq.s32.totalorder %s121, 0
      %p400 = por %p398, %p399
      %s402 = sadd.s32 %s401, 1
      %p405 = scmp.eq.s32.totalorder %s115, 1
      %p406 = scmp.ne.s32.totalorder %s401, %s403
      %p407 = scmp.eq.s32.totalorder %s115, 0
      %p408 = por %p406, %p407
      %p409 = scmp.ne.s32.totalorder %s401, %s403
      %p410 = scmp.eq.s32.totalorder %s120, 1
      %p411 = por %p409, %p410
      %p412 = scmp.ne.s32.totalorder %s403, %s404
      %p413 = scmp.eq.s32.totalorder %s120, 0
      %p414 = por %p412, %p413
      %p415 = scmp.ne.s32.totalorder %s403, %s404
      %p416 = scmp.eq.s32.totalorder %s121, 1
      %p417 = por %p415, %p416
      %p419 = scmp.ne.s32.totalorder %s404, %s418
      %p420 = scmp.eq.s32.totalorder %s121, 0
      %p421 = por %p419, %p420
      %s423 = sadd.s32 %s422, 1
      %p426 = scmp.eq.s32.totalorder %s115, 1
      %p427 = scmp.ne.s32.totalorder %s422, %s424
      %p428 = scmp.eq.s32.totalorder %s115, 0
      %p429 = por %p427, %p428
      %p430 = scmp.ne.s32.totalorder %s422, %s424
      %p431 = scmp.eq.s32.totalorder %s120, 1
      %p432 = por %p430, %p431
      %p433 = scmp.ne.s32.totalorder %s424, %s425
      %p434 = scmp.eq.s32.totalorder %s120, 0
      %p435 = por %p433, %p434
      %p436 = scmp.ne.s32.totalorder %s424, %s425
      %p437 = scmp.eq.s32.totalorder %s121, 1
      %p438 = por %p436, %p437
      %p440 = scmp.ne.s32.totalorder %s425, %s439
      %p441 = scmp.eq.s32.totalorder %s121, 0
      %p442 = por %p440, %p441
      %s444 = sadd.s32 %s443, 1
      %p447 = scmp.eq.s32.totalorder %s115, 1
      %p448 = scmp.ne.s32.totalorder %s443, %s445
      %p449 = scmp.eq.s32.totalorder %s115, 0
      %p450 = por %p448, %p449
      %p451 = scmp.ne.s32.totalorder %s443, %s445
      %p452 = scmp.eq.s32.totalorder %s120, 1
      %p453 = por %p451, %p452
      %p454 = scmp.ne.s32.totalorder %s445, %s446
      %p455 = scmp.eq.s32.totalorder %s120, 0
      %p456 = por %p454, %p455
      %p457 = scmp.ne.s32.totalorder %s445, %s446
      %p458 = scmp.eq.s32.totalorder %s121, 1
      %p459 = por %p457, %p458
      %p461 = scmp.ne.s32.totalorder %s446, %s460
      %p462 = scmp.eq.s32.totalorder %s121, 0
      %p463 = por %p461, %p462
      %s465 = sadd.s32 %s464, 1
      %p468 = scmp.eq.s32.totalorder %s115, 1
      %p469 = scmp.ne.s32.totalorder %s464, %s466
      %p470 = scmp.eq.s32.totalorder %s115, 0
      %p471 = por %p469, %p470
      %p472 = scmp.ne.s32.totalorder %s464, %s466
      %p473 = scmp.eq.s32.totalorder %s120, 1
      %p474 = por %p472, %p473
      %p475 = scmp.ne.s32.totalorder %s466, %s467
      %p476 = scmp.eq.s32.totalorder %s120, 0
      %p477 = por %p475, %p476
      %p478 = scmp.ne.s32.totalorder %s466, %s467
      %p479 = scmp.eq.s32.totalorder %s121, 1
      %p480 = por %p478, %p479
      %p482 = scmp.ne.s32.totalorder %s467, %s481
      %p483 = scmp.eq.s32.totalorder %s121, 0
      %p484 = por %p482, %p483
      %s486 = sadd.s32 %s485, 1
      %p489 = scmp.eq.s32.totalorder %s115, 1
      %p490 = scmp.ne.s32.totalorder %s485, %s487
      %p491 = scmp.eq.s32.totalorder %s115, 0
      %p492 = por %p490, %p491
      %p493 = scmp.ne.s32.totalorder %s485, %s487
      %p494 = scmp.eq.s32.totalorder %s120, 1
      %p495 = por %p493, %p494
      %p496 = scmp.ne.s32.totalorder %s487, %s488
      %p497 = scmp.eq.s32.totalorder %s120, 0
      %p498 = por %p496, %p497
      %p499 = scmp.ne.s32.totalorder %s487, %s488
      %p500 = scmp.eq.s32.totalorder %s121, 1
      %p501 = por %p499, %p500
      %p503 = scmp.ne.s32.totalorder %s488, %s502
      %p504 = scmp.eq.s32.totalorder %s121, 0
      %p505 = por %p503, %p504
      %s507 = sadd.s32 %s506, 1
      %p510 = scmp.eq.s32.totalorder %s115, 1
      %p511 = scmp.ne.s32.totalorder %s506, %s508
      %p512 = scmp.eq.s32.totalorder %s115, 0
      %p513 = por %p511, %p512
      %p514 = scmp.ne.s32.totalorder %s506, %s508
      %p515 = scmp.eq.s32.totalorder %s120, 1
      %p516 = por %p514, %p515
      %p517 = scmp.ne.s32.totalorder %s508, %s509
      %p518 = scmp.eq.s32.totalorder %s120, 0
      %p519 = por %p517, %p518
      %p520 = scmp.ne.s32.totalorder %s508, %s509
      %p521 = scmp.eq.s32.totalorder %s121, 1
      %p522 = por %p520, %p521
      %p524 = scmp.ne.s32.totalorder %s509, %s523
      %p525 = scmp.eq.s32.totalorder %s121, 0
      %p526 = por %p524, %p525
      %s528 = sadd.s32 %s527, 1
      %p531 = scmp.eq.s32.totalorder %s115, 1
      %p532 = scmp.ne.s32.totalorder %s527, %s529
      %p533 = scmp.eq.s32.totalorder %s115, 0
      %p534 = por %p532, %p533
      %p535 = scmp.ne.s32.totalorder %s527, %s529
      %p536 = scmp.eq.s32.totalorder %s120, 1
      %p537 = por %p535, %p536
      %p538 = scmp.ne.s32.totalorder %s529, %s530
      %p539 = scmp.eq.s32.totalorder %s120, 0
      %p540 = por %p538, %p539
      %p541 = scmp.ne.s32.totalorder %s529, %s530
      %p542 = scmp.eq.s32.totalorder %s121, 1
      %p543 = por %p541, %p542
      %p545 = scmp.ne.s32.totalorder %s530, %s544
      %p546 = scmp.eq.s32.totalorder %s121, 0
      %p547 = por %p545, %p546
      %s549 = sadd.s32 %s548, 1
      %p552 = scmp.eq.s32.totalorder %s115, 1
      %p553 = scmp.ne.s32.totalorder %s548, %s550
      %p554 = scmp.eq.s32.totalorder %s115, 0
      %p555 = por %p553, %p554
      %p556 = scmp.ne.s32.totalorder %s548, %s550
      %p557 = scmp.eq.s32.totalorder %s120, 1
      %p558 = por %p556, %p557
      %p559 = scmp.ne.s32.totalorder %s550, %s551
      %p560 = scmp.eq.s32.totalorder %s120, 0
      %p561 = por %p559, %p560
      %p562 = scmp.ne.s32.totalorder %s550, %s551
      %p563 = scmp.eq.s32.totalorder %s121, 1
      %p564 = por %p562, %p563
      %p566 = scmp.ne.s32.totalorder %s551, %s565
      %p567 = scmp.eq.s32.totalorder %s121, 0
      %p568 = por %p566, %p567
      %s570 = sadd.s32 %s569, 1
      %p573 = scmp.eq.s32.totalorder %s115, 1
      %p574 = scmp.ne.s32.totalorder %s569, %s571
      %p575 = scmp.eq.s32.totalorder %s115, 0
      %p576 = por %p574, %p575
      %p577 = scmp.ne.s32.totalorder %s569, %s571
      %p578 = scmp.eq.s32.totalorder %s120, 1
      %p579 = por %p577, %p578
      %p580 = scmp.ne.s32.totalorder %s571, %s572
      %p581 = scmp.eq.s32.totalorder %s120, 0
      %p582 = por %p580, %p581
      %p583 = scmp.ne.s32.totalorder %s571, %s572
      %p584 = scmp.eq.s32.totalorder %s121, 1
      %p585 = por %p583, %p584
      %p587 = scmp.ne.s32.totalorder %s572, %s586
      %p588 = scmp.eq.s32.totalorder %s121, 0
      %p589 = por %p587, %p588
      %s591 = sadd.s32 %s590, 1
      %p594 = scmp.eq.s32.totalorder %s115, 1
      %p595 = scmp.ne.s32.totalorder %s590, %s592
      %p596 = scmp.eq.s32.totalorder %s115, 0
      %p597 = por %p595, %p596
      %p598 = scmp.ne.s32.totalorder %s590, %s592
      %p599 = scmp.eq.s32.totalorder %s120, 1
      %p600 = por %p598, %p599
      %p601 = scmp.ne.s32.totalorder %s592, %s593
      %p602 = scmp.eq.s32.totalorder %s120, 0
      %p603 = por %p601, %p602
      %p604 = scmp.ne.s32.totalorder %s592, %s593
      %p605 = scmp.eq.s32.totalorder %s121, 1
      %p606 = por %p604, %p605
      %p608 = scmp.ne.s32.totalorder %s593, %s607
      %p609 = scmp.eq.s32.totalorder %s121, 0
      %p610 = por %p608, %p609
      %s612 = sadd.s32 %s611, 1
      %p615 = scmp.eq.s32.totalorder %s115, 1
      %p616 = scmp.ne.s32.totalorder %s611, %s613
      %p617 = scmp.eq.s32.totalorder %s115, 0
      %p618 = por %p616, %p617
      %p619 = scmp.ne.s32.totalorder %s611, %s613
      %p620 = scmp.eq.s32.totalorder %s120, 1
      %p621 = por %p619, %p620
      %p622 = scmp.ne.s32.totalorder %s613, %s614
      %p623 = scmp.eq.s32.totalorder %s120, 0
      %p624 = por %p622, %p623
      %p625 = scmp.ne.s32.totalorder %s613, %s614
      %p626 = scmp.eq.s32.totalorder %s121, 1
      %p627 = por %p625, %p626
      %p629 = scmp.ne.s32.totalorder %s614, %s628
      %p630 = scmp.eq.s32.totalorder %s121, 0
      %p631 = por %p629, %p630
      %s633 = sadd.s32 %s632, 1
      %p636 = scmp.eq.s32.totalorder %s115, 1
      %p637 = scmp.ne.s32.totalorder %s632, %s634
      %p638 = scmp.eq.s32.totalorder %s115, 0
      %p639 = por %p637, %p638
      %p640 = scmp.ne.s32.totalorder %s632, %s634
      %p641 = scmp.eq.s32.totalorder %s120, 1
      %p642 = por %p640, %p641
      %p643 = scmp.ne.s32.totalorder %s634, %s635
      %p644 = scmp.eq.s32.totalorder %s120, 0
      %p645 = por %p643, %p644
      %p646 = scmp.ne.s32.totalorder %s634, %s635
      %p647 = scmp.eq.s32.totalorder %s121, 1
      %p648 = por %p646, %p647
      %p650 = scmp.ne.s32.totalorder %s635, %s649
      %p651 = scmp.eq.s32.totalorder %s121, 0
      %p652 = por %p650, %p651
      %s654 = sadd.s32 %s653, 1
      %p657 = scmp.eq.s32.totalorder %s115, 1
      %p658 = scmp.ne.s32.totalorder %s653, %s655
      %p659 = scmp.eq.s32.totalorder %s115, 0
      %p660 = por %p658, %p659
      %p661 = scmp.ne.s32.totalorder %s653, %s655
      %p662 = scmp.eq.s32.totalorder %s120, 1
      %p663 = por %p661, %p662
      %p664 = scmp.ne.s32.totalorder %s655, %s656
      %p665 = scmp.eq.s32.totalorder %s120, 0
      %p666 = por %p664, %p665
      %p667 = scmp.ne.s32.totalorder %s655, %s656
      %p668 = scmp.eq.s32.totalorder %s121, 1
      %p669 = por %p667, %p668
      %p671 = scmp.ne.s32.totalorder %s656, %s670
      %p672 = scmp.eq.s32.totalorder %s121, 0
      %p673 = por %p671, %p672
      %s675 = sadd.s32 %s674, 1
      %p678 = scmp.eq.s32.totalorder %s115, 1
      %p679 = scmp.ne.s32.totalorder %s674, %s676
      %p680 = scmp.eq.s32.totalorder %s115, 0
      %p681 = por %p679, %p680
      %p682 = scmp.ne.s32.totalorder %s674, %s676
      %p683 = scmp.eq.s32.totalorder %s120, 1
      %p684 = por %p682, %p683
      %p685 = scmp.ne.s32.totalorder %s676, %s677
      %p686 = scmp.eq.s32.totalorder %s120, 0
      %p687 = por %p685, %p686
      %p688 = scmp.ne.s32.totalorder %s676, %s677
      %p689 = scmp.eq.s32.totalorder %s121, 1
      %p690 = por %p688, %p689
      %p692 = scmp.ne.s32.totalorder %s677, %s691
      %p693 = scmp.eq.s32.totalorder %s121, 0
      %p694 = por %p692, %p693
      %s696 = sadd.s32 %s695, 1
      %p699 = scmp.eq.s32.totalorder %s115, 1
      %p700 = scmp.ne.s32.totalorder %s695, %s697
      %p701 = scmp.eq.s32.totalorder %s115, 0
      %p702 = por %p700, %p701
      %p703 = scmp.ne.s32.totalorder %s695, %s697
      %p704 = scmp.eq.s32.totalorder %s120, 1
      %p705 = por %p703, %p704
      %p706 = scmp.ne.s32.totalorder %s697, %s698
      %p707 = scmp.eq.s32.totalorder %s120, 0
      %p708 = por %p706, %p707
      %p709 = scmp.ne.s32.totalorder %s697, %s698
      %p710 = scmp.eq.s32.totalorder %s121, 1
      %p711 = por %p709, %p710
      %p713 = scmp.ne.s32.totalorder %s698, %s712
      %p714 = scmp.eq.s32.totalorder %s121, 0
      %p715 = por %p713, %p714
      %s717 = sadd.s32 %s716, 1
      %p720 = scmp.eq.s32.totalorder %s115, 1
      %p721 = scmp.ne.s32.totalorder %s716, %s718
      %p722 = scmp.eq.s32.totalorder %s115, 0
      %p723 = por %p721, %p722
      %p724 = scmp.ne.s32.totalorder %s716, %s718
      %p725 = scmp.eq.s32.totalorder %s120, 1
      %p726 = por %p724, %p725
      %p727 = scmp.ne.s32.totalorder %s718, %s719
      %p728 = scmp.eq.s32.totalorder %s120, 0
      %p729 = por %p727, %p728
      %p730 = scmp.ne.s32.totalorder %s718, %s719
      %p731 = scmp.eq.s32.totalorder %s121, 1
      %p732 = por %p730, %p731
      %p734 = scmp.ne.s32.totalorder %s719, %s733
      %p735 = scmp.eq.s32.totalorder %s121, 0
      %p736 = por %p734, %p735
      %s738 = sadd.s32 %s737, 1
      %p741 = scmp.eq.s32.totalorder %s115, 1
      %p742 = scmp.ne.s32.totalorder %s737, %s739
      %p743 = scmp.eq.s32.totalorder %s115, 0
      %p744 = por %p742, %p743
      %p745 = scmp.ne.s32.totalorder %s737, %s739
      %p746 = scmp.eq.s32.totalorder %s120, 1
      %p747 = por %p745, %p746
      %p748 = scmp.ne.s32.totalorder %s739, %s740
      %p749 = scmp.eq.s32.totalorder %s120, 0
      %p750 = por %p748, %p749
      %p751 = scmp.ne.s32.totalorder %s739, %s740
      %p752 = scmp.eq.s32.totalorder %s121, 1
      %p753 = por %p751, %p752
      %p755 = scmp.ne.s32.totalorder %s740, %s754
      %p756 = scmp.eq.s32.totalorder %s121, 0
      %p757 = por %p755, %p756
      %s759 = sadd.s32 %s758, 1
      %p762 = scmp.eq.s32.totalorder %s115, 1
      %p763 = scmp.ne.s32.totalorder %s758, %s760
      %p764 = scmp.eq.s32.totalorder %s115, 0
      %p765 = por %p763, %p764
      %p766 = scmp.ne.s32.totalorder %s758, %s760
      %p767 = scmp.eq.s32.totalorder %s120, 1
      %p768 = por %p766, %p767
      %p769 = scmp.ne.s32.totalorder %s760, %s761
      %p770 = scmp.eq.s32.totalorder %s120, 0
      %p771 = por %p769, %p770
      %p772 = scmp.ne.s32.totalorder %s760, %s761
      %p773 = scmp.eq.s32.totalorder %s121, 1
      %p774 = por %p772, %p773
      %p776 = scmp.ne.s32.totalorder %s761, %s775
      %p777 = scmp.eq.s32.totalorder %s121, 0
      %p778 = por %p776, %p777
      %s780 = sadd.s32 %s779, 1
      %p783 = scmp.eq.s32.totalorder %s115, 1
      %p784 = scmp.ne.s32.totalorder %s779, %s781
      %p785 = scmp.eq.s32.totalorder %s115, 0
      %p786 = por %p784, %p785
      %p787 = scmp.ne.s32.totalorder %s779, %s781
      %p788 = scmp.eq.s32.totalorder %s120, 1
      %p789 = por %p787, %p788
      %p790 = scmp.ne.s32.totalorder %s781, %s782
      %p791 = scmp.eq.s32.totalorder %s120, 0
      %p792 = por %p790, %p791
      %p793 = scmp.ne.s32.totalorder %s781, %s782
      %p794 = scmp.eq.s32.totalorder %s121, 1
      %p795 = por %p793, %p794
      %p797 = scmp.ne.s32.totalorder %s782, %s796
      %p798 = scmp.eq.s32.totalorder %s121, 0
      %p799 = por %p797, %p798
      %s801 = sadd.s32 %s800, 1
      %p804 = scmp.eq.s32.totalorder %s115, 1
      %p805 = scmp.ne.s32.totalorder %s800, %s802
      %p806 = scmp.eq.s32.totalorder %s115, 0
      %p807 = por %p805, %p806
      %p808 = scmp.ne.s32.totalorder %s800, %s802
      %p809 = scmp.eq.s32.totalorder %s120, 1
      %p810 = por %p808, %p809
      %p811 = scmp.ne.s32.totalorder %s802, %s803
      %p812 = scmp.eq.s32.totalorder %s120, 0
      %p813 = por %p811, %p812
      %p814 = scmp.ne.s32.totalorder %s802, %s803
      %p815 = scmp.eq.s32.totalorder %s121, 1
      %p816 = por %p814, %p815
      %p818 = scmp.ne.s32.totalorder %s803, %s817
      %p819 = scmp.eq.s32.totalorder %s121, 0
      %p820 = por %p818, %p819
      %s822 = sadd.s32 %s821, 1
      %p825 = scmp.eq.s32.totalorder %s115, 1
      %p826 = scmp.ne.s32.totalorder %s821, %s823
      %p827 = scmp.eq.s32.totalorder %s115, 0
      %p828 = por %p826, %p827
      %p829 = scmp.ne.s32.totalorder %s821, %s823
      %p830 = scmp.eq.s32.totalorder %s120, 1
      %p831 = por %p829, %p830
      %p832 = scmp.ne.s32.totalorder %s823, %s824
      %p833 = scmp.eq.s32.totalorder %s120, 0
      %p834 = por %p832, %p833
      %p835 = scmp.ne.s32.totalorder %s823, %s824
      %p836 = scmp.eq.s32.totalorder %s121, 1
      %p837 = por %p835, %p836
      %p839 = scmp.ne.s32.totalorder %s824, %s838
      %p840 = scmp.eq.s32.totalorder %s121, 0
      %p841 = por %p839, %p840
      %s843 = sadd.s32 %s842, 1
      %p846 = scmp.eq.s32.totalorder %s115, 1
      %p847 = scmp.ne.s32.totalorder %s842, %s844
      %p848 = scmp.eq.s32.totalorder %s115, 0
      %p849 = por %p847, %p848
      %p850 = scmp.ne.s32.totalorder %s842, %s844
      %p851 = scmp.eq.s32.totalorder %s120, 1
      %p852 = por %p850, %p851
      %p853 = scmp.ne.s32.totalorder %s844, %s845
      %p854 = scmp.eq.s32.totalorder %s120, 0
      %p855 = por %p853, %p854
      %p856 = scmp.ne.s32.totalorder %s844, %s845
      %p857 = scmp.eq.s32.totalorder %s121, 1
      %p858 = por %p856, %p857
      %p860 = scmp.ne.s32.totalorder %s845, %s859
      %p861 = scmp.eq.s32.totalorder %s121, 0
      %p862 = por %p860, %p861
      %s864 = sadd.s32 %s863, 1
      %p867 = scmp.eq.s32.totalorder %s115, 1
      %p868 = scmp.ne.s32.totalorder %s863, %s865
      %p869 = scmp.eq.s32.totalorder %s115, 0
      %p870 = por %p868, %p869
      %p871 = scmp.ne.s32.totalorder %s863, %s865
      %p872 = scmp.eq.s32.totalorder %s120, 1
      %p873 = por %p871, %p872
      %p874 = scmp.ne.s32.totalorder %s865, %s866
      %p875 = scmp.eq.s32.totalorder %s120, 0
      %p876 = por %p874, %p875
      %p877 = scmp.ne.s32.totalorder %s865, %s866
      %p878 = scmp.eq.s32.totalorder %s121, 1
      %p879 = por %p877, %p878
      %p881 = scmp.ne.s32.totalorder %s866, %s880
      %p882 = scmp.eq.s32.totalorder %s121, 0
      %p883 = por %p881, %p882
      %s885 = sadd.s32 %s884, 1
      %p888 = scmp.eq.s32.totalorder %s115, 1
      %p889 = scmp.ne.s32.totalorder %s884, %s886
      %p890 = scmp.eq.s32.totalorder %s115, 0
      %p891 = por %p889, %p890
      %p892 = scmp.ne.s32.totalorder %s884, %s886
      %p893 = scmp.eq.s32.totalorder %s120, 1
      %p894 = por %p892, %p893
      %p895 = scmp.ne.s32.totalorder %s886, %s887
      %p896 = scmp.eq.s32.totalorder %s120, 0
      %p897 = por %p895, %p896
      %p898 = scmp.ne.s32.totalorder %s886, %s887
      %p899 = scmp.eq.s32.totalorder %s121, 1
      %p900 = por %p898, %p899
      %p902 = scmp.ne.s32.totalorder %s887, %s901
      %p903 = scmp.eq.s32.totalorder %s121, 0
      %p904 = por %p902, %p903
      %s906 = sadd.s32 %s905, 1
      %p909 = scmp.eq.s32.totalorder %s115, 1
      %p910 = scmp.ne.s32.totalorder %s905, %s907
      %p911 = scmp.eq.s32.totalorder %s115, 0
      %p912 = por %p910, %p911
      %p913 = scmp.ne.s32.totalorder %s905, %s907
      %p914 = scmp.eq.s32.totalorder %s120, 1
      %p915 = por %p913, %p914
      %p916 = scmp.ne.s32.totalorder %s907, %s908
      %p917 = scmp.eq.s32.totalorder %s120, 0
      %p918 = por %p916, %p917
      %p919 = scmp.ne.s32.totalorder %s907, %s908
      %p920 = scmp.eq.s32.totalorder %s121, 1
      %p921 = por %p919, %p920
      %p923 = scmp.ne.s32.totalorder %s908, %s922
      %p924 = scmp.eq.s32.totalorder %s121, 0
      %p925 = por %p923, %p924
      %s927 = sadd.s32 %s926, 1
      %p930 = scmp.eq.s32.totalorder %s115, 1
      %p931 = scmp.ne.s32.totalorder %s926, %s928
      %p932 = scmp.eq.s32.totalorder %s115, 0
      %p933 = por %p931, %p932
      %p934 = scmp.ne.s32.totalorder %s926, %s928
      %p935 = scmp.eq.s32.totalorder %s120, 1
      %p936 = por %p934, %p935
      %p937 = scmp.ne.s32.totalorder %s928, %s929
      %p938 = scmp.eq.s32.totalorder %s120, 0
      %p939 = por %p937, %p938
      %p940 = scmp.ne.s32.totalorder %s928, %s929
      %p941 = scmp.eq.s32.totalorder %s121, 1
      %p942 = por %p940, %p941
      %p944 = scmp.ne.s32.totalorder %s929, %s943
      %p945 = scmp.eq.s32.totalorder %s121, 0
      %p946 = por %p944, %p945
      %s948 = sadd.s32 %s947, 1
      %p951 = scmp.eq.s32.totalorder %s115, 1
      %p952 = scmp.ne.s32.totalorder %s947, %s949
      %p953 = scmp.eq.s32.totalorder %s115, 0
      %p954 = por %p952, %p953
      %p955 = scmp.ne.s32.totalorder %s947, %s949
      %p956 = scmp.eq.s32.totalorder %s120, 1
      %p957 = por %p955, %p956
      %p958 = scmp.ne.s32.totalorder %s949, %s950
      %p959 = scmp.eq.s32.totalorder %s120, 0
      %p960 = por %p958, %p959
      %p961 = scmp.ne.s32.totalorder %s949, %s950
      %p962 = scmp.eq.s32.totalorder %s121, 1
      %p963 = por %p961, %p962
      %p965 = scmp.ne.s32.totalorder %s950, %s964
      %p966 = scmp.eq.s32.totalorder %s121, 0
      %p967 = por %p965, %p966
      %s969 = sadd.s32 %s968, 1
      %p972 = scmp.eq.s32.totalorder %s115, 1
      %p973 = scmp.ne.s32.totalorder %s968, %s970
      %p974 = scmp.eq.s32.totalorder %s115, 0
      %p975 = por %p973, %p974
      %p976 = scmp.ne.s32.totalorder %s968, %s970
      %p977 = scmp.eq.s32.totalorder %s120, 1
      %p978 = por %p976, %p977
      %p979 = scmp.ne.s32.totalorder %s970, %s971
      %p980 = scmp.eq.s32.totalorder %s120, 0
      %p981 = por %p979, %p980
      %p982 = scmp.ne.s32.totalorder %s970, %s971
      %p983 = scmp.eq.s32.totalorder %s121, 1
      %p984 = por %p982, %p983
      %p986 = scmp.ne.s32.totalorder %s971, %s985
      %p987 = scmp.eq.s32.totalorder %s121, 0
      %p988 = por %p986, %p987
      %s990 = sadd.s32 %s989, 1
      %p993 = scmp.eq.s32.totalorder %s115, 1
      %p994 = scmp.ne.s32.totalorder %s989, %s991
      %p995 = scmp.eq.s32.totalorder %s115, 0
      %p996 = por %p994, %p995
      %p997 = scmp.ne.s32.totalorder %s989, %s991
      %p998 = scmp.eq.s32.totalorder %s120, 1
      %p999 = por %p997, %p998
      %p1000 = scmp.ne.s32.totalorder %s991, %s992
      %p1001 = scmp.eq.s32.totalorder %s120, 0
      %p1002 = por %p1000, %p1001
      %p1003 = scmp.ne.s32.totalorder %s991, %s992
      %p1004 = scmp.eq.s32.totalorder %s121, 1
      %p1005 = por %p1003, %p1004
      %p1007 = scmp.ne.s32.totalorder %s992, %s1006
      %p1008 = scmp.eq.s32.totalorder %s121, 0
      %p1009 = por %p1007, %p1008
      %s1011 = sadd.s32 %s1010, 1
      %p1014 = scmp.eq.s32.totalorder %s115, 1
      %p1015 = scmp.ne.s32.totalorder %s1010, %s1012
      %p1016 = scmp.eq.s32.totalorder %s115, 0
      %p1017 = por %p1015, %p1016
      %p1018 = scmp.ne.s32.totalorder %s1010, %s1012
      %p1019 = scmp.eq.s32.totalorder %s120, 1
      %p1020 = por %p1018, %p1019
      %p1021 = scmp.ne.s32.totalorder %s1012, %s1013
      %p1022 = scmp.eq.s32.totalorder %s120, 0
      %p1023 = por %p1021, %p1022
      %p1024 = scmp.ne.s32.totalorder %s1012, %s1013
      %p1025 = scmp.eq.s32.totalorder %s121, 1
      %p1026 = por %p1024, %p1025
      %p1028 = scmp.ne.s32.totalorder %s1013, %s1027
      %p1029 = scmp.eq.s32.totalorder %s121, 0
      %p1030 = por %p1028, %p1029
      %s1032 = sadd.s32 %s1031, 1
      %p1035 = scmp.eq.s32.totalorder %s115, 1
      %p1036 = scmp.ne.s32.totalorder %s1031, %s1033
      %p1037 = scmp.eq.s32.totalorder %s115, 0
      %p1038 = por %p1036, %p1037
      %p1039 = scmp.ne.s32.totalorder %s1031, %s1033
      %p1040 = scmp.eq.s32.totalorder %s120, 1
      %p1041 = por %p1039, %p1040
      %p1042 = scmp.ne.s32.totalorder %s1033, %s1034
      %p1043 = scmp.eq.s32.totalorder %s120, 0
      %p1044 = por %p1042, %p1043
      %p1045 = scmp.ne.s32.totalorder %s1033, %s1034
      %p1046 = scmp.eq.s32.totalorder %s121, 1
      %p1047 = por %p1045, %p1046
      %p1049 = scmp.ne.s32.totalorder %s1034, %s1048
      %p1050 = scmp.eq.s32.totalorder %s121, 0
      %p1051 = por %p1049, %p1050
      %s1053 = sadd.s32 %s1052, 1
      %p1056 = scmp.eq.s32.totalorder %s115, 1
      %p1057 = scmp.ne.s32.totalorder %s1052, %s1054
      %p1058 = scmp.eq.s32.totalorder %s115, 0
      %p1059 = por %p1057, %p1058
      %p1060 = scmp.ne.s32.totalorder %s1052, %s1054
      %p1061 = scmp.eq.s32.totalorder %s120, 1
      %p1062 = por %p1060, %p1061
      %p1063 = scmp.ne.s32.totalorder %s1054, %s1055
      %p1064 = scmp.eq.s32.totalorder %s120, 0
      %p1065 = por %p1063, %p1064
      %p1066 = scmp.ne.s32.totalorder %s1054, %s1055
      %p1067 = scmp.eq.s32.totalorder %s121, 1
      %p1068 = por %p1066, %p1067
      %p1070 = scmp.ne.s32.totalorder %s1055, %s1069
      %p1071 = scmp.eq.s32.totalorder %s121, 0
      %p1072 = por %p1070, %p1071
      %s1074 = sadd.s32 %s1073, 1
      %p1077 = scmp.eq.s32.totalorder %s115, 1
      %p1078 = scmp.ne.s32.totalorder %s1073, %s1075
      %p1079 = scmp.eq.s32.totalorder %s115, 0
      %p1080 = por %p1078, %p1079
      %p1081 = scmp.ne.s32.totalorder %s1073, %s1075
      %p1082 = scmp.eq.s32.totalorder %s120, 1
      %p1083 = por %p1081, %p1082
      %p1084 = scmp.ne.s32.totalorder %s1075, %s1076
      %p1085 = scmp.eq.s32.totalorder %s120, 0
      %p1086 = por %p1084, %p1085
      %p1087 = scmp.ne.s32.totalorder %s1075, %s1076
      %p1088 = scmp.eq.s32.totalorder %s121, 1
      %p1089 = por %p1087, %p1088
      %p1091 = scmp.ne.s32.totalorder %s1076, %s1090
      %p1092 = scmp.eq.s32.totalorder %s121, 0
      %p1093 = por %p1091, %p1092
      %s1095 = sadd.s32 %s1094, 1
      %p1098 = scmp.eq.s32.totalorder %s115, 1
      %p1099 = scmp.ne.s32.totalorder %s1094, %s1096
      %p1100 = scmp.eq.s32.totalorder %s115, 0
      %p1101 = por %p1099, %p1100
      %p1102 = scmp.ne.s32.totalorder %s1094, %s1096
      %p1103 = scmp.eq.s32.totalorder %s120, 1
      %p1104 = por %p1102, %p1103
      %p1105 = scmp.ne.s32.totalorder %s1096, %s1097
      %p1106 = scmp.eq.s32.totalorder %s120, 0
      %p1107 = por %p1105, %p1106
      %p1108 = scmp.ne.s32.totalorder %s1096, %s1097
      %p1109 = scmp.eq.s32.totalorder %s121, 1
      %p1110 = por %p1108, %p1109
      %p1112 = scmp.ne.s32.totalorder %s1097, %s1111
      %p1113 = scmp.eq.s32.totalorder %s121, 0
      %p1114 = por %p1112, %p1113
      %s1116 = sadd.s32 %s1115, 1
      %p1119 = scmp.eq.s32.totalorder %s115, 1
      %p1120 = scmp.ne.s32.totalorder %s1115, %s1117
      %p1121 = scmp.eq.s32.totalorder %s115, 0
      %p1122 = por %p1120, %p1121
      %p1123 = scmp.ne.s32.totalorder %s1115, %s1117
      %p1124 = scmp.eq.s32.totalorder %s120, 1
      %p1125 = por %p1123, %p1124
      %p1126 = scmp.ne.s32.totalorder %s1117, %s1118
      %p1127 = scmp.eq.s32.totalorder %s120, 0
      %p1128 = por %p1126, %p1127
      %p1129 = scmp.ne.s32.totalorder %s1117, %s1118
      %p1130 = scmp.eq.s32.totalorder %s121, 1
      %p1131 = por %p1129, %p1130
      %p1133 = scmp.ne.s32.totalorder %s1118, %s1132
      %p1134 = scmp.eq.s32.totalorder %s121, 0
      %p1135 = por %p1133, %p1134
      %s1137 = sadd.s32 %s1136, 1
      %p1140 = scmp.eq.s32.totalorder %s115, 1
      %p1141 = scmp.ne.s32.totalorder %s1136, %s1138
      %p1142 = scmp.eq.s32.totalorder %s115, 0
      %p1143 = por %p1141, %p1142
      %p1144 = scmp.ne.s32.totalorder %s1136, %s1138
      %p1145 = scmp.eq.s32.totalorder %s120, 1
      %p1146 = por %p1144, %p1145
      %p1147 = scmp.ne.s32.totalorder %s1138, %s1139
      %p1148 = scmp.eq.s32.totalorder %s120, 0
      %p1149 = por %p1147, %p1148
      %p1150 = scmp.ne.s32.totalorder %s1138, %s1139
      %p1151 = scmp.eq.s32.totalorder %s121, 1
      %p1152 = por %p1150, %p1151
      %p1154 = scmp.ne.s32.totalorder %s1139, %s1153
      %p1155 = scmp.eq.s32.totalorder %s121, 0
      %p1156 = por %p1154, %p1155
      %s1158 = sadd.s32 %s1157, 1
      %p1161 = scmp.eq.s32.totalorder %s115, 1
      %p1162 = scmp.ne.s32.totalorder %s1157, %s1159
      %p1163 = scmp.eq.s32.totalorder %s115, 0
      %p1164 = por %p1162, %p1163
      %p1165 = scmp.ne.s32.totalorder %s1157, %s1159
      %p1166 = scmp.eq.s32.totalorder %s120, 1
      %p1167 = por %p1165, %p1166
      %p1168 = scmp.ne.s32.totalorder %s1159, %s1160
      %p1169 = scmp.eq.s32.totalorder %s120, 0
      %p1170 = por %p1168, %p1169
      %p1171 = scmp.ne.s32.totalorder %s1159, %s1160
      %p1172 = scmp.eq.s32.totalorder %s121, 1
      %p1173 = por %p1171, %p1172
      %p1175 = scmp.ne.s32.totalorder %s1160, %s1174
      %p1176 = scmp.eq.s32.totalorder %s121, 0
      %p1177 = por %p1175, %p1176
      %s1178 = ssub.s32 %s115, %s122
      %p1179 = scmp.eq.s32.totalorder %s1178, 0
      %s1181 = sadd.s32 %s1180, 1
      %s1182 = scalar_select %p1179, %s1180, %s1181
      %p1185 = pneg %p1179
      %p1186 = scmp.eq.s32.totalorder %s115, 1
      %p1187 = por %p1185, %p1186
      %p1188 = scmp.ne.s32.totalorder %s1180, %s1183
      %p1189 = scmp.eq.s32.totalorder %s115, 0
      %p1190 = por %p1188, %p1189
      %p1191 = scmp.ne.s32.totalorder %s1180, %s1183
      %p1192 = scmp.eq.s32.totalorder %s120, 1
      %p1193 = por %p1191, %p1192
      %p1194 = scmp.ne.s32.totalorder %s1183, %s1184
      %p1195 = scmp.eq.s32.totalorder %s120, 0
      %p1196 = por %p1194, %p1195
      %p1197 = scmp.ne.s32.totalorder %s1183, %s1184
      %p1198 = scmp.eq.s32.totalorder %s121, 1
      %p1199 = por %p1197, %p1198
      %p1201 = scmp.ne.s32.totalorder %s1184, %s1200
      %p1202 = scmp.eq.s32.totalorder %s121, 0
      %p1203 = por %p1201, %p1202
      %p1204 = scmp.le.s32.totalorder 1, %s115
      %p1205 = scmp.lt.s32.totalorder %s115, 3
      %p1206 = pnand %p1204, %p1205
      %p1207 = pneg %p1206
      // Predicated region
      $region9: #{_lambda_.1} parent=5 // pred_check
        _
      $region10: #{_lambda_.1} parent=5 // pred_check_branch
        %1209 = sbr.rel (%p1206) target = $region12
      $region11: #{_lambda_.1} parent=5 // pred_region
        %s1210 = ssub.s32 %s115, 1
        // Predicated region
        $region13: #{_lambda_.1} parent=11 // pred_check
          %p1211 = pneg %p162
        $region14: #{_lambda_.1} parent=11 // pred_check_branch
          %1213 = sbr.rel (%p1211) target = $region16
        $region15: #{_lambda_.1} parent=11 // pred_region
          _
        $region16: #{_lambda_.1} parent=11 // pred_fallthru
          _
        // Predicated region
        $region17: #{_lambda_.1} parent=11 // pred_check
          %p1214 = pneg %p183
        $region18: #{_lambda_.1} parent=11 // pred_check_branch
          %1216 = sbr.rel (%p1214) target = $region20
        $region19: #{_lambda_.1} parent=11 // pred_region
          _
        $region20: #{_lambda_.1} parent=11 // pred_fallthru
          _
        // Predicated region
        $region21: #{_lambda_.1} parent=11 // pred_check
          %p1217 = pneg %p204
        $region22: #{_lambda_.1} parent=11 // pred_check_branch
          %1219 = sbr.rel (%p1217) target = $region24
        $region23: #{_lambda_.1} parent=11 // pred_region
          _
        $region24: #{_lambda_.1} parent=11 // pred_fallthru
          _
        // Predicated region
        $region25: #{_lambda_.1} parent=11 // pred_check
          %p1220 = pneg %p225
        $region26: #{_lambda_.1} parent=11 // pred_check_branch
          %1222 = sbr.rel (%p1220) target = $region28
        $region27: #{_lambda_.1} parent=11 // pred_region
          _
        $region28: #{_lambda_.1} parent=11 // pred_fallthru
          _
        // Predicated region
        $region29: #{_lambda_.1} parent=11 // pred_check
          %p1223 = pneg %p246
        $region30: #{_lambda_.1} parent=11 // pred_check_branch
          %1225 = sbr.rel (%p1223) target = $region32
        $region31: #{_lambda_.1} parent=11 // pred_region
          _
        $region32: #{_lambda_.1} parent=11 // pred_fallthru
          _
        // Predicated region
        $region33: #{_lambda_.1} parent=11 // pred_check
          %p1226 = pneg %p267
        $region34: #{_lambda_.1} parent=11 // pred_check_branch
          %1228 = sbr.rel (%p1226) target = $region36
        $region35: #{_lambda_.1} parent=11 // pred_region
          _
        $region36: #{_lambda_.1} parent=11 // pred_fallthru
          _
        // Predicated region
        $region37: #{_lambda_.1} parent=11 // pred_check
          %p1229 = pneg %p288
        $region38: #{_lambda_.1} parent=11 // pred_check_branch
          %1231 = sbr.rel (%p1229) target = $region40
        $region39: #{_lambda_.1} parent=11 // pred_region
          _
        $region40: #{_lambda_.1} parent=11 // pred_fallthru
          _
        // Predicated region
        $region41: #{_lambda_.1} parent=11 // pred_check
          %p1232 = pneg %p309
        $region42: #{_lambda_.1} parent=11 // pred_check_branch
          %1234 = sbr.rel (%p1232) target = $region44
        $region43: #{_lambda_.1} parent=11 // pred_region
          _
        $region44: #{_lambda_.1} parent=11 // pred_fallthru
          _
        // Predicated region
        $region45: #{_lambda_.1} parent=11 // pred_check
          %p1235 = pneg %p330
        $region46: #{_lambda_.1} parent=11 // pred_check_branch
          %1237 = sbr.rel (%p1235) target = $region48
        $region47: #{_lambda_.1} parent=11 // pred_region
          _
        $region48: #{_lambda_.1} parent=11 // pred_fallthru
          _
        // Predicated region
        $region49: #{_lambda_.1} parent=11 // pred_check
          %p1238 = pneg %p351
        $region50: #{_lambda_.1} parent=11 // pred_check_branch
          %1240 = sbr.rel (%p1238) target = $region52
        $region51: #{_lambda_.1} parent=11 // pred_region
          _
        $region52: #{_lambda_.1} parent=11 // pred_fallthru
          _
        // Predicated region
        $region53: #{_lambda_.1} parent=11 // pred_check
          %p1241 = pneg %p372
        $region54: #{_lambda_.1} parent=11 // pred_check_branch
          %1243 = sbr.rel (%p1241) target = $region56
        $region55: #{_lambda_.1} parent=11 // pred_region
          _
        $region56: #{_lambda_.1} parent=11 // pred_fallthru
          _
        // Predicated region
        $region57: #{_lambda_.1} parent=11 // pred_check
          %p1244 = pneg %p393
        $region58: #{_lambda_.1} parent=11 // pred_check_branch
          %1246 = sbr.rel (%p1244) target = $region60
        $region59: #{_lambda_.1} parent=11 // pred_region
          _
        $region60: #{_lambda_.1} parent=11 // pred_fallthru
          _
        // Predicated region
        $region61: #{_lambda_.1} parent=11 // pred_check
          %p1247 = pneg %p414
        $region62: #{_lambda_.1} parent=11 // pred_check_branch
          %1249 = sbr.rel (%p1247) target = $region64
        $region63: #{_lambda_.1} parent=11 // pred_region
          _
        $region64: #{_lambda_.1} parent=11 // pred_fallthru
          _
        // Predicated region
        $region65: #{_lambda_.1} parent=11 // pred_check
          %p1250 = pneg %p435
        $region66: #{_lambda_.1} parent=11 // pred_check_branch
          %1252 = sbr.rel (%p1250) target = $region68
        $region67: #{_lambda_.1} parent=11 // pred_region
          _
        $region68: #{_lambda_.1} parent=11 // pred_fallthru
          _
        // Predicated region
        $region69: #{_lambda_.1} parent=11 // pred_check
          %p1253 = pneg %p456
        $region70: #{_lambda_.1} parent=11 // pred_check_branch
          %1255 = sbr.rel (%p1253) target = $region72
        $region71: #{_lambda_.1} parent=11 // pred_region
          _
        $region72: #{_lambda_.1} parent=11 // pred_fallthru
          _
        // Predicated region
        $region73: #{_lambda_.1} parent=11 // pred_check
          %p1256 = pneg %p477
        $region74: #{_lambda_.1} parent=11 // pred_check_branch
          %1258 = sbr.rel (%p1256) target = $region76
        $region75: #{_lambda_.1} parent=11 // pred_region
          _
        $region76: #{_lambda_.1} parent=11 // pred_fallthru
          _
        // Predicated region
        $region77: #{_lambda_.1} parent=11 // pred_check
          %p1259 = pneg %p498
        $region78: #{_lambda_.1} parent=11 // pred_check_branch
          %1261 = sbr.rel (%p1259) target = $region80
        $region79: #{_lambda_.1} parent=11 // pred_region
          _
        $region80: #{_lambda_.1} parent=11 // pred_fallthru
          _
        // Predicated region
        $region81: #{_lambda_.1} parent=11 // pred_check
          %p1262 = pneg %p519
        $region82: #{_lambda_.1} parent=11 // pred_check_branch
          %1264 = sbr.rel (%p1262) target = $region84
        $region83: #{_lambda_.1} parent=11 // pred_region
          _
        $region84: #{_lambda_.1} parent=11 // pred_fallthru
          _
        // Predicated region
        $region85: #{_lambda_.1} parent=11 // pred_check
          %p1265 = pneg %p540
        $region86: #{_lambda_.1} parent=11 // pred_check_branch
          %1267 = sbr.rel (%p1265) target = $region88
        $region87: #{_lambda_.1} parent=11 // pred_region
          _
        $region88: #{_lambda_.1} parent=11 // pred_fallthru
          _
        // Predicated region
        $region89: #{_lambda_.1} parent=11 // pred_check
          %p1268 = pneg %p561
        $region90: #{_lambda_.1} parent=11 // pred_check_branch
          %1270 = sbr.rel (%p1268) target = $region92
        $region91: #{_lambda_.1} parent=11 // pred_region
          _
        $region92: #{_lambda_.1} parent=11 // pred_fallthru
          _
        // Predicated region
        $region93: #{_lambda_.1} parent=11 // pred_check
          %p1271 = pneg %p582
        $region94: #{_lambda_.1} parent=11 // pred_check_branch
          %1273 = sbr.rel (%p1271) target = $region96
        $region95: #{_lambda_.1} parent=11 // pred_region
          _
        $region96: #{_lambda_.1} parent=11 // pred_fallthru
          _
        // Predicated region
        $region97: #{_lambda_.1} parent=11 // pred_check
          %p1274 = pneg %p603
        $region98: #{_lambda_.1} parent=11 // pred_check_branch
          %1276 = sbr.rel (%p1274) target = $region100
        $region99: #{_lambda_.1} parent=11 // pred_region
          _
        $region100: #{_lambda_.1} parent=11 // pred_fallthru
          _
        // Predicated region
        $region101: #{_lambda_.1} parent=11 // pred_check
          %p1277 = pneg %p624
        $region102: #{_lambda_.1} parent=11 // pred_check_branch
          %1279 = sbr.rel (%p1277) target = $region104
        $region103: #{_lambda_.1} parent=11 // pred_region
          _
        $region104: #{_lambda_.1} parent=11 // pred_fallthru
          _
        // Predicated region
        $region105: #{_lambda_.1} parent=11 // pred_check
          %p1280 = pneg %p645
        $region106: #{_lambda_.1} parent=11 // pred_check_branch
          %1282 = sbr.rel (%p1280) target = $region108
        $region107: #{_lambda_.1} parent=11 // pred_region
          _
        $region108: #{_lambda_.1} parent=11 // pred_fallthru
          _
        // Predicated region
        $region109: #{_lambda_.1} parent=11 // pred_check
          %p1283 = pneg %p666
        $region110: #{_lambda_.1} parent=11 // pred_check_branch
          %1285 = sbr.rel (%p1283) target = $region112
        $region111: #{_lambda_.1} parent=11 // pred_region
          _
        $region112: #{_lambda_.1} parent=11 // pred_fallthru
          _
        // Predicated region
        $region113: #{_lambda_.1} parent=11 // pred_check
          %p1286 = pneg %p687
        $region114: #{_lambda_.1} parent=11 // pred_check_branch
          %1288 = sbr.rel (%p1286) target = $region116
        $region115: #{_lambda_.1} parent=11 // pred_region
          _
        $region116: #{_lambda_.1} parent=11 // pred_fallthru
          _
        // Predicated region
        $region117: #{_lambda_.1} parent=11 // pred_check
          %p1289 = pneg %p708
        $region118: #{_lambda_.1} parent=11 // pred_check_branch
          %1291 = sbr.rel (%p1289) target = $region120
        $region119: #{_lambda_.1} parent=11 // pred_region
          _
        $region120: #{_lambda_.1} parent=11 // pred_fallthru
          _
        // Predicated region
        $region121: #{_lambda_.1} parent=11 // pred_check
          %p1292 = pneg %p729
        $region122: #{_lambda_.1} parent=11 // pred_check_branch
          %1294 = sbr.rel (%p1292) target = $region124
        $region123: #{_lambda_.1} parent=11 // pred_region
          _
        $region124: #{_lambda_.1} parent=11 // pred_fallthru
          _
        // Predicated region
        $region125: #{_lambda_.1} parent=11 // pred_check
          %p1295 = pneg %p750
        $region126: #{_lambda_.1} parent=11 // pred_check_branch
          %1297 = sbr.rel (%p1295) target = $region128
        $region127: #{_lambda_.1} parent=11 // pred_region
          _
        $region128: #{_lambda_.1} parent=11 // pred_fallthru
          _
        // Predicated region
        $region129: #{_lambda_.1} parent=11 // pred_check
          %p1298 = pneg %p771
        $region130: #{_lambda_.1} parent=11 // pred_check_branch
          %1300 = sbr.rel (%p1298) target = $region132
        $region131: #{_lambda_.1} parent=11 // pred_region
          _
        $region132: #{_lambda_.1} parent=11 // pred_fallthru
          _
        // Predicated region
        $region133: #{_lambda_.1} parent=11 // pred_check
          %p1301 = pneg %p792
        $region134: #{_lambda_.1} parent=11 // pred_check_branch
          %1303 = sbr.rel (%p1301) target = $region136
        $region135: #{_lambda_.1} parent=11 // pred_region
          _
        $region136: #{_lambda_.1} parent=11 // pred_fallthru
          _
        // Predicated region
        $region137: #{_lambda_.1} parent=11 // pred_check
          %p1304 = pneg %p813
        $region138: #{_lambda_.1} parent=11 // pred_check_branch
          %1306 = sbr.rel (%p1304) target = $region140
        $region139: #{_lambda_.1} parent=11 // pred_region
          _
        $region140: #{_lambda_.1} parent=11 // pred_fallthru
          _
        // Predicated region
        $region141: #{_lambda_.1} parent=11 // pred_check
          %p1307 = pneg %p834
        $region142: #{_lambda_.1} parent=11 // pred_check_branch
          %1309 = sbr.rel (%p1307) target = $region144
        $region143: #{_lambda_.1} parent=11 // pred_region
          _
        $region144: #{_lambda_.1} parent=11 // pred_fallthru
          _
        // Predicated region
        $region145: #{_lambda_.1} parent=11 // pred_check
          %p1310 = pneg %p855
        $region146: #{_lambda_.1} parent=11 // pred_check_branch
          %1312 = sbr.rel (%p1310) target = $region148
        $region147: #{_lambda_.1} parent=11 // pred_region
          %s1314 = ssub.s32 16, 16
          %1315 = vsyncadd [#allocation3], %s1314
          %s1317 = sshll.u32 [#allocation2], 4
          %s1318 = int_to_ptr.vmem [resolvable:$true] %s1317
          %1320 = dma.hbm_to_vmem [thread:$0]  %s69, 16, %s1318, [#allocation3]
        $region148: #{_lambda_.1} parent=11 // pred_fallthru
          _
        // Predicated region
        $region149: #{_lambda_.1} parent=11 // pred_check
          %p1321 = pneg %p876
        $region150: #{_lambda_.1} parent=11 // pred_check_branch
          %1323 = sbr.rel (%p1321) target = $region152
        $region151: #{_lambda_.1} parent=11 // pred_region
          _
        $region152: #{_lambda_.1} parent=11 // pred_fallthru
          _
        // Predicated region
        $region153: #{_lambda_.1} parent=11 // pred_check
          %p1324 = pneg %p897
        $region154: #{_lambda_.1} parent=11 // pred_check_branch
          %1326 = sbr.rel (%p1324) target = $region156
        $region155: #{_lambda_.1} parent=11 // pred_region
          %s1328 = ssub.s32 16, 16
          %1329 = vsyncadd [#allocation6], %s1328
          %s1331 = sshll.u32 [#allocation5], 4
          %s1332 = int_to_ptr.vmem [resolvable:$true] %s1331
          %1334 = dma.hbm_to_vmem [thread:$0]  %s73, 16, %s1332, [#allocation6]
        $region156: #{_lambda_.1} parent=11 // pred_fallthru
          _
        // Predicated region
        $region157: #{_lambda_.1} parent=11 // pred_check
          %p1335 = pneg %p918
        $region158: #{_lambda_.1} parent=11 // pred_check_branch
          %1337 = sbr.rel (%p1335) target = $region160
        $region159: #{_lambda_.1} parent=11 // pred_region
          _
        $region160: #{_lambda_.1} parent=11 // pred_fallthru
          _
        // Predicated region
        $region161: #{_lambda_.1} parent=11 // pred_check
          %p1338 = pneg %p939
        $region162: #{_lambda_.1} parent=11 // pred_check_branch
          %1340 = sbr.rel (%p1338) target = $region164
        $region163: #{_lambda_.1} parent=11 // pred_region
          %s1342 = ssub.s32 16, 16
          %1343 = vsyncadd [#allocation6], %s1342
          %s1345 = sshll.u32 [#allocation7], 4
          %s1346 = int_to_ptr.vmem [resolvable:$true] %s1345
          %1348 = dma.hbm_to_vmem [thread:$0]  %s77, 16, %s1346, [#allocation6]
        $region164: #{_lambda_.1} parent=11 // pred_fallthru
          _
        // Predicated region
        $region165: #{_lambda_.1} parent=11 // pred_check
          %p1349 = pneg %p960
        $region166: #{_lambda_.1} parent=11 // pred_check_branch
          %1351 = sbr.rel (%p1349) target = $region168
        $region167: #{_lambda_.1} parent=11 // pred_region
          %s1353 = ssub.s32 16, 16
          %1354 = vsyncadd [#allocation9], %s1353
          %s1356 = sshll.u32 [#allocation8], 4
          %s1357 = int_to_ptr.vmem [resolvable:$true] %s1356
          %1359 = dma.hbm_to_vmem [thread:$0]  %s79, 16, %s1357, [#allocation9]
        $region168: #{_lambda_.1} parent=11 // pred_fallthru
          _
        // Predicated region
        $region169: #{_lambda_.1} parent=11 // pred_check
          %p1360 = pneg %p981
        $region170: #{_lambda_.1} parent=11 // pred_check_branch
          %1362 = sbr.rel (%p1360) target = $region172
        $region171: #{_lambda_.1} parent=11 // pred_region
          _
        $region172: #{_lambda_.1} parent=11 // pred_fallthru
          _
        // Predicated region
        $region173: #{_lambda_.1} parent=11 // pred_check
          %p1363 = pneg %p1002
        $region174: #{_lambda_.1} parent=11 // pred_check_branch
          %1365 = sbr.rel (%p1363) target = $region176
        $region175: #{_lambda_.1} parent=11 // pred_region
          %s1367 = ssub.s32 16, 16
          %1368 = vsyncadd [#allocation9], %s1367
          %s1370 = sshll.u32 [#allocation10], 4
          %s1371 = int_to_ptr.vmem [resolvable:$true] %s1370
          %1373 = dma.hbm_to_vmem [thread:$0]  %s83, 16, %s1371, [#allocation9]
        $region176: #{_lambda_.1} parent=11 // pred_fallthru
          _
        // Predicated region
        $region177: #{_lambda_.1} parent=11 // pred_check
          %p1374 = pneg %p1023
        $region178: #{_lambda_.1} parent=11 // pred_check_branch
          %1376 = sbr.rel (%p1374) target = $region180
        $region179: #{_lambda_.1} parent=11 // pred_region
          _
        $region180: #{_lambda_.1} parent=11 // pred_fallthru
          _
        // Predicated region
        $region181: #{_lambda_.1} parent=11 // pred_check
          %p1377 = pneg %p1044
        $region182: #{_lambda_.1} parent=11 // pred_check_branch
          %1379 = sbr.rel (%p1377) target = $region184
        $region183: #{_lambda_.1} parent=11 // pred_region
          %s1381 = ssub.s32 16, 16
          %1382 = vsyncadd [#allocation12], %s1381
          %s1384 = sshll.u32 [#allocation11], 4
          %s1385 = int_to_ptr.vmem [resolvable:$true] %s1384
          %1387 = dma.hbm_to_vmem [thread:$0]  %s87, 16, %s1385, [#allocation12]
        $region184: #{_lambda_.1} parent=11 // pred_fallthru
          _
        // Predicated region
        $region185: #{_lambda_.1} parent=11 // pred_check
          %p1388 = pneg %p1065
        $region186: #{_lambda_.1} parent=11 // pred_check_branch
          %1390 = sbr.rel (%p1388) target = $region188
        $region187: #{_lambda_.1} parent=11 // pred_region
          _
        $region188: #{_lambda_.1} parent=11 // pred_fallthru
          _
        // Predicated region
        $region189: #{_lambda_.1} parent=11 // pred_check
          %p1391 = pneg %p1086
        $region190: #{_lambda_.1} parent=11 // pred_check_branch
          %1393 = sbr.rel (%p1391) target = $region192
        $region191: #{_lambda_.1} parent=11 // pred_region
          %s1395 = ssub.s32 16, 16
          %1396 = vsyncadd [#allocation12], %s1395
          %s1398 = sshll.u32 [#allocation13], 4
          %s1399 = int_to_ptr.vmem [resolvable:$true] %s1398
          %1401 = dma.hbm_to_vmem [thread:$0]  %s91, 16, %s1399, [#allocation12]
        $region192: #{_lambda_.1} parent=11 // pred_fallthru
          _
        // Predicated region
        $region193: #{_lambda_.1} parent=11 // pred_check
          %p1402 = pneg %p1107
        $region194: #{_lambda_.1} parent=11 // pred_check_branch
          %1404 = sbr.rel (%p1402) target = $region196
        $region195: #{_lambda_.1} parent=11 // pred_region
          _
        $region196: #{_lambda_.1} parent=11 // pred_fallthru
          _
        // Predicated region
        $region197: #{_lambda_.1} parent=11 // pred_check
          %p1405 = pneg %p1128
        $region198: #{_lambda_.1} parent=11 // pred_check_branch
          %1407 = sbr.rel (%p1405) target = $region200
        $region199: #{_lambda_.1} parent=11 // pred_region
          %s1409 = ssub.s32 16, 16
          %1410 = vsyncadd [#allocation15], %s1409
          %s1412 = sshll.u32 [#allocation14], 4
          %s1413 = int_to_ptr.vmem [resolvable:$true] %s1412
          %1415 = dma.hbm_to_vmem [thread:$0]  %s95, 16, %s1413, [#allocation15]
        $region200: #{_lambda_.1} parent=11 // pred_fallthru
          _
        // Predicated region
        $region201: #{_lambda_.1} parent=11 // pred_check
          %p1416 = pneg %p1149
        $region202: #{_lambda_.1} parent=11 // pred_check_branch
          %1418 = sbr.rel (%p1416) target = $region204
        $region203: #{_lambda_.1} parent=11 // pred_region
          _
        $region204: #{_lambda_.1} parent=11 // pred_fallthru
          _
        // Predicated region
        $region205: #{_lambda_.1} parent=11 // pred_check
          %p1419 = pneg %p1170
        $region206: #{_lambda_.1} parent=11 // pred_check_branch
          %1421 = sbr.rel (%p1419) target = $region208
        $region207: #{_lambda_.1} parent=11 // pred_region
          %s1423 = ssub.s32 16, 16
          %1424 = vsyncadd [#allocation15], %s1423
          %s1426 = sshll.u32 [#allocation16], 4
          %s1427 = int_to_ptr.vmem [resolvable:$true] %s1426
          %1429 = dma.hbm_to_vmem [thread:$0]  %s99, 16, %s1427, [#allocation15]
        $region208: #{_lambda_.1} parent=11 // pred_fallthru
          _
      $region12: #{_lambda_.1} parent=5 // pred_fallthru
        _
      %p1430 = scmp.lt.s32.totalorder %s115, 2
      // Predicated region
      $region209: #{_lambda_.1} parent=5 // pred_check
        %p1431 = pneg %p1430
      $region210: #{_lambda_.1} parent=5 // pred_check_branch
        %1433 = sbr.rel (%p1431) target = $region212
      $region211: #{_lambda_.1} parent=5 // pred_region
        // Predicated region
        $region213: #{_lambda_.1} parent=211 // pred_check
          %p1434 = pneg %p135
        $region214: #{_lambda_.1} parent=211 // pred_check_branch
          %1436 = sbr.rel (%p1434) target = $region216
        $region215: #{_lambda_.1} parent=211 // pred_region
          %p1437 = scmp.lt.s32.totalorder %s115, 1
          %s1438 = scalar_select %p1437, %s115, 1
          %s1439 = smul.addr %s1438, 32
          %s1440 = smul.addr %s1439, 8
          %s1441 = scalar_lea.vmem %s1, %s1440
        $region216: #{_lambda_.1} parent=211 // pred_fallthru
          _
      $region212: #{_lambda_.1} parent=5 // pred_fallthru
        _
      %p1442 = scmp.le.s32.totalorder 1, %s115
      %p1443 = scmp.lt.s32.totalorder %s115, 3
      %p1444 = pnand %p1442, %p1443
      %p1445 = pneg %p1444
      // Predicated region
      $region217: #{_lambda_.1} parent=5 // pred_check
        _
      $region218: #{_lambda_.1} parent=5 // pred_check_branch
        %1447 = sbr.rel (%p1444) target = $region220
      $region219: #{_lambda_.1} parent=5 // pred_region
        %s1448 = ssub.s32 %s115, 1
        // Predicated region
        $region221: #{_lambda_.1} parent=219 // pred_check
          %p1449 = pneg %p855
        $region222: #{_lambda_.1} parent=219 // pred_check_branch
          %1451 = sbr.rel (%p1449) target = $region224
        $region223: #{_lambda_.1} parent=219 // pred_region
          %1452 = dma.done [#allocation3], 16
        $region224: #{_lambda_.1} parent=219 // pred_fallthru
          _
        // Predicated region
        $region225: #{_lambda_.1} parent=219 // pred_check
          %p1453 = pneg %p897
        $region226: #{_lambda_.1} parent=219 // pred_check_branch
          %1455 = sbr.rel (%p1453) target = $region228
        $region227: #{_lambda_.1} parent=219 // pred_region
          %1456 = dma.done [#allocation6], 16
        $region228: #{_lambda_.1} parent=219 // pred_fallthru
          _
        // Predicated region
        $region229: #{_lambda_.1} parent=219 // pred_check
          %p1457 = pneg %p939
        $region230: #{_lambda_.1} parent=219 // pred_check_branch
          %1459 = sbr.rel (%p1457) target = $region232
        $region231: #{_lambda_.1} parent=219 // pred_region
          %1460 = dma.done [#allocation6], 16
        $region232: #{_lambda_.1} parent=219 // pred_fallthru
          _
        // Predicated region
        $region233: #{_lambda_.1} parent=219 // pred_check
          %p1461 = pneg %p960
        $region234: #{_lambda_.1} parent=219 // pred_check_branch
          %1463 = sbr.rel (%p1461) target = $region236
        $region235: #{_lambda_.1} parent=219 // pred_region
          %1464 = dma.done [#allocation9], 16
        $region236: #{_lambda_.1} parent=219 // pred_fallthru
          _
        // Predicated region
        $region237: #{_lambda_.1} parent=219 // pred_check
          %p1465 = pneg %p1002
        $region238: #{_lambda_.1} parent=219 // pred_check_branch
          %1467 = sbr.rel (%p1465) target = $region240
        $region239: #{_lambda_.1} parent=219 // pred_region
          %1468 = dma.done [#allocation9], 16
        $region240: #{_lambda_.1} parent=219 // pred_fallthru
          _
        // Predicated region
        $region241: #{_lambda_.1} parent=219 // pred_check
          %p1469 = pneg %p1044
        $region242: #{_lambda_.1} parent=219 // pred_check_branch
          %1471 = sbr.rel (%p1469) target = $region244
        $region243: #{_lambda_.1} parent=219 // pred_region
          %1472 = dma.done [#allocation12], 16
        $region244: #{_lambda_.1} parent=219 // pred_fallthru
          _
        // Predicated region
        $region245: #{_lambda_.1} parent=219 // pred_check
          %p1473 = pneg %p1086
        $region246: #{_lambda_.1} parent=219 // pred_check_branch
          %1475 = sbr.rel (%p1473) target = $region248
        $region247: #{_lambda_.1} parent=219 // pred_region
          %1476 = dma.done [#allocation12], 16
        $region248: #{_lambda_.1} parent=219 // pred_fallthru
          _
        // Predicated region
        $region249: #{_lambda_.1} parent=219 // pred_check
          %p1477 = pneg %p1128
        $region250: #{_lambda_.1} parent=219 // pred_check_branch
          %1479 = sbr.rel (%p1477) target = $region252
        $region251: #{_lambda_.1} parent=219 // pred_region
          %1480 = dma.done [#allocation15], 16
        $region252: #{_lambda_.1} parent=219 // pred_fallthru
          _
        // Predicated region
        $region253: #{_lambda_.1} parent=219 // pred_check
          %p1481 = pneg %p1170
        $region254: #{_lambda_.1} parent=219 // pred_check_branch
          %1483 = sbr.rel (%p1481) target = $region256
        $region255: #{_lambda_.1} parent=219 // pred_region
          %1484 = dma.done [#allocation15], 16
        $region256: #{_lambda_.1} parent=219 // pred_fallthru
          _
        %p1485 = scmp.lt.s32.totalorder %s120, 1
        %s1486 = scalar_select %p1485, %s120, 1
        %s1487 = smul.addr %s1486, 32
        %s1488 = smul.addr %s1487, 8
        %s1489 = scalar_lea.vmem %s1, %s1488
        %p1490 = pneg %p141
        %p1491 = pneg %p138
        %p1492 = pneg %p162
        %p1493 = pneg %p159
        %p1494 = pneg %p183
        %p1495 = pneg %p180
        %p1496 = pneg %p204
        %p1497 = pneg %p201
        %p1498 = pneg %p225
        %p1499 = pneg %p222
        %p1500 = pneg %p246
        %p1501 = pneg %p243
        %p1502 = pneg %p267
        %p1503 = pneg %p264
        %p1504 = pneg %p288
        %p1505 = pneg %p285
        %p1506 = pneg %p309
        %p1507 = pneg %p306
        %p1508 = pneg %p330
        %p1509 = pneg %p327
        %p1510 = pneg %p351
        %p1511 = pneg %p348
        %p1512 = pneg %p372
        %p1513 = pneg %p369
        %p1514 = pneg %p393
        %p1515 = pneg %p390
        %p1516 = pneg %p414
        %p1517 = pneg %p411
        %p1518 = pneg %p435
        %p1519 = pneg %p432
        %p1520 = pneg %p456
        %p1521 = pneg %p453
        %p1522 = pneg %p477
        %p1523 = pneg %p474
        %p1524 = pneg %p498
        %p1525 = pneg %p495
        %p1526 = pneg %p519
        %p1527 = pneg %p516
        %p1528 = pneg %p540
        %p1529 = pneg %p537
        %p1530 = pneg %p561
        %p1531 = pneg %p558
        %p1532 = pneg %p582
        %p1533 = pneg %p579
        %p1534 = pneg %p603
        %p1535 = pneg %p600
        %p1536 = pneg %p624
        %p1537 = pneg %p621
        %p1538 = pneg %p645
        %p1539 = pneg %p642
        %p1540 = pneg %p666
        %p1541 = pneg %p663
        %p1542 = pneg %p687
        %p1543 = pneg %p684
        %p1544 = pneg %p708
        %p1545 = pneg %p705
        %p1546 = pneg %p729
        %p1547 = pneg %p726
        %p1548 = pneg %p750
        %p1549 = pneg %p747
        %p1550 = pneg %p771
        %p1551 = pneg %p768
        %p1552 = pneg %p792
        %p1553 = pneg %p789
        %p1554 = pneg %p813
        %p1555 = pneg %p810
        %p1556 = pneg %p834
        %p1557 = pneg %p831
        %p1558 = pneg %p855
        %p1559 = pneg %p852
        %p1560 = pneg %p876
        %p1561 = pneg %p873
        %p1562 = pneg %p897
        %p1563 = pneg %p894
        %p1564 = pneg %p918
        %p1565 = pneg %p915
        %p1566 = pneg %p939
        %p1567 = pneg %p936
        %p1568 = pneg %p960
        %p1569 = pneg %p957
        %p1570 = pneg %p981
        %p1571 = pneg %p978
        %p1572 = pneg %p1002
        %p1573 = pneg %p999
        %p1574 = pneg %p1023
        %p1575 = pneg %p1020
        %p1576 = pneg %p1044
        %p1577 = pneg %p1041
        %p1578 = pneg %p1065
        %p1579 = pneg %p1062
        %p1580 = pneg %p1086
        %p1581 = pneg %p1083
        %p1582 = pneg %p1107
        %p1583 = pneg %p1104
        %p1584 = pneg %p1128
        %p1585 = pneg %p1125
        %p1586 = pneg %p1149
        %p1587 = pneg %p1146
        %p1588 = pneg %p1170
        %p1589 = pneg %p1167
        %p1590 = pneg %p1196
        %p1591 = pneg %p1193
        %s1592 = sand.u32 %s1183, 1
        %s1593 = scalar_lea.sflag [#allocation4], %s1592
        %s1594 = sand.u32 %s1183, 1
        %s1595 = scalar_lea.vmem [#allocation17], %s1594
        %p1596 = scmp.lt.s32.totalorder %s120, 1
        %s1597 = scalar_select %p1596, %s120, 1
        %s1598 = smul.addr %s1597, 32
        %s1599 = smul.addr %s1598, 8
        %s1600 = scalar_lea.vmem %s1, %s1599
        %v1601 = vld [vmem:[%s1600] sm:$0xff]
        %v1602 = vld [vmem:[%s1600 + $0x8] sm:$0xff]
        %v1603 = vld [vmem:[%s1600 + $0x10] sm:$0xff]
        %v1604 = vld [vmem:[%s1600 + $0x18] sm:$0xff]
        %v1605 = vld [vmem:[%s1600 + $0x20] sm:$0xff]
        %v1606 = vld [vmem:[%s1600 + $0x28] sm:$0xff]
        %v1607 = vld [vmem:[%s1600 + $0x30] sm:$0xff]
        %v1608 = vld [vmem:[%s1600 + $0x38] sm:$0xff]
        %v1609 = vld [vmem:[%s1600 + $0x40] sm:$0xff]
        %v1610 = vld [vmem:[%s1600 + $0x48] sm:$0xff]
        %v1611 = vld [vmem:[%s1600 + $0x50] sm:$0xff]
        %v1612 = vld [vmem:[%s1600 + $0x58] sm:$0xff]
        %v1613 = vld [vmem:[%s1600 + $0x60] sm:$0xff]
        %v1614 = vld [vmem:[%s1600 + $0x68] sm:$0xff]
        %v1615 = vld [vmem:[%s1600 + $0x70] sm:$0xff]
        %v1616 = vld [vmem:[%s1600 + $0x78] sm:$0xff]
        %v1617 = vld [vmem:[%s1600 + $0x80] sm:$0xff]
        %v1618 = vld [vmem:[%s1600 + $0x88] sm:$0xff]
        %v1619 = vld [vmem:[%s1600 + $0x90] sm:$0xff]
        %v1620 = vld [vmem:[%s1600 + $0x98] sm:$0xff]
        %v1621 = vld [vmem:[%s1600 + $0xa0] sm:$0xff]
        %v1622 = vld [vmem:[%s1600 + $0xa8] sm:$0xff]
        %v1623 = vld [vmem:[%s1600 + $0xb0] sm:$0xff]
        %v1624 = vld [vmem:[%s1600 + $0xb8] sm:$0xff]
        %v1625 = vld [vmem:[%s1600 + $0xc0] sm:$0xff]
        %v1626 = vld [vmem:[%s1600 + $0xc8] sm:$0xff]
        %v1627 = vld [vmem:[%s1600 + $0xd0] sm:$0xff]
        %v1628 = vld [vmem:[%s1600 + $0xd8] sm:$0xff]
        %v1629 = vld [vmem:[%s1600 + $0xe0] sm:$0xff]
        %v1630 = vld [vmem:[%s1600 + $0xe8] sm:$0xff]
        %v1631 = vld [vmem:[%s1600 + $0xf0] sm:$0xff]
        %v1632 = vld [vmem:[%s1600 + $0xf8] sm:$0xff]
        %v1633 = vld [vmem:[%s3] sm:$0xff]
        %v1634 = vld [vmem:[%s3 + $0x8] sm:$0xff]
        %v1635 = vld [vmem:[%s3 + $0x10] sm:$0xff]
        %v1636 = vld [vmem:[%s3 + $0x18] sm:$0xff]
        %v1637 = vld [vmem:[%s3 + $0x20] sm:$0xff]
        %v1638 = vld [vmem:[%s3 + $0x28] sm:$0xff]
        %v1639 = vld [vmem:[%s3 + $0x30] sm:$0xff]
        %v1640 = vld [vmem:[%s3 + $0x38] sm:$0xff]
        %v1641 = vld [vmem:[%s3 + $0x40] sm:$0xff]
        %v1642 = vld [vmem:[%s5] sm:$0xff]
        %v1643 = vld [vmem:[%s5 + $0x8] sm:$0xff]
        %v1644 = vld [vmem:[%s5 + $0x10] sm:$0xff]
        %v1645 = vld [vmem:[%s5 + $0x18] sm:$0xff]
        %v1646 = vld [vmem:[%s5 + $0x20] sm:$0xff]
        %v1647 = vld [vmem:[%s5 + $0x28] sm:$0xff]
        %v1648 = vld [vmem:[%s5 + $0x30] sm:$0xff]
        %v1649 = vld [vmem:[%s5 + $0x38] sm:$0xff]
        %v1650 = vld [vmem:[%s5 + $0x40] sm:$0xff]
        %v1651 = vld [vmem:[%s5 + $0x48] sm:$0xff]
        %v1652 = vld [vmem:[%s5 + $0x50] sm:$0xff]
        %v1653 = vld [vmem:[%s5 + $0x58] sm:$0xff]
        %v1654 = vld [vmem:[%s5 + $0x60] sm:$0xff]
        %v1655 = vld [vmem:[%s5 + $0x68] sm:$0xff]
        %v1656 = vld [vmem:[%s5 + $0x70] sm:$0xff]
        %v1657 = vld [vmem:[%s5 + $0x78] sm:$0xff]
        %v1658 = vld [vmem:[%s5 + $0x80] sm:$0xff]
        %v1659 = vld [vmem:[%s5 + $0x88] sm:$0xff]
        %v1660 = vld [vmem:[%s5 + $0x90] sm:$0xff]
        %v1661 = vld [vmem:[%s5 + $0x98] sm:$0xff]
        %v1662 = vld [vmem:[%s5 + $0xa0] sm:$0xff]
        %v1663 = vld [vmem:[%s5 + $0xa8] sm:$0xff]
        %v1664 = vld [vmem:[%s5 + $0xb0] sm:$0xff]
        %v1665 = vld [vmem:[%s5 + $0xb8] sm:$0xff]
        %v1666 = vld [vmem:[%s5 + $0xc0] sm:$0xff]
        %v1667 = vld [vmem:[%s5 + $0xc8] sm:$0xff]
        %v1668 = vld [vmem:[%s5 + $0xd0] sm:$0xff]
        %v1669 = vld [vmem:[%s5 + $0xd8] sm:$0xff]
        %v1670 = vld [vmem:[%s5 + $0xe0] sm:$0xff]
        %v1671 = vld [vmem:[%s5 + $0xe8] sm:$0xff]
        %v1672 = vld [vmem:[%s5 + $0xf0] sm:$0xff]
        %v1673 = vld [vmem:[%s5 + $0xf8] sm:$0xff]
        %vm1674 = vcmask 588800
        %v1676 = vsel %vm1674, %v1601, 0
        %v1679 = vsel %vm1674, %v1602, 0
        %v1682 = vsel %vm1674, %v1603, 0
        %v1685 = vsel %vm1674, %v1604, 0
        %v1688 = vsel %vm1674, %v1605, 0
        %v1691 = vsel %vm1674, %v1606, 0
        %v1694 = vsel %vm1674, %v1607, 0
        %v1697 = vsel %vm1674, %v1608, 0
        %v1700 = vsel %vm1674, %v1609, 0
        %v1703 = vsel %vm1674, %v1610, 0
        %v1706 = vsel %vm1674, %v1611, 0
        %v1709 = vsel %vm1674, %v1612, 0
        %v1712 = vsel %vm1674, %v1613, 0
        %v1715 = vsel %vm1674, %v1614, 0
        %v1718 = vsel %vm1674, %v1615, 0
        %v1721 = vsel %vm1674, %v1616, 0
        %v1724 = vsel %vm1674, %v1617, 0
        %v1727 = vsel %vm1674, %v1618, 0
        %v1730 = vsel %vm1674, %v1619, 0
        %v1733 = vsel %vm1674, %v1620, 0
        %v1736 = vsel %vm1674, %v1621, 0
        %v1739 = vsel %vm1674, %v1622, 0
        %v1742 = vsel %vm1674, %v1623, 0
        %v1745 = vsel %vm1674, %v1624, 0
        %v1748 = vsel %vm1674, %v1625, 0
        %v1751 = vsel %vm1674, %v1626, 0
        %v1754 = vsel %vm1674, %v1627, 0
        %v1757 = vsel %vm1674, %v1628, 0
        %v1760 = vsel %vm1674, %v1629, 0
        %v1763 = vsel %vm1674, %v1630, 0
        %v1766 = vsel %vm1674, %v1631, 0
        %v1769 = vsel %vm1674, %v1632, 0
        %1771 = vmatprep.subr.mxu0 0.0
        %1772 = vmatpush1.msra.mxu0 %v1633
        %1773 = vmatprep.subr.mxu0 0.0
        %1774 = vmatpush1.msra.mxu0 %v1634
        %1775 = vmatprep.subr.mxu0 0.0
        %1776 = vmatpush1.msra.mxu0 %v1635
        %1777 = vmatprep.subr.mxu0 0.0
        %1778 = vmatpush1.msra.mxu0 %v1636
        %1779 = vmatprep.subr.mxu0 0.0
        %1780 = vmatpush1.msra.mxu0 %v1637
        %1781 = vmatprep.subr.mxu0 0.0
        %1782 = vmatpush1.msra.mxu0 %v1638
        %1783 = vmatprep.subr.mxu0 0.0
        %1784 = vmatpush1.msra.mxu0 %v1639
        %1785 = vmatprep.subr.mxu0 0.0
        %1786 = vmatpush1.msra.mxu0 %v1640
        %1787 = vmatprep.subr.mxu0 0.0
        %1788 = vmatpush1.msra.mxu0 %v1641
        %1789 = vmatprep.subr.mxu0 0.0
        %1790 = vmatpush1.msra.mxu0 0.0
        %1791 = vmatprep.subr.mxu0 0.0
        %1792 = vmatpush1.msra.mxu0 0.0
        %1793 = vmatprep.subr.mxu0 0.0
        %1794 = vmatpush1.msra.mxu0 0.0
        %1795 = vmatprep.subr.mxu0 0.0
        %1796 = vmatpush1.msra.mxu0 0.0
        %1797 = vmatprep.subr.mxu0 0.0
        %1798 = vmatpush1.msra.mxu0 0.0
        %1799 = vmatprep.subr.mxu0 0.0
        %1800 = vmatpush1.msra.mxu0 0.0
        %1801 = vmatprep.subr.mxu0 0.0
        %1802 = vmatpush1.msra.mxu0 0.0
        %1803 = vmatprep.subr.mxu0 0.0
        %1804 = vmatpush1.msra.mxu0 0.0
        %1805 = vmatprep.subr.mxu0 0.0
        %1806 = vmatpush1.msra.mxu0 0.0
        %1807 = vmatprep.subr.mxu0 0.0
        %1808 = vmatpush1.msra.mxu0 0.0
        %1809 = vmatprep.subr.mxu0 0.0
        %1810 = vmatpush1.msra.mxu0 0.0
        %1811 = vmatprep.subr.mxu0 0.0
        %1812 = vmatpush1.msra.mxu0 0.0
        %1813 = vmatprep.subr.mxu0 0.0
        %1814 = vmatpush1.msra.mxu0 0.0
        %1815 = vmatprep.subr.mxu0 0.0
        %1816 = vmatpush1.msra.mxu0 0.0
        %1817 = vmatprep.subr.mxu0 0.0
        %1818 = vmatpush1.msra.mxu0 0.0
        %1819 = vmatprep.subr.mxu0 0.0
        %1820 = vmatpush1.msra.mxu0 0.0
        %1821 = vmatprep.subr.mxu0 0.0
        %1822 = vmatpush1.msra.mxu0 0.0
        %1823 = vmatprep.subr.mxu0 0.0
        %1824 = vmatpush1.msra.mxu0 0.0
        %1825 = vmatprep.subr.mxu0 0.0
        %1826 = vmatpush1.msra.mxu0 0.0
        %1827 = vmatprep.subr.mxu0 0.0
        %1828 = vmatpush1.msra.mxu0 0.0
        %1829 = vmatprep.subr.mxu0 0.0
        %1830 = vmatpush1.msra.mxu0 0.0
        %1831 = vmatprep.subr.mxu0 0.0
        %1832 = vmatpush1.msra.mxu0 0.0
        %1833 = vmatprep.subr.mxu0 0.0
        %1834 = vmatpush1.msra.mxu0 0.0
        %1835 = vmatprep.mubr.f32.mxu0 0.0
        %1836 = vmatmul.mubr.f32.gmra.mrb[0].mxu0 %v1676
        %v1837 = vpop.f32.mrb[0].mxu0
        %v1838 = vadd.f32 %v1642, %v1837
        %v1839 = vpop.f32.mrb[0].mxu0
        %1840 = vmatprep.mubr.f32.mxu0 0.0
        %1841 = vmatmul.mubr.f32.gmra.mrb[0].mxu0 %v1679
        %v1842 = vpop.f32.mrb[0].mxu0
        %v1843 = vadd.f32 %v1643, %v1842
        %v1844 = vpop.f32.mrb[0].mxu0
        %1845 = vmatprep.mubr.f32.mxu0 0.0
        %1846 = vmatmul.mubr.f32.gmra.mrb[0].mxu0 %v1682
        %v1847 = vpop.f32.mrb[0].mxu0
        %v1848 = vadd.f32 %v1644, %v1847
        %v1849 = vpop.f32.mrb[0].mxu0
        %1850 = vmatprep.mubr.f32.mxu0 0.0
        %1851 = vmatmul.mubr.f32.gmra.mrb[0].mxu0 %v1685
        %v1852 = vpop.f32.mrb[0].mxu0
        %v1853 = vadd.f32 %v1645, %v1852
        %v1854 = vpop.f32.mrb[0].mxu0
        %1855 = vmatprep.mubr.f32.mxu0 0.0
        %1856 = vmatmul.mubr.f32.gmra.mrb[0].mxu0 %v1688
        %v1857 = vpop.f32.mrb[0].mxu0
        %v1858 = vadd.f32 %v1646, %v1857
        %v1859 = vpop.f32.mrb[0].mxu0
        %1860 = vmatprep.mubr.f32.mxu0 0.0
        %1861 = vmatmul.mubr.f32.gmra.mrb[0].mxu0 %v1691
        %v1862 = vpop.f32.mrb[0].mxu0
        %v1863 = vadd.f32 %v1647, %v1862
        %v1864 = vpop.f32.mrb[0].mxu0
        %1865 = vmatprep.mubr.f32.mxu0 0.0
        %1866 = vmatmul.mubr.f32.gmra.mrb[0].mxu0 %v1694
        %v1867 = vpop.f32.mrb[0].mxu0
        %v1868 = vadd.f32 %v1648, %v1867
        %v1869 = vpop.f32.mrb[0].mxu0
        %1870 = vmatprep.mubr.f32.mxu0 0.0
        %1871 = vmatmul.mubr.f32.gmra.mrb[0].mxu0 %v1697
        %v1872 = vpop.f32.mrb[0].mxu0
        %v1873 = vadd.f32 %v1649, %v1872
        %v1874 = vpop.f32.mrb[0].mxu0
        %1875 = vmatprep.mubr.f32.mxu0 0.0
        %1876 = vmatmul.mubr.f32.gmra.mrb[0].mxu0 %v1700
        %v1877 = vpop.f32.mrb[0].mxu0
        %v1878 = vadd.f32 %v1650, %v1877
        %v1879 = vpop.f32.mrb[0].mxu0
        %1880 = vmatprep.mubr.f32.mxu0 0.0
        %1881 = vmatmul.mubr.f32.gmra.mrb[0].mxu0 %v1703
        %v1882 = vpop.f32.mrb[0].mxu0
        %v1883 = vadd.f32 %v1651, %v1882
        %v1884 = vpop.f32.mrb[0].mxu0
        %1885 = vmatprep.mubr.f32.mxu0 0.0
        %1886 = vmatmul.mubr.f32.gmra.mrb[0].mxu0 %v1706
        %v1887 = vpop.f32.mrb[0].mxu0
        %v1888 = vadd.f32 %v1652, %v1887
        %v1889 = vpop.f32.mrb[0].mxu0
        %1890 = vmatprep.mubr.f32.mxu0 0.0
        %1891 = vmatmul.mubr.f32.gmra.mrb[0].mxu0 %v1709
        %v1892 = vpop.f32.mrb[0].mxu0
        %v1893 = vadd.f32 %v1653, %v1892
        %v1894 = vpop.f32.mrb[0].mxu0
        %1895 = vmatprep.mubr.f32.mxu0 0.0
        %1896 = vmatmul.mubr.f32.gmra.mrb[0].mxu0 %v1712
        %v1897 = vpop.f32.mrb[0].mxu0
        %v1898 = vadd.f32 %v1654, %v1897
        %v1899 = vpop.f32.mrb[0].mxu0
        %1900 = vmatprep.mubr.f32.mxu0 0.0
        %1901 = vmatmul.mubr.f32.gmra.mrb[0].mxu0 %v1715
        %v1902 = vpop.f32.mrb[0].mxu0
        %v1903 = vadd.f32 %v1655, %v1902
        %v1904 = vpop.f32.mrb[0].mxu0
        %1905 = vmatprep.mubr.f32.mxu0 0.0
        %1906 = vmatmul.mubr.f32.gmra.mrb[0].mxu0 %v1718
        %v1907 = vpop.f32.mrb[0].mxu0
        %v1908 = vadd.f32 %v1656, %v1907
        %v1909 = vpop.f32.mrb[0].mxu0
        %1910 = vmatprep.mubr.f32.mxu0 0.0
        %1911 = vmatmul.mubr.f32.gmra.mrb[0].mxu0 %v1721
        %v1912 = vpop.f32.mrb[0].mxu0
        %v1913 = vadd.f32 %v1657, %v1912
        %v1914 = vpop.f32.mrb[0].mxu0
        %1915 = vmatprep.mubr.f32.mxu0 0.0
        %1916 = vmatmul.mubr.f32.gmra.mrb[0].mxu0 %v1724
        %v1917 = vpop.f32.mrb[0].mxu0
        %v1918 = vadd.f32 %v1658, %v1917
        %v1919 = vpop.f32.mrb[0].mxu0
        %1920 = vmatprep.mubr.f32.mxu0 0.0
        %1921 = vmatmul.mubr.f32.gmra.mrb[0].mxu0 %v1727
        %v1922 = vpop.f32.mrb[0].mxu0
        %v1923 = vadd.f32 %v1659, %v1922
        %v1924 = vpop.f32.mrb[0].mxu0
        %1925 = vmatprep.mubr.f32.mxu0 0.0
        %1926 = vmatmul.mubr.f32.gmra.mrb[0].mxu0 %v1730
        %v1927 = vpop.f32.mrb[0].mxu0
        %v1928 = vadd.f32 %v1660, %v1927
        %v1929 = vpop.f32.mrb[0].mxu0
        %1930 = vmatprep.mubr.f32.mxu0 0.0
        %1931 = vmatmul.mubr.f32.gmra.mrb[0].mxu0 %v1733
        %v1932 = vpop.f32.mrb[0].mxu0
        %v1933 = vadd.f32 %v1661, %v1932
        %v1934 = vpop.f32.mrb[0].mxu0
        %1935 = vmatprep.mubr.f32.mxu0 0.0
        %1936 = vmatmul.mubr.f32.gmra.mrb[0].mxu0 %v1736
        %v1937 = vpop.f32.mrb[0].mxu0
        %v1938 = vadd.f32 %v1662, %v1937
        %v1939 = vpop.f32.mrb[0].mxu0
        %1940 = vmatprep.mubr.f32.mxu0 0.0
        %1941 = vmatmul.mubr.f32.gmra.mrb[0].mxu0 %v1739
        %v1942 = vpop.f32.mrb[0].mxu0
        %v1943 = vadd.f32 %v1663, %v1942
        %v1944 = vpop.f32.mrb[0].mxu0
        %1945 = vmatprep.mubr.f32.mxu0 0.0
        %1946 = vmatmul.mubr.f32.gmra.mrb[0].mxu0 %v1742
        %v1947 = vpop.f32.mrb[0].mxu0
        %v1948 = vadd.f32 %v1664, %v1947
        %v1949 = vpop.f32.mrb[0].mxu0
        %1950 = vmatprep.mubr.f32.mxu0 0.0
        %1951 = vmatmul.mubr.f32.gmra.mrb[0].mxu0 %v1745
        %v1952 = vpop.f32.mrb[0].mxu0
        %v1953 = vadd.f32 %v1665, %v1952
        %v1954 = vpop.f32.mrb[0].mxu0
        %1955 = vmatprep.mubr.f32.mxu0 0.0
        %1956 = vmatmul.mubr.f32.gmra.mrb[0].mxu0 %v1748
        %v1957 = vpop.f32.mrb[0].mxu0
        %v1958 = vadd.f32 %v1666, %v1957
        %v1959 = vpop.f32.mrb[0].mxu0
        %1960 = vmatprep.mubr.f32.mxu0 0.0
        %1961 = vmatmul.mubr.f32.gmra.mrb[0].mxu0 %v1751
        %v1962 = vpop.f32.mrb[0].mxu0
        %v1963 = vadd.f32 %v1667, %v1962
        %v1964 = vpop.f32.mrb[0].mxu0
        %1965 = vmatprep.mubr.f32.mxu0 0.0
        %1966 = vmatmul.mubr.f32.gmra.mrb[0].mxu0 %v1754
        %v1967 = vpop.f32.mrb[0].mxu0
        %v1968 = vadd.f32 %v1668, %v1967
        %v1969 = vpop.f32.mrb[0].mxu0
        %1970 = vmatprep.mubr.f32.mxu0 0.0
        %1971 = vmatmul.mubr.f32.gmra.mrb[0].mxu0 %v1757
        %v1972 = vpop.f32.mrb[0].mxu0
        %v1973 = vadd.f32 %v1669, %v1972
        %v1974 = vpop.f32.mrb[0].mxu0
        %1975 = vmatprep.mubr.f32.mxu0 0.0
        %1976 = vmatmul.mubr.f32.gmra.mrb[0].mxu0 %v1760
        %v1977 = vpop.f32.mrb[0].mxu0
        %v1978 = vadd.f32 %v1670, %v1977
        %v1979 = vpop.f32.mrb[0].mxu0
        %1980 = vmatprep.mubr.f32.mxu0 0.0
        %1981 = vmatmul.mubr.f32.gmra.mrb[0].mxu0 %v1763
        %v1982 = vpop.f32.mrb[0].mxu0
        %v1983 = vadd.f32 %v1671, %v1982
        %v1984 = vpop.f32.mrb[0].mxu0
        %1985 = vmatprep.mubr.f32.mxu0 0.0
        %1986 = vmatmul.mubr.f32.gmra.mrb[0].mxu0 %v1766
        %v1987 = vpop.f32.mrb[0].mxu0
        %v1988 = vadd.f32 %v1672, %v1987
        %v1989 = vpop.f32.mrb[0].mxu0
        %1990 = vmatprep.mubr.f32.mxu0 0.0
        %1991 = vmatmul.mubr.f32.gmra.mrb[0].mxu0 %v1769
        %v1992 = vpop.f32.mrb[0].mxu0
        %v1993 = vadd.f32 %v1673, %v1992
        %v1994 = vpop.f32.mrb[0].mxu0
        %1995 = vdwg.mxu0
        %v1996 = vmax.f32 %v1838, 0.0
        %v1997 = vmax.f32 %v1843, 0.0
        %v1998 = vmax.f32 %v1848, 0.0
        %v1999 = vmax.f32 %v1853, 0.0
        %v2000 = vmax.f32 %v1858, 0.0
        %v2001 = vmax.f32 %v1863, 0.0
        %v2002 = vmax.f32 %v1868, 0.0
        %v2003 = vmax.f32 %v1873, 0.0
        %v2004 = vmax.f32 %v1878, 0.0
        %v2005 = vmax.f32 %v1883, 0.0
        %v2006 = vmax.f32 %v1888, 0.0
        %v2007 = vmax.f32 %v1893, 0.0
        %v2008 = vmax.f32 %v1898, 0.0
        %v2009 = vmax.f32 %v1903, 0.0
        %v2010 = vmax.f32 %v1908, 0.0
        %v2011 = vmax.f32 %v1913, 0.0
        %v2012 = vmax.f32 %v1918, 0.0
        %v2013 = vmax.f32 %v1923, 0.0
        %v2014 = vmax.f32 %v1928, 0.0
        %v2015 = vmax.f32 %v1933, 0.0
        %v2016 = vmax.f32 %v1938, 0.0
        %v2017 = vmax.f32 %v1943, 0.0
        %v2018 = vmax.f32 %v1948, 0.0
        %v2019 = vmax.f32 %v1953, 0.0
        %v2020 = vmax.f32 %v1958, 0.0
        %v2021 = vmax.f32 %v1963, 0.0
        %v2022 = vmax.f32 %v1968, 0.0
        %v2023 = vmax.f32 %v1973, 0.0
        %v2024 = vmax.f32 %v1978, 0.0
        %v2025 = vmax.f32 %v1983, 0.0
        %v2026 = vmax.f32 %v1988, 0.0
        %v2027 = vmax.f32 %v1993, 0.0
        %v2028 = vld [vmem:[%s7] sm:$0xff]
        %v2029 = vld [vmem:[%s7 + $0x8] sm:$0xff]
        %v2030 = vld [vmem:[%s7 + $0x10] sm:$0xff]
        %v2031 = vld [vmem:[%s7 + $0x18] sm:$0xff]
        %v2032 = vld [vmem:[%s7 + $0x20] sm:$0xff]
        %v2033 = vld [vmem:[%s7 + $0x28] sm:$0xff]
        %v2034 = vld [vmem:[%s7 + $0x30] sm:$0xff]
        %v2035 = vld [vmem:[%s7 + $0x38] sm:$0xff]
        %v2036 = vld [vmem:[%s7 + $0x40] sm:$0xff]
        %v2037 = vld [vmem:[%s7 + $0x48] sm:$0xff]
        %v2038 = vld [vmem:[%s7 + $0x50] sm:$0xff]
        %v2039 = vld [vmem:[%s7 + $0x58] sm:$0xff]
        %v2040 = vld [vmem:[%s7 + $0x60] sm:$0xff]
        %v2041 = vld [vmem:[%s7 + $0x68] sm:$0xff]
        %v2042 = vld [vmem:[%s7 + $0x70] sm:$0xff]
        %v2043 = vld [vmem:[%s7 + $0x78] sm:$0xff]
        %2044 = vmatprep.subr.mxu0 0.0
        %2045 = vmatpush1.msra.mxu0 %v1996
        %2046 = vmatprep.subr.mxu0 0.0
        %2047 = vmatpush1.msra.mxu0 %v1997
        %2048 = vmatprep.subr.mxu0 0.0
        %2049 = vmatpush1.msra.mxu0 %v1998
        %2050 = vmatprep.subr.mxu0 0.0
        %2051 = vmatpush1.msra.mxu0 %v1999
        %2052 = vmatprep.subr.mxu0 0.0
        %2053 = vmatpush1.msra.mxu0 %v2000
        %2054 = vmatprep.subr.mxu0 0.0
        %2055 = vmatpush1.msra.mxu0 %v2001
        %2056 = vmatprep.subr.mxu0 0.0
        %2057 = vmatpush1.msra.mxu0 %v2002
        %2058 = vmatprep.subr.mxu0 0.0
        %2059 = vmatpush1.msra.mxu0 %v2003
        %2060 = vmatprep.subr.mxu0 0.0
        %2061 = vmatpush1.msra.mxu0 %v2004
        %2062 = vmatprep.subr.mxu0 0.0
        %2063 = vmatpush1.msra.mxu0 %v2005
        %2064 = vmatprep.subr.mxu0 0.0
        %2065 = vmatpush1.msra.mxu0 %v2006
        %2066 = vmatprep.subr.mxu0 0.0
        %2067 = vmatpush1.msra.mxu0 %v2007
        %2068 = vmatprep.subr.mxu0 0.0
        %2069 = vmatpush1.msra.mxu0 %v2008
        %2070 = vmatprep.subr.mxu0 0.0
        %2071 = vmatpush1.msra.mxu0 %v2009
        %2072 = vmatprep.subr.mxu0 0.0
        %2073 = vmatpush1.msra.mxu0 %v2010
        %2074 = vmatprep.subr.mxu0 0.0
        %2075 = vmatpush1.msra.mxu0 %v2011
        %2076 = vmatprep.subr.mxu0 0.0
        %2077 = vmatpush1.msra.mxu0 %v2012
        %2078 = vmatprep.subr.mxu0 0.0
        %2079 = vmatpush1.msra.mxu0 %v2013
        %2080 = vmatprep.subr.mxu0 0.0
        %2081 = vmatpush1.msra.mxu0 %v2014
        %2082 = vmatprep.subr.mxu0 0.0
        %2083 = vmatpush1.msra.mxu0 %v2015
        %2084 = vmatprep.subr.mxu0 0.0
        %2085 = vmatpush1.msra.mxu0 %v2016
        %2086 = vmatprep.subr.mxu0 0.0
        %2087 = vmatpush1.msra.mxu0 %v2017
        %2088 = vmatprep.subr.mxu0 0.0
        %2089 = vmatpush1.msra.mxu0 %v2018
        %2090 = vmatprep.subr.mxu0 0.0
        %2091 = vmatpush1.msra.mxu0 %v2019
        %2092 = vmatprep.subr.mxu0 0.0
        %2093 = vmatpush1.msra.mxu0 %v2020
        %2094 = vmatprep.subr.mxu0 0.0
        %2095 = vmatpush1.msra.mxu0 %v2021
        %2096 = vmatprep.subr.mxu0 0.0
        %2097 = vmatpush1.msra.mxu0 %v2022
        %2098 = vmatprep.subr.mxu0 0.0
        %2099 = vmatpush1.msra.mxu0 %v2023
        %2100 = vmatprep.subr.mxu0 0.0
        %2101 = vmatpush1.msra.mxu0 %v2024
        %2102 = vmatprep.subr.mxu0 0.0
        %2103 = vmatpush1.msra.mxu0 %v2025
        %2104 = vmatprep.subr.mxu0 0.0
        %2105 = vmatpush1.msra.mxu0 %v2026
        %2106 = vmatprep.subr.mxu0 0.0
        %2107 = vmatpush1.msra.mxu0 %v2027
        %2108 = vmatprep.mubr.f32.mxu0 %v2029
        %2109 = vmatmul.mubr.f32.gmra.mrb[0].mxu0 %v2028
        %v2110 = vpop.f32.mrb[0].mxu0
        %v2111 = vadd.f32 0.0, %v2110
        %v2112 = vpop.f32.mrb[0].mxu0
        %2113 = vmatprep.mubr.f32.mxu0 %v2031
        %2114 = vmatmul.mubr.f32.gmra.mrb[0].mxu0 %v2030
        %v2115 = vpop.f32.mrb[0].mxu0
        %v2116 = vadd.f32 0.0, %v2115
        %v2117 = vpop.f32.mrb[0].mxu0
        %2118 = vmatprep.mubr.f32.mxu0 %v2033
        %2119 = vmatmul.mubr.f32.gmra.mrb[0].mxu0 %v2032
        %v2120 = vpop.f32.mrb[0].mxu0
        %v2121 = vadd.f32 0.0, %v2120
        %v2122 = vpop.f32.mrb[0].mxu0
        %2123 = vmatprep.mubr.f32.mxu0 %v2035
        %2124 = vmatmul.mubr.f32.gmra.mrb[0].mxu0 %v2034
        %v2125 = vpop.f32.mrb[0].mxu0
        %v2126 = vadd.f32 0.0, %v2125
        %v2127 = vpop.f32.mrb[0].mxu0
        %2128 = vmatprep.mubr.f32.mxu0 %v2037
        %2129 = vmatmul.mubr.f32.gmra.mrb[0].mxu0 %v2036
        %v2130 = vpop.f32.mrb[0].mxu0
        %v2131 = vadd.f32 0.0, %v2130
        %v2132 = vpop.f32.mrb[0].mxu0
        %2133 = vmatprep.mubr.f32.mxu0 %v2039
        %2134 = vmatmul.mubr.f32.gmra.mrb[0].mxu0 %v2038
        %v2135 = vpop.f32.mrb[0].mxu0
        %v2136 = vadd.f32 0.0, %v2135
        %v2137 = vpop.f32.mrb[0].mxu0
        %2138 = vmatprep.mubr.f32.mxu0 %v2041
        %2139 = vmatmul.mubr.f32.gmra.mrb[0].mxu0 %v2040
        %v2140 = vpop.f32.mrb[0].mxu0
        %v2141 = vadd.f32 0.0, %v2140
        %v2142 = vpop.f32.mrb[0].mxu0
        %2143 = vmatprep.mubr.f32.mxu0 %v2043
        %2144 = vmatmul.mubr.f32.gmra.mrb[0].mxu0 %v2042
        %v2145 = vpop.f32.mrb[0].mxu0
        %v2146 = vadd.f32 0.0, %v2145
        %v2147 = vpop.f32.mrb[0].mxu0
        %2148 = vdwg.mxu0
        %s2149 = scalar_lea.vmem %s7, 128
        %v2150 = vld [vmem:[%s2149] sm:$0xff]
        %v2151 = vld [vmem:[%s2149 + $0x8] sm:$0xff]
        %v2152 = vld [vmem:[%s2149 + $0x10] sm:$0xff]
        %v2153 = vld [vmem:[%s2149 + $0x18] sm:$0xff]
        %v2154 = vld [vmem:[%s2149 + $0x20] sm:$0xff]
        %v2155 = vld [vmem:[%s2149 + $0x28] sm:$0xff]
        %v2156 = vld [vmem:[%s2149 + $0x30] sm:$0xff]
        %v2157 = vld [vmem:[%s2149 + $0x38] sm:$0xff]
        %v2158 = vld [vmem:[%s2149 + $0x40] sm:$0xff]
        %v2159 = vld [vmem:[%s2149 + $0x48] sm:$0xff]
        %v2160 = vld [vmem:[%s2149 + $0x50] sm:$0xff]
        %v2161 = vld [vmem:[%s2149 + $0x58] sm:$0xff]
        %v2162 = vld [vmem:[%s2149 + $0x60] sm:$0xff]
        %v2163 = vld [vmem:[%s2149 + $0x68] sm:$0xff]
        %v2164 = vld [vmem:[%s2149 + $0x70] sm:$0xff]
        %v2165 = vld [vmem:[%s2149 + $0x78] sm:$0xff]
        %2166 = vmatprep.subr.mxu0 0.0
        %2167 = vmatpush1.msra.mxu0 %v1996
        %2168 = vmatprep.subr.mxu0 0.0
        %2169 = vmatpush1.msra.mxu0 %v1997
        %2170 = vmatprep.subr.mxu0 0.0
        %2171 = vmatpush1.msra.mxu0 %v1998
        %2172 = vmatprep.subr.mxu0 0.0
        %2173 = vmatpush1.msra.mxu0 %v1999
        %2174 = vmatprep.subr.mxu0 0.0
        %2175 = vmatpush1.msra.mxu0 %v2000
        %2176 = vmatprep.subr.mxu0 0.0
        %2177 = vmatpush1.msra.mxu0 %v2001
        %2178 = vmatprep.subr.mxu0 0.0
        %2179 = vmatpush1.msra.mxu0 %v2002
        %2180 = vmatprep.subr.mxu0 0.0
        %2181 = vmatpush1.msra.mxu0 %v2003
        %2182 = vmatprep.subr.mxu0 0.0
        %2183 = vmatpush1.msra.mxu0 %v2004
        %2184 = vmatprep.subr.mxu0 0.0
        %2185 = vmatpush1.msra.mxu0 %v2005
        %2186 = vmatprep.subr.mxu0 0.0
        %2187 = vmatpush1.msra.mxu0 %v2006
        %2188 = vmatprep.subr.mxu0 0.0
        %2189 = vmatpush1.msra.mxu0 %v2007
        %2190 = vmatprep.subr.mxu0 0.0
        %2191 = vmatpush1.msra.mxu0 %v2008
        %2192 = vmatprep.subr.mxu0 0.0
        %2193 = vmatpush1.msra.mxu0 %v2009
        %2194 = vmatprep.subr.mxu0 0.0
        %2195 = vmatpush1.msra.mxu0 %v2010
        %2196 = vmatprep.subr.mxu0 0.0
        %2197 = vmatpush1.msra.mxu0 %v2011
        %2198 = vmatprep.subr.mxu0 0.0
        %2199 = vmatpush1.msra.mxu0 %v2012
        %2200 = vmatprep.subr.mxu0 0.0
        %2201 = vmatpush1.msra.mxu0 %v2013
        %2202 = vmatprep.subr.mxu0 0.0
        %2203 = vmatpush1.msra.mxu0 %v2014
        %2204 = vmatprep.subr.mxu0 0.0
        %2205 = vmatpush1.msra.mxu0 %v2015
        %2206 = vmatprep.subr.mxu0 0.0
        %2207 = vmatpush1.msra.mxu0 %v2016
        %2208 = vmatprep.subr.mxu0 0.0
        %2209 = vmatpush1.msra.mxu0 %v2017
        %2210 = vmatprep.subr.mxu0 0.0
        %2211 = vmatpush1.msra.mxu0 %v2018
        %2212 = vmatprep.subr.mxu0 0.0
        %2213 = vmatpush1.msra.mxu0 %v2019
        %2214 = vmatprep.subr.mxu0 0.0
        %2215 = vmatpush1.msra.mxu0 %v2020
        %2216 = vmatprep.subr.mxu0 0.0
        %2217 = vmatpush1.msra.mxu0 %v2021
        %2218 = vmatprep.subr.mxu0 0.0
        %2219 = vmatpush1.msra.mxu0 %v2022
        %2220 = vmatprep.subr.mxu0 0.0
        %2221 = vmatpush1.msra.mxu0 %v2023
        %2222 = vmatprep.subr.mxu0 0.0
        %2223 = vmatpush1.msra.mxu0 %v2024
        %2224 = vmatprep.subr.mxu0 0.0
        %2225 = vmatpush1.msra.mxu0 %v2025
        %2226 = vmatprep.subr.mxu0 0.0
        %2227 = vmatpush1.msra.mxu0 %v2026
        %2228 = vmatprep.subr.mxu0 0.0
        %2229 = vmatpush1.msra.mxu0 %v2027
        %2230 = vmatprep.mubr.f32.mxu0 %v2151
        %2231 = vmatmul.mubr.f32.gmra.mrb[0].mxu0 %v2150
        %v2232 = vpop.f32.mrb[0].mxu0
        %v2233 = vadd.f32 0.0, %v2232
        %v2234 = vpop.f32.mrb[0].mxu0
        %2235 = vmatprep.mubr.f32.mxu0 %v2153
        %2236 = vmatmul.mubr.f32.gmra.mrb[0].mxu0 %v2152
        %v2237 = vpop.f32.mrb[0].mxu0
        %v2238 = vadd.f32 0.0, %v2237
        %v2239 = vpop.f32.mrb[0].mxu0
        %2240 = vmatprep.mubr.f32.mxu0 %v2155
        %2241 = vmatmul.mubr.f32.gmra.mrb[0].mxu0 %v2154
        %v2242 = vpop.f32.mrb[0].mxu0
        %v2243 = vadd.f32 0.0, %v2242
        %v2244 = vpop.f32.mrb[0].mxu0
        %2245 = vmatprep.mubr.f32.mxu0 %v2157
        %2246 = vmatmul.mubr.f32.gmra.mrb[0].mxu0 %v2156
        %v2247 = vpop.f32.mrb[0].mxu0
        %v2248 = vadd.f32 0.0, %v2247
        %v2249 = vpop.f32.mrb[0].mxu0
        %2250 = vmatprep.mubr.f32.mxu0 %v2159
        %2251 = vmatmul.mubr.f32.gmra.mrb[0].mxu0 %v2158
        %v2252 = vpop.f32.mrb[0].mxu0
        %v2253 = vadd.f32 0.0, %v2252
        %v2254 = vpop.f32.mrb[0].mxu0
        %2255 = vmatprep.mubr.f32.mxu0 %v2161
        %2256 = vmatmul.mubr.f32.gmra.mrb[0].mxu0 %v2160
        %v2257 = vpop.f32.mrb[0].mxu0
        %v2258 = vadd.f32 0.0, %v2257
        %v2259 = vpop.f32.mrb[0].mxu0
        %2260 = vmatprep.mubr.f32.mxu0 %v2163
        %2261 = vmatmul.mubr.f32.gmra.mrb[0].mxu0 %v2162
        %v2262 = vpop.f32.mrb[0].mxu0
        %v2263 = vadd.f32 0.0, %v2262
        %v2264 = vpop.f32.mrb[0].mxu0
        %2265 = vmatprep.mubr.f32.mxu0 %v2165
        %2266 = vmatmul.mubr.f32.gmra.mrb[0].mxu0 %v2164
        %v2267 = vpop.f32.mrb[0].mxu0
        %v2268 = vadd.f32 0.0, %v2267
        %v2269 = vpop.f32.mrb[0].mxu0
        %2270 = vdwg.mxu0
        %v2271 = vmax.f32 %v2111, %v2233
        %v2272 = vmax.f32 %v2116, %v2238
        %v2273 = vmax.f32 %v2121, %v2243
        %v2274 = vmax.f32 %v2126, %v2248
        %v2275 = vmax.f32 %v2131, %v2253
        %v2276 = vmax.f32 %v2136, %v2258
        %v2277 = vmax.f32 %v2141, %v2263
        %v2278 = vmax.f32 %v2146, %v2268
        %s2279 = scalar_lea.vmem %s7, 256
        %v2280 = vld [vmem:[%s2279] sm:$0xff]
        %v2281 = vld [vmem:[%s2279 + $0x8] sm:$0xff]
        %v2282 = vld [vmem:[%s2279 + $0x10] sm:$0xff]
        %v2283 = vld [vmem:[%s2279 + $0x18] sm:$0xff]
        %v2284 = vld [vmem:[%s2279 + $0x20] sm:$0xff]
        %v2285 = vld [vmem:[%s2279 + $0x28] sm:$0xff]
        %v2286 = vld [vmem:[%s2279 + $0x30] sm:$0xff]
        %v2287 = vld [vmem:[%s2279 + $0x38] sm:$0xff]
        %v2288 = vld [vmem:[%s2279 + $0x40] sm:$0xff]
        %v2289 = vld [vmem:[%s2279 + $0x48] sm:$0xff]
        %v2290 = vld [vmem:[%s2279 + $0x50] sm:$0xff]
        %v2291 = vld [vmem:[%s2279 + $0x58] sm:$0xff]
        %v2292 = vld [vmem:[%s2279 + $0x60] sm:$0xff]
        %v2293 = vld [vmem:[%s2279 + $0x68] sm:$0xff]
        %v2294 = vld [vmem:[%s2279 + $0x70] sm:$0xff]
        %v2295 = vld [vmem:[%s2279 + $0x78] sm:$0xff]
        %2296 = vmatprep.subr.mxu0 0.0
        %2297 = vmatpush1.msra.mxu0 %v1996
        %2298 = vmatprep.subr.mxu0 0.0
        %2299 = vmatpush1.msra.mxu0 %v1997
        %2300 = vmatprep.subr.mxu0 0.0
        %2301 = vmatpush1.msra.mxu0 %v1998
        %2302 = vmatprep.subr.mxu0 0.0
        %2303 = vmatpush1.msra.mxu0 %v1999
        %2304 = vmatprep.subr.mxu0 0.0
        %2305 = vmatpush1.msra.mxu0 %v2000
        %2306 = vmatprep.subr.mxu0 0.0
        %2307 = vmatpush1.msra.mxu0 %v2001
        %2308 = vmatprep.subr.mxu0 0.0
        %2309 = vmatpush1.msra.mxu0 %v2002
        %2310 = vmatprep.subr.mxu0 0.0
        %2311 = vmatpush1.msra.mxu0 %v2003
        %2312 = vmatprep.subr.mxu0 0.0
        %2313 = vmatpush1.msra.mxu0 %v2004
        %2314 = vmatprep.subr.mxu0 0.0
        %2315 = vmatpush1.msra.mxu0 %v2005
        %2316 = vmatprep.subr.mxu0 0.0
        %2317 = vmatpush1.msra.mxu0 %v2006
        %2318 = vmatprep.subr.mxu0 0.0
        %2319 = vmatpush1.msra.mxu0 %v2007
        %2320 = vmatprep.subr.mxu0 0.0
        %2321 = vmatpush1.msra.mxu0 %v2008
        %2322 = vmatprep.subr.mxu0 0.0
        %2323 = vmatpush1.msra.mxu0 %v2009
        %2324 = vmatprep.subr.mxu0 0.0
        %2325 = vmatpush1.msra.mxu0 %v2010
        %2326 = vmatprep.subr.mxu0 0.0
        %2327 = vmatpush1.msra.mxu0 %v2011
        %2328 = vmatprep.subr.mxu0 0.0
        %2329 = vmatpush1.msra.mxu0 %v2012
        %2330 = vmatprep.subr.mxu0 0.0
        %2331 = vmatpush1.msra.mxu0 %v2013
        %2332 = vmatprep.subr.mxu0 0.0
        %2333 = vmatpush1.msra.mxu0 %v2014
        %2334 = vmatprep.subr.mxu0 0.0
        %2335 = vmatpush1.msra.mxu0 %v2015
        %2336 = vmatprep.subr.mxu0 0.0
        %2337 = vmatpush1.msra.mxu0 %v2016
        %2338 = vmatprep.subr.mxu0 0.0
        %2339 = vmatpush1.msra.mxu0 %v2017
        %2340 = vmatprep.subr.mxu0 0.0
        %2341 = vmatpush1.msra.mxu0 %v2018
        %2342 = vmatprep.subr.mxu0 0.0
        %2343 = vmatpush1.msra.mxu0 %v2019
        %2344 = vmatprep.subr.mxu0 0.0
        %2345 = vmatpush1.msra.mxu0 %v2020
        %2346 = vmatprep.subr.mxu0 0.0
        %2347 = vmatpush1.msra.mxu0 %v2021
        %2348 = vmatprep.subr.mxu0 0.0
        %2349 = vmatpush1.msra.mxu0 %v2022
        %2350 = vmatprep.subr.mxu0 0.0
        %2351 = vmatpush1.msra.mxu0 %v2023
        %2352 = vmatprep.subr.mxu0 0.0
        %2353 = vmatpush1.msra.mxu0 %v2024
        %2354 = vmatprep.subr.mxu0 0.0
        %2355 = vmatpush1.msra.mxu0 %v2025
        %2356 = vmatprep.subr.mxu0 0.0
        %2357 = vmatpush1.msra.mxu0 %v2026
        %2358 = vmatprep.subr.mxu0 0.0
        %2359 = vmatpush1.msra.mxu0 %v2027
        %2360 = vmatprep.mubr.f32.mxu0 %v2281
        %2361 = vmatmul.mubr.f32.gmra.mrb[0].mxu0 %v2280
        %v2362 = vpop.f32.mrb[0].mxu0
        %v2363 = vadd.f32 0.0, %v2362
        %v2364 = vpop.f32.mrb[0].mxu0
        %2365 = vmatprep.mubr.f32.mxu0 %v2283
        %2366 = vmatmul.mubr.f32.gmra.mrb[0].mxu0 %v2282
        %v2367 = vpop.f32.mrb[0].mxu0
        %v2368 = vadd.f32 0.0, %v2367
        %v2369 = vpop.f32.mrb[0].mxu0
        %2370 = vmatprep.mubr.f32.mxu0 %v2285
        %2371 = vmatmul.mubr.f32.gmra.mrb[0].mxu0 %v2284
        %v2372 = vpop.f32.mrb[0].mxu0
        %v2373 = vadd.f32 0.0, %v2372
        %v2374 = vpop.f32.mrb[0].mxu0
        %2375 = vmatprep.mubr.f32.mxu0 %v2287
        %2376 = vmatmul.mubr.f32.gmra.mrb[0].mxu0 %v2286
        %v2377 = vpop.f32.mrb[0].mxu0
        %v2378 = vadd.f32 0.0, %v2377
        %v2379 = vpop.f32.mrb[0].mxu0
        %2380 = vmatprep.mubr.f32.mxu0 %v2289
        %2381 = vmatmul.mubr.f32.gmra.mrb[0].mxu0 %v2288
        %v2382 = vpop.f32.mrb[0].mxu0
        %v2383 = vadd.f32 0.0, %v2382
        %v2384 = vpop.f32.mrb[0].mxu0
        %2385 = vmatprep.mubr.f32.mxu0 %v2291
        %2386 = vmatmul.mubr.f32.gmra.mrb[0].mxu0 %v2290
        %v2387 = vpop.f32.mrb[0].mxu0
        %v2388 = vadd.f32 0.0, %v2387
        %v2389 = vpop.f32.mrb[0].mxu0
        %2390 = vmatprep.mubr.f32.mxu0 %v2293
        %2391 = vmatmul.mubr.f32.gmra.mrb[0].mxu0 %v2292
        %v2392 = vpop.f32.mrb[0].mxu0
        %v2393 = vadd.f32 0.0, %v2392
        %v2394 = vpop.f32.mrb[0].mxu0
        %2395 = vmatprep.mubr.f32.mxu0 %v2295
        %2396 = vmatmul.mubr.f32.gmra.mrb[0].mxu0 %v2294
        %v2397 = vpop.f32.mrb[0].mxu0
        %v2398 = vadd.f32 0.0, %v2397
        %v2399 = vpop.f32.mrb[0].mxu0
        %2400 = vdwg.mxu0
        %v2401 = vmax.f32 %v2271, %v2363
        %v2402 = vmax.f32 %v2272, %v2368
        %v2403 = vmax.f32 %v2273, %v2373
        %v2404 = vmax.f32 %v2274, %v2378
        %v2405 = vmax.f32 %v2275, %v2383
        %v2406 = vmax.f32 %v2276, %v2388
        %v2407 = vmax.f32 %v2277, %v2393
        %v2408 = vmax.f32 %v2278, %v2398
        %s2409 = scalar_lea.vmem %s7, 384
        %v2410 = vld [vmem:[%s2409] sm:$0xff]
        %v2411 = vld [vmem:[%s2409 + $0x8] sm:$0xff]
        %v2412 = vld [vmem:[%s2409 + $0x10] sm:$0xff]
        %v2413 = vld [vmem:[%s2409 + $0x18] sm:$0xff]
        %v2414 = vld [vmem:[%s2409 + $0x20] sm:$0xff]
        %v2415 = vld [vmem:[%s2409 + $0x28] sm:$0xff]
        %v2416 = vld [vmem:[%s2409 + $0x30] sm:$0xff]
        %v2417 = vld [vmem:[%s2409 + $0x38] sm:$0xff]
        %v2418 = vld [vmem:[%s2409 + $0x40] sm:$0xff]
        %v2419 = vld [vmem:[%s2409 + $0x48] sm:$0xff]
        %v2420 = vld [vmem:[%s2409 + $0x50] sm:$0xff]
        %v2421 = vld [vmem:[%s2409 + $0x58] sm:$0xff]
        %v2422 = vld [vmem:[%s2409 + $0x60] sm:$0xff]
        %v2423 = vld [vmem:[%s2409 + $0x68] sm:$0xff]
        %v2424 = vld [vmem:[%s2409 + $0x70] sm:$0xff]
        %v2425 = vld [vmem:[%s2409 + $0x78] sm:$0xff]
        %2426 = vmatprep.subr.mxu0 0.0
        %2427 = vmatpush1.msra.mxu0 %v1996
        %2428 = vmatprep.subr.mxu0 0.0
        %2429 = vmatpush1.msra.mxu0 %v1997
        %2430 = vmatprep.subr.mxu0 0.0
        %2431 = vmatpush1.msra.mxu0 %v1998
        %2432 = vmatprep.subr.mxu0 0.0
        %2433 = vmatpush1.msra.mxu0 %v1999
        %2434 = vmatprep.subr.mxu0 0.0
        %2435 = vmatpush1.msra.mxu0 %v2000
        %2436 = vmatprep.subr.mxu0 0.0
        %2437 = vmatpush1.msra.mxu0 %v2001
        %2438 = vmatprep.subr.mxu0 0.0
        %2439 = vmatpush1.msra.mxu0 %v2002
        %2440 = vmatprep.subr.mxu0 0.0
        %2441 = vmatpush1.msra.mxu0 %v2003
        %2442 = vmatprep.subr.mxu0 0.0
        %2443 = vmatpush1.msra.mxu0 %v2004
        %2444 = vmatprep.subr.mxu0 0.0
        %2445 = vmatpush1.msra.mxu0 %v2005
        %2446 = vmatprep.subr.mxu0 0.0
        %2447 = vmatpush1.msra.mxu0 %v2006
        %2448 = vmatprep.subr.mxu0 0.0
        %2449 = vmatpush1.msra.mxu0 %v2007
        %2450 = vmatprep.subr.mxu0 0.0
        %2451 = vmatpush1.msra.mxu0 %v2008
        %2452 = vmatprep.subr.mxu0 0.0
        %2453 = vmatpush1.msra.mxu0 %v2009
        %2454 = vmatprep.subr.mxu0 0.0
        %2455 = vmatpush1.msra.mxu0 %v2010
        %2456 = vmatprep.subr.mxu0 0.0
        %2457 = vmatpush1.msra.mxu0 %v2011
        %2458 = vmatprep.subr.mxu0 0.0
        %2459 = vmatpush1.msra.mxu0 %v2012
        %2460 = vmatprep.subr.mxu0 0.0
        %2461 = vmatpush1.msra.mxu0 %v2013
        %2462 = vmatprep.subr.mxu0 0.0
        %2463 = vmatpush1.msra.mxu0 %v2014
        %2464 = vmatprep.subr.mxu0 0.0
        %2465 = vmatpush1.msra.mxu0 %v2015
        %2466 = vmatprep.subr.mxu0 0.0
        %2467 = vmatpush1.msra.mxu0 %v2016
        %2468 = vmatprep.subr.mxu0 0.0
        %2469 = vmatpush1.msra.mxu0 %v2017
        %2470 = vmatprep.subr.mxu0 0.0
        %2471 = vmatpush1.msra.mxu0 %v2018
        %2472 = vmatprep.subr.mxu0 0.0
        %2473 = vmatpush1.msra.mxu0 %v2019
        %2474 = vmatprep.subr.mxu0 0.0
        %2475 = vmatpush1.msra.mxu0 %v2020
        %2476 = vmatprep.subr.mxu0 0.0
        %2477 = vmatpush1.msra.mxu0 %v2021
        %2478 = vmatprep.subr.mxu0 0.0
        %2479 = vmatpush1.msra.mxu0 %v2022
        %2480 = vmatprep.subr.mxu0 0.0
        %2481 = vmatpush1.msra.mxu0 %v2023
        %2482 = vmatprep.subr.mxu0 0.0
        %2483 = vmatpush1.msra.mxu0 %v2024
        %2484 = vmatprep.subr.mxu0 0.0
        %2485 = vmatpush1.msra.mxu0 %v2025
        %2486 = vmatprep.subr.mxu0 0.0
        %2487 = vmatpush1.msra.mxu0 %v2026
        %2488 = vmatprep.subr.mxu0 0.0
        %2489 = vmatpush1.msra.mxu0 %v2027
        %2490 = vmatprep.mubr.f32.mxu0 %v2411
        %2491 = vmatmul.mubr.f32.gmra.mrb[0].mxu0 %v2410
        %v2492 = vpop.f32.mrb[0].mxu0
        %v2493 = vadd.f32 0.0, %v2492
        %v2494 = vpop.f32.mrb[0].mxu0
        %2495 = vmatprep.mubr.f32.mxu0 %v2413
        %2496 = vmatmul.mubr.f32.gmra.mrb[0].mxu0 %v2412
        %v2497 = vpop.f32.mrb[0].mxu0
        %v2498 = vadd.f32 0.0, %v2497
        %v2499 = vpop.f32.mrb[0].mxu0
        %2500 = vmatprep.mubr.f32.mxu0 %v2415
        %2501 = vmatmul.mubr.f32.gmra.mrb[0].mxu0 %v2414
        %v2502 = vpop.f32.mrb[0].mxu0
        %v2503 = vadd.f32 0.0, %v2502
        %v2504 = vpop.f32.mrb[0].mxu0
        %2505 = vmatprep.mubr.f32.mxu0 %v2417
        %2506 = vmatmul.mubr.f32.gmra.mrb[0].mxu0 %v2416
        %v2507 = vpop.f32.mrb[0].mxu0
        %v2508 = vadd.f32 0.0, %v2507
        %v2509 = vpop.f32.mrb[0].mxu0
        %2510 = vmatprep.mubr.f32.mxu0 %v2419
        %2511 = vmatmul.mubr.f32.gmra.mrb[0].mxu0 %v2418
        %v2512 = vpop.f32.mrb[0].mxu0
        %v2513 = vadd.f32 0.0, %v2512
        %v2514 = vpop.f32.mrb[0].mxu0
        %2515 = vmatprep.mubr.f32.mxu0 %v2421
        %2516 = vmatmul.mubr.f32.gmra.mrb[0].mxu0 %v2420
        %v2517 = vpop.f32.mrb[0].mxu0
        %v2518 = vadd.f32 0.0, %v2517
        %v2519 = vpop.f32.mrb[0].mxu0
        %2520 = vmatprep.mubr.f32.mxu0 %v2423
        %2521 = vmatmul.mubr.f32.gmra.mrb[0].mxu0 %v2422
        %v2522 = vpop.f32.mrb[0].mxu0
        %v2523 = vadd.f32 0.0, %v2522
        %v2524 = vpop.f32.mrb[0].mxu0
        %2525 = vmatprep.mubr.f32.mxu0 %v2425
        %2526 = vmatmul.mubr.f32.gmra.mrb[0].mxu0 %v2424
        %v2527 = vpop.f32.mrb[0].mxu0
        %v2528 = vadd.f32 0.0, %v2527
        %v2529 = vpop.f32.mrb[0].mxu0
        %2530 = vdwg.mxu0
        %v2531 = vmax.f32 %v2401, %v2493
        %v2532 = vmax.f32 %v2402, %v2498
        %v2533 = vmax.f32 %v2403, %v2503
        %v2534 = vmax.f32 %v2404, %v2508
        %v2535 = vmax.f32 %v2405, %v2513
        %v2536 = vmax.f32 %v2406, %v2518
        %v2537 = vmax.f32 %v2407, %v2523
        %v2538 = vmax.f32 %v2408, %v2528
        %s2539 = scalar_lea.vmem %s7, 512
        %v2540 = vld [vmem:[%s2539] sm:$0xff]
        %v2541 = vld [vmem:[%s2539 + $0x8] sm:$0xff]
        %v2542 = vld [vmem:[%s2539 + $0x10] sm:$0xff]
        %v2543 = vld [vmem:[%s2539 + $0x18] sm:$0xff]
        %v2544 = vld [vmem:[%s2539 + $0x20] sm:$0xff]
        %v2545 = vld [vmem:[%s2539 + $0x28] sm:$0xff]
        %v2546 = vld [vmem:[%s2539 + $0x30] sm:$0xff]
        %v2547 = vld [vmem:[%s2539 + $0x38] sm:$0xff]
        %v2548 = vld [vmem:[%s2539 + $0x40] sm:$0xff]
        %v2549 = vld [vmem:[%s2539 + $0x48] sm:$0xff]
        %v2550 = vld [vmem:[%s2539 + $0x50] sm:$0xff]
        %v2551 = vld [vmem:[%s2539 + $0x58] sm:$0xff]
        %v2552 = vld [vmem:[%s2539 + $0x60] sm:$0xff]
        %v2553 = vld [vmem:[%s2539 + $0x68] sm:$0xff]
        %v2554 = vld [vmem:[%s2539 + $0x70] sm:$0xff]
        %v2555 = vld [vmem:[%s2539 + $0x78] sm:$0xff]
        %2556 = vmatprep.subr.mxu0 0.0
        %2557 = vmatpush1.msra.mxu0 %v1996
        %2558 = vmatprep.subr.mxu0 0.0
        %2559 = vmatpush1.msra.mxu0 %v1997
        %2560 = vmatprep.subr.mxu0 0.0
        %2561 = vmatpush1.msra.mxu0 %v1998
        %2562 = vmatprep.subr.mxu0 0.0
        %2563 = vmatpush1.msra.mxu0 %v1999
        %2564 = vmatprep.subr.mxu0 0.0
        %2565 = vmatpush1.msra.mxu0 %v2000
        %2566 = vmatprep.subr.mxu0 0.0
        %2567 = vmatpush1.msra.mxu0 %v2001
        %2568 = vmatprep.subr.mxu0 0.0
        %2569 = vmatpush1.msra.mxu0 %v2002
        %2570 = vmatprep.subr.mxu0 0.0
        %2571 = vmatpush1.msra.mxu0 %v2003
        %2572 = vmatprep.subr.mxu0 0.0
        %2573 = vmatpush1.msra.mxu0 %v2004
        %2574 = vmatprep.subr.mxu0 0.0
        %2575 = vmatpush1.msra.mxu0 %v2005
        %2576 = vmatprep.subr.mxu0 0.0
        %2577 = vmatpush1.msra.mxu0 %v2006
        %2578 = vmatprep.subr.mxu0 0.0
        %2579 = vmatpush1.msra.mxu0 %v2007
        %2580 = vmatprep.subr.mxu0 0.0
        %2581 = vmatpush1.msra.mxu0 %v2008
        %2582 = vmatprep.subr.mxu0 0.0
        %2583 = vmatpush1.msra.mxu0 %v2009
        %2584 = vmatprep.subr.mxu0 0.0
        %2585 = vmatpush1.msra.mxu0 %v2010
        %2586 = vmatprep.subr.mxu0 0.0
        %2587 = vmatpush1.msra.mxu0 %v2011
        %2588 = vmatprep.subr.mxu0 0.0
        %2589 = vmatpush1.msra.mxu0 %v2012
        %2590 = vmatprep.subr.mxu0 0.0
        %2591 = vmatpush1.msra.mxu0 %v2013
        %2592 = vmatprep.subr.mxu0 0.0
        %2593 = vmatpush1.msra.mxu0 %v2014
        %2594 = vmatprep.subr.mxu0 0.0
        %2595 = vmatpush1.msra.mxu0 %v2015
        %2596 = vmatprep.subr.mxu0 0.0
        %2597 = vmatpush1.msra.mxu0 %v2016
        %2598 = vmatprep.subr.mxu0 0.0
        %2599 = vmatpush1.msra.mxu0 %v2017
        %2600 = vmatprep.subr.mxu0 0.0
        %2601 = vmatpush1.msra.mxu0 %v2018
        %2602 = vmatprep.subr.mxu0 0.0
        %2603 = vmatpush1.msra.mxu0 %v2019
        %2604 = vmatprep.subr.mxu0 0.0
        %2605 = vmatpush1.msra.mxu0 %v2020
        %2606 = vmatprep.subr.mxu0 0.0
        %2607 = vmatpush1.msra.mxu0 %v2021
        %2608 = vmatprep.subr.mxu0 0.0
        %2609 = vmatpush1.msra.mxu0 %v2022
        %2610 = vmatprep.subr.mxu0 0.0
        %2611 = vmatpush1.msra.mxu0 %v2023
        %2612 = vmatprep.subr.mxu0 0.0
        %2613 = vmatpush1.msra.mxu0 %v2024
        %2614 = vmatprep.subr.mxu0 0.0
        %2615 = vmatpush1.msra.mxu0 %v2025
        %2616 = vmatprep.subr.mxu0 0.0
        %2617 = vmatpush1.msra.mxu0 %v2026
        %2618 = vmatprep.subr.mxu0 0.0
        %2619 = vmatpush1.msra.mxu0 %v2027
        %2620 = vmatprep.mubr.f32.mxu0 %v2541
        %2621 = vmatmul.mubr.f32.gmra.mrb[0].mxu0 %v2540
        %v2622 = vpop.f32.mrb[0].mxu0
        %v2623 = vadd.f32 0.0, %v2622
        %v2624 = vpop.f32.mrb[0].mxu0
        %2625 = vmatprep.mubr.f32.mxu0 %v2543
        %2626 = vmatmul.mubr.f32.gmra.mrb[0].mxu0 %v2542
        %v2627 = vpop.f32.mrb[0].mxu0
        %v2628 = vadd.f32 0.0, %v2627
        %v2629 = vpop.f32.mrb[0].mxu0
        %2630 = vmatprep.mubr.f32.mxu0 %v2545
        %2631 = vmatmul.mubr.f32.gmra.mrb[0].mxu0 %v2544
        %v2632 = vpop.f32.mrb[0].mxu0
        %v2633 = vadd.f32 0.0, %v2632
        %v2634 = vpop.f32.mrb[0].mxu0
        %2635 = vmatprep.mubr.f32.mxu0 %v2547
        %2636 = vmatmul.mubr.f32.gmra.mrb[0].mxu0 %v2546
        %v2637 = vpop.f32.mrb[0].mxu0
        %v2638 = vadd.f32 0.0, %v2637
        %v2639 = vpop.f32.mrb[0].mxu0
        %2640 = vmatprep.mubr.f32.mxu0 %v2549
        %2641 = vmatmul.mubr.f32.gmra.mrb[0].mxu0 %v2548
        %v2642 = vpop.f32.mrb[0].mxu0
        %v2643 = vadd.f32 0.0, %v2642
        %v2644 = vpop.f32.mrb[0].mxu0
        %2645 = vmatprep.mubr.f32.mxu0 %v2551
        %2646 = vmatmul.mubr.f32.gmra.mrb[0].mxu0 %v2550
        %v2647 = vpop.f32.mrb[0].mxu0
        %v2648 = vadd.f32 0.0, %v2647
        %v2649 = vpop.f32.mrb[0].mxu0
        %2650 = vmatprep.mubr.f32.mxu0 %v2553
        %2651 = vmatmul.mubr.f32.gmra.mrb[0].mxu0 %v2552
        %v2652 = vpop.f32.mrb[0].mxu0
        %v2653 = vadd.f32 0.0, %v2652
        %v2654 = vpop.f32.mrb[0].mxu0
        %2655 = vmatprep.mubr.f32.mxu0 %v2555
        %2656 = vmatmul.mubr.f32.gmra.mrb[0].mxu0 %v2554
        %v2657 = vpop.f32.mrb[0].mxu0
        %v2658 = vadd.f32 0.0, %v2657
        %v2659 = vpop.f32.mrb[0].mxu0
        %2660 = vdwg.mxu0
        %v2661 = vmax.f32 %v2531, %v2623
        %v2662 = vmax.f32 %v2532, %v2628
        %v2663 = vmax.f32 %v2533, %v2633
        %v2664 = vmax.f32 %v2534, %v2638
        %v2665 = vmax.f32 %v2535, %v2643
        %v2666 = vmax.f32 %v2536, %v2648
        %v2667 = vmax.f32 %v2537, %v2653
        %v2668 = vmax.f32 %v2538, %v2658
        %s2669 = scalar_lea.vmem %s7, 640
        %v2670 = vld [vmem:[%s2669] sm:$0xff]
        %v2671 = vld [vmem:[%s2669 + $0x8] sm:$0xff]
        %v2672 = vld [vmem:[%s2669 + $0x10] sm:$0xff]
        %v2673 = vld [vmem:[%s2669 + $0x18] sm:$0xff]
        %v2674 = vld [vmem:[%s2669 + $0x20] sm:$0xff]
        %v2675 = vld [vmem:[%s2669 + $0x28] sm:$0xff]
        %v2676 = vld [vmem:[%s2669 + $0x30] sm:$0xff]
        %v2677 = vld [vmem:[%s2669 + $0x38] sm:$0xff]
        %v2678 = vld [vmem:[%s2669 + $0x40] sm:$0xff]
        %v2679 = vld [vmem:[%s2669 + $0x48] sm:$0xff]
        %v2680 = vld [vmem:[%s2669 + $0x50] sm:$0xff]
        %v2681 = vld [vmem:[%s2669 + $0x58] sm:$0xff]
        %v2682 = vld [vmem:[%s2669 + $0x60] sm:$0xff]
        %v2683 = vld [vmem:[%s2669 + $0x68] sm:$0xff]
        %v2684 = vld [vmem:[%s2669 + $0x70] sm:$0xff]
        %v2685 = vld [vmem:[%s2669 + $0x78] sm:$0xff]
        %2686 = vmatprep.subr.mxu0 0.0
        %2687 = vmatpush1.msra.mxu0 %v1996
        %2688 = vmatprep.subr.mxu0 0.0
        %2689 = vmatpush1.msra.mxu0 %v1997
        %2690 = vmatprep.subr.mxu0 0.0
        %2691 = vmatpush1.msra.mxu0 %v1998
        %2692 = vmatprep.subr.mxu0 0.0
        %2693 = vmatpush1.msra.mxu0 %v1999
        %2694 = vmatprep.subr.mxu0 0.0
        %2695 = vmatpush1.msra.mxu0 %v2000
        %2696 = vmatprep.subr.mxu0 0.0
        %2697 = vmatpush1.msra.mxu0 %v2001
        %2698 = vmatprep.subr.mxu0 0.0
        %2699 = vmatpush1.msra.mxu0 %v2002
        %2700 = vmatprep.subr.mxu0 0.0
        %2701 = vmatpush1.msra.mxu0 %v2003
        %2702 = vmatprep.subr.mxu0 0.0
        %2703 = vmatpush1.msra.mxu0 %v2004
        %2704 = vmatprep.subr.mxu0 0.0
        %2705 = vmatpush1.msra.mxu0 %v2005
        %2706 = vmatprep.subr.mxu0 0.0
        %2707 = vmatpush1.msra.mxu0 %v2006
        %2708 = vmatprep.subr.mxu0 0.0
        %2709 = vmatpush1.msra.mxu0 %v2007
        %2710 = vmatprep.subr.mxu0 0.0
        %2711 = vmatpush1.msra.mxu0 %v2008
        %2712 = vmatprep.subr.mxu0 0.0
        %2713 = vmatpush1.msra.mxu0 %v2009
        %2714 = vmatprep.subr.mxu0 0.0
        %2715 = vmatpush1.msra.mxu0 %v2010
        %2716 = vmatprep.subr.mxu0 0.0
        %2717 = vmatpush1.msra.mxu0 %v2011
        %2718 = vmatprep.subr.mxu0 0.0
        %2719 = vmatpush1.msra.mxu0 %v2012
        %2720 = vmatprep.subr.mxu0 0.0
        %2721 = vmatpush1.msra.mxu0 %v2013
        %2722 = vmatprep.subr.mxu0 0.0
        %2723 = vmatpush1.msra.mxu0 %v2014
        %2724 = vmatprep.subr.mxu0 0.0
        %2725 = vmatpush1.msra.mxu0 %v2015
        %2726 = vmatprep.subr.mxu0 0.0
        %2727 = vmatpush1.msra.mxu0 %v2016
        %2728 = vmatprep.subr.mxu0 0.0
        %2729 = vmatpush1.msra.mxu0 %v2017
        %2730 = vmatprep.subr.mxu0 0.0
        %2731 = vmatpush1.msra.mxu0 %v2018
        %2732 = vmatprep.subr.mxu0 0.0
        %2733 = vmatpush1.msra.mxu0 %v2019
        %2734 = vmatprep.subr.mxu0 0.0
        %2735 = vmatpush1.msra.mxu0 %v2020
        %2736 = vmatprep.subr.mxu0 0.0
        %2737 = vmatpush1.msra.mxu0 %v2021
        %2738 = vmatprep.subr.mxu0 0.0
        %2739 = vmatpush1.msra.mxu0 %v2022
        %2740 = vmatprep.subr.mxu0 0.0
        %2741 = vmatpush1.msra.mxu0 %v2023
        %2742 = vmatprep.subr.mxu0 0.0
        %2743 = vmatpush1.msra.mxu0 %v2024
        %2744 = vmatprep.subr.mxu0 0.0
        %2745 = vmatpush1.msra.mxu0 %v2025
        %2746 = vmatprep.subr.mxu0 0.0
        %2747 = vmatpush1.msra.mxu0 %v2026
        %2748 = vmatprep.subr.mxu0 0.0
        %2749 = vmatpush1.msra.mxu0 %v2027
        %2750 = vmatprep.mubr.f32.mxu0 %v2671
        %2751 = vmatmul.mubr.f32.gmra.mrb[0].mxu0 %v2670
        %v2752 = vpop.f32.mrb[0].mxu0
        %v2753 = vadd.f32 0.0, %v2752
        %v2754 = vpop.f32.mrb[0].mxu0
        %2755 = vmatprep.mubr.f32.mxu0 %v2673
        %2756 = vmatmul.mubr.f32.gmra.mrb[0].mxu0 %v2672
        %v2757 = vpop.f32.mrb[0].mxu0
        %v2758 = vadd.f32 0.0, %v2757
        %v2759 = vpop.f32.mrb[0].mxu0
        %2760 = vmatprep.mubr.f32.mxu0 %v2675
        %2761 = vmatmul.mubr.f32.gmra.mrb[0].mxu0 %v2674
        %v2762 = vpop.f32.mrb[0].mxu0
        %v2763 = vadd.f32 0.0, %v2762
        %v2764 = vpop.f32.mrb[0].mxu0
        %2765 = vmatprep.mubr.f32.mxu0 %v2677
        %2766 = vmatmul.mubr.f32.gmra.mrb[0].mxu0 %v2676
        %v2767 = vpop.f32.mrb[0].mxu0
        %v2768 = vadd.f32 0.0, %v2767
        %v2769 = vpop.f32.mrb[0].mxu0
        %2770 = vmatprep.mubr.f32.mxu0 %v2679
        %2771 = vmatmul.mubr.f32.gmra.mrb[0].mxu0 %v2678
        %v2772 = vpop.f32.mrb[0].mxu0
        %v2773 = vadd.f32 0.0, %v2772
        %v2774 = vpop.f32.mrb[0].mxu0
        %2775 = vmatprep.mubr.f32.mxu0 %v2681
        %2776 = vmatmul.mubr.f32.gmra.mrb[0].mxu0 %v2680
        %v2777 = vpop.f32.mrb[0].mxu0
        %v2778 = vadd.f32 0.0, %v2777
        %v2779 = vpop.f32.mrb[0].mxu0
        %2780 = vmatprep.mubr.f32.mxu0 %v2683
        %2781 = vmatmul.mubr.f32.gmra.mrb[0].mxu0 %v2682
        %v2782 = vpop.f32.mrb[0].mxu0
        %v2783 = vadd.f32 0.0, %v2782
        %v2784 = vpop.f32.mrb[0].mxu0
        %2785 = vmatprep.mubr.f32.mxu0 %v2685
        %2786 = vmatmul.mubr.f32.gmra.mrb[0].mxu0 %v2684
        %v2787 = vpop.f32.mrb[0].mxu0
        %v2788 = vadd.f32 0.0, %v2787
        %v2789 = vpop.f32.mrb[0].mxu0
        %2790 = vdwg.mxu0
        %v2791 = vmax.f32 %v2661, %v2753
        %v2792 = vmax.f32 %v2662, %v2758
        %v2793 = vmax.f32 %v2663, %v2763
        %v2794 = vmax.f32 %v2664, %v2768
        %v2795 = vmax.f32 %v2665, %v2773
        %v2796 = vmax.f32 %v2666, %v2778
        %v2797 = vmax.f32 %v2667, %v2783
        %v2798 = vmax.f32 %v2668, %v2788
        %s2799 = scalar_lea.vmem %s7, 768
        %v2800 = vld [vmem:[%s2799] sm:$0xff]
        %v2801 = vld [vmem:[%s2799 + $0x8] sm:$0xff]
        %v2802 = vld [vmem:[%s2799 + $0x10] sm:$0xff]
        %v2803 = vld [vmem:[%s2799 + $0x18] sm:$0xff]
        %v2804 = vld [vmem:[%s2799 + $0x20] sm:$0xff]
        %v2805 = vld [vmem:[%s2799 + $0x28] sm:$0xff]
        %v2806 = vld [vmem:[%s2799 + $0x30] sm:$0xff]
        %v2807 = vld [vmem:[%s2799 + $0x38] sm:$0xff]
        %v2808 = vld [vmem:[%s2799 + $0x40] sm:$0xff]
        %v2809 = vld [vmem:[%s2799 + $0x48] sm:$0xff]
        %v2810 = vld [vmem:[%s2799 + $0x50] sm:$0xff]
        %v2811 = vld [vmem:[%s2799 + $0x58] sm:$0xff]
        %v2812 = vld [vmem:[%s2799 + $0x60] sm:$0xff]
        %v2813 = vld [vmem:[%s2799 + $0x68] sm:$0xff]
        %v2814 = vld [vmem:[%s2799 + $0x70] sm:$0xff]
        %v2815 = vld [vmem:[%s2799 + $0x78] sm:$0xff]
        %2816 = vmatprep.subr.mxu0 0.0
        %2817 = vmatpush1.msra.mxu0 %v1996
        %2818 = vmatprep.subr.mxu0 0.0
        %2819 = vmatpush1.msra.mxu0 %v1997
        %2820 = vmatprep.subr.mxu0 0.0
        %2821 = vmatpush1.msra.mxu0 %v1998
        %2822 = vmatprep.subr.mxu0 0.0
        %2823 = vmatpush1.msra.mxu0 %v1999
        %2824 = vmatprep.subr.mxu0 0.0
        %2825 = vmatpush1.msra.mxu0 %v2000
        %2826 = vmatprep.subr.mxu0 0.0
        %2827 = vmatpush1.msra.mxu0 %v2001
        %2828 = vmatprep.subr.mxu0 0.0
        %2829 = vmatpush1.msra.mxu0 %v2002
        %2830 = vmatprep.subr.mxu0 0.0
        %2831 = vmatpush1.msra.mxu0 %v2003
        %2832 = vmatprep.subr.mxu0 0.0
        %2833 = vmatpush1.msra.mxu0 %v2004
        %2834 = vmatprep.subr.mxu0 0.0
        %2835 = vmatpush1.msra.mxu0 %v2005
        %2836 = vmatprep.subr.mxu0 0.0
        %2837 = vmatpush1.msra.mxu0 %v2006
        %2838 = vmatprep.subr.mxu0 0.0
        %2839 = vmatpush1.msra.mxu0 %v2007
        %2840 = vmatprep.subr.mxu0 0.0
        %2841 = vmatpush1.msra.mxu0 %v2008
        %2842 = vmatprep.subr.mxu0 0.0
        %2843 = vmatpush1.msra.mxu0 %v2009
        %2844 = vmatprep.subr.mxu0 0.0
        %2845 = vmatpush1.msra.mxu0 %v2010
        %2846 = vmatprep.subr.mxu0 0.0
        %2847 = vmatpush1.msra.mxu0 %v2011
        %2848 = vmatprep.subr.mxu0 0.0
        %2849 = vmatpush1.msra.mxu0 %v2012
        %2850 = vmatprep.subr.mxu0 0.0
        %2851 = vmatpush1.msra.mxu0 %v2013
        %2852 = vmatprep.subr.mxu0 0.0
        %2853 = vmatpush1.msra.mxu0 %v2014
        %2854 = vmatprep.subr.mxu0 0.0
        %2855 = vmatpush1.msra.mxu0 %v2015
        %2856 = vmatprep.subr.mxu0 0.0
        %2857 = vmatpush1.msra.mxu0 %v2016
        %2858 = vmatprep.subr.mxu0 0.0
        %2859 = vmatpush1.msra.mxu0 %v2017
        %2860 = vmatprep.subr.mxu0 0.0
        %2861 = vmatpush1.msra.mxu0 %v2018
        %2862 = vmatprep.subr.mxu0 0.0
        %2863 = vmatpush1.msra.mxu0 %v2019
        %2864 = vmatprep.subr.mxu0 0.0
        %2865 = vmatpush1.msra.mxu0 %v2020
        %2866 = vmatprep.subr.mxu0 0.0
        %2867 = vmatpush1.msra.mxu0 %v2021
        %2868 = vmatprep.subr.mxu0 0.0
        %2869 = vmatpush1.msra.mxu0 %v2022
        %2870 = vmatprep.subr.mxu0 0.0
        %2871 = vmatpush1.msra.mxu0 %v2023
        %2872 = vmatprep.subr.mxu0 0.0
        %2873 = vmatpush1.msra.mxu0 %v2024
        %2874 = vmatprep.subr.mxu0 0.0
        %2875 = vmatpush1.msra.mxu0 %v2025
        %2876 = vmatprep.subr.mxu0 0.0
        %2877 = vmatpush1.msra.mxu0 %v2026
        %2878 = vmatprep.subr.mxu0 0.0
        %2879 = vmatpush1.msra.mxu0 %v2027
        %2880 = vmatprep.mubr.f32.mxu0 %v2801
        %2881 = vmatmul.mubr.f32.gmra.mrb[0].mxu0 %v2800
        %v2882 = vpop.f32.mrb[0].mxu0
        %v2883 = vadd.f32 0.0, %v2882
        %v2884 = vpop.f32.mrb[0].mxu0
        %2885 = vmatprep.mubr.f32.mxu0 %v2803
        %2886 = vmatmul.mubr.f32.gmra.mrb[0].mxu0 %v2802
        %v2887 = vpop.f32.mrb[0].mxu0
        %v2888 = vadd.f32 0.0, %v2887
        %v2889 = vpop.f32.mrb[0].mxu0
        %2890 = vmatprep.mubr.f32.mxu0 %v2805
        %2891 = vmatmul.mubr.f32.gmra.mrb[0].mxu0 %v2804
        %v2892 = vpop.f32.mrb[0].mxu0
        %v2893 = vadd.f32 0.0, %v2892
        %v2894 = vpop.f32.mrb[0].mxu0
        %2895 = vmatprep.mubr.f32.mxu0 %v2807
        %2896 = vmatmul.mubr.f32.gmra.mrb[0].mxu0 %v2806
        %v2897 = vpop.f32.mrb[0].mxu0
        %v2898 = vadd.f32 0.0, %v2897
        %v2899 = vpop.f32.mrb[0].mxu0
        %2900 = vmatprep.mubr.f32.mxu0 %v2809
        %2901 = vmatmul.mubr.f32.gmra.mrb[0].mxu0 %v2808
        %v2902 = vpop.f32.mrb[0].mxu0
        %v2903 = vadd.f32 0.0, %v2902
        %v2904 = vpop.f32.mrb[0].mxu0
        %2905 = vmatprep.mubr.f32.mxu0 %v2811
        %2906 = vmatmul.mubr.f32.gmra.mrb[0].mxu0 %v2810
        %v2907 = vpop.f32.mrb[0].mxu0
        %v2908 = vadd.f32 0.0, %v2907
        %v2909 = vpop.f32.mrb[0].mxu0
        %2910 = vmatprep.mubr.f32.mxu0 %v2813
        %2911 = vmatmul.mubr.f32.gmra.mrb[0].mxu0 %v2812
        %v2912 = vpop.f32.mrb[0].mxu0
        %v2913 = vadd.f32 0.0, %v2912
        %v2914 = vpop.f32.mrb[0].mxu0
        %2915 = vmatprep.mubr.f32.mxu0 %v2815
        %2916 = vmatmul.mubr.f32.gmra.mrb[0].mxu0 %v2814
        %v2917 = vpop.f32.mrb[0].mxu0
        %v2918 = vadd.f32 0.0, %v2917
        %v2919 = vpop.f32.mrb[0].mxu0
        %2920 = vdwg.mxu0
        %v2921 = vmax.f32 %v2791, %v2883
        %v2922 = vmax.f32 %v2792, %v2888
        %v2923 = vmax.f32 %v2793, %v2893
        %v2924 = vmax.f32 %v2794, %v2898
        %v2925 = vmax.f32 %v2795, %v2903
        %v2926 = vmax.f32 %v2796, %v2908
        %v2927 = vmax.f32 %v2797, %v2913
        %v2928 = vmax.f32 %v2798, %v2918
        %s2929 = scalar_lea.vmem %s7, 896
        %v2930 = vld [vmem:[%s2929] sm:$0xff]
        %v2931 = vld [vmem:[%s2929 + $0x8] sm:$0xff]
        %v2932 = vld [vmem:[%s2929 + $0x10] sm:$0xff]
        %v2933 = vld [vmem:[%s2929 + $0x18] sm:$0xff]
        %v2934 = vld [vmem:[%s2929 + $0x20] sm:$0xff]
        %v2935 = vld [vmem:[%s2929 + $0x28] sm:$0xff]
        %v2936 = vld [vmem:[%s2929 + $0x30] sm:$0xff]
        %v2937 = vld [vmem:[%s2929 + $0x38] sm:$0xff]
        %v2938 = vld [vmem:[%s2929 + $0x40] sm:$0xff]
        %v2939 = vld [vmem:[%s2929 + $0x48] sm:$0xff]
        %v2940 = vld [vmem:[%s2929 + $0x50] sm:$0xff]
        %v2941 = vld [vmem:[%s2929 + $0x58] sm:$0xff]
        %v2942 = vld [vmem:[%s2929 + $0x60] sm:$0xff]
        %v2943 = vld [vmem:[%s2929 + $0x68] sm:$0xff]
        %v2944 = vld [vmem:[%s2929 + $0x70] sm:$0xff]
        %v2945 = vld [vmem:[%s2929 + $0x78] sm:$0xff]
        %2946 = vmatprep.subr.mxu0 0.0
        %2947 = vmatpush1.msra.mxu0 %v1996
        %2948 = vmatprep.subr.mxu0 0.0
        %2949 = vmatpush1.msra.mxu0 %v1997
        %2950 = vmatprep.subr.mxu0 0.0
        %2951 = vmatpush1.msra.mxu0 %v1998
        %2952 = vmatprep.subr.mxu0 0.0
        %2953 = vmatpush1.msra.mxu0 %v1999
        %2954 = vmatprep.subr.mxu0 0.0
        %2955 = vmatpush1.msra.mxu0 %v2000
        %2956 = vmatprep.subr.mxu0 0.0
        %2957 = vmatpush1.msra.mxu0 %v2001
        %2958 = vmatprep.subr.mxu0 0.0
        %2959 = vmatpush1.msra.mxu0 %v2002
        %2960 = vmatprep.subr.mxu0 0.0
        %2961 = vmatpush1.msra.mxu0 %v2003
        %2962 = vmatprep.subr.mxu0 0.0
        %2963 = vmatpush1.msra.mxu0 %v2004
        %2964 = vmatprep.subr.mxu0 0.0
        %2965 = vmatpush1.msra.mxu0 %v2005
        %2966 = vmatprep.subr.mxu0 0.0
        %2967 = vmatpush1.msra.mxu0 %v2006
        %2968 = vmatprep.subr.mxu0 0.0
        %2969 = vmatpush1.msra.mxu0 %v2007
        %2970 = vmatprep.subr.mxu0 0.0
        %2971 = vmatpush1.msra.mxu0 %v2008
        %2972 = vmatprep.subr.mxu0 0.0
        %2973 = vmatpush1.msra.mxu0 %v2009
        %2974 = vmatprep.subr.mxu0 0.0
        %2975 = vmatpush1.msra.mxu0 %v2010
        %2976 = vmatprep.subr.mxu0 0.0
        %2977 = vmatpush1.msra.mxu0 %v2011
        %2978 = vmatprep.subr.mxu0 0.0
        %2979 = vmatpush1.msra.mxu0 %v2012
        %2980 = vmatprep.subr.mxu0 0.0
        %2981 = vmatpush1.msra.mxu0 %v2013
        %2982 = vmatprep.subr.mxu0 0.0
        %2983 = vmatpush1.msra.mxu0 %v2014
        %2984 = vmatprep.subr.mxu0 0.0
        %2985 = vmatpush1.msra.mxu0 %v2015
        %2986 = vmatprep.subr.mxu0 0.0
        %2987 = vmatpush1.msra.mxu0 %v2016
        %2988 = vmatprep.subr.mxu0 0.0
        %2989 = vmatpush1.msra.mxu0 %v2017
        %2990 = vmatprep.subr.mxu0 0.0
        %2991 = vmatpush1.msra.mxu0 %v2018
        %2992 = vmatprep.subr.mxu0 0.0
        %2993 = vmatpush1.msra.mxu0 %v2019
        %2994 = vmatprep.subr.mxu0 0.0
        %2995 = vmatpush1.msra.mxu0 %v2020
        %2996 = vmatprep.subr.mxu0 0.0
        %2997 = vmatpush1.msra.mxu0 %v2021
        %2998 = vmatprep.subr.mxu0 0.0
        %2999 = vmatpush1.msra.mxu0 %v2022
        %3000 = vmatprep.subr.mxu0 0.0
        %3001 = vmatpush1.msra.mxu0 %v2023
        %3002 = vmatprep.subr.mxu0 0.0
        %3003 = vmatpush1.msra.mxu0 %v2024
        %3004 = vmatprep.subr.mxu0 0.0
        %3005 = vmatpush1.msra.mxu0 %v2025
        %3006 = vmatprep.subr.mxu0 0.0
        %3007 = vmatpush1.msra.mxu0 %v2026
        %3008 = vmatprep.subr.mxu0 0.0
        %3009 = vmatpush1.msra.mxu0 %v2027
        %3010 = vmatprep.mubr.f32.mxu0 %v2931
        %3011 = vmatmul.mubr.f32.gmra.mrb[0].mxu0 %v2930
        %v3012 = vpop.f32.mrb[0].mxu0
        %v3013 = vadd.f32 0.0, %v3012
        %v3014 = vpop.f32.mrb[0].mxu0
        %3015 = vmatprep.mubr.f32.mxu0 %v2933
        %3016 = vmatmul.mubr.f32.gmra.mrb[0].mxu0 %v2932
        %v3017 = vpop.f32.mrb[0].mxu0
        %v3018 = vadd.f32 0.0, %v3017
        %v3019 = vpop.f32.mrb[0].mxu0
        %3020 = vmatprep.mubr.f32.mxu0 %v2935
        %3021 = vmatmul.mubr.f32.gmra.mrb[0].mxu0 %v2934
        %v3022 = vpop.f32.mrb[0].mxu0
        %v3023 = vadd.f32 0.0, %v3022
        %v3024 = vpop.f32.mrb[0].mxu0
        %3025 = vmatprep.mubr.f32.mxu0 %v2937
        %3026 = vmatmul.mubr.f32.gmra.mrb[0].mxu0 %v2936
        %v3027 = vpop.f32.mrb[0].mxu0
        %v3028 = vadd.f32 0.0, %v3027
        %v3029 = vpop.f32.mrb[0].mxu0
        %3030 = vmatprep.mubr.f32.mxu0 %v2939
        %3031 = vmatmul.mubr.f32.gmra.mrb[0].mxu0 %v2938
        %v3032 = vpop.f32.mrb[0].mxu0
        %v3033 = vadd.f32 0.0, %v3032
        %v3034 = vpop.f32.mrb[0].mxu0
        %3035 = vmatprep.mubr.f32.mxu0 %v2941
        %3036 = vmatmul.mubr.f32.gmra.mrb[0].mxu0 %v2940
        %v3037 = vpop.f32.mrb[0].mxu0
        %v3038 = vadd.f32 0.0, %v3037
        %v3039 = vpop.f32.mrb[0].mxu0
        %3040 = vmatprep.mubr.f32.mxu0 %v2943
        %3041 = vmatmul.mubr.f32.gmra.mrb[0].mxu0 %v2942
        %v3042 = vpop.f32.mrb[0].mxu0
        %v3043 = vadd.f32 0.0, %v3042
        %v3044 = vpop.f32.mrb[0].mxu0
        %3045 = vmatprep.mubr.f32.mxu0 %v2945
        %3046 = vmatmul.mubr.f32.gmra.mrb[0].mxu0 %v2944
        %v3047 = vpop.f32.mrb[0].mxu0
        %v3048 = vadd.f32 0.0, %v3047
        %v3049 = vpop.f32.mrb[0].mxu0
        %3050 = vdwg.mxu0
        %v3051 = vmax.f32 %v2921, %v3013
        %v3052 = vmax.f32 %v2922, %v3018
        %v3053 = vmax.f32 %v2923, %v3023
        %v3054 = vmax.f32 %v2924, %v3028
        %v3055 = vmax.f32 %v2925, %v3033
        %v3056 = vmax.f32 %v2926, %v3038
        %v3057 = vmax.f32 %v2927, %v3043
        %v3058 = vmax.f32 %v2928, %v3048
        %s3059 = scalar_lea.vmem %s7, 1024
        %v3060 = vld [vmem:[%s3059] sm:$0xff]
        %v3061 = vld [vmem:[%s3059 + $0x8] sm:$0xff]
        %v3062 = vld [vmem:[%s3059 + $0x10] sm:$0xff]
        %v3063 = vld [vmem:[%s3059 + $0x18] sm:$0xff]
        %v3064 = vld [vmem:[%s3059 + $0x20] sm:$0xff]
        %v3065 = vld [vmem:[%s3059 + $0x28] sm:$0xff]
        %v3066 = vld [vmem:[%s3059 + $0x30] sm:$0xff]
        %v3067 = vld [vmem:[%s3059 + $0x38] sm:$0xff]
        %v3068 = vld [vmem:[%s3059 + $0x40] sm:$0xff]
        %v3069 = vld [vmem:[%s3059 + $0x48] sm:$0xff]
        %v3070 = vld [vmem:[%s3059 + $0x50] sm:$0xff]
        %v3071 = vld [vmem:[%s3059 + $0x58] sm:$0xff]
        %v3072 = vld [vmem:[%s3059 + $0x60] sm:$0xff]
        %v3073 = vld [vmem:[%s3059 + $0x68] sm:$0xff]
        %v3074 = vld [vmem:[%s3059 + $0x70] sm:$0xff]
        %v3075 = vld [vmem:[%s3059 + $0x78] sm:$0xff]
        %3076 = vmatprep.subr.mxu0 0.0
        %3077 = vmatpush1.msra.mxu0 %v1996
        %3078 = vmatprep.subr.mxu0 0.0
        %3079 = vmatpush1.msra.mxu0 %v1997
        %3080 = vmatprep.subr.mxu0 0.0
        %3081 = vmatpush1.msra.mxu0 %v1998
        %3082 = vmatprep.subr.mxu0 0.0
        %3083 = vmatpush1.msra.mxu0 %v1999
        %3084 = vmatprep.subr.mxu0 0.0
        %3085 = vmatpush1.msra.mxu0 %v2000
        %3086 = vmatprep.subr.mxu0 0.0
        %3087 = vmatpush1.msra.mxu0 %v2001
        %3088 = vmatprep.subr.mxu0 0.0
        %3089 = vmatpush1.msra.mxu0 %v2002
        %3090 = vmatprep.subr.mxu0 0.0
        %3091 = vmatpush1.msra.mxu0 %v2003
        %3092 = vmatprep.subr.mxu0 0.0
        %3093 = vmatpush1.msra.mxu0 %v2004
        %3094 = vmatprep.subr.mxu0 0.0
        %3095 = vmatpush1.msra.mxu0 %v2005
        %3096 = vmatprep.subr.mxu0 0.0
        %3097 = vmatpush1.msra.mxu0 %v2006
        %3098 = vmatprep.subr.mxu0 0.0
        %3099 = vmatpush1.msra.mxu0 %v2007
        %3100 = vmatprep.subr.mxu0 0.0
        %3101 = vmatpush1.msra.mxu0 %v2008
        %3102 = vmatprep.subr.mxu0 0.0
        %3103 = vmatpush1.msra.mxu0 %v2009
        %3104 = vmatprep.subr.mxu0 0.0
        %3105 = vmatpush1.msra.mxu0 %v2010
        %3106 = vmatprep.subr.mxu0 0.0
        %3107 = vmatpush1.msra.mxu0 %v2011
        %3108 = vmatprep.subr.mxu0 0.0
        %3109 = vmatpush1.msra.mxu0 %v2012
        %3110 = vmatprep.subr.mxu0 0.0
        %3111 = vmatpush1.msra.mxu0 %v2013
        %3112 = vmatprep.subr.mxu0 0.0
        %3113 = vmatpush1.msra.mxu0 %v2014
        %3114 = vmatprep.subr.mxu0 0.0
        %3115 = vmatpush1.msra.mxu0 %v2015
        %3116 = vmatprep.subr.mxu0 0.0
        %3117 = vmatpush1.msra.mxu0 %v2016
        %3118 = vmatprep.subr.mxu0 0.0
        %3119 = vmatpush1.msra.mxu0 %v2017
        %3120 = vmatprep.subr.mxu0 0.0
        %3121 = vmatpush1.msra.mxu0 %v2018
        %3122 = vmatprep.subr.mxu0 0.0
        %3123 = vmatpush1.msra.mxu0 %v2019
        %3124 = vmatprep.subr.mxu0 0.0
        %3125 = vmatpush1.msra.mxu0 %v2020
        %3126 = vmatprep.subr.mxu0 0.0
        %3127 = vmatpush1.msra.mxu0 %v2021
        %3128 = vmatprep.subr.mxu0 0.0
        %3129 = vmatpush1.msra.mxu0 %v2022
        %3130 = vmatprep.subr.mxu0 0.0
        %3131 = vmatpush1.msra.mxu0 %v2023
        %3132 = vmatprep.subr.mxu0 0.0
        %3133 = vmatpush1.msra.mxu0 %v2024
        %3134 = vmatprep.subr.mxu0 0.0
        %3135 = vmatpush1.msra.mxu0 %v2025
        %3136 = vmatprep.subr.mxu0 0.0
        %3137 = vmatpush1.msra.mxu0 %v2026
        %3138 = vmatprep.subr.mxu0 0.0
        %3139 = vmatpush1.msra.mxu0 %v2027
        %3140 = vmatprep.mubr.f32.mxu0 %v3061
        %3141 = vmatmul.mubr.f32.gmra.mrb[0].mxu0 %v3060
        %v3142 = vpop.f32.mrb[0].mxu0
        %v3143 = vadd.f32 0.0, %v3142
        %v3144 = vpop.f32.mrb[0].mxu0
        %3145 = vmatprep.mubr.f32.mxu0 %v3063
        %3146 = vmatmul.mubr.f32.gmra.mrb[0].mxu0 %v3062
        %v3147 = vpop.f32.mrb[0].mxu0
        %v3148 = vadd.f32 0.0, %v3147
        %v3149 = vpop.f32.mrb[0].mxu0
        %3150 = vmatprep.mubr.f32.mxu0 %v3065
        %3151 = vmatmul.mubr.f32.gmra.mrb[0].mxu0 %v3064
        %v3152 = vpop.f32.mrb[0].mxu0
        %v3153 = vadd.f32 0.0, %v3152
        %v3154 = vpop.f32.mrb[0].mxu0
        %3155 = vmatprep.mubr.f32.mxu0 %v3067
        %3156 = vmatmul.mubr.f32.gmra.mrb[0].mxu0 %v3066
        %v3157 = vpop.f32.mrb[0].mxu0
        %v3158 = vadd.f32 0.0, %v3157
        %v3159 = vpop.f32.mrb[0].mxu0
        %3160 = vmatprep.mubr.f32.mxu0 %v3069
        %3161 = vmatmul.mubr.f32.gmra.mrb[0].mxu0 %v3068
        %v3162 = vpop.f32.mrb[0].mxu0
        %v3163 = vadd.f32 0.0, %v3162
        %v3164 = vpop.f32.mrb[0].mxu0
        %3165 = vmatprep.mubr.f32.mxu0 %v3071
        %3166 = vmatmul.mubr.f32.gmra.mrb[0].mxu0 %v3070
        %v3167 = vpop.f32.mrb[0].mxu0
        %v3168 = vadd.f32 0.0, %v3167
        %v3169 = vpop.f32.mrb[0].mxu0
        %3170 = vmatprep.mubr.f32.mxu0 %v3073
        %3171 = vmatmul.mubr.f32.gmra.mrb[0].mxu0 %v3072
        %v3172 = vpop.f32.mrb[0].mxu0
        %v3173 = vadd.f32 0.0, %v3172
        %v3174 = vpop.f32.mrb[0].mxu0
        %3175 = vmatprep.mubr.f32.mxu0 %v3075
        %3176 = vmatmul.mubr.f32.gmra.mrb[0].mxu0 %v3074
        %v3177 = vpop.f32.mrb[0].mxu0
        %v3178 = vadd.f32 0.0, %v3177
        %v3179 = vpop.f32.mrb[0].mxu0
        %3180 = vdwg.mxu0
        %v3181 = vmax.f32 %v3051, %v3143
        %v3182 = vmax.f32 %v3052, %v3148
        %v3183 = vmax.f32 %v3053, %v3153
        %v3184 = vmax.f32 %v3054, %v3158
        %v3185 = vmax.f32 %v3055, %v3163
        %v3186 = vmax.f32 %v3056, %v3168
        %v3187 = vmax.f32 %v3057, %v3173
        %v3188 = vmax.f32 %v3058, %v3178
        %v3189 = vld [vmem:[%s11] sm:$0xff]
        %v3190 = vld [vmem:[%s13] sm:$0x1]
        %v3192 = vlaneseq
        %v3193 = vshrl.u32 %v3192, 7
        %v3194 = vsub.s32 0, %v3193
        %v3195 = vrot.slane %v3190, %v3194
        %vm3197 = vcmask 64512
        %v3199 = vsel %vm3197, %v3181, 0
        %v3202 = vsel %vm3197, %v3182, 0
        %v3205 = vsel %vm3197, %v3183, 0
        %v3208 = vsel %vm3197, %v3184, 0
        %v3211 = vsel %vm3197, %v3185, 0
        %v3214 = vsel %vm3197, %v3186, 0
        %v3217 = vsel %vm3197, %v3187, 0
        %v3220 = vsel %vm3197, %v3188, 0
        %3222 = vmatprep.subr.mxu0 0.0
        %3223 = vmatpush1.msra.mxu0 %v3189
        %3224 = vmatprep.subr.mxu0 0.0
        %3225 = vmatpush1.msra.mxu0 0.0
        %3226 = vmatprep.subr.mxu0 0.0
        %3227 = vmatpush1.msra.mxu0 0.0
        %3228 = vmatprep.subr.mxu0 0.0
        %3229 = vmatpush1.msra.mxu0 0.0
        %3230 = vmatprep.subr.mxu0 0.0
        %3231 = vmatpush1.msra.mxu0 0.0
        %3232 = vmatprep.subr.mxu0 0.0
        %3233 = vmatpush1.msra.mxu0 0.0
        %3234 = vmatprep.subr.mxu0 0.0
        %3235 = vmatpush1.msra.mxu0 0.0
        %3236 = vmatprep.subr.mxu0 0.0
        %3237 = vmatpush1.msra.mxu0 0.0
        %3238 = vmatprep.subr.mxu0 0.0
        %3239 = vmatpush1.msra.mxu0 0.0
        %3240 = vmatprep.subr.mxu0 0.0
        %3241 = vmatpush1.msra.mxu0 0.0
        %3242 = vmatprep.subr.mxu0 0.0
        %3243 = vmatpush1.msra.mxu0 0.0
        %3244 = vmatprep.subr.mxu0 0.0
        %3245 = vmatpush1.msra.mxu0 0.0
        %3246 = vmatprep.subr.mxu0 0.0
        %3247 = vmatpush1.msra.mxu0 0.0
        %3248 = vmatprep.subr.mxu0 0.0
        %3249 = vmatpush1.msra.mxu0 0.0
        %3250 = vmatprep.subr.mxu0 0.0
        %3251 = vmatpush1.msra.mxu0 0.0
        %3252 = vmatprep.subr.mxu0 0.0
        %3253 = vmatpush1.msra.mxu0 0.0
        %3254 = vmatprep.subr.mxu0 0.0
        %3255 = vmatpush1.msra.mxu0 0.0
        %3256 = vmatprep.subr.mxu0 0.0
        %3257 = vmatpush1.msra.mxu0 0.0
        %3258 = vmatprep.subr.mxu0 0.0
        %3259 = vmatpush1.msra.mxu0 0.0
        %3260 = vmatprep.subr.mxu0 0.0
        %3261 = vmatpush1.msra.mxu0 0.0
        %3262 = vmatprep.subr.mxu0 0.0
        %3263 = vmatpush1.msra.mxu0 0.0
        %3264 = vmatprep.subr.mxu0 0.0
        %3265 = vmatpush1.msra.mxu0 0.0
        %3266 = vmatprep.subr.mxu0 0.0
        %3267 = vmatpush1.msra.mxu0 0.0
        %3268 = vmatprep.subr.mxu0 0.0
        %3269 = vmatpush1.msra.mxu0 0.0
        %3270 = vmatprep.subr.mxu0 0.0
        %3271 = vmatpush1.msra.mxu0 0.0
        %3272 = vmatprep.subr.mxu0 0.0
        %3273 = vmatpush1.msra.mxu0 0.0
        %3274 = vmatprep.subr.mxu0 0.0
        %3275 = vmatpush1.msra.mxu0 0.0
        %3276 = vmatprep.subr.mxu0 0.0
        %3277 = vmatpush1.msra.mxu0 0.0
        %3278 = vmatprep.subr.mxu0 0.0
        %3279 = vmatpush1.msra.mxu0 0.0
        %3280 = vmatprep.subr.mxu0 0.0
        %3281 = vmatpush1.msra.mxu0 0.0
        %3282 = vmatprep.subr.mxu0 0.0
        %3283 = vmatpush1.msra.mxu0 0.0
        %3284 = vmatprep.subr.mxu0 0.0
        %3285 = vmatpush1.msra.mxu0 0.0
        %3286 = vmatprep.mubr.f32.mxu0 0.0
        %3287 = vmatmul.mubr.f32.gmra.mrb[0].mxu0 %v3199
        %v3288 = vpop.f32.mrb[0].mxu0
        %v3289 = vadd.f32 %v3195, %v3288
        %v3290 = vpop.f32.mrb[0].mxu0
        %3291 = vmatprep.mubr.f32.mxu0 0.0
        %3292 = vmatmul.mubr.f32.gmra.mrb[0].mxu0 %v3202
        %v3293 = vpop.f32.mrb[0].mxu0
        %v3294 = vadd.f32 %v3195, %v3293
        %v3295 = vpop.f32.mrb[0].mxu0
        %3296 = vmatprep.mubr.f32.mxu0 0.0
        %3297 = vmatmul.mubr.f32.gmra.mrb[0].mxu0 %v3205
        %v3298 = vpop.f32.mrb[0].mxu0
        %v3299 = vadd.f32 %v3195, %v3298
        %v3300 = vpop.f32.mrb[0].mxu0
        %3301 = vmatprep.mubr.f32.mxu0 0.0
        %3302 = vmatmul.mubr.f32.gmra.mrb[0].mxu0 %v3208
        %v3303 = vpop.f32.mrb[0].mxu0
        %v3304 = vadd.f32 %v3195, %v3303
        %v3305 = vpop.f32.mrb[0].mxu0
        %3306 = vmatprep.mubr.f32.mxu0 0.0
        %3307 = vmatmul.mubr.f32.gmra.mrb[0].mxu0 %v3211
        %v3308 = vpop.f32.mrb[0].mxu0
        %v3309 = vadd.f32 %v3195, %v3308
        %v3310 = vpop.f32.mrb[0].mxu0
        %3311 = vmatprep.mubr.f32.mxu0 0.0
        %3312 = vmatmul.mubr.f32.gmra.mrb[0].mxu0 %v3214
        %v3313 = vpop.f32.mrb[0].mxu0
        %v3314 = vadd.f32 %v3195, %v3313
        %v3315 = vpop.f32.mrb[0].mxu0
        %3316 = vmatprep.mubr.f32.mxu0 0.0
        %3317 = vmatmul.mubr.f32.gmra.mrb[0].mxu0 %v3217
        %v3318 = vpop.f32.mrb[0].mxu0
        %v3319 = vadd.f32 %v3195, %v3318
        %v3320 = vpop.f32.mrb[0].mxu0
        %3321 = vmatprep.mubr.f32.mxu0 0.0
        %3322 = vmatmul.mubr.f32.gmra.mrb[0].mxu0 %v3220
        %v3323 = vpop.f32.mrb[0].mxu0
        %v3324 = vadd.f32 %v3195, %v3323
        %v3325 = vpop.f32.mrb[0].mxu0
        %3326 = vdwg.mxu0
        %v3327 = vmax.f32 %v3289, 0.0
        %v3328 = vmax.f32 %v3294, 0.0
        %v3329 = vmax.f32 %v3299, 0.0
        %v3330 = vmax.f32 %v3304, 0.0
        %v3331 = vmax.f32 %v3309, 0.0
        %v3332 = vmax.f32 %v3314, 0.0
        %v3333 = vmax.f32 %v3319, 0.0
        %v3334 = vmax.f32 %v3324, 0.0
        %v3335 = vld [vmem:[%s15] sm:$0x1]
        %v3337 = vlaneseq
        %v3338 = vshrl.u32 %v3337, 7
        %v3339 = vsub.s32 0, %v3338
        %v3340 = vrot.slane %v3335, %v3339
        %v3342 = vmul.f32 %v3327, %v3340
        %v3343 = vmul.f32 %v3328, %v3340
        %v3344 = vmul.f32 %v3329, %v3340
        %v3345 = vmul.f32 %v3330, %v3340
        %v3346 = vmul.f32 %v3331, %v3340
        %v3347 = vmul.f32 %v3332, %v3340
        %v3348 = vmul.f32 %v3333, %v3340
        %v3349 = vmul.f32 %v3334, %v3340
        %s3350 = scalar_lea.vmem %s15, 1
        %v3351 = vld [vmem:[%s3350] sm:$0x1]
        %v3353 = vlaneseq
        %v3354 = vshrl.u32 %v3353, 7
        %v3355 = vsub.s32 0, %v3354
        %v3356 = vrot.slane %v3351, %v3355
        %v3358 = vmul.f32 %v3327, %v3356
        %v3359 = vmul.f32 %v3328, %v3356
        %v3360 = vmul.f32 %v3329, %v3356
        %v3361 = vmul.f32 %v3330, %v3356
        %v3362 = vmul.f32 %v3331, %v3356
        %v3363 = vmul.f32 %v3332, %v3356
        %v3364 = vmul.f32 %v3333, %v3356
        %v3365 = vmul.f32 %v3334, %v3356
        %s3366 = scalar_lea.vmem %s15, 2
        %v3367 = vld [vmem:[%s3366] sm:$0x1]
        %v3369 = vlaneseq
        %v3370 = vshrl.u32 %v3369, 7
        %v3371 = vsub.s32 0, %v3370
        %v3372 = vrot.slane %v3367, %v3371
        %v3374 = vmul.f32 %v3327, %v3372
        %v3375 = vmul.f32 %v3328, %v3372
        %v3376 = vmul.f32 %v3329, %v3372
        %v3377 = vmul.f32 %v3330, %v3372
        %v3378 = vmul.f32 %v3331, %v3372
        %v3379 = vmul.f32 %v3332, %v3372
        %v3380 = vmul.f32 %v3333, %v3372
        %v3381 = vmul.f32 %v3334, %v3372
        %s3382 = scalar_lea.vmem %s15, 3
        %v3383 = vld [vmem:[%s3382] sm:$0x1]
        %v3385 = vlaneseq
        %v3386 = vshrl.u32 %v3385, 7
        %v3387 = vsub.s32 0, %v3386
        %v3388 = vrot.slane %v3383, %v3387
        %v3390 = vmul.f32 %v3327, %v3388
        %v3391 = vmul.f32 %v3328, %v3388
        %v3392 = vmul.f32 %v3329, %v3388
        %v3393 = vmul.f32 %v3330, %v3388
        %v3394 = vmul.f32 %v3331, %v3388
        %v3395 = vmul.f32 %v3332, %v3388
        %v3396 = vmul.f32 %v3333, %v3388
        %v3397 = vmul.f32 %v3334, %v3388
        %s3398 = scalar_lea.vmem %s15, 4
        %v3399 = vld [vmem:[%s3398] sm:$0x1]
        %v3401 = vlaneseq
        %v3402 = vshrl.u32 %v3401, 7
        %v3403 = vsub.s32 0, %v3402
        %v3404 = vrot.slane %v3399, %v3403
        %v3406 = vmul.f32 %v3327, %v3404
        %v3407 = vmul.f32 %v3328, %v3404
        %v3408 = vmul.f32 %v3329, %v3404
        %v3409 = vmul.f32 %v3330, %v3404
        %v3410 = vmul.f32 %v3331, %v3404
        %v3411 = vmul.f32 %v3332, %v3404
        %v3412 = vmul.f32 %v3333, %v3404
        %v3413 = vmul.f32 %v3334, %v3404
        %s3414 = scalar_lea.vmem %s15, 5
        %v3415 = vld [vmem:[%s3414] sm:$0x1]
        %v3417 = vlaneseq
        %v3418 = vshrl.u32 %v3417, 7
        %v3419 = vsub.s32 0, %v3418
        %v3420 = vrot.slane %v3415, %v3419
        %v3422 = vmul.f32 %v3327, %v3420
        %v3423 = vmul.f32 %v3328, %v3420
        %v3424 = vmul.f32 %v3329, %v3420
        %v3425 = vmul.f32 %v3330, %v3420
        %v3426 = vmul.f32 %v3331, %v3420
        %v3427 = vmul.f32 %v3332, %v3420
        %v3428 = vmul.f32 %v3333, %v3420
        %v3429 = vmul.f32 %v3334, %v3420
        %s3430 = scalar_lea.vmem %s15, 6
        %v3431 = vld [vmem:[%s3430] sm:$0x1]
        %v3433 = vlaneseq
        %v3434 = vshrl.u32 %v3433, 7
        %v3435 = vsub.s32 0, %v3434
        %v3436 = vrot.slane %v3431, %v3435
        %v3438 = vmul.f32 %v3327, %v3436
        %v3439 = vmul.f32 %v3328, %v3436
        %v3440 = vmul.f32 %v3329, %v3436
        %v3441 = vmul.f32 %v3330, %v3436
        %v3442 = vmul.f32 %v3331, %v3436
        %v3443 = vmul.f32 %v3332, %v3436
        %v3444 = vmul.f32 %v3333, %v3436
        %v3445 = vmul.f32 %v3334, %v3436
        %s3446 = scalar_lea.vmem %s15, 7
        %v3447 = vld [vmem:[%s3446] sm:$0x1]
        %v3449 = vlaneseq
        %v3450 = vshrl.u32 %v3449, 7
        %v3451 = vsub.s32 0, %v3450
        %v3452 = vrot.slane %v3447, %v3451
        %v3454 = vmul.f32 %v3327, %v3452
        %v3455 = vmul.f32 %v3328, %v3452
        %v3456 = vmul.f32 %v3329, %v3452
        %v3457 = vmul.f32 %v3330, %v3452
        %v3458 = vmul.f32 %v3331, %v3452
        %v3459 = vmul.f32 %v3332, %v3452
        %v3460 = vmul.f32 %v3333, %v3452
        %v3461 = vmul.f32 %v3334, %v3452
        %s3462 = scalar_lea.vmem %s15, 8
        %v3463 = vld [vmem:[%s3462] sm:$0x1]
        %v3465 = vlaneseq
        %v3466 = vshrl.u32 %v3465, 7
        %v3467 = vsub.s32 0, %v3466
        %v3468 = vrot.slane %v3463, %v3467
        %v3470 = vmul.f32 %v3327, %v3468
        %v3471 = vmul.f32 %v3328, %v3468
        %v3472 = vmul.f32 %v3329, %v3468
        %v3473 = vmul.f32 %v3330, %v3468
        %v3474 = vmul.f32 %v3331, %v3468
        %v3475 = vmul.f32 %v3332, %v3468
        %v3476 = vmul.f32 %v3333, %v3468
        %v3477 = vmul.f32 %v3334, %v3468
        %v3478 = vld [vmem:[%s9] sm:$0xff]
        %v3479 = vld [vmem:[%s9 + $0x8] sm:$0xff]
        %v3480 = vld [vmem:[%s9 + $0x10] sm:$0xff]
        %v3481 = vld [vmem:[%s9 + $0x18] sm:$0xff]
        %v3482 = vld [vmem:[%s9 + $0x20] sm:$0xff]
        %v3483 = vld [vmem:[%s9 + $0x28] sm:$0xff]
        %v3484 = vld [vmem:[%s9 + $0x30] sm:$0xff]
        %v3485 = vld [vmem:[%s9 + $0x38] sm:$0xff]
        %v3486 = vld [vmem:[%s9 + $0x40] sm:$0xff]
        %v3487 = vld [vmem:[%s9 + $0x48] sm:$0xff]
        %v3488 = vld [vmem:[%s17] sm:$0x1]
        %v3490 = vlaneseq
        %v3491 = vshrl.u32 %v3490, 7
        %v3492 = vsub.s32 0, %v3491
        %v3493 = vrot.slane %v3488, %v3492
        %vm3495 = vcmask 523264
        %v3497 = vsel %vm3495, %v3482, 0
        %v3500 = vsel %vm3495, %v3487, 0
        %3502 = vmatprep.subr.mxu0 0.0
        %3503 = vmatpush1.msra.mxu0 %v3342
        %3504 = vmatprep.subr.mxu0 0.0
        %3505 = vmatpush1.msra.mxu0 %v3343
        %3506 = vmatprep.subr.mxu0 0.0
        %3507 = vmatpush1.msra.mxu0 %v3344
        %3508 = vmatprep.subr.mxu0 0.0
        %3509 = vmatpush1.msra.mxu0 %v3345
        %3510 = vmatprep.subr.mxu0 0.0
        %3511 = vmatpush1.msra.mxu0 %v3346
        %3512 = vmatprep.subr.mxu0 0.0
        %3513 = vmatpush1.msra.mxu0 %v3347
        %3514 = vmatprep.subr.mxu0 0.0
        %3515 = vmatpush1.msra.mxu0 %v3348
        %3516 = vmatprep.subr.mxu0 0.0
        %3517 = vmatpush1.msra.mxu0 %v3349
        %3518 = vmatprep.subr.mxu0 0.0
        %3519 = vmatpush1.msra.mxu0 %v3358
        %3520 = vmatprep.subr.mxu0 0.0
        %3521 = vmatpush1.msra.mxu0 %v3359
        %3522 = vmatprep.subr.mxu0 0.0
        %3523 = vmatpush1.msra.mxu0 %v3360
        %3524 = vmatprep.subr.mxu0 0.0
        %3525 = vmatpush1.msra.mxu0 %v3361
        %3526 = vmatprep.subr.mxu0 0.0
        %3527 = vmatpush1.msra.mxu0 %v3362
        %3528 = vmatprep.subr.mxu0 0.0
        %3529 = vmatpush1.msra.mxu0 %v3363
        %3530 = vmatprep.subr.mxu0 0.0
        %3531 = vmatpush1.msra.mxu0 %v3364
        %3532 = vmatprep.subr.mxu0 0.0
        %3533 = vmatpush1.msra.mxu0 %v3365
        %3534 = vmatprep.subr.mxu0 0.0
        %3535 = vmatpush1.msra.mxu0 %v3374
        %3536 = vmatprep.subr.mxu0 0.0
        %3537 = vmatpush1.msra.mxu0 %v3375
        %3538 = vmatprep.subr.mxu0 0.0
        %3539 = vmatpush1.msra.mxu0 %v3376
        %3540 = vmatprep.subr.mxu0 0.0
        %3541 = vmatpush1.msra.mxu0 %v3377
        %3542 = vmatprep.subr.mxu0 0.0
        %3543 = vmatpush1.msra.mxu0 %v3378
        %3544 = vmatprep.subr.mxu0 0.0
        %3545 = vmatpush1.msra.mxu0 %v3379
        %3546 = vmatprep.subr.mxu0 0.0
        %3547 = vmatpush1.msra.mxu0 %v3380
        %3548 = vmatprep.subr.mxu0 0.0
        %3549 = vmatpush1.msra.mxu0 %v3381
        %3550 = vmatprep.subr.mxu0 0.0
        %3551 = vmatpush1.msra.mxu0 %v3390
        %3552 = vmatprep.subr.mxu0 0.0
        %3553 = vmatpush1.msra.mxu0 %v3391
        %3554 = vmatprep.subr.mxu0 0.0
        %3555 = vmatpush1.msra.mxu0 %v3392
        %3556 = vmatprep.subr.mxu0 0.0
        %3557 = vmatpush1.msra.mxu0 %v3393
        %3558 = vmatprep.subr.mxu0 0.0
        %3559 = vmatpush1.msra.mxu0 %v3394
        %3560 = vmatprep.subr.mxu0 0.0
        %3561 = vmatpush1.msra.mxu0 %v3395
        %3562 = vmatprep.subr.mxu0 0.0
        %3563 = vmatpush1.msra.mxu0 %v3396
        %3564 = vmatprep.subr.mxu0 0.0
        %3565 = vmatpush1.msra.mxu0 %v3397
        %3566 = vmatprep.mubr.f32.mxu0 %v3479
        %3567 = vmatmul.mubr.f32.gmra.mrb[0].mxu0 %v3478
        %v3568 = vpop.f32.mrb[0].mxu0
        %v3569 = vadd.f32 %v3493, %v3568
        %v3570 = vpop.f32.mrb[0].mxu0
        %3571 = vmatprep.mubr.f32.mxu0 %v3484
        %3572 = vmatmul.mubr.f32.gmra.mrb[0].mxu0 %v3483
        %v3573 = vpop.f32.mrb[0].mxu0
        %v3574 = vadd.f32 %v3493, %v3573
        %v3575 = vpop.f32.mrb[0].mxu0
        %3576 = vdwg.mxu0
        %3577 = vmatprep.subr.mxu0 0.0
        %3578 = vmatpush1.msra.mxu0 %v3406
        %3579 = vmatprep.subr.mxu0 0.0
        %3580 = vmatpush1.msra.mxu0 %v3407
        %3581 = vmatprep.subr.mxu0 0.0
        %3582 = vmatpush1.msra.mxu0 %v3408
        %3583 = vmatprep.subr.mxu0 0.0
        %3584 = vmatpush1.msra.mxu0 %v3409
        %3585 = vmatprep.subr.mxu0 0.0
        %3586 = vmatpush1.msra.mxu0 %v3410
        %3587 = vmatprep.subr.mxu0 0.0
        %3588 = vmatpush1.msra.mxu0 %v3411
        %3589 = vmatprep.subr.mxu0 0.0
        %3590 = vmatpush1.msra.mxu0 %v3412
        %3591 = vmatprep.subr.mxu0 0.0
        %3592 = vmatpush1.msra.mxu0 %v3413
        %3593 = vmatprep.subr.mxu0 0.0
        %3594 = vmatpush1.msra.mxu0 %v3422
        %3595 = vmatprep.subr.mxu0 0.0
        %3596 = vmatpush1.msra.mxu0 %v3423
        %3597 = vmatprep.subr.mxu0 0.0
        %3598 = vmatpush1.msra.mxu0 %v3424
        %3599 = vmatprep.subr.mxu0 0.0
        %3600 = vmatpush1.msra.mxu0 %v3425
        %3601 = vmatprep.subr.mxu0 0.0
        %3602 = vmatpush1.msra.mxu0 %v3426
        %3603 = vmatprep.subr.mxu0 0.0
        %3604 = vmatpush1.msra.mxu0 %v3427
        %3605 = vmatprep.subr.mxu0 0.0
        %3606 = vmatpush1.msra.mxu0 %v3428
        %3607 = vmatprep.subr.mxu0 0.0
        %3608 = vmatpush1.msra.mxu0 %v3429
        %3609 = vmatprep.subr.mxu0 0.0
        %3610 = vmatpush1.msra.mxu0 %v3438
        %3611 = vmatprep.subr.mxu0 0.0
        %3612 = vmatpush1.msra.mxu0 %v3439
        %3613 = vmatprep.subr.mxu0 0.0
        %3614 = vmatpush1.msra.mxu0 %v3440
        %3615 = vmatprep.subr.mxu0 0.0
        %3616 = vmatpush1.msra.mxu0 %v3441
        %3617 = vmatprep.subr.mxu0 0.0
        %3618 = vmatpush1.msra.mxu0 %v3442
        %3619 = vmatprep.subr.mxu0 0.0
        %3620 = vmatpush1.msra.mxu0 %v3443
        %3621 = vmatprep.subr.mxu0 0.0
        %3622 = vmatpush1.msra.mxu0 %v3444
        %3623 = vmatprep.subr.mxu0 0.0
        %3624 = vmatpush1.msra.mxu0 %v3445
        %3625 = vmatprep.subr.mxu0 0.0
        %3626 = vmatpush1.msra.mxu0 %v3454
        %3627 = vmatprep.subr.mxu0 0.0
        %3628 = vmatpush1.msra.mxu0 %v3455
        %3629 = vmatprep.subr.mxu0 0.0
        %3630 = vmatpush1.msra.mxu0 %v3456
        %3631 = vmatprep.subr.mxu0 0.0
        %3632 = vmatpush1.msra.mxu0 %v3457
        %3633 = vmatprep.subr.mxu0 0.0
        %3634 = vmatpush1.msra.mxu0 %v3458
        %3635 = vmatprep.subr.mxu0 0.0
        %3636 = vmatpush1.msra.mxu0 %v3459
        %3637 = vmatprep.subr.mxu0 0.0
        %3638 = vmatpush1.msra.mxu0 %v3460
        %3639 = vmatprep.subr.mxu0 0.0
        %3640 = vmatpush1.msra.mxu0 %v3461
        %3641 = vmatprep.mubr.f32.mxu0 %v3481
        %3642 = vmatmul.mubr.f32.gmra.mrb[0].mxu0 %v3480
        %v3643 = vpop.f32.mrb[0].mxu0
        %v3644 = vadd.f32 %v3569, %v3643
        %v3645 = vpop.f32.mrb[0].mxu0
        %3646 = vmatprep.mubr.f32.mxu0 %v3486
        %3647 = vmatmul.mubr.f32.gmra.mrb[0].mxu0 %v3485
        %v3648 = vpop.f32.mrb[0].mxu0
        %v3649 = vadd.f32 %v3574, %v3648
        %v3650 = vpop.f32.mrb[0].mxu0
        %3651 = vdwg.mxu0
        %3652 = vmatprep.subr.mxu0 0.0
        %3653 = vmatpush1.msra.mxu0 %v3470
        %3654 = vmatprep.subr.mxu0 0.0
        %3655 = vmatpush1.msra.mxu0 %v3471
        %3656 = vmatprep.subr.mxu0 0.0
        %3657 = vmatpush1.msra.mxu0 %v3472
        %3658 = vmatprep.subr.mxu0 0.0
        %3659 = vmatpush1.msra.mxu0 %v3473
        %3660 = vmatprep.subr.mxu0 0.0
        %3661 = vmatpush1.msra.mxu0 %v3474
        %3662 = vmatprep.subr.mxu0 0.0
        %3663 = vmatpush1.msra.mxu0 %v3475
        %3664 = vmatprep.subr.mxu0 0.0
        %3665 = vmatpush1.msra.mxu0 %v3476
        %3666 = vmatprep.subr.mxu0 0.0
        %3667 = vmatpush1.msra.mxu0 %v3477
        %3668 = vmatprep.subr.mxu0 0.0
        %3669 = vmatpush1.msra.mxu0 0.0
        %3670 = vmatprep.subr.mxu0 0.0
        %3671 = vmatpush1.msra.mxu0 0.0
        %3672 = vmatprep.subr.mxu0 0.0
        %3673 = vmatpush1.msra.mxu0 0.0
        %3674 = vmatprep.subr.mxu0 0.0
        %3675 = vmatpush1.msra.mxu0 0.0
        %3676 = vmatprep.subr.mxu0 0.0
        %3677 = vmatpush1.msra.mxu0 0.0
        %3678 = vmatprep.subr.mxu0 0.0
        %3679 = vmatpush1.msra.mxu0 0.0
        %3680 = vmatprep.subr.mxu0 0.0
        %3681 = vmatpush1.msra.mxu0 0.0
        %3682 = vmatprep.subr.mxu0 0.0
        %3683 = vmatpush1.msra.mxu0 0.0
        %3684 = vmatprep.subr.mxu0 0.0
        %3685 = vmatpush1.msra.mxu0 0.0
        %3686 = vmatprep.subr.mxu0 0.0
        %3687 = vmatpush1.msra.mxu0 0.0
        %3688 = vmatprep.subr.mxu0 0.0
        %3689 = vmatpush1.msra.mxu0 0.0
        %3690 = vmatprep.subr.mxu0 0.0
        %3691 = vmatpush1.msra.mxu0 0.0
        %3692 = vmatprep.subr.mxu0 0.0
        %3693 = vmatpush1.msra.mxu0 0.0
        %3694 = vmatprep.subr.mxu0 0.0
        %3695 = vmatpush1.msra.mxu0 0.0
        %3696 = vmatprep.subr.mxu0 0.0
        %3697 = vmatpush1.msra.mxu0 0.0
        %3698 = vmatprep.subr.mxu0 0.0
        %3699 = vmatpush1.msra.mxu0 0.0
        %3700 = vmatprep.subr.mxu0 0.0
        %3701 = vmatpush1.msra.mxu0 0.0
        %3702 = vmatprep.subr.mxu0 0.0
        %3703 = vmatpush1.msra.mxu0 0.0
        %3704 = vmatprep.subr.mxu0 0.0
        %3705 = vmatpush1.msra.mxu0 0.0
        %3706 = vmatprep.subr.mxu0 0.0
        %3707 = vmatpush1.msra.mxu0 0.0
        %3708 = vmatprep.subr.mxu0 0.0
        %3709 = vmatpush1.msra.mxu0 0.0
        %3710 = vmatprep.subr.mxu0 0.0
        %3711 = vmatpush1.msra.mxu0 0.0
        %3712 = vmatprep.subr.mxu0 0.0
        %3713 = vmatpush1.msra.mxu0 0.0
        %3714 = vmatprep.subr.mxu0 0.0
        %3715 = vmatpush1.msra.mxu0 0.0
        %3716 = vmatprep.mubr.f32.mxu0 0.0
        %3717 = vmatmul.mubr.f32.gmra.mrb[0].mxu0 %v3497
        %v3718 = vpop.f32.mrb[0].mxu0
        %v3719 = vadd.f32 %v3644, %v3718
        %v3720 = vpop.f32.mrb[0].mxu0
        %3721 = vmatprep.mubr.f32.mxu0 0.0
        %3722 = vmatmul.mubr.f32.gmra.mrb[0].mxu0 %v3500
        %v3723 = vpop.f32.mrb[0].mxu0
        %v3724 = vadd.f32 %v3649, %v3723
        %v3725 = vpop.f32.mrb[0].mxu0
        %3726 = vdwg.mxu0
        %v3727 = vld [vmem:[%s19] sm:$0xff]
        %v3728 = vld [vmem:[%s19 + $0x8] sm:$0xff]
        %v3729 = vld [vmem:[%s21] sm:$0x1]
        %v3731 = vlaneseq
        %v3732 = vshrl.u32 %v3731, 7
        %v3733 = vsub.s32 0, %v3732
        %v3734 = vrot.slane %v3729, %v3733
        %vm3736 = vcmask 130048
        %v3738 = vsel %vm3736, %v3719, 0
        %v3741 = vsel %vm3736, %v3724, 0
        %3743 = vmatprep.subr.mxu0 0.0
        %3744 = vmatpush1.msra.mxu0 %v3727
        %3745 = vmatprep.subr.mxu0 0.0
        %3746 = vmatpush1.msra.mxu0 %v3728
        %3747 = vmatprep.subr.mxu0 0.0
        %3748 = vmatpush1.msra.mxu0 0.0
        %3749 = vmatprep.subr.mxu0 0.0
        %3750 = vmatpush1.msra.mxu0 0.0
        %3751 = vmatprep.subr.mxu0 0.0
        %3752 = vmatpush1.msra.mxu0 0.0
        %3753 = vmatprep.subr.mxu0 0.0
        %3754 = vmatpush1.msra.mxu0 0.0
        %3755 = vmatprep.subr.mxu0 0.0
        %3756 = vmatpush1.msra.mxu0 0.0
        %3757 = vmatprep.subr.mxu0 0.0
        %3758 = vmatpush1.msra.mxu0 0.0
        %3759 = vmatprep.subr.mxu0 0.0
        %3760 = vmatpush1.msra.mxu0 0.0
        %3761 = vmatprep.subr.mxu0 0.0
        %3762 = vmatpush1.msra.mxu0 0.0
        %3763 = vmatprep.subr.mxu0 0.0
        %3764 = vmatpush1.msra.mxu0 0.0
        %3765 = vmatprep.subr.mxu0 0.0
        %3766 = vmatpush1.msra.mxu0 0.0
        %3767 = vmatprep.subr.mxu0 0.0
        %3768 = vmatpush1.msra.mxu0 0.0
        %3769 = vmatprep.subr.mxu0 0.0
        %3770 = vmatpush1.msra.mxu0 0.0
        %3771 = vmatprep.subr.mxu0 0.0
        %3772 = vmatpush1.msra.mxu0 0.0
        %3773 = vmatprep.subr.mxu0 0.0
        %3774 = vmatpush1.msra.mxu0 0.0
        %3775 = vmatprep.subr.mxu0 0.0
        %3776 = vmatpush1.msra.mxu0 0.0
        %3777 = vmatprep.subr.mxu0 0.0
        %3778 = vmatpush1.msra.mxu0 0.0
        %3779 = vmatprep.subr.mxu0 0.0
        %3780 = vmatpush1.msra.mxu0 0.0
        %3781 = vmatprep.subr.mxu0 0.0
        %3782 = vmatpush1.msra.mxu0 0.0
        %3783 = vmatprep.subr.mxu0 0.0
        %3784 = vmatpush1.msra.mxu0 0.0
        %3785 = vmatprep.subr.mxu0 0.0
        %3786 = vmatpush1.msra.mxu0 0.0
        %3787 = vmatprep.subr.mxu0 0.0
        %3788 = vmatpush1.msra.mxu0 0.0
        %3789 = vmatprep.subr.mxu0 0.0
        %3790 = vmatpush1.msra.mxu0 0.0
        %3791 = vmatprep.subr.mxu0 0.0
        %3792 = vmatpush1.msra.mxu0 0.0
        %3793 = vmatprep.subr.mxu0 0.0
        %3794 = vmatpush1.msra.mxu0 0.0
        %3795 = vmatprep.subr.mxu0 0.0
        %3796 = vmatpush1.msra.mxu0 0.0
        %3797 = vmatprep.subr.mxu0 0.0
        %3798 = vmatpush1.msra.mxu0 0.0
        %3799 = vmatprep.subr.mxu0 0.0
        %3800 = vmatpush1.msra.mxu0 0.0
        %3801 = vmatprep.subr.mxu0 0.0
        %3802 = vmatpush1.msra.mxu0 0.0
        %3803 = vmatprep.subr.mxu0 0.0
        %3804 = vmatpush1.msra.mxu0 0.0
        %3805 = vmatprep.subr.mxu0 0.0
        %3806 = vmatpush1.msra.mxu0 0.0
        %3807 = vmatprep.mubr.f32.mxu0 0.0
        %3808 = vmatmul.mubr.f32.gmra.mrb[0].mxu0 %v3738
        %v3809 = vpop.f32.mrb[0].mxu0
        %v3810 = vadd.f32 %v3734, %v3809
        %v3811 = vpop.f32.mrb[0].mxu0
        %3812 = vmatprep.mubr.f32.mxu0 0.0
        %3813 = vmatmul.mubr.f32.gmra.mrb[0].mxu0 %v3741
        %v3814 = vpop.f32.mrb[0].mxu0
        %v3815 = vadd.f32 %v3734, %v3814
        %v3816 = vpop.f32.mrb[0].mxu0
        %3817 = vdwg.mxu0
        %v3818 = vmax.f32 %v3810, 0.0
        %v3819 = vmax.f32 %v3815, 0.0
        %v3820 = vld [vmem:[%s25] sm:$0xff]
        %v3821 = vld [vmem:[%s25 + $0x8] sm:$0xff]
        %v3822 = vld [vmem:[%s27] sm:$0x1]
        %v3824 = vlaneseq
        %v3825 = vshrl.u32 %v3824, 7
        %v3826 = vsub.s32 0, %v3825
        %v3827 = vrot.slane %v3822, %v3826
        %v3830 = vsel %vm3736, %v3818, 0
        %v3833 = vsel %vm3736, %v3819, 0
        %3835 = vmatprep.subr.mxu0 0.0
        %3836 = vmatpush1.msra.mxu0 %v3820
        %3837 = vmatprep.subr.mxu0 0.0
        %3838 = vmatpush1.msra.mxu0 %v3821
        %3839 = vmatprep.subr.mxu0 0.0
        %3840 = vmatpush1.msra.mxu0 0.0
        %3841 = vmatprep.subr.mxu0 0.0
        %3842 = vmatpush1.msra.mxu0 0.0
        %3843 = vmatprep.subr.mxu0 0.0
        %3844 = vmatpush1.msra.mxu0 0.0
        %3845 = vmatprep.subr.mxu0 0.0
        %3846 = vmatpush1.msra.mxu0 0.0
        %3847 = vmatprep.subr.mxu0 0.0
        %3848 = vmatpush1.msra.mxu0 0.0
        %3849 = vmatprep.subr.mxu0 0.0
        %3850 = vmatpush1.msra.mxu0 0.0
        %3851 = vmatprep.subr.mxu0 0.0
        %3852 = vmatpush1.msra.mxu0 0.0
        %3853 = vmatprep.subr.mxu0 0.0
        %3854 = vmatpush1.msra.mxu0 0.0
        %3855 = vmatprep.subr.mxu0 0.0
        %3856 = vmatpush1.msra.mxu0 0.0
        %3857 = vmatprep.subr.mxu0 0.0
        %3858 = vmatpush1.msra.mxu0 0.0
        %3859 = vmatprep.subr.mxu0 0.0
        %3860 = vmatpush1.msra.mxu0 0.0
        %3861 = vmatprep.subr.mxu0 0.0
        %3862 = vmatpush1.msra.mxu0 0.0
        %3863 = vmatprep.subr.mxu0 0.0
        %3864 = vmatpush1.msra.mxu0 0.0
        %3865 = vmatprep.subr.mxu0 0.0
        %3866 = vmatpush1.msra.mxu0 0.0
        %3867 = vmatprep.subr.mxu0 0.0
        %3868 = vmatpush1.msra.mxu0 0.0
        %3869 = vmatprep.subr.mxu0 0.0
        %3870 = vmatpush1.msra.mxu0 0.0
        %3871 = vmatprep.subr.mxu0 0.0
        %3872 = vmatpush1.msra.mxu0 0.0
        %3873 = vmatprep.subr.mxu0 0.0
        %3874 = vmatpush1.msra.mxu0 0.0
        %3875 = vmatprep.subr.mxu0 0.0
        %3876 = vmatpush1.msra.mxu0 0.0
        %3877 = vmatprep.subr.mxu0 0.0
        %3878 = vmatpush1.msra.mxu0 0.0
        %3879 = vmatprep.subr.mxu0 0.0
        %3880 = vmatpush1.msra.mxu0 0.0
        %3881 = vmatprep.subr.mxu0 0.0
        %3882 = vmatpush1.msra.mxu0 0.0
        %3883 = vmatprep.subr.mxu0 0.0
        %3884 = vmatpush1.msra.mxu0 0.0
        %3885 = vmatprep.subr.mxu0 0.0
        %3886 = vmatpush1.msra.mxu0 0.0
        %3887 = vmatprep.subr.mxu0 0.0
        %3888 = vmatpush1.msra.mxu0 0.0
        %3889 = vmatprep.subr.mxu0 0.0
        %3890 = vmatpush1.msra.mxu0 0.0
        %3891 = vmatprep.subr.mxu0 0.0
        %3892 = vmatpush1.msra.mxu0 0.0
        %3893 = vmatprep.subr.mxu0 0.0
        %3894 = vmatpush1.msra.mxu0 0.0
        %3895 = vmatprep.subr.mxu0 0.0
        %3896 = vmatpush1.msra.mxu0 0.0
        %3897 = vmatprep.subr.mxu0 0.0
        %3898 = vmatpush1.msra.mxu0 0.0
        %3899 = vmatprep.mubr.f32.mxu0 0.0
        %3900 = vmatmul.mubr.f32.gmra.mrb[0].mxu0 %v3830
        %v3901 = vpop.f32.mrb[0].mxu0
        %v3902 = vadd.f32 %v3827, %v3901
        %v3903 = vpop.f32.mrb[0].mxu0
        %3904 = vmatprep.mubr.f32.mxu0 0.0
        %3905 = vmatmul.mubr.f32.gmra.mrb[0].mxu0 %v3833
        %v3906 = vpop.f32.mrb[0].mxu0
        %v3907 = vadd.f32 %v3827, %v3906
        %v3908 = vpop.f32.mrb[0].mxu0
        %3909 = vdwg.mxu0
        %v3910 = vmax.f32 %v3902, 0.0
        %v3911 = vmax.f32 %v3907, 0.0
        %v3912 = vld [vmem:[%s29] sm:$0x1]
        %v3914 = vlaneseq
        %v3915 = vshrl.u32 %v3914, 7
        %v3916 = vsub.s32 0, %v3915
        %v3917 = vrot.slane %v3912, %v3916
        %v3919 = vmul.f32 %v3910, %v3917
        %v3920 = vmul.f32 %v3911, %v3917
        %s3921 = scalar_lea.vmem %s29, 1
        %v3922 = vld [vmem:[%s3921] sm:$0x1]
        %v3924 = vlaneseq
        %v3925 = vshrl.u32 %v3924, 7
        %v3926 = vsub.s32 0, %v3925
        %v3927 = vrot.slane %v3922, %v3926
        %v3929 = vmul.f32 %v3910, %v3927
        %v3930 = vmul.f32 %v3911, %v3927
        %s3931 = scalar_lea.vmem %s29, 2
        %v3932 = vld [vmem:[%s3931] sm:$0x1]
        %v3934 = vlaneseq
        %v3935 = vshrl.u32 %v3934, 7
        %v3936 = vsub.s32 0, %v3935
        %v3937 = vrot.slane %v3932, %v3936
        %v3939 = vmul.f32 %v3910, %v3937
        %v3940 = vmul.f32 %v3911, %v3937
        %s3941 = scalar_lea.vmem %s29, 3
        %v3942 = vld [vmem:[%s3941] sm:$0x1]
        %v3944 = vlaneseq
        %v3945 = vshrl.u32 %v3944, 7
        %v3946 = vsub.s32 0, %v3945
        %v3947 = vrot.slane %v3942, %v3946
        %v3949 = vmul.f32 %v3910, %v3947
        %v3950 = vmul.f32 %v3911, %v3947
        %s3951 = scalar_lea.vmem %s29, 4
        %v3952 = vld [vmem:[%s3951] sm:$0x1]
        %v3954 = vlaneseq
        %v3955 = vshrl.u32 %v3954, 7
        %v3956 = vsub.s32 0, %v3955
        %v3957 = vrot.slane %v3952, %v3956
        %v3959 = vmul.f32 %v3910, %v3957
        %v3960 = vmul.f32 %v3911, %v3957
        %s3961 = scalar_lea.vmem %s29, 5
        %v3962 = vld [vmem:[%s3961] sm:$0x1]
        %v3964 = vlaneseq
        %v3965 = vshrl.u32 %v3964, 7
        %v3966 = vsub.s32 0, %v3965
        %v3967 = vrot.slane %v3962, %v3966
        %v3969 = vmul.f32 %v3910, %v3967
        %v3970 = vmul.f32 %v3911, %v3967
        %s3971 = scalar_lea.vmem %s29, 6
        %v3972 = vld [vmem:[%s3971] sm:$0x1]
        %v3974 = vlaneseq
        %v3975 = vshrl.u32 %v3974, 7
        %v3976 = vsub.s32 0, %v3975
        %v3977 = vrot.slane %v3972, %v3976
        %v3979 = vmul.f32 %v3910, %v3977
        %v3980 = vmul.f32 %v3911, %v3977
        %s3981 = scalar_lea.vmem %s29, 7
        %v3982 = vld [vmem:[%s3981] sm:$0x1]
        %v3984 = vlaneseq
        %v3985 = vshrl.u32 %v3984, 7
        %v3986 = vsub.s32 0, %v3985
        %v3987 = vrot.slane %v3982, %v3986
        %v3989 = vmul.f32 %v3910, %v3987
        %v3990 = vmul.f32 %v3911, %v3987
        %s3991 = scalar_lea.vmem %s29, 8
        %v3992 = vld [vmem:[%s3991] sm:$0x1]
        %v3994 = vlaneseq
        %v3995 = vshrl.u32 %v3994, 7
        %v3996 = vsub.s32 0, %v3995
        %v3997 = vrot.slane %v3992, %v3996
        %v3999 = vmul.f32 %v3910, %v3997
        %v4000 = vmul.f32 %v3911, %v3997
        %v4001 = vld [vmem:[%s23] sm:$0xff]
        %v4002 = vld [vmem:[%s23 + $0x8] sm:$0xff]
        %v4003 = vld [vmem:[%s23 + $0x10] sm:$0xff]
        %v4004 = vld [vmem:[%s23 + $0x18] sm:$0xff]
        %v4005 = vld [vmem:[%s31] sm:$0x1]
        %v4007 = vlaneseq
        %v4008 = vshrl.u32 %v4007, 7
        %v4009 = vsub.s32 0, %v4008
        %v4010 = vrot.slane %v4005, %v4009
        %v4013 = vsel %vm3736, %v4002, 0
        %v4016 = vsel %vm3736, %v4004, 0
        %4018 = vmatprep.subr.mxu0 0.0
        %4019 = vmatpush1.msra.mxu0 %v3919
        %4020 = vmatprep.subr.mxu0 0.0
        %4021 = vmatpush1.msra.mxu0 %v3920
        %4022 = vmatprep.subr.mxu0 0.0
        %4023 = vmatpush1.msra.mxu0 %v3929
        %4024 = vmatprep.subr.mxu0 0.0
        %4025 = vmatpush1.msra.mxu0 %v3930
        %4026 = vmatprep.subr.mxu0 0.0
        %4027 = vmatpush1.msra.mxu0 %v3939
        %4028 = vmatprep.subr.mxu0 0.0
        %4029 = vmatpush1.msra.mxu0 %v3940
        %4030 = vmatprep.subr.mxu0 0.0
        %4031 = vmatpush1.msra.mxu0 %v3949
        %4032 = vmatprep.subr.mxu0 0.0
        %4033 = vmatpush1.msra.mxu0 %v3950
        %4034 = vmatprep.subr.mxu0 0.0
        %4035 = vmatpush1.msra.mxu0 %v3959
        %4036 = vmatprep.subr.mxu0 0.0
        %4037 = vmatpush1.msra.mxu0 %v3960
        %4038 = vmatprep.subr.mxu0 0.0
        %4039 = vmatpush1.msra.mxu0 %v3969
        %4040 = vmatprep.subr.mxu0 0.0
        %4041 = vmatpush1.msra.mxu0 %v3970
        %4042 = vmatprep.subr.mxu0 0.0
        %4043 = vmatpush1.msra.mxu0 %v3979
        %4044 = vmatprep.subr.mxu0 0.0
        %4045 = vmatpush1.msra.mxu0 %v3980
        %4046 = vmatprep.subr.mxu0 0.0
        %4047 = vmatpush1.msra.mxu0 %v3989
        %4048 = vmatprep.subr.mxu0 0.0
        %4049 = vmatpush1.msra.mxu0 %v3990
        %4050 = vmatprep.subr.mxu0 0.0
        %4051 = vmatpush1.msra.mxu0 %v3999
        %4052 = vmatprep.subr.mxu0 0.0
        %4053 = vmatpush1.msra.mxu0 %v4000
        %4054 = vmatprep.subr.mxu0 0.0
        %4055 = vmatpush1.msra.mxu0 0.0
        %4056 = vmatprep.subr.mxu0 0.0
        %4057 = vmatpush1.msra.mxu0 0.0
        %4058 = vmatprep.subr.mxu0 0.0
        %4059 = vmatpush1.msra.mxu0 0.0
        %4060 = vmatprep.subr.mxu0 0.0
        %4061 = vmatpush1.msra.mxu0 0.0
        %4062 = vmatprep.subr.mxu0 0.0
        %4063 = vmatpush1.msra.mxu0 0.0
        %4064 = vmatprep.subr.mxu0 0.0
        %4065 = vmatpush1.msra.mxu0 0.0
        %4066 = vmatprep.subr.mxu0 0.0
        %4067 = vmatpush1.msra.mxu0 0.0
        %4068 = vmatprep.subr.mxu0 0.0
        %4069 = vmatpush1.msra.mxu0 0.0
        %4070 = vmatprep.subr.mxu0 0.0
        %4071 = vmatpush1.msra.mxu0 0.0
        %4072 = vmatprep.subr.mxu0 0.0
        %4073 = vmatpush1.msra.mxu0 0.0
        %4074 = vmatprep.subr.mxu0 0.0
        %4075 = vmatpush1.msra.mxu0 0.0
        %4076 = vmatprep.subr.mxu0 0.0
        %4077 = vmatpush1.msra.mxu0 0.0
        %4078 = vmatprep.subr.mxu0 0.0
        %4079 = vmatpush1.msra.mxu0 0.0
        %4080 = vmatprep.subr.mxu0 0.0
        %4081 = vmatpush1.msra.mxu0 0.0
        %4082 = vmatprep.mubr.f32.mxu0 %v4013
        %4083 = vmatmul.mubr.f32.gmra.mrb[0].mxu0 %v4001
        %v4084 = vpop.f32.mrb[0].mxu0
        %v4085 = vadd.f32 %v4010, %v4084
        %v4086 = vpop.f32.mrb[0].mxu0
        %4087 = vmatprep.mubr.f32.mxu0 %v4016
        %4088 = vmatmul.mubr.f32.gmra.mrb[0].mxu0 %v4003
        %v4089 = vpop.f32.mrb[0].mxu0
        %v4090 = vadd.f32 %v4010, %v4089
        %v4091 = vpop.f32.mrb[0].mxu0
        %4092 = vdwg.mxu0
        %v4093 = vld [vmem:[%s33] sm:$0xff]
        %v4094 = vld [vmem:[%s33 + $0x8] sm:$0xff]
        %v4095 = vld [vmem:[%s35] sm:$0x1]
        %v4097 = vlaneseq
        %v4098 = vshrl.u32 %v4097, 7
        %v4099 = vsub.s32 0, %v4098
        %v4100 = vrot.slane %v4095, %v4099
        %v4103 = vsel %vm3736, %v4085, 0
        %v4106 = vsel %vm3736, %v4090, 0
        %4108 = vmatprep.subr.mxu0 0.0
        %4109 = vmatpush1.msra.mxu0 %v4093
        %4110 = vmatprep.subr.mxu0 0.0
        %4111 = vmatpush1.msra.mxu0 %v4094
        %4112 = vmatprep.subr.mxu0 0.0
        %4113 = vmatpush1.msra.mxu0 0.0
        %4114 = vmatprep.subr.mxu0 0.0
        %4115 = vmatpush1.msra.mxu0 0.0
        %4116 = vmatprep.subr.mxu0 0.0
        %4117 = vmatpush1.msra.mxu0 0.0
        %4118 = vmatprep.subr.mxu0 0.0
        %4119 = vmatpush1.msra.mxu0 0.0
        %4120 = vmatprep.subr.mxu0 0.0
        %4121 = vmatpush1.msra.mxu0 0.0
        %4122 = vmatprep.subr.mxu0 0.0
        %4123 = vmatpush1.msra.mxu0 0.0
        %4124 = vmatprep.subr.mxu0 0.0
        %4125 = vmatpush1.msra.mxu0 0.0
        %4126 = vmatprep.subr.mxu0 0.0
        %4127 = vmatpush1.msra.mxu0 0.0
        %4128 = vmatprep.subr.mxu0 0.0
        %4129 = vmatpush1.msra.mxu0 0.0
        %4130 = vmatprep.subr.mxu0 0.0
        %4131 = vmatpush1.msra.mxu0 0.0
        %4132 = vmatprep.subr.mxu0 0.0
        %4133 = vmatpush1.msra.mxu0 0.0
        %4134 = vmatprep.subr.mxu0 0.0
        %4135 = vmatpush1.msra.mxu0 0.0
        %4136 = vmatprep.subr.mxu0 0.0
        %4137 = vmatpush1.msra.mxu0 0.0
        %4138 = vmatprep.subr.mxu0 0.0
        %4139 = vmatpush1.msra.mxu0 0.0
        %4140 = vmatprep.subr.mxu0 0.0
        %4141 = vmatpush1.msra.mxu0 0.0
        %4142 = vmatprep.subr.mxu0 0.0
        %4143 = vmatpush1.msra.mxu0 0.0
        %4144 = vmatprep.subr.mxu0 0.0
        %4145 = vmatpush1.msra.mxu0 0.0
        %4146 = vmatprep.subr.mxu0 0.0
        %4147 = vmatpush1.msra.mxu0 0.0
        %4148 = vmatprep.subr.mxu0 0.0
        %4149 = vmatpush1.msra.mxu0 0.0
        %4150 = vmatprep.subr.mxu0 0.0
        %4151 = vmatpush1.msra.mxu0 0.0
        %4152 = vmatprep.subr.mxu0 0.0
        %4153 = vmatpush1.msra.mxu0 0.0
        %4154 = vmatprep.subr.mxu0 0.0
        %4155 = vmatpush1.msra.mxu0 0.0
        %4156 = vmatprep.subr.mxu0 0.0
        %4157 = vmatpush1.msra.mxu0 0.0
        %4158 = vmatprep.subr.mxu0 0.0
        %4159 = vmatpush1.msra.mxu0 0.0
        %4160 = vmatprep.subr.mxu0 0.0
        %4161 = vmatpush1.msra.mxu0 0.0
        %4162 = vmatprep.subr.mxu0 0.0
        %4163 = vmatpush1.msra.mxu0 0.0
        %4164 = vmatprep.subr.mxu0 0.0
        %4165 = vmatpush1.msra.mxu0 0.0
        %4166 = vmatprep.subr.mxu0 0.0
        %4167 = vmatpush1.msra.mxu0 0.0
        %4168 = vmatprep.subr.mxu0 0.0
        %4169 = vmatpush1.msra.mxu0 0.0
        %4170 = vmatprep.subr.mxu0 0.0
        %4171 = vmatpush1.msra.mxu0 0.0
        %4172 = vmatprep.mubr.f32.mxu0 0.0
        %4173 = vmatmul.mubr.f32.gmra.mrb[0].mxu0 %v4103
        %v4174 = vpop.f32.mrb[0].mxu0
        %v4175 = vadd.f32 %v4100, %v4174
        %v4176 = vpop.f32.mrb[0].mxu0
        %4177 = vmatprep.mubr.f32.mxu0 0.0
        %4178 = vmatmul.mubr.f32.gmra.mrb[0].mxu0 %v4106
        %v4179 = vpop.f32.mrb[0].mxu0
        %v4180 = vadd.f32 %v4100, %v4179
        %v4181 = vpop.f32.mrb[0].mxu0
        %4182 = vdwg.mxu0
        %v4183 = vmax.f32 %v4175, 0.0
        %v4184 = vmax.f32 %v4180, 0.0
        %v4185 = vld [vmem:[%s39] sm:$0xff]
        %v4186 = vld [vmem:[%s39 + $0x8] sm:$0xff]
        %v4187 = vld [vmem:[%s41] sm:$0x1]
        %v4189 = vlaneseq
        %v4190 = vshrl.u32 %v4189, 7
        %v4191 = vsub.s32 0, %v4190
        %v4192 = vrot.slane %v4187, %v4191
        %v4195 = vsel %vm3736, %v4183, 0
        %v4198 = vsel %vm3736, %v4184, 0
        %4200 = vmatprep.subr.mxu0 0.0
        %4201 = vmatpush1.msra.mxu0 %v4185
        %4202 = vmatprep.subr.mxu0 0.0
        %4203 = vmatpush1.msra.mxu0 %v4186
        %4204 = vmatprep.subr.mxu0 0.0
        %4205 = vmatpush1.msra.mxu0 0.0
        %4206 = vmatprep.subr.mxu0 0.0
        %4207 = vmatpush1.msra.mxu0 0.0
        %4208 = vmatprep.subr.mxu0 0.0
        %4209 = vmatpush1.msra.mxu0 0.0
        %4210 = vmatprep.subr.mxu0 0.0
        %4211 = vmatpush1.msra.mxu0 0.0
        %4212 = vmatprep.subr.mxu0 0.0
        %4213 = vmatpush1.msra.mxu0 0.0
        %4214 = vmatprep.subr.mxu0 0.0
        %4215 = vmatpush1.msra.mxu0 0.0
        %4216 = vmatprep.subr.mxu0 0.0
        %4217 = vmatpush1.msra.mxu0 0.0
        %4218 = vmatprep.subr.mxu0 0.0
        %4219 = vmatpush1.msra.mxu0 0.0
        %4220 = vmatprep.subr.mxu0 0.0
        %4221 = vmatpush1.msra.mxu0 0.0
        %4222 = vmatprep.subr.mxu0 0.0
        %4223 = vmatpush1.msra.mxu0 0.0
        %4224 = vmatprep.subr.mxu0 0.0
        %4225 = vmatpush1.msra.mxu0 0.0
        %4226 = vmatprep.subr.mxu0 0.0
        %4227 = vmatpush1.msra.mxu0 0.0
        %4228 = vmatprep.subr.mxu0 0.0
        %4229 = vmatpush1.msra.mxu0 0.0
        %4230 = vmatprep.subr.mxu0 0.0
        %4231 = vmatpush1.msra.mxu0 0.0
        %4232 = vmatprep.subr.mxu0 0.0
        %4233 = vmatpush1.msra.mxu0 0.0
        %4234 = vmatprep.subr.mxu0 0.0
        %4235 = vmatpush1.msra.mxu0 0.0
        %4236 = vmatprep.subr.mxu0 0.0
        %4237 = vmatpush1.msra.mxu0 0.0
        %4238 = vmatprep.subr.mxu0 0.0
        %4239 = vmatpush1.msra.mxu0 0.0
        %4240 = vmatprep.subr.mxu0 0.0
        %4241 = vmatpush1.msra.mxu0 0.0
        %4242 = vmatprep.subr.mxu0 0.0
        %4243 = vmatpush1.msra.mxu0 0.0
        %4244 = vmatprep.subr.mxu0 0.0
        %4245 = vmatpush1.msra.mxu0 0.0
        %4246 = vmatprep.subr.mxu0 0.0
        %4247 = vmatpush1.msra.mxu0 0.0
        %4248 = vmatprep.subr.mxu0 0.0
        %4249 = vmatpush1.msra.mxu0 0.0
        %4250 = vmatprep.subr.mxu0 0.0
        %4251 = vmatpush1.msra.mxu0 0.0
        %4252 = vmatprep.subr.mxu0 0.0
        %4253 = vmatpush1.msra.mxu0 0.0
        %4254 = vmatprep.subr.mxu0 0.0
        %4255 = vmatpush1.msra.mxu0 0.0
        %4256 = vmatprep.subr.mxu0 0.0
        %4257 = vmatpush1.msra.mxu0 0.0
        %4258 = vmatprep.subr.mxu0 0.0
        %4259 = vmatpush1.msra.mxu0 0.0
        %4260 = vmatprep.subr.mxu0 0.0
        %4261 = vmatpush1.msra.mxu0 0.0
        %4262 = vmatprep.subr.mxu0 0.0
        %4263 = vmatpush1.msra.mxu0 0.0
        %4264 = vmatprep.mubr.f32.mxu0 0.0
        %4265 = vmatmul.mubr.f32.gmra.mrb[0].mxu0 %v4195
        %v4266 = vpop.f32.mrb[0].mxu0
        %v4267 = vadd.f32 %v4192, %v4266
        %v4268 = vpop.f32.mrb[0].mxu0
        %4269 = vmatprep.mubr.f32.mxu0 0.0
        %4270 = vmatmul.mubr.f32.gmra.mrb[0].mxu0 %v4198
        %v4271 = vpop.f32.mrb[0].mxu0
        %v4272 = vadd.f32 %v4192, %v4271
        %v4273 = vpop.f32.mrb[0].mxu0
        %4274 = vdwg.mxu0
        %v4275 = vmax.f32 %v4267, 0.0
        %v4276 = vmax.f32 %v4272, 0.0
        %v4277 = vld [vmem:[%s43] sm:$0x1]
        %v4279 = vlaneseq
        %v4280 = vshrl.u32 %v4279, 7
        %v4281 = vsub.s32 0, %v4280
        %v4282 = vrot.slane %v4277, %v4281
        %v4284 = vmul.f32 %v4275, %v4282
        %v4285 = vmul.f32 %v4276, %v4282
        %s4286 = scalar_lea.vmem %s43, 1
        %v4287 = vld [vmem:[%s4286] sm:$0x1]
        %v4289 = vlaneseq
        %v4290 = vshrl.u32 %v4289, 7
        %v4291 = vsub.s32 0, %v4290
        %v4292 = vrot.slane %v4287, %v4291
        %v4294 = vmul.f32 %v4275, %v4292
        %v4295 = vmul.f32 %v4276, %v4292
        %s4296 = scalar_lea.vmem %s43, 2
        %v4297 = vld [vmem:[%s4296] sm:$0x1]
        %v4299 = vlaneseq
        %v4300 = vshrl.u32 %v4299, 7
        %v4301 = vsub.s32 0, %v4300
        %v4302 = vrot.slane %v4297, %v4301
        %v4304 = vmul.f32 %v4275, %v4302
        %v4305 = vmul.f32 %v4276, %v4302
        %s4306 = scalar_lea.vmem %s43, 3
        %v4307 = vld [vmem:[%s4306] sm:$0x1]
        %v4309 = vlaneseq
        %v4310 = vshrl.u32 %v4309, 7
        %v4311 = vsub.s32 0, %v4310
        %v4312 = vrot.slane %v4307, %v4311
        %v4314 = vmul.f32 %v4275, %v4312
        %v4315 = vmul.f32 %v4276, %v4312
        %s4316 = scalar_lea.vmem %s43, 4
        %v4317 = vld [vmem:[%s4316] sm:$0x1]
        %v4319 = vlaneseq
        %v4320 = vshrl.u32 %v4319, 7
        %v4321 = vsub.s32 0, %v4320
        %v4322 = vrot.slane %v4317, %v4321
        %v4324 = vmul.f32 %v4275, %v4322
        %v4325 = vmul.f32 %v4276, %v4322
        %s4326 = scalar_lea.vmem %s43, 5
        %v4327 = vld [vmem:[%s4326] sm:$0x1]
        %v4329 = vlaneseq
        %v4330 = vshrl.u32 %v4329, 7
        %v4331 = vsub.s32 0, %v4330
        %v4332 = vrot.slane %v4327, %v4331
        %v4334 = vmul.f32 %v4275, %v4332
        %v4335 = vmul.f32 %v4276, %v4332
        %s4336 = scalar_lea.vmem %s43, 6
        %v4337 = vld [vmem:[%s4336] sm:$0x1]
        %v4339 = vlaneseq
        %v4340 = vshrl.u32 %v4339, 7
        %v4341 = vsub.s32 0, %v4340
        %v4342 = vrot.slane %v4337, %v4341
        %v4344 = vmul.f32 %v4275, %v4342
        %v4345 = vmul.f32 %v4276, %v4342
        %s4346 = scalar_lea.vmem %s43, 7
        %v4347 = vld [vmem:[%s4346] sm:$0x1]
        %v4349 = vlaneseq
        %v4350 = vshrl.u32 %v4349, 7
        %v4351 = vsub.s32 0, %v4350
        %v4352 = vrot.slane %v4347, %v4351
        %v4354 = vmul.f32 %v4275, %v4352
        %v4355 = vmul.f32 %v4276, %v4352
        %s4356 = scalar_lea.vmem %s43, 8
        %v4357 = vld [vmem:[%s4356] sm:$0x1]
        %v4359 = vlaneseq
        %v4360 = vshrl.u32 %v4359, 7
        %v4361 = vsub.s32 0, %v4360
        %v4362 = vrot.slane %v4357, %v4361
        %v4364 = vmul.f32 %v4275, %v4362
        %v4365 = vmul.f32 %v4276, %v4362
        %v4366 = vld [vmem:[%s37] sm:$0xff]
        %v4367 = vld [vmem:[%s45] sm:$0x1]
        %v4369 = vlaneseq
        %v4370 = vshrl.u32 %v4369, 7
        %v4371 = vsub.s32 0, %v4370
        %v4372 = vrot.slane %v4367, %v4371
        %v4375 = vcombine.high %v4366, %v4366
        %v4376 = vsel %vm3736, %v4375, 0
        %4378 = vmatprep.subr.mxu0 0.0
        %4379 = vmatpush1.msra.mxu0 %v4284
        %4380 = vmatprep.subr.mxu0 0.0
        %4381 = vmatpush1.msra.mxu0 %v4285
        %4382 = vmatprep.subr.mxu0 0.0
        %4383 = vmatpush1.msra.mxu0 %v4294
        %4384 = vmatprep.subr.mxu0 0.0
        %4385 = vmatpush1.msra.mxu0 %v4295
        %4386 = vmatprep.subr.mxu0 0.0
        %4387 = vmatpush1.msra.mxu0 %v4304
        %4388 = vmatprep.subr.mxu0 0.0
        %4389 = vmatpush1.msra.mxu0 %v4305
        %4390 = vmatprep.subr.mxu0 0.0
        %4391 = vmatpush1.msra.mxu0 %v4314
        %4392 = vmatprep.subr.mxu0 0.0
        %4393 = vmatpush1.msra.mxu0 %v4315
        %4394 = vmatprep.subr.mxu0 0.0
        %4395 = vmatpush1.msra.mxu0 %v4324
        %4396 = vmatprep.subr.mxu0 0.0
        %4397 = vmatpush1.msra.mxu0 %v4325
        %4398 = vmatprep.subr.mxu0 0.0
        %4399 = vmatpush1.msra.mxu0 %v4334
        %4400 = vmatprep.subr.mxu0 0.0
        %4401 = vmatpush1.msra.mxu0 %v4335
        %4402 = vmatprep.subr.mxu0 0.0
        %4403 = vmatpush1.msra.mxu0 %v4344
        %4404 = vmatprep.subr.mxu0 0.0
        %4405 = vmatpush1.msra.mxu0 %v4345
        %4406 = vmatprep.subr.mxu0 0.0
        %4407 = vmatpush1.msra.mxu0 %v4354
        %4408 = vmatprep.subr.mxu0 0.0
        %4409 = vmatpush1.msra.mxu0 %v4355
        %4410 = vmatprep.subr.mxu0 0.0
        %4411 = vmatpush1.msra.mxu0 %v4364
        %4412 = vmatprep.subr.mxu0 0.0
        %4413 = vmatpush1.msra.mxu0 %v4365
        %4414 = vmatprep.subr.mxu0 0.0
        %4415 = vmatpush1.msra.mxu0 0.0
        %4416 = vmatprep.subr.mxu0 0.0
        %4417 = vmatpush1.msra.mxu0 0.0
        %4418 = vmatprep.subr.mxu0 0.0
        %4419 = vmatpush1.msra.mxu0 0.0
        %4420 = vmatprep.subr.mxu0 0.0
        %4421 = vmatpush1.msra.mxu0 0.0
        %4422 = vmatprep.subr.mxu0 0.0
        %4423 = vmatpush1.msra.mxu0 0.0
        %4424 = vmatprep.subr.mxu0 0.0
        %4425 = vmatpush1.msra.mxu0 0.0
        %4426 = vmatprep.subr.mxu0 0.0
        %4427 = vmatpush1.msra.mxu0 0.0
        %4428 = vmatprep.subr.mxu0 0.0
        %4429 = vmatpush1.msra.mxu0 0.0
        %4430 = vmatprep.subr.mxu0 0.0
        %4431 = vmatpush1.msra.mxu0 0.0
        %4432 = vmatprep.subr.mxu0 0.0
        %4433 = vmatpush1.msra.mxu0 0.0
        %4434 = vmatprep.subr.mxu0 0.0
        %4435 = vmatpush1.msra.mxu0 0.0
        %4436 = vmatprep.subr.mxu0 0.0
        %4437 = vmatpush1.msra.mxu0 0.0
        %4438 = vmatprep.subr.mxu0 0.0
        %4439 = vmatpush1.msra.mxu0 0.0
        %4440 = vmatprep.subr.mxu0 0.0
        %4441 = vmatpush1.msra.mxu0 0.0
        %4442 = vmatprep.mubr.f32.mxu0 %v4376
        %4443 = vmatmul.mubr.f32.gmra.mrb[0].mxu0 %v4366
        %v4444 = vpop.f32.mrb[0].mxu0
        %v4445 = vadd.f32 %v4372, %v4444
        %v4446 = vpop.f32.mrb[0].mxu0
        %4447 = vdwg.mxu0
        %v4448 = vld [vmem:[%s47] sm:$0xff]
        %v4449 = vld [vmem:[%s47 + $0x8] sm:$0xff]
        %v4450 = vld [vmem:[%s47 + $0x10] sm:$0xff]
        %v4451 = vld [vmem:[%s47 + $0x18] sm:$0xff]
        %v4452 = vld [vmem:[%s49] sm:$0x1]
        %v4454 = vlaneseq
        %v4455 = vshrl.u32 %v4454, 7
        %v4456 = vsub.s32 0, %v4455
        %v4457 = vrot.slane %v4452, %v4456
        %vm4459 = vcmask 261120
        %v4461 = vsel %vm4459, %v4445, 0
        %4463 = vmatprep.subr.mxu0 0.0
        %4464 = vmatpush1.msra.mxu0 %v4448
        %4465 = vmatprep.subr.mxu0 0.0
        %4466 = vmatpush1.msra.mxu0 %v4449
        %4467 = vmatprep.subr.mxu0 0.0
        %4468 = vmatpush1.msra.mxu0 %v4450
        %4469 = vmatprep.subr.mxu0 0.0
        %4470 = vmatpush1.msra.mxu0 %v4451
        %4471 = vmatprep.subr.mxu0 0.0
        %4472 = vmatpush1.msra.mxu0 0.0
        %4473 = vmatprep.subr.mxu0 0.0
        %4474 = vmatpush1.msra.mxu0 0.0
        %4475 = vmatprep.subr.mxu0 0.0
        %4476 = vmatpush1.msra.mxu0 0.0
        %4477 = vmatprep.subr.mxu0 0.0
        %4478 = vmatpush1.msra.mxu0 0.0
        %4479 = vmatprep.subr.mxu0 0.0
        %4480 = vmatpush1.msra.mxu0 0.0
        %4481 = vmatprep.subr.mxu0 0.0
        %4482 = vmatpush1.msra.mxu0 0.0
        %4483 = vmatprep.subr.mxu0 0.0
        %4484 = vmatpush1.msra.mxu0 0.0
        %4485 = vmatprep.subr.mxu0 0.0
        %4486 = vmatpush1.msra.mxu0 0.0
        %4487 = vmatprep.subr.mxu0 0.0
        %4488 = vmatpush1.msra.mxu0 0.0
        %4489 = vmatprep.subr.mxu0 0.0
        %4490 = vmatpush1.msra.mxu0 0.0
        %4491 = vmatprep.subr.mxu0 0.0
        %4492 = vmatpush1.msra.mxu0 0.0
        %4493 = vmatprep.subr.mxu0 0.0
        %4494 = vmatpush1.msra.mxu0 0.0
        %4495 = vmatprep.subr.mxu0 0.0
        %4496 = vmatpush1.msra.mxu0 0.0
        %4497 = vmatprep.subr.mxu0 0.0
        %4498 = vmatpush1.msra.mxu0 0.0
        %4499 = vmatprep.subr.mxu0 0.0
        %4500 = vmatpush1.msra.mxu0 0.0
        %4501 = vmatprep.subr.mxu0 0.0
        %4502 = vmatpush1.msra.mxu0 0.0
        %4503 = vmatprep.subr.mxu0 0.0
        %4504 = vmatpush1.msra.mxu0 0.0
        %4505 = vmatprep.subr.mxu0 0.0
        %4506 = vmatpush1.msra.mxu0 0.0
        %4507 = vmatprep.subr.mxu0 0.0
        %4508 = vmatpush1.msra.mxu0 0.0
        %4509 = vmatprep.subr.mxu0 0.0
        %4510 = vmatpush1.msra.mxu0 0.0
        %4511 = vmatprep.subr.mxu0 0.0
        %4512 = vmatpush1.msra.mxu0 0.0
        %4513 = vmatprep.subr.mxu0 0.0
        %4514 = vmatpush1.msra.mxu0 0.0
        %4515 = vmatprep.subr.mxu0 0.0
        %4516 = vmatpush1.msra.mxu0 0.0
        %4517 = vmatprep.subr.mxu0 0.0
        %4518 = vmatpush1.msra.mxu0 0.0
        %4519 = vmatprep.subr.mxu0 0.0
        %4520 = vmatpush1.msra.mxu0 0.0
        %4521 = vmatprep.subr.mxu0 0.0
        %4522 = vmatpush1.msra.mxu0 0.0
        %4523 = vmatprep.subr.mxu0 0.0
        %4524 = vmatpush1.msra.mxu0 0.0
        %4525 = vmatprep.subr.mxu0 0.0
        %4526 = vmatpush1.msra.mxu0 0.0
        %4527 = vmatprep.mubr.f32.mxu0 0.0
        %4528 = vmatmul.mubr.f32.gmra.mrb[0].mxu0 %v4461
        %v4529 = vpop.f32.mrb[0].mxu0
        %v4530 = vadd.f32 %v4457, %v4529
        %v4531 = vpop.f32.mrb[0].mxu0
        %4532 = vdwg.mxu0
        %v4533 = vmax.f32 %v4530, 0.0
        %v4534 = vld [vmem:[%s53] sm:$0xff]
        %v4535 = vld [vmem:[%s53 + $0x8] sm:$0xff]
        %v4536 = vld [vmem:[%s53 + $0x10] sm:$0xff]
        %v4537 = vld [vmem:[%s53 + $0x18] sm:$0xff]
        %v4538 = vld [vmem:[%s55] sm:$0x1]
        %v4540 = vlaneseq
        %v4541 = vshrl.u32 %v4540, 7
        %v4542 = vsub.s32 0, %v4541
        %v4543 = vrot.slane %v4538, %v4542
        %v4546 = vsel %vm4459, %v4533, 0
        %4548 = vmatprep.subr.mxu0 0.0
        %4549 = vmatpush1.msra.mxu0 %v4534
        %4550 = vmatprep.subr.mxu0 0.0
        %4551 = vmatpush1.msra.mxu0 %v4535
        %4552 = vmatprep.subr.mxu0 0.0
        %4553 = vmatpush1.msra.mxu0 %v4536
        %4554 = vmatprep.subr.mxu0 0.0
        %4555 = vmatpush1.msra.mxu0 %v4537
        %4556 = vmatprep.subr.mxu0 0.0
        %4557 = vmatpush1.msra.mxu0 0.0
        %4558 = vmatprep.subr.mxu0 0.0
        %4559 = vmatpush1.msra.mxu0 0.0
        %4560 = vmatprep.subr.mxu0 0.0
        %4561 = vmatpush1.msra.mxu0 0.0
        %4562 = vmatprep.subr.mxu0 0.0
        %4563 = vmatpush1.msra.mxu0 0.0
        %4564 = vmatprep.subr.mxu0 0.0
        %4565 = vmatpush1.msra.mxu0 0.0
        %4566 = vmatprep.subr.mxu0 0.0
        %4567 = vmatpush1.msra.mxu0 0.0
        %4568 = vmatprep.subr.mxu0 0.0
        %4569 = vmatpush1.msra.mxu0 0.0
        %4570 = vmatprep.subr.mxu0 0.0
        %4571 = vmatpush1.msra.mxu0 0.0
        %4572 = vmatprep.subr.mxu0 0.0
        %4573 = vmatpush1.msra.mxu0 0.0
        %4574 = vmatprep.subr.mxu0 0.0
        %4575 = vmatpush1.msra.mxu0 0.0
        %4576 = vmatprep.subr.mxu0 0.0
        %4577 = vmatpush1.msra.mxu0 0.0
        %4578 = vmatprep.subr.mxu0 0.0
        %4579 = vmatpush1.msra.mxu0 0.0
        %4580 = vmatprep.subr.mxu0 0.0
        %4581 = vmatpush1.msra.mxu0 0.0
        %4582 = vmatprep.subr.mxu0 0.0
        %4583 = vmatpush1.msra.mxu0 0.0
        %4584 = vmatprep.subr.mxu0 0.0
        %4585 = vmatpush1.msra.mxu0 0.0
        %4586 = vmatprep.subr.mxu0 0.0
        %4587 = vmatpush1.msra.mxu0 0.0
        %4588 = vmatprep.subr.mxu0 0.0
        %4589 = vmatpush1.msra.mxu0 0.0
        %4590 = vmatprep.subr.mxu0 0.0
        %4591 = vmatpush1.msra.mxu0 0.0
        %4592 = vmatprep.subr.mxu0 0.0
        %4593 = vmatpush1.msra.mxu0 0.0
        %4594 = vmatprep.subr.mxu0 0.0
        %4595 = vmatpush1.msra.mxu0 0.0
        %4596 = vmatprep.subr.mxu0 0.0
        %4597 = vmatpush1.msra.mxu0 0.0
        %4598 = vmatprep.subr.mxu0 0.0
        %4599 = vmatpush1.msra.mxu0 0.0
        %4600 = vmatprep.subr.mxu0 0.0
        %4601 = vmatpush1.msra.mxu0 0.0
        %4602 = vmatprep.subr.mxu0 0.0
        %4603 = vmatpush1.msra.mxu0 0.0
        %4604 = vmatprep.subr.mxu0 0.0
        %4605 = vmatpush1.msra.mxu0 0.0
        %4606 = vmatprep.subr.mxu0 0.0
        %4607 = vmatpush1.msra.mxu0 0.0
        %4608 = vmatprep.subr.mxu0 0.0
        %4609 = vmatpush1.msra.mxu0 0.0
        %4610 = vmatprep.subr.mxu0 0.0
        %4611 = vmatpush1.msra.mxu0 0.0
        %4612 = vmatprep.mubr.f32.mxu0 0.0
        %4613 = vmatmul.mubr.f32.gmra.mrb[0].mxu0 %v4546
        %v4614 = vpop.f32.mrb[0].mxu0
        %v4615 = vadd.f32 %v4543, %v4614
        %v4616 = vpop.f32.mrb[0].mxu0
        %4617 = vdwg.mxu0
        %v4618 = vmax.f32 %v4615, 0.0
        %v4619 = vld [vmem:[%s57] sm:$0x1]
        %v4621 = vlaneseq
        %v4622 = vshrl.u32 %v4621, 7
        %v4623 = vsub.s32 0, %v4622
        %v4624 = vrot.slane %v4619, %v4623
        %v4626 = vmul.f32 %v4618, %v4624
        %s4627 = scalar_lea.vmem %s57, 1
        %v4628 = vld [vmem:[%s4627] sm:$0x1]
        %v4630 = vlaneseq
        %v4631 = vshrl.u32 %v4630, 7
        %v4632 = vsub.s32 0, %v4631
        %v4633 = vrot.slane %v4628, %v4632
        %v4635 = vmul.f32 %v4618, %v4633
        %s4636 = scalar_lea.vmem %s57, 2
        %v4637 = vld [vmem:[%s4636] sm:$0x1]
        %v4639 = vlaneseq
        %v4640 = vshrl.u32 %v4639, 7
        %v4641 = vsub.s32 0, %v4640
        %v4642 = vrot.slane %v4637, %v4641
        %v4644 = vmul.f32 %v4618, %v4642
        %s4645 = scalar_lea.vmem %s57, 3
        %v4646 = vld [vmem:[%s4645] sm:$0x1]
        %v4648 = vlaneseq
        %v4649 = vshrl.u32 %v4648, 7
        %v4650 = vsub.s32 0, %v4649
        %v4651 = vrot.slane %v4646, %v4650
        %v4653 = vmul.f32 %v4618, %v4651
        %s4654 = scalar_lea.vmem %s57, 4
        %v4655 = vld [vmem:[%s4654] sm:$0x1]
        %v4657 = vlaneseq
        %v4658 = vshrl.u32 %v4657, 7
        %v4659 = vsub.s32 0, %v4658
        %v4660 = vrot.slane %v4655, %v4659
        %v4662 = vmul.f32 %v4618, %v4660
        %s4663 = scalar_lea.vmem %s57, 5
        %v4664 = vld [vmem:[%s4663] sm:$0x1]
        %v4666 = vlaneseq
        %v4667 = vshrl.u32 %v4666, 7
        %v4668 = vsub.s32 0, %v4667
        %v4669 = vrot.slane %v4664, %v4668
        %v4671 = vmul.f32 %v4618, %v4669
        %s4672 = scalar_lea.vmem %s57, 6
        %v4673 = vld [vmem:[%s4672] sm:$0x1]
        %v4675 = vlaneseq
        %v4676 = vshrl.u32 %v4675, 7
        %v4677 = vsub.s32 0, %v4676
        %v4678 = vrot.slane %v4673, %v4677
        %v4680 = vmul.f32 %v4618, %v4678
        %s4681 = scalar_lea.vmem %s57, 7
        %v4682 = vld [vmem:[%s4681] sm:$0x1]
        %v4684 = vlaneseq
        %v4685 = vshrl.u32 %v4684, 7
        %v4686 = vsub.s32 0, %v4685
        %v4687 = vrot.slane %v4682, %v4686
        %v4689 = vmul.f32 %v4618, %v4687
        %s4690 = scalar_lea.vmem %s57, 8
        %v4691 = vld [vmem:[%s4690] sm:$0x1]
        %v4693 = vlaneseq
        %v4694 = vshrl.u32 %v4693, 7
        %v4695 = vsub.s32 0, %v4694
        %v4696 = vrot.slane %v4691, %v4695
        %v4698 = vmul.f32 %v4618, %v4696
        %v4700 = vrot.slane %v4635, 4
        %v4703 = vrot.slane %v4653, 4
        %v4706 = vrot.slane %v4671, 4
        %v4709 = vrot.slane %v4689, 4
        %vm4711 = vcmask 1043456
        %v4712 = vsel %vm4711, %v4626, %v4700
        %v4713 = vsel %vm4711, %v4644, %v4703
        %v4714 = vsel %vm4711, %v4662, %v4706
        %v4715 = vsel %vm4711, %v4680, %v4709
        %v4716 = vld [vmem:[%s51] sm:$0xf]
        %v4717 = vld [vmem:[%s59] sm:$0x1]
        %v4719 = vlaneseq
        %v4720 = vshrl.u32 %v4719, 7
        %v4721 = vsub.s32 0, %v4720
        %v4722 = vrot.slane %v4717, %v4721
        %vm4724 = vcmask 293888
        %v4726 = vsel %vm4724, %v4716, 0
        %v4729 = vsel %vm4711, %v4698, 0
        %4731 = vmatprep.subr.mxu0 0.0
        %4732 = vmatpush1.msra.mxu0 %v4712
        %4733 = vmatprep.subr.mxu0 0.0
        %4734 = vmatpush1.msra.mxu0 %v4713
        %4735 = vmatprep.subr.mxu0 0.0
        %4736 = vmatpush1.msra.mxu0 %v4714
        %4737 = vmatprep.subr.mxu0 0.0
        %4738 = vmatpush1.msra.mxu0 %v4715
        %4739 = vmatprep.subr.mxu0 0.0
        %4740 = vmatpush1.msra.mxu0 %v4729
        %4741 = vmatprep.subr.mxu0 0.0
        %4742 = vmatpush1.msra.mxu0 0.0
        %4743 = vmatprep.subr.mxu0 0.0
        %4744 = vmatpush1.msra.mxu0 0.0
        %4745 = vmatprep.subr.mxu0 0.0
        %4746 = vmatpush1.msra.mxu0 0.0
        %4747 = vmatprep.subr.mxu0 0.0
        %4748 = vmatpush1.msra.mxu0 0.0
        %4749 = vmatprep.subr.mxu0 0.0
        %4750 = vmatpush1.msra.mxu0 0.0
        %4751 = vmatprep.subr.mxu0 0.0
        %4752 = vmatpush1.msra.mxu0 0.0
        %4753 = vmatprep.subr.mxu0 0.0
        %4754 = vmatpush1.msra.mxu0 0.0
        %4755 = vmatprep.subr.mxu0 0.0
        %4756 = vmatpush1.msra.mxu0 0.0
        %4757 = vmatprep.subr.mxu0 0.0
        %4758 = vmatpush1.msra.mxu0 0.0
        %4759 = vmatprep.subr.mxu0 0.0
        %4760 = vmatpush1.msra.mxu0 0.0
        %4761 = vmatprep.subr.mxu0 0.0
        %4762 = vmatpush1.msra.mxu0 0.0
        %4763 = vmatprep.subr.mxu0 0.0
        %4764 = vmatpush1.msra.mxu0 0.0
        %4765 = vmatprep.subr.mxu0 0.0
        %4766 = vmatpush1.msra.mxu0 0.0
        %4767 = vmatprep.subr.mxu0 0.0
        %4768 = vmatpush1.msra.mxu0 0.0
        %4769 = vmatprep.subr.mxu0 0.0
        %4770 = vmatpush1.msra.mxu0 0.0
        %4771 = vmatprep.subr.mxu0 0.0
        %4772 = vmatpush1.msra.mxu0 0.0
        %4773 = vmatprep.subr.mxu0 0.0
        %4774 = vmatpush1.msra.mxu0 0.0
        %4775 = vmatprep.subr.mxu0 0.0
        %4776 = vmatpush1.msra.mxu0 0.0
        %4777 = vmatprep.subr.mxu0 0.0
        %4778 = vmatpush1.msra.mxu0 0.0
        %4779 = vmatprep.subr.mxu0 0.0
        %4780 = vmatpush1.msra.mxu0 0.0
        %4781 = vmatprep.subr.mxu0 0.0
        %4782 = vmatpush1.msra.mxu0 0.0
        %4783 = vmatprep.subr.mxu0 0.0
        %4784 = vmatpush1.msra.mxu0 0.0
        %4785 = vmatprep.subr.mxu0 0.0
        %4786 = vmatpush1.msra.mxu0 0.0
        %4787 = vmatprep.subr.mxu0 0.0
        %4788 = vmatpush1.msra.mxu0 0.0
        %4789 = vmatprep.subr.mxu0 0.0
        %4790 = vmatpush1.msra.mxu0 0.0
        %4791 = vmatprep.subr.mxu0 0.0
        %4792 = vmatpush1.msra.mxu0 0.0
        %4793 = vmatprep.subr.mxu0 0.0
        %4794 = vmatpush1.msra.mxu0 0.0
        %4795 = vmatprep.mubr.f32.mxu0 0.0
        %4796 = vmatmul.mubr.f32.gmra.mrb[0].mxu0 %v4726
        %v4797 = vpop.f32.mrb[0].mxu0
        %v4798 = vadd.f32 %v4722, %v4797
        %v4799 = vpop.f32.mrb[0].mxu0
        %4800 = vdwg.mxu0
        %v4801 = vld [vmem:[%s61] sm:$0xff]
        %v4802 = vld [vmem:[%s61 + $0x8] sm:$0xff]
        %v4803 = vld [vmem:[%s61 + $0x10] sm:$0xff]
        %v4804 = vld [vmem:[%s61 + $0x18] sm:$0xff]
        %v4805 = vld [vmem:[%s63] sm:$0x1]
        %v4807 = vlaneseq
        %v4808 = vshrl.u32 %v4807, 7
        %v4809 = vsub.s32 0, %v4808
        %v4810 = vrot.slane %v4805, %v4809
        %v4813 = vsel %vm4459, %v4798, 0
        %4815 = vmatprep.subr.mxu0 0.0
        %4816 = vmatpush1.msra.mxu0 %v4801
        %4817 = vmatprep.subr.mxu0 0.0
        %4818 = vmatpush1.msra.mxu0 %v4802
        %4819 = vmatprep.subr.mxu0 0.0
        %4820 = vmatpush1.msra.mxu0 %v4803
        %4821 = vmatprep.subr.mxu0 0.0
        %4822 = vmatpush1.msra.mxu0 %v4804
        %4823 = vmatprep.subr.mxu0 0.0
        %4824 = vmatpush1.msra.mxu0 0.0
        %4825 = vmatprep.subr.mxu0 0.0
        %4826 = vmatpush1.msra.mxu0 0.0
        %4827 = vmatprep.subr.mxu0 0.0
        %4828 = vmatpush1.msra.mxu0 0.0
        %4829 = vmatprep.subr.mxu0 0.0
        %4830 = vmatpush1.msra.mxu0 0.0
        %4831 = vmatprep.subr.mxu0 0.0
        %4832 = vmatpush1.msra.mxu0 0.0
        %4833 = vmatprep.subr.mxu0 0.0
        %4834 = vmatpush1.msra.mxu0 0.0
        %4835 = vmatprep.subr.mxu0 0.0
        %4836 = vmatpush1.msra.mxu0 0.0
        %4837 = vmatprep.subr.mxu0 0.0
        %4838 = vmatpush1.msra.mxu0 0.0
        %4839 = vmatprep.subr.mxu0 0.0
        %4840 = vmatpush1.msra.mxu0 0.0
        %4841 = vmatprep.subr.mxu0 0.0
        %4842 = vmatpush1.msra.mxu0 0.0
        %4843 = vmatprep.subr.mxu0 0.0
        %4844 = vmatpush1.msra.mxu0 0.0
        %4845 = vmatprep.subr.mxu0 0.0
        %4846 = vmatpush1.msra.mxu0 0.0
        %4847 = vmatprep.subr.mxu0 0.0
        %4848 = vmatpush1.msra.mxu0 0.0
        %4849 = vmatprep.subr.mxu0 0.0
        %4850 = vmatpush1.msra.mxu0 0.0
        %4851 = vmatprep.subr.mxu0 0.0
        %4852 = vmatpush1.msra.mxu0 0.0
        %4853 = vmatprep.subr.mxu0 0.0
        %4854 = vmatpush1.msra.mxu0 0.0
        %4855 = vmatprep.subr.mxu0 0.0
        %4856 = vmatpush1.msra.mxu0 0.0
        %4857 = vmatprep.subr.mxu0 0.0
        %4858 = vmatpush1.msra.mxu0 0.0
        %4859 = vmatprep.subr.mxu0 0.0
        %4860 = vmatpush1.msra.mxu0 0.0
        %4861 = vmatprep.subr.mxu0 0.0
        %4862 = vmatpush1.msra.mxu0 0.0
        %4863 = vmatprep.subr.mxu0 0.0
        %4864 = vmatpush1.msra.mxu0 0.0
        %4865 = vmatprep.subr.mxu0 0.0
        %4866 = vmatpush1.msra.mxu0 0.0
        %4867 = vmatprep.subr.mxu0 0.0
        %4868 = vmatpush1.msra.mxu0 0.0
        %4869 = vmatprep.subr.mxu0 0.0
        %4870 = vmatpush1.msra.mxu0 0.0
        %4871 = vmatprep.subr.mxu0 0.0
        %4872 = vmatpush1.msra.mxu0 0.0
        %4873 = vmatprep.subr.mxu0 0.0
        %4874 = vmatpush1.msra.mxu0 0.0
        %4875 = vmatprep.subr.mxu0 0.0
        %4876 = vmatpush1.msra.mxu0 0.0
        %4877 = vmatprep.subr.mxu0 0.0
        %4878 = vmatpush1.msra.mxu0 0.0
        %4879 = vmatprep.mubr.f32.mxu0 0.0
        %4880 = vmatmul.mubr.f32.gmra.mrb[0].mxu0 %v4813
        %v4881 = vpop.f32.mrb[0].mxu0
        %v4882 = vadd.f32 %v4810, %v4881
        %v4883 = vpop.f32.mrb[0].mxu0
        %4884 = vdwg.mxu0
        %v4885 = vmax.f32 %v4882, 0.0
        %v4886 = vld [vmem:[%s67] sm:$0xff]
        %v4887 = vld [vmem:[%s67 + $0x8] sm:$0xff]
        %v4888 = vld [vmem:[%s67 + $0x10] sm:$0xff]
        %v4889 = vld [vmem:[%s67 + $0x18] sm:$0xff]
        %v4890 = vld [vmem:[#allocation2] sm:$0x1]
        %v4892 = vlaneseq
        %v4893 = vshrl.u32 %v4892, 7
        %v4894 = vsub.s32 0, %v4893
        %v4895 = vrot.slane %v4890, %v4894
        %v4898 = vsel %vm4459, %v4885, 0
        %4900 = vmatprep.subr.mxu0 0.0
        %4901 = vmatpush1.msra.mxu0 %v4886
        %4902 = vmatprep.subr.mxu0 0.0
        %4903 = vmatpush1.msra.mxu0 %v4887
        %4904 = vmatprep.subr.mxu0 0.0
        %4905 = vmatpush1.msra.mxu0 %v4888
        %4906 = vmatprep.subr.mxu0 0.0
        %4907 = vmatpush1.msra.mxu0 %v4889
        %4908 = vmatprep.subr.mxu0 0.0
        %4909 = vmatpush1.msra.mxu0 0.0
        %4910 = vmatprep.subr.mxu0 0.0
        %4911 = vmatpush1.msra.mxu0 0.0
        %4912 = vmatprep.subr.mxu0 0.0
        %4913 = vmatpush1.msra.mxu0 0.0
        %4914 = vmatprep.subr.mxu0 0.0
        %4915 = vmatpush1.msra.mxu0 0.0
        %4916 = vmatprep.subr.mxu0 0.0
        %4917 = vmatpush1.msra.mxu0 0.0
        %4918 = vmatprep.subr.mxu0 0.0
        %4919 = vmatpush1.msra.mxu0 0.0
        %4920 = vmatprep.subr.mxu0 0.0
        %4921 = vmatpush1.msra.mxu0 0.0
        %4922 = vmatprep.subr.mxu0 0.0
        %4923 = vmatpush1.msra.mxu0 0.0
        %4924 = vmatprep.subr.mxu0 0.0
        %4925 = vmatpush1.msra.mxu0 0.0
        %4926 = vmatprep.subr.mxu0 0.0
        %4927 = vmatpush1.msra.mxu0 0.0
        %4928 = vmatprep.subr.mxu0 0.0
        %4929 = vmatpush1.msra.mxu0 0.0
        %4930 = vmatprep.subr.mxu0 0.0
        %4931 = vmatpush1.msra.mxu0 0.0
        %4932 = vmatprep.subr.mxu0 0.0
        %4933 = vmatpush1.msra.mxu0 0.0
        %4934 = vmatprep.subr.mxu0 0.0
        %4935 = vmatpush1.msra.mxu0 0.0
        %4936 = vmatprep.subr.mxu0 0.0
        %4937 = vmatpush1.msra.mxu0 0.0
        %4938 = vmatprep.subr.mxu0 0.0
        %4939 = vmatpush1.msra.mxu0 0.0
        %4940 = vmatprep.subr.mxu0 0.0
        %4941 = vmatpush1.msra.mxu0 0.0
        %4942 = vmatprep.subr.mxu0 0.0
        %4943 = vmatpush1.msra.mxu0 0.0
        %4944 = vmatprep.subr.mxu0 0.0
        %4945 = vmatpush1.msra.mxu0 0.0
        %4946 = vmatprep.subr.mxu0 0.0
        %4947 = vmatpush1.msra.mxu0 0.0
        %4948 = vmatprep.subr.mxu0 0.0
        %4949 = vmatpush1.msra.mxu0 0.0
        %4950 = vmatprep.subr.mxu0 0.0
        %4951 = vmatpush1.msra.mxu0 0.0
        %4952 = vmatprep.subr.mxu0 0.0
        %4953 = vmatpush1.msra.mxu0 0.0
        %4954 = vmatprep.subr.mxu0 0.0
        %4955 = vmatpush1.msra.mxu0 0.0
        %4956 = vmatprep.subr.mxu0 0.0
        %4957 = vmatpush1.msra.mxu0 0.0
        %4958 = vmatprep.subr.mxu0 0.0
        %4959 = vmatpush1.msra.mxu0 0.0
        %4960 = vmatprep.subr.mxu0 0.0
        %4961 = vmatpush1.msra.mxu0 0.0
        %4962 = vmatprep.subr.mxu0 0.0
        %4963 = vmatpush1.msra.mxu0 0.0
        %4964 = vmatprep.mubr.f32.mxu0 0.0
        %4965 = vmatmul.mubr.f32.gmra.mrb[0].mxu0 %v4898
        %v4966 = vpop.f32.mrb[0].mxu0
        %v4967 = vadd.f32 %v4895, %v4966
        %v4968 = vpop.f32.mrb[0].mxu0
        %4969 = vdwg.mxu0
        %v4970 = vmax.f32 %v4967, 0.0
        %v4971 = vld [vmem:[%s71] sm:$0x1]
        %v4973 = vlaneseq
        %v4974 = vshrl.u32 %v4973, 7
        %v4975 = vsub.s32 0, %v4974
        %v4976 = vrot.slane %v4971, %v4975
        %v4978 = vmul.f32 %v4970, %v4976
        %s4979 = scalar_lea.vmem %s71, 1
        %v4980 = vld [vmem:[%s4979] sm:$0x1]
        %v4982 = vlaneseq
        %v4983 = vshrl.u32 %v4982, 7
        %v4984 = vsub.s32 0, %v4983
        %v4985 = vrot.slane %v4980, %v4984
        %v4987 = vmul.f32 %v4970, %v4985
        %s4988 = scalar_lea.vmem %s71, 2
        %v4989 = vld [vmem:[%s4988] sm:$0x1]
        %v4991 = vlaneseq
        %v4992 = vshrl.u32 %v4991, 7
        %v4993 = vsub.s32 0, %v4992
        %v4994 = vrot.slane %v4989, %v4993
        %v4996 = vmul.f32 %v4970, %v4994
        %s4997 = scalar_lea.vmem %s71, 3
        %v4998 = vld [vmem:[%s4997] sm:$0x1]
        %v5000 = vlaneseq
        %v5001 = vshrl.u32 %v5000, 7
        %v5002 = vsub.s32 0, %v5001
        %v5003 = vrot.slane %v4998, %v5002
        %v5005 = vmul.f32 %v4970, %v5003
        %s5006 = scalar_lea.vmem %s71, 4
        %v5007 = vld [vmem:[%s5006] sm:$0x1]
        %v5009 = vlaneseq
        %v5010 = vshrl.u32 %v5009, 7
        %v5011 = vsub.s32 0, %v5010
        %v5012 = vrot.slane %v5007, %v5011
        %v5014 = vmul.f32 %v4970, %v5012
        %s5015 = scalar_lea.vmem %s71, 5
        %v5016 = vld [vmem:[%s5015] sm:$0x1]
        %v5018 = vlaneseq
        %v5019 = vshrl.u32 %v5018, 7
        %v5020 = vsub.s32 0, %v5019
        %v5021 = vrot.slane %v5016, %v5020
        %v5023 = vmul.f32 %v4970, %v5021
        %s5024 = scalar_lea.vmem %s71, 6
        %v5025 = vld [vmem:[%s5024] sm:$0x1]
        %v5027 = vlaneseq
        %v5028 = vshrl.u32 %v5027, 7
        %v5029 = vsub.s32 0, %v5028
        %v5030 = vrot.slane %v5025, %v5029
        %v5032 = vmul.f32 %v4970, %v5030
        %s5033 = scalar_lea.vmem %s71, 7
        %v5034 = vld [vmem:[%s5033] sm:$0x1]
        %v5036 = vlaneseq
        %v5037 = vshrl.u32 %v5036, 7
        %v5038 = vsub.s32 0, %v5037
        %v5039 = vrot.slane %v5034, %v5038
        %v5041 = vmul.f32 %v4970, %v5039
        %s5042 = scalar_lea.vmem %s71, 8
        %v5043 = vld [vmem:[%s5042] sm:$0x1]
        %v5045 = vlaneseq
        %v5046 = vshrl.u32 %v5045, 7
        %v5047 = vsub.s32 0, %v5046
        %v5048 = vrot.slane %v5043, %v5047
        %v5050 = vmul.f32 %v4970, %v5048
        %v5052 = vrot.slane %v4987, 4
        %v5055 = vrot.slane %v5005, 4
        %v5058 = vrot.slane %v5023, 4
        %v5061 = vrot.slane %v5041, 4
        %v5063 = vsel %vm4711, %v4978, %v5052
        %v5064 = vsel %vm4711, %v4996, %v5055
        %v5065 = vsel %vm4711, %v5014, %v5058
        %v5066 = vsel %vm4711, %v5032, %v5061
        %v5067 = vld [vmem:[%s65] sm:$0x1]
        %v5068 = vld [vmem:[#allocation5] sm:$0x1]
        %v5070 = vsel %vm4724, %v5067, 0
        %v5073 = vsel %vm4711, %v5050, 0
        %5075 = vmatprep.subr.mxu0 0.0
        %5076 = vmatpush1.msra.mxu0 %v5063
        %5077 = vmatprep.subr.mxu0 0.0
        %5078 = vmatpush1.msra.mxu0 %v5064
        %5079 = vmatprep.subr.mxu0 0.0
        %5080 = vmatpush1.msra.mxu0 %v5065
        %5081 = vmatprep.subr.mxu0 0.0
        %5082 = vmatpush1.msra.mxu0 %v5066
        %5083 = vmatprep.subr.mxu0 0.0
        %5084 = vmatpush1.msra.mxu0 %v5073
        %5085 = vmatprep.subr.mxu0 0.0
        %5086 = vmatpush1.msra.mxu0 0.0
        %5087 = vmatprep.subr.mxu0 0.0
        %5088 = vmatpush1.msra.mxu0 0.0
        %5089 = vmatprep.subr.mxu0 0.0
        %5090 = vmatpush1.msra.mxu0 0.0
        %5091 = vmatprep.subr.mxu0 0.0
        %5092 = vmatpush1.msra.mxu0 0.0
        %5093 = vmatprep.subr.mxu0 0.0
        %5094 = vmatpush1.msra.mxu0 0.0
        %5095 = vmatprep.subr.mxu0 0.0
        %5096 = vmatpush1.msra.mxu0 0.0
        %5097 = vmatprep.subr.mxu0 0.0
        %5098 = vmatpush1.msra.mxu0 0.0
        %5099 = vmatprep.subr.mxu0 0.0
        %5100 = vmatpush1.msra.mxu0 0.0
        %5101 = vmatprep.subr.mxu0 0.0
        %5102 = vmatpush1.msra.mxu0 0.0
        %5103 = vmatprep.subr.mxu0 0.0
        %5104 = vmatpush1.msra.mxu0 0.0
        %5105 = vmatprep.subr.mxu0 0.0
        %5106 = vmatpush1.msra.mxu0 0.0
        %5107 = vmatprep.subr.mxu0 0.0
        %5108 = vmatpush1.msra.mxu0 0.0
        %5109 = vmatprep.subr.mxu0 0.0
        %5110 = vmatpush1.msra.mxu0 0.0
        %5111 = vmatprep.subr.mxu0 0.0
        %5112 = vmatpush1.msra.mxu0 0.0
        %5113 = vmatprep.subr.mxu0 0.0
        %5114 = vmatpush1.msra.mxu0 0.0
        %5115 = vmatprep.subr.mxu0 0.0
        %5116 = vmatpush1.msra.mxu0 0.0
        %5117 = vmatprep.subr.mxu0 0.0
        %5118 = vmatpush1.msra.mxu0 0.0
        %5119 = vmatprep.subr.mxu0 0.0
        %5120 = vmatpush1.msra.mxu0 0.0
        %5121 = vmatprep.subr.mxu0 0.0
        %5122 = vmatpush1.msra.mxu0 0.0
        %5123 = vmatprep.subr.mxu0 0.0
        %5124 = vmatpush1.msra.mxu0 0.0
        %5125 = vmatprep.subr.mxu0 0.0
        %5126 = vmatpush1.msra.mxu0 0.0
        %5127 = vmatprep.subr.mxu0 0.0
        %5128 = vmatpush1.msra.mxu0 0.0
        %5129 = vmatprep.subr.mxu0 0.0
        %5130 = vmatpush1.msra.mxu0 0.0
        %5131 = vmatprep.subr.mxu0 0.0
        %5132 = vmatpush1.msra.mxu0 0.0
        %5133 = vmatprep.subr.mxu0 0.0
        %5134 = vmatpush1.msra.mxu0 0.0
        %5135 = vmatprep.subr.mxu0 0.0
        %5136 = vmatpush1.msra.mxu0 0.0
        %5137 = vmatprep.subr.mxu0 0.0
        %5138 = vmatpush1.msra.mxu0 0.0
        %5139 = vmatprep.mubr.f32.mxu0 0.0
        %5140 = vmatmul.mubr.f32.gmra.mrb[0].mxu0 %v5070
        %v5141 = vpop.f32.mrb[0].mxu0
        %v5142 = vadd.f32 %v5068, %v5141
        %v5143 = vpop.f32.mrb[0].mxu0
        %5144 = vdwg.mxu0
        %v5145 = vld [vmem:[%s75] sm:$0xff]
        %v5146 = vld [vmem:[%s75 + $0x8] sm:$0xff]
        %v5147 = vld [vmem:[%s75 + $0x10] sm:$0xff]
        %v5148 = vld [vmem:[%s75 + $0x18] sm:$0xff]
        %v5149 = vld [vmem:[%s75 + $0x20] sm:$0xff]
        %v5150 = vld [vmem:[%s75 + $0x28] sm:$0xff]
        %v5151 = vld [vmem:[%s75 + $0x30] sm:$0xff]
        %v5152 = vld [vmem:[%s75 + $0x38] sm:$0xff]
        %v5153 = vld [vmem:[#allocation7] sm:$0x1]
        %v5155 = vsel %vm3495, %v5142, 0
        %5157 = vmatprep.subr.mxu0 0.0
        %5158 = vmatpush1.msra.mxu0 %v5145
        %5159 = vmatprep.subr.mxu0 0.0
        %5160 = vmatpush1.msra.mxu0 %v5146
        %5161 = vmatprep.subr.mxu0 0.0
        %5162 = vmatpush1.msra.mxu0 %v5147
        %5163 = vmatprep.subr.mxu0 0.0
        %5164 = vmatpush1.msra.mxu0 %v5148
        %5165 = vmatprep.subr.mxu0 0.0
        %5166 = vmatpush1.msra.mxu0 %v5149
        %5167 = vmatprep.subr.mxu0 0.0
        %5168 = vmatpush1.msra.mxu0 %v5150
        %5169 = vmatprep.subr.mxu0 0.0
        %5170 = vmatpush1.msra.mxu0 %v5151
        %5171 = vmatprep.subr.mxu0 0.0
        %5172 = vmatpush1.msra.mxu0 %v5152
        %5173 = vmatprep.subr.mxu0 0.0
        %5174 = vmatpush1.msra.mxu0 0.0
        %5175 = vmatprep.subr.mxu0 0.0
        %5176 = vmatpush1.msra.mxu0 0.0
        %5177 = vmatprep.subr.mxu0 0.0
        %5178 = vmatpush1.msra.mxu0 0.0
        %5179 = vmatprep.subr.mxu0 0.0
        %5180 = vmatpush1.msra.mxu0 0.0
        %5181 = vmatprep.subr.mxu0 0.0
        %5182 = vmatpush1.msra.mxu0 0.0
        %5183 = vmatprep.subr.mxu0 0.0
        %5184 = vmatpush1.msra.mxu0 0.0
        %5185 = vmatprep.subr.mxu0 0.0
        %5186 = vmatpush1.msra.mxu0 0.0
        %5187 = vmatprep.subr.mxu0 0.0
        %5188 = vmatpush1.msra.mxu0 0.0
        %5189 = vmatprep.subr.mxu0 0.0
        %5190 = vmatpush1.msra.mxu0 0.0
        %5191 = vmatprep.subr.mxu0 0.0
        %5192 = vmatpush1.msra.mxu0 0.0
        %5193 = vmatprep.subr.mxu0 0.0
        %5194 = vmatpush1.msra.mxu0 0.0
        %5195 = vmatprep.subr.mxu0 0.0
        %5196 = vmatpush1.msra.mxu0 0.0
        %5197 = vmatprep.subr.mxu0 0.0
        %5198 = vmatpush1.msra.mxu0 0.0
        %5199 = vmatprep.subr.mxu0 0.0
        %5200 = vmatpush1.msra.mxu0 0.0
        %5201 = vmatprep.subr.mxu0 0.0
        %5202 = vmatpush1.msra.mxu0 0.0
        %5203 = vmatprep.subr.mxu0 0.0
        %5204 = vmatpush1.msra.mxu0 0.0
        %5205 = vmatprep.subr.mxu0 0.0
        %5206 = vmatpush1.msra.mxu0 0.0
        %5207 = vmatprep.subr.mxu0 0.0
        %5208 = vmatpush1.msra.mxu0 0.0
        %5209 = vmatprep.subr.mxu0 0.0
        %5210 = vmatpush1.msra.mxu0 0.0
        %5211 = vmatprep.subr.mxu0 0.0
        %5212 = vmatpush1.msra.mxu0 0.0
        %5213 = vmatprep.subr.mxu0 0.0
        %5214 = vmatpush1.msra.mxu0 0.0
        %5215 = vmatprep.subr.mxu0 0.0
        %5216 = vmatpush1.msra.mxu0 0.0
        %5217 = vmatprep.subr.mxu0 0.0
        %5218 = vmatpush1.msra.mxu0 0.0
        %5219 = vmatprep.subr.mxu0 0.0
        %5220 = vmatpush1.msra.mxu0 0.0
        %5221 = vmatprep.mubr.f32.mxu0 0.0
        %5222 = vmatmul.mubr.f32.gmra.mrb[0].mxu0 %v5155
        %v5223 = vpop.f32.mrb[0].mxu0
        %v5224 = vadd.f32 %v5153, %v5223
        %v5225 = vpop.f32.mrb[0].mxu0
        %5226 = vdwg.mxu0
        %v5227 = vmax.f32 %v5224, 0.0
        %v5228 = vld [vmem:[%s81] sm:$0xff]
        %v5229 = vld [vmem:[%s81 + $0x8] sm:$0xff]
        %v5230 = vld [vmem:[%s81 + $0x10] sm:$0xff]
        %v5231 = vld [vmem:[%s81 + $0x18] sm:$0xff]
        %v5232 = vld [vmem:[%s81 + $0x20] sm:$0xff]
        %v5233 = vld [vmem:[%s81 + $0x28] sm:$0xff]
        %v5234 = vld [vmem:[%s81 + $0x30] sm:$0xff]
        %v5235 = vld [vmem:[%s81 + $0x38] sm:$0xff]
        %v5236 = vld [vmem:[#allocation10] sm:$0x1]
        %v5238 = vsel %vm3495, %v5227, 0
        %5240 = vmatprep.subr.mxu0 0.0
        %5241 = vmatpush1.msra.mxu0 %v5228
        %5242 = vmatprep.subr.mxu0 0.0
        %5243 = vmatpush1.msra.mxu0 %v5229
        %5244 = vmatprep.subr.mxu0 0.0
        %5245 = vmatpush1.msra.mxu0 %v5230
        %5246 = vmatprep.subr.mxu0 0.0
        %5247 = vmatpush1.msra.mxu0 %v5231
        %5248 = vmatprep.subr.mxu0 0.0
        %5249 = vmatpush1.msra.mxu0 %v5232
        %5250 = vmatprep.subr.mxu0 0.0
        %5251 = vmatpush1.msra.mxu0 %v5233
        %5252 = vmatprep.subr.mxu0 0.0
        %5253 = vmatpush1.msra.mxu0 %v5234
        %5254 = vmatprep.subr.mxu0 0.0
        %5255 = vmatpush1.msra.mxu0 %v5235
        %5256 = vmatprep.subr.mxu0 0.0
        %5257 = vmatpush1.msra.mxu0 0.0
        %5258 = vmatprep.subr.mxu0 0.0
        %5259 = vmatpush1.msra.mxu0 0.0
        %5260 = vmatprep.subr.mxu0 0.0
        %5261 = vmatpush1.msra.mxu0 0.0
        %5262 = vmatprep.subr.mxu0 0.0
        %5263 = vmatpush1.msra.mxu0 0.0
        %5264 = vmatprep.subr.mxu0 0.0
        %5265 = vmatpush1.msra.mxu0 0.0
        %5266 = vmatprep.subr.mxu0 0.0
        %5267 = vmatpush1.msra.mxu0 0.0
        %5268 = vmatprep.subr.mxu0 0.0
        %5269 = vmatpush1.msra.mxu0 0.0
        %5270 = vmatprep.subr.mxu0 0.0
        %5271 = vmatpush1.msra.mxu0 0.0
        %5272 = vmatprep.subr.mxu0 0.0
        %5273 = vmatpush1.msra.mxu0 0.0
        %5274 = vmatprep.subr.mxu0 0.0
        %5275 = vmatpush1.msra.mxu0 0.0
        %5276 = vmatprep.subr.mxu0 0.0
        %5277 = vmatpush1.msra.mxu0 0.0
        %5278 = vmatprep.subr.mxu0 0.0
        %5279 = vmatpush1.msra.mxu0 0.0
        %5280 = vmatprep.subr.mxu0 0.0
        %5281 = vmatpush1.msra.mxu0 0.0
        %5282 = vmatprep.subr.mxu0 0.0
        %5283 = vmatpush1.msra.mxu0 0.0
        %5284 = vmatprep.subr.mxu0 0.0
        %5285 = vmatpush1.msra.mxu0 0.0
        %5286 = vmatprep.subr.mxu0 0.0
        %5287 = vmatpush1.msra.mxu0 0.0
        %5288 = vmatprep.subr.mxu0 0.0
        %5289 = vmatpush1.msra.mxu0 0.0
        %5290 = vmatprep.subr.mxu0 0.0
        %5291 = vmatpush1.msra.mxu0 0.0
        %5292 = vmatprep.subr.mxu0 0.0
        %5293 = vmatpush1.msra.mxu0 0.0
        %5294 = vmatprep.subr.mxu0 0.0
        %5295 = vmatpush1.msra.mxu0 0.0
        %5296 = vmatprep.subr.mxu0 0.0
        %5297 = vmatpush1.msra.mxu0 0.0
        %5298 = vmatprep.subr.mxu0 0.0
        %5299 = vmatpush1.msra.mxu0 0.0
        %5300 = vmatprep.subr.mxu0 0.0
        %5301 = vmatpush1.msra.mxu0 0.0
        %5302 = vmatprep.subr.mxu0 0.0
        %5303 = vmatpush1.msra.mxu0 0.0
        %5304 = vmatprep.mubr.f32.mxu0 0.0
        %5305 = vmatmul.mubr.f32.gmra.mrb[0].mxu0 %v5238
        %v5306 = vpop.f32.mrb[0].mxu0
        %v5307 = vadd.f32 %v5236, %v5306
        %v5308 = vpop.f32.mrb[0].mxu0
        %5309 = vdwg.mxu0
        %v5310 = vmax.f32 %v5307, 0.0
        %v5311 = vld [vmem:[%s85] sm:$0x1]
        %v5312 = vmul.f32 %v5310, %v5311
        %s5313 = scalar_lea.vmem %s85, 1
        %v5314 = vld [vmem:[%s5313] sm:$0x1]
        %v5315 = vmul.f32 %v5310, %v5314
        %s5316 = scalar_lea.vmem %s85, 2
        %v5317 = vld [vmem:[%s5316] sm:$0x1]
        %v5318 = vmul.f32 %v5310, %v5317
        %s5319 = scalar_lea.vmem %s85, 3
        %v5320 = vld [vmem:[%s5319] sm:$0x1]
        %v5321 = vmul.f32 %v5310, %v5320
        %s5322 = scalar_lea.vmem %s85, 4
        %v5323 = vld [vmem:[%s5322] sm:$0x1]
        %v5324 = vmul.f32 %v5310, %v5323
        %s5325 = scalar_lea.vmem %s85, 5
        %v5326 = vld [vmem:[%s5325] sm:$0x1]
        %v5327 = vmul.f32 %v5310, %v5326
        %s5328 = scalar_lea.vmem %s85, 6
        %v5329 = vld [vmem:[%s5328] sm:$0x1]
        %v5330 = vmul.f32 %v5310, %v5329
        %s5331 = scalar_lea.vmem %s85, 7
        %v5332 = vld [vmem:[%s5331] sm:$0x1]
        %v5333 = vmul.f32 %v5310, %v5332
        %s5334 = scalar_lea.vmem %s85, 8
        %v5335 = vld [vmem:[%s5334] sm:$0x1]
        %v5336 = vmul.f32 %v5310, %v5335
        %v5338 = vrot.slane %v5315, 7
        %v5341 = vrot.slane %v5318, 6
        %v5344 = vrot.slane %v5321, 5
        %v5347 = vrot.slane %v5324, 4
        %v5350 = vrot.slane %v5327, 3
        %v5353 = vrot.slane %v5330, 2
        %v5356 = vrot.slane %v5333, 1
        %vm5358 = vcmask 1040384
        %v5359 = vsel %vm5358, %v5312, %v5338
        %vm5360 = vcmask 1041408
        %v5361 = vsel %vm5360, %v5359, %v5341
        %vm5362 = vcmask 1042432
        %v5363 = vsel %vm5362, %v5361, %v5344
        %v5364 = vsel %vm4711, %v5363, %v5347
        %vm5365 = vcmask 1044480
        %v5366 = vsel %vm5365, %v5364, %v5350
        %vm5367 = vcmask 1045504
        %v5368 = vsel %vm5367, %v5366, %v5353
        %vm5369 = vcmask 1046528
        %v5370 = vsel %vm5369, %v5368, %v5356
        %v5371 = vld [vmem:[#allocation8] sm:$0x1]
        %v5372 = vld [vmem:[#allocation11] sm:$0x1]
        %vm5373 = vcmask 72704
        %v5375 = vsel %vm5373, %v5371, 0
        %v5378 = vsel %vm5358, %v5336, 0
        %5380 = vmatprep.subr.mxu0 0.0
        %5381 = vmatpush1.msra.mxu0 %v5370
        %5382 = vmatprep.subr.mxu0 0.0
        %5383 = vmatpush1.msra.mxu0 %v5378
        %5384 = vmatprep.subr.mxu0 0.0
        %5385 = vmatpush1.msra.mxu0 0.0
        %5386 = vmatprep.subr.mxu0 0.0
        %5387 = vmatpush1.msra.mxu0 0.0
        %5388 = vmatprep.subr.mxu0 0.0
        %5389 = vmatpush1.msra.mxu0 0.0
        %5390 = vmatprep.subr.mxu0 0.0
        %5391 = vmatpush1.msra.mxu0 0.0
        %5392 = vmatprep.subr.mxu0 0.0
        %5393 = vmatpush1.msra.mxu0 0.0
        %5394 = vmatprep.subr.mxu0 0.0
        %5395 = vmatpush1.msra.mxu0 0.0
        %5396 = vmatprep.subr.mxu0 0.0
        %5397 = vmatpush1.msra.mxu0 0.0
        %5398 = vmatprep.subr.mxu0 0.0
        %5399 = vmatpush1.msra.mxu0 0.0
        %5400 = vmatprep.subr.mxu0 0.0
        %5401 = vmatpush1.msra.mxu0 0.0
        %5402 = vmatprep.subr.mxu0 0.0
        %5403 = vmatpush1.msra.mxu0 0.0
        %5404 = vmatprep.subr.mxu0 0.0
        %5405 = vmatpush1.msra.mxu0 0.0
        %5406 = vmatprep.subr.mxu0 0.0
        %5407 = vmatpush1.msra.mxu0 0.0
        %5408 = vmatprep.subr.mxu0 0.0
        %5409 = vmatpush1.msra.mxu0 0.0
        %5410 = vmatprep.subr.mxu0 0.0
        %5411 = vmatpush1.msra.mxu0 0.0
        %5412 = vmatprep.subr.mxu0 0.0
        %5413 = vmatpush1.msra.mxu0 0.0
        %5414 = vmatprep.subr.mxu0 0.0
        %5415 = vmatpush1.msra.mxu0 0.0
        %5416 = vmatprep.subr.mxu0 0.0
        %5417 = vmatpush1.msra.mxu0 0.0
        %5418 = vmatprep.subr.mxu0 0.0
        %5419 = vmatpush1.msra.mxu0 0.0
        %5420 = vmatprep.subr.mxu0 0.0
        %5421 = vmatpush1.msra.mxu0 0.0
        %5422 = vmatprep.subr.mxu0 0.0
        %5423 = vmatpush1.msra.mxu0 0.0
        %5424 = vmatprep.subr.mxu0 0.0
        %5425 = vmatpush1.msra.mxu0 0.0
        %5426 = vmatprep.subr.mxu0 0.0
        %5427 = vmatpush1.msra.mxu0 0.0
        %5428 = vmatprep.subr.mxu0 0.0
        %5429 = vmatpush1.msra.mxu0 0.0
        %5430 = vmatprep.subr.mxu0 0.0
        %5431 = vmatpush1.msra.mxu0 0.0
        %5432 = vmatprep.subr.mxu0 0.0
        %5433 = vmatpush1.msra.mxu0 0.0
        %5434 = vmatprep.subr.mxu0 0.0
        %5435 = vmatpush1.msra.mxu0 0.0
        %5436 = vmatprep.subr.mxu0 0.0
        %5437 = vmatpush1.msra.mxu0 0.0
        %5438 = vmatprep.subr.mxu0 0.0
        %5439 = vmatpush1.msra.mxu0 0.0
        %5440 = vmatprep.subr.mxu0 0.0
        %5441 = vmatpush1.msra.mxu0 0.0
        %5442 = vmatprep.subr.mxu0 0.0
        %5443 = vmatpush1.msra.mxu0 0.0
        %5444 = vmatprep.mubr.f32.mxu0 0.0
        %5445 = vmatmul.mubr.f32.gmra.mrb[0].mxu0 %v5375
        %v5446 = vpop.f32.mrb[0].mxu0
        %v5447 = vadd.f32 %v5372, %v5446
        %v5448 = vpop.f32.mrb[0].mxu0
        %5449 = vdwg.mxu0
        %v5450 = vld [vmem:[%s89] sm:$0xff]
        %v5451 = vld [vmem:[%s89 + $0x8] sm:$0xff]
        %v5452 = vld [vmem:[%s89 + $0x10] sm:$0xff]
        %v5453 = vld [vmem:[%s89 + $0x18] sm:$0xff]
        %v5454 = vld [vmem:[%s89 + $0x20] sm:$0xff]
        %v5455 = vld [vmem:[%s89 + $0x28] sm:$0xff]
        %v5456 = vld [vmem:[%s89 + $0x30] sm:$0xff]
        %v5457 = vld [vmem:[%s89 + $0x38] sm:$0xff]
        %v5458 = vld [vmem:[#allocation13] sm:$0x1]
        %v5460 = vsel %vm3495, %v5447, 0
        %5462 = vmatprep.subr.mxu0 0.0
        %5463 = vmatpush1.msra.mxu0 %v5450
        %5464 = vmatprep.subr.mxu0 0.0
        %5465 = vmatpush1.msra.mxu0 %v5451
        %5466 = vmatprep.subr.mxu0 0.0
        %5467 = vmatpush1.msra.mxu0 %v5452
        %5468 = vmatprep.subr.mxu0 0.0
        %5469 = vmatpush1.msra.mxu0 %v5453
        %5470 = vmatprep.subr.mxu0 0.0
        %5471 = vmatpush1.msra.mxu0 %v5454
        %5472 = vmatprep.subr.mxu0 0.0
        %5473 = vmatpush1.msra.mxu0 %v5455
        %5474 = vmatprep.subr.mxu0 0.0
        %5475 = vmatpush1.msra.mxu0 %v5456
        %5476 = vmatprep.subr.mxu0 0.0
        %5477 = vmatpush1.msra.mxu0 %v5457
        %5478 = vmatprep.subr.mxu0 0.0
        %5479 = vmatpush1.msra.mxu0 0.0
        %5480 = vmatprep.subr.mxu0 0.0
        %5481 = vmatpush1.msra.mxu0 0.0
        %5482 = vmatprep.subr.mxu0 0.0
        %5483 = vmatpush1.msra.mxu0 0.0
        %5484 = vmatprep.subr.mxu0 0.0
        %5485 = vmatpush1.msra.mxu0 0.0
        %5486 = vmatprep.subr.mxu0 0.0
        %5487 = vmatpush1.msra.mxu0 0.0
        %5488 = vmatprep.subr.mxu0 0.0
        %5489 = vmatpush1.msra.mxu0 0.0
        %5490 = vmatprep.subr.mxu0 0.0
        %5491 = vmatpush1.msra.mxu0 0.0
        %5492 = vmatprep.subr.mxu0 0.0
        %5493 = vmatpush1.msra.mxu0 0.0
        %5494 = vmatprep.subr.mxu0 0.0
        %5495 = vmatpush1.msra.mxu0 0.0
        %5496 = vmatprep.subr.mxu0 0.0
        %5497 = vmatpush1.msra.mxu0 0.0
        %5498 = vmatprep.subr.mxu0 0.0
        %5499 = vmatpush1.msra.mxu0 0.0
        %5500 = vmatprep.subr.mxu0 0.0
        %5501 = vmatpush1.msra.mxu0 0.0
        %5502 = vmatprep.subr.mxu0 0.0
        %5503 = vmatpush1.msra.mxu0 0.0
        %5504 = vmatprep.subr.mxu0 0.0
        %5505 = vmatpush1.msra.mxu0 0.0
        %5506 = vmatprep.subr.mxu0 0.0
        %5507 = vmatpush1.msra.mxu0 0.0
        %5508 = vmatprep.subr.mxu0 0.0
        %5509 = vmatpush1.msra.mxu0 0.0
        %5510 = vmatprep.subr.mxu0 0.0
        %5511 = vmatpush1.msra.mxu0 0.0
        %5512 = vmatprep.subr.mxu0 0.0
        %5513 = vmatpush1.msra.mxu0 0.0
        %5514 = vmatprep.subr.mxu0 0.0
        %5515 = vmatpush1.msra.mxu0 0.0
        %5516 = vmatprep.subr.mxu0 0.0
        %5517 = vmatpush1.msra.mxu0 0.0
        %5518 = vmatprep.subr.mxu0 0.0
        %5519 = vmatpush1.msra.mxu0 0.0
        %5520 = vmatprep.subr.mxu0 0.0
        %5521 = vmatpush1.msra.mxu0 0.0
        %5522 = vmatprep.subr.mxu0 0.0
        %5523 = vmatpush1.msra.mxu0 0.0
        %5524 = vmatprep.subr.mxu0 0.0
        %5525 = vmatpush1.msra.mxu0 0.0
        %5526 = vmatprep.mubr.f32.mxu0 0.0
        %5527 = vmatmul.mubr.f32.gmra.mrb[0].mxu0 %v5460
        %v5528 = vpop.f32.mrb[0].mxu0
        %v5529 = vadd.f32 %v5458, %v5528
        %v5530 = vpop.f32.mrb[0].mxu0
        %5531 = vdwg.mxu0
        %v5532 = vmax.f32 %v5529, 0.0
        %v5533 = vld [vmem:[%s93] sm:$0xff]
        %v5534 = vld [vmem:[%s93 + $0x8] sm:$0xff]
        %v5535 = vld [vmem:[%s93 + $0x10] sm:$0xff]
        %v5536 = vld [vmem:[%s93 + $0x18] sm:$0xff]
        %v5537 = vld [vmem:[%s93 + $0x20] sm:$0xff]
        %v5538 = vld [vmem:[%s93 + $0x28] sm:$0xff]
        %v5539 = vld [vmem:[%s93 + $0x30] sm:$0xff]
        %v5540 = vld [vmem:[%s93 + $0x38] sm:$0xff]
        %v5541 = vld [vmem:[#allocation14] sm:$0x1]
        %v5543 = vsel %vm3495, %v5532, 0
        %5545 = vmatprep.subr.mxu0 0.0
        %5546 = vmatpush1.msra.mxu0 %v5533
        %5547 = vmatprep.subr.mxu0 0.0
        %5548 = vmatpush1.msra.mxu0 %v5534
        %5549 = vmatprep.subr.mxu0 0.0
        %5550 = vmatpush1.msra.mxu0 %v5535
        %5551 = vmatprep.subr.mxu0 0.0
        %5552 = vmatpush1.msra.mxu0 %v5536
        %5553 = vmatprep.subr.mxu0 0.0
        %5554 = vmatpush1.msra.mxu0 %v5537
        %5555 = vmatprep.subr.mxu0 0.0
        %5556 = vmatpush1.msra.mxu0 %v5538
        %5557 = vmatprep.subr.mxu0 0.0
        %5558 = vmatpush1.msra.mxu0 %v5539
        %5559 = vmatprep.subr.mxu0 0.0
        %5560 = vmatpush1.msra.mxu0 %v5540
        %5561 = vmatprep.subr.mxu0 0.0
        %5562 = vmatpush1.msra.mxu0 0.0
        %5563 = vmatprep.subr.mxu0 0.0
        %5564 = vmatpush1.msra.mxu0 0.0
        %5565 = vmatprep.subr.mxu0 0.0
        %5566 = vmatpush1.msra.mxu0 0.0
        %5567 = vmatprep.subr.mxu0 0.0
        %5568 = vmatpush1.msra.mxu0 0.0
        %5569 = vmatprep.subr.mxu0 0.0
        %5570 = vmatpush1.msra.mxu0 0.0
        %5571 = vmatprep.subr.mxu0 0.0
        %5572 = vmatpush1.msra.mxu0 0.0
        %5573 = vmatprep.subr.mxu0 0.0
        %5574 = vmatpush1.msra.mxu0 0.0
        %5575 = vmatprep.subr.mxu0 0.0
        %5576 = vmatpush1.msra.mxu0 0.0
        %5577 = vmatprep.subr.mxu0 0.0
        %5578 = vmatpush1.msra.mxu0 0.0
        %5579 = vmatprep.subr.mxu0 0.0
        %5580 = vmatpush1.msra.mxu0 0.0
        %5581 = vmatprep.subr.mxu0 0.0
        %5582 = vmatpush1.msra.mxu0 0.0
        %5583 = vmatprep.subr.mxu0 0.0
        %5584 = vmatpush1.msra.mxu0 0.0
        %5585 = vmatprep.subr.mxu0 0.0
        %5586 = vmatpush1.msra.mxu0 0.0
        %5587 = vmatprep.subr.mxu0 0.0
        %5588 = vmatpush1.msra.mxu0 0.0
        %5589 = vmatprep.subr.mxu0 0.0
        %5590 = vmatpush1.msra.mxu0 0.0
        %5591 = vmatprep.subr.mxu0 0.0
        %5592 = vmatpush1.msra.mxu0 0.0
        %5593 = vmatprep.subr.mxu0 0.0
        %5594 = vmatpush1.msra.mxu0 0.0
        %5595 = vmatprep.subr.mxu0 0.0
        %5596 = vmatpush1.msra.mxu0 0.0
        %5597 = vmatprep.subr.mxu0 0.0
        %5598 = vmatpush1.msra.mxu0 0.0
        %5599 = vmatprep.subr.mxu0 0.0
        %5600 = vmatpush1.msra.mxu0 0.0
        %5601 = vmatprep.subr.mxu0 0.0
        %5602 = vmatpush1.msra.mxu0 0.0
        %5603 = vmatprep.subr.mxu0 0.0
        %5604 = vmatpush1.msra.mxu0 0.0
        %5605 = vmatprep.subr.mxu0 0.0
        %5606 = vmatpush1.msra.mxu0 0.0
        %5607 = vmatprep.subr.mxu0 0.0
        %5608 = vmatpush1.msra.mxu0 0.0
        %5609 = vmatprep.mubr.f32.mxu0 0.0
        %5610 = vmatmul.mubr.f32.gmra.mrb[0].mxu0 %v5543
        %v5611 = vpop.f32.mrb[0].mxu0
        %v5612 = vadd.f32 %v5541, %v5611
        %v5613 = vpop.f32.mrb[0].mxu0
        %5614 = vdwg.mxu0
        %v5615 = vmax.f32 %v5612, 0.0
        %v5616 = vadd.f32 %v5615, 0.0
        %v5617 = vld [vmem:[%s97] sm:$0xff]
        %v5618 = vld [vmem:[%s97 + $0x8] sm:$0xff]
        %v5619 = vld [vmem:[%s97 + $0x10] sm:$0xff]
        %v5620 = vld [vmem:[%s97 + $0x18] sm:$0xff]
        %v5621 = vld [vmem:[%s97 + $0x20] sm:$0xff]
        %v5622 = vld [vmem:[%s97 + $0x28] sm:$0xff]
        %v5623 = vld [vmem:[%s97 + $0x30] sm:$0xff]
        %v5624 = vld [vmem:[%s97 + $0x38] sm:$0xff]
        %v5625 = vld [vmem:[%s97 + $0x40] sm:$0xff]
        %v5626 = vld [vmem:[%s97 + $0x48] sm:$0xff]
        %v5627 = vld [vmem:[%s97 + $0x50] sm:$0xff]
        %v5628 = vld [vmem:[%s97 + $0x58] sm:$0xff]
        %v5629 = vld [vmem:[%s97 + $0x60] sm:$0xff]
        %v5630 = vld [vmem:[%s97 + $0x68] sm:$0xff]
        %v5631 = vld [vmem:[%s97 + $0x70] sm:$0xff]
        %v5632 = vld [vmem:[%s97 + $0x78] sm:$0xff]
        %v5633 = vld [vmem:[#allocation16] sm:$0x1]
        %5634 = vmatprep.subr.mxu0 0.0
        %5635 = vmatpush1.msra.mxu0 %v5617
        %5636 = vmatprep.subr.mxu0 0.0
        %5637 = vmatpush1.msra.mxu0 %v5618
        %5638 = vmatprep.subr.mxu0 0.0
        %5639 = vmatpush1.msra.mxu0 %v5619
        %5640 = vmatprep.subr.mxu0 0.0
        %5641 = vmatpush1.msra.mxu0 %v5620
        %5642 = vmatprep.subr.mxu0 0.0
        %5643 = vmatpush1.msra.mxu0 %v5621
        %5644 = vmatprep.subr.mxu0 0.0
        %5645 = vmatpush1.msra.mxu0 %v5622
        %5646 = vmatprep.subr.mxu0 0.0
        %5647 = vmatpush1.msra.mxu0 %v5623
        %5648 = vmatprep.subr.mxu0 0.0
        %5649 = vmatpush1.msra.mxu0 %v5624
        %5650 = vmatprep.subr.mxu0 0.0
        %5651 = vmatpush1.msra.mxu0 %v5625
        %5652 = vmatprep.subr.mxu0 0.0
        %5653 = vmatpush1.msra.mxu0 %v5626
        %5654 = vmatprep.subr.mxu0 0.0
        %5655 = vmatpush1.msra.mxu0 %v5627
        %5656 = vmatprep.subr.mxu0 0.0
        %5657 = vmatpush1.msra.mxu0 %v5628
        %5658 = vmatprep.subr.mxu0 0.0
        %5659 = vmatpush1.msra.mxu0 %v5629
        %5660 = vmatprep.subr.mxu0 0.0
        %5661 = vmatpush1.msra.mxu0 %v5630
        %5662 = vmatprep.subr.mxu0 0.0
        %5663 = vmatpush1.msra.mxu0 %v5631
        %5664 = vmatprep.subr.mxu0 0.0
        %5665 = vmatpush1.msra.mxu0 %v5632
        %5666 = vmatprep.subr.mxu0 0.0
        %5667 = vmatpush1.msra.mxu0 0.0
        %5668 = vmatprep.subr.mxu0 0.0
        %5669 = vmatpush1.msra.mxu0 0.0
        %5670 = vmatprep.subr.mxu0 0.0
        %5671 = vmatpush1.msra.mxu0 0.0
        %5672 = vmatprep.subr.mxu0 0.0
        %5673 = vmatpush1.msra.mxu0 0.0
        %5674 = vmatprep.subr.mxu0 0.0
        %5675 = vmatpush1.msra.mxu0 0.0
        %5676 = vmatprep.subr.mxu0 0.0
        %5677 = vmatpush1.msra.mxu0 0.0
        %5678 = vmatprep.subr.mxu0 0.0
        %5679 = vmatpush1.msra.mxu0 0.0
        %5680 = vmatprep.subr.mxu0 0.0
        %5681 = vmatpush1.msra.mxu0 0.0
        %5682 = vmatprep.subr.mxu0 0.0
        %5683 = vmatpush1.msra.mxu0 0.0
        %5684 = vmatprep.subr.mxu0 0.0
        %5685 = vmatpush1.msra.mxu0 0.0
        %5686 = vmatprep.subr.mxu0 0.0
        %5687 = vmatpush1.msra.mxu0 0.0
        %5688 = vmatprep.subr.mxu0 0.0
        %5689 = vmatpush1.msra.mxu0 0.0
        %5690 = vmatprep.subr.mxu0 0.0
        %5691 = vmatpush1.msra.mxu0 0.0
        %5692 = vmatprep.subr.mxu0 0.0
        %5693 = vmatpush1.msra.mxu0 0.0
        %5694 = vmatprep.subr.mxu0 0.0
        %5695 = vmatpush1.msra.mxu0 0.0
        %5696 = vmatprep.subr.mxu0 0.0
        %5697 = vmatpush1.msra.mxu0 0.0
        %5698 = vmatprep.mubr.f32.mxu0 0.0
        %5699 = vmatmul.mubr.f32.gmra.mrb[0].mxu0 %v5616
        %v5700 = vpop.f32.mrb[0].mxu0
        %v5701 = vadd.f32 %v5633, %v5700
        %v5702 = vpop.f32.mrb[0].mxu0
        %5703 = vdwg.mxu0
        %vm5704 = vcmask 73728
        %5705 = vst.msk [vmem:[%s1595] sm:$0x1] %vm5704, %v5701
        %s5706 = sand.u32 %s1183, 1
        %s5707 = scalar_lea.sflag [#allocation4], %s5706
        %s5708 = sand.u32 %s1183, 1
        %s5709 = scalar_lea.vmem [#allocation17], %s5708
        // Predicated region
        $region257: #{_lambda_.1} parent=219 // pred_check
          %p5710 = pneg %p1193
        $region258: #{_lambda_.1} parent=219 // pred_check_branch
          %5712 = sbr.rel (%p5710) target = $region260
        $region259: #{_lambda_.1} parent=219 // pred_region
          %s5714 = ssub.s32 16, 16
          %5715 = vsyncadd %s5707, %s5714
          %s5716 = smul.addr %s120, 16
          %s5717 = scalar_lea.hbm %s101, %s5716
          %s5719 = sshll.u32 %s5709, 4
          %s5720 = int_to_ptr.vmem [resolvable:$true] %s5719
          %5722 = dma.vmem_to_hbm [thread:$0]  %s5720, 16, %s5717, %s5707
        $region260: #{_lambda_.1} parent=219 // pred_fallthru
          _
      $region220: #{_lambda_.1} parent=5 // pred_fallthru
        _
      %p5723 = scmp.le.s32.totalorder 2, %s115
      // Predicated region
      $region261: #{_lambda_.1} parent=5 // pred_check
        %p5724 = pneg %p5723
      $region262: #{_lambda_.1} parent=5 // pred_check_branch
        %5726 = sbr.rel (%p5724) target = $region264
      $region263: #{_lambda_.1} parent=5 // pred_region
        %s5727 = ssub.s32 %s115, 2
        // Predicated region
        $region265: #{_lambda_.1} parent=263 // pred_check
          %p5728 = pneg %p1199
        $region266: #{_lambda_.1} parent=263 // pred_check_branch
          %5730 = sbr.rel (%p5728) target = $region268
        $region267: #{_lambda_.1} parent=263 // pred_region
          %s5731 = sand.u32 %s1184, 1
          %s5732 = scalar_lea.sflag [#allocation4], %s5731
          %s5733 = sand.u32 %s1184, 1
          %s5734 = scalar_lea.vmem [#allocation17], %s5733
          %5735 = dma.done %s5732, 16
        $region268: #{_lambda_.1} parent=263 // pred_fallthru
          _
      $region264: #{_lambda_.1} parent=5 // pred_fallthru
        _
    $region6: #{_lambda_.1} parent=1 // loop_footer
      %s119 = sadd.s32 1, %s115
    $region7: #{_lambda_.1} parent=1 // loop_footer_branch
      %114 = sbr.rel target = $region3
    $region8: #{_lambda_.1} parent=1 // loop_exit
      _
    %5736 = vsyncpa [#allocation3], 1
    %s5737 = scalar_lea.sflag [#allocation3], 1
    %5738 = vsyncpa %s5737, 1
    %5739 = vsyncpa [#allocation6], 1
    %5740 = vsyncpa [#allocation9], 1
    %5741 = vsyncpa [#allocation12], 1
    %5742 = vsyncpa [#allocation15], 1
    %5743 = vsyncpa [#allocation4], 1
    %s5744 = scalar_lea.sflag [#allocation4], 1
    %5745 = vsyncpa %s5744, 1

</llo_original>
